<compile_context>
chip_gen: v7x
topology: tpu7x:2x2x1
jax: 0.10.0
libtpu: 0.0.40
codegen_flags: <defaults>
</compile_context>

<pallas_src>
import functools

import jax
import jax.numpy as jnp
from jax.experimental import pallas as pl
from jax.experimental.pallas import tpu as pltpu

NUM_ACTIONS = 6        # stands in for len(options.get('actions'))
HEAD_PAD = 128         # lane-dense padded width of the merged actor+critic output
MAX_TILE_B = 32        # batch tile (VMEM-safe on v7x, fine on v5e/v6e)
K1 = 8 * 84 * 4        # conv1 expanded K (one 8-row NHWC input strip) = 2688
N1 = 24 * 16           # conv1 expanded N (w_out padded 20->24, 16 ch)   = 384
K2 = 4 * N1            # conv2 expanded K                                = 1536
N2 = 12 * 32           # conv2 expanded N (w_out padded 9->12, 32 ch)    = 384
KF = 9 * N2            # fc1 K (9 h_out chunks)                          = 3456


# --------------------------------------------------------------------------
# Fused Pallas kernel: conv1 -> conv2 -> fc1 -> {actor softmax, critic value}
# --------------------------------------------------------------------------
def _fused_kernel(TB, A,
                  p1_ref, w1_ref, b1_ref, w2_ref, b2_ref, wf_ref, bf_ref,
                  wh_ref, bh_ref, out_ref, h1_ref, c2_ref):
    """One batch tile per grid step; 4 MXU matmuls total.

    p1_ref : (1, 20*TB, 2688) bf16  conv1 input strips, rows (hp, hh, b)
    w1_ref : (2688, 384) bf16       width-expanded conv1 weight
    w2_ref : (1536, 384) bf16       width-expanded conv2 weight
    wf_ref : (3456, 256) bf16       fc1 weight (flatten permutation folded in)
    wh_ref : (256, 128)  f32        merged actor(A) + critic(1) head, zero padded
    out_ref: (1, TB, 128) f32       cols [0,A) probs, col A value, rest 0
    h1_ref : (20*TB, 384) f32       conv1 activation scratch, rows (hp, hh, b)
    c2_ref : (9*TB, 384)  f32       conv2 activation scratch, rows (h2, b)
    """
    # ---------------- conv1 (width-expanded): ONE bf16 matmul ----------------
    y1 = jnp.dot(p1_ref[0], w1_ref[...], preferred_element_type=jnp.float32)
    y1 = jnp.maximum(y1 + b1_ref[...], 0.0)
    h1_ref[...] = y1                                   # single full-width store

    # ---------------- conv2 (width-expanded): 4 slices + ONE matmul ----------
    # piece dh = conv1 rows (parity dh%2, hh = h2 + dh//2, b) -> contiguous.
    pieces = [h1_ref[pl.ds((dh % 2) * 10 * TB + (dh // 2) * TB, 9 * TB), :]
              for dh in range(4)]
    lhs2 = jnp.concatenate(pieces, axis=-1)            # (9*TB, 1536), rows (h2, b)
    y2 = jnp.dot(lhs2.astype(jnp.bfloat16), w2_ref[...],
                 preferred_element_type=jnp.float32)
    y2 = jnp.maximum(y2 + b2_ref[...], 0.0)
    c2_ref[...] = y2                                   # single full-width store

    # ---------------- fc1: 9 slices + ONE (TB, 3456) matmul ------------------
    rows = jnp.concatenate(
        [c2_ref[pl.ds(h2 * TB, TB), :] for h2 in range(9)], axis=-1)  # (TB, 3456)
    h3 = jnp.dot(rows.astype(jnp.bfloat16), wf_ref[...],
                 preferred_element_type=jnp.float32)
    h3 = jnp.maximum(h3 + bf_ref[...], 0.0)            # (TB, 256) f32

    # ---------------- merged actor softmax + critic value --------------------
    logits = jnp.dot(h3, wh_ref[...],
                     preferred_element_type=jnp.float32) + bh_ref[...]  # (TB, 128)
    lane = jax.lax.broadcasted_iota(jnp.int32, logits.shape, 1)
    masked = jnp.where(lane < A, logits, jnp.float32(-1e30))
    m = jnp.max(masked, axis=-1, keepdims=True)
    e = jnp.exp(masked - m)
    s = jnp.sum(e, axis=-1, keepdims=True)
    inv = pl.reciprocal(s, approx=True)
    inv = inv * (2.0 - s * inv)                        # one Newton step
    probs = e * inv                                    # zero on padded lanes
    out_ref[0] = jnp.where(lane == A, logits, probs)


def _fused_forward(p1, prep, nt, TB):
    kernel = functools.partial(_fused_kernel, TB, NUM_ACTIONS)
    return pl.pallas_call(
        kernel,
        out_shape=jax.ShapeDtypeStruct((nt, TB, HEAD_PAD), jnp.float32),
        grid=(nt,),
        in_specs=[
            pl.BlockSpec((1, 20 * TB, K1), lambda i: (i, 0, 0)),
            pl.BlockSpec((K1, N1), lambda i: (0, 0)),
            pl.BlockSpec((1, N1), lambda i: (0, 0)),
            pl.BlockSpec((K2, N2), lambda i: (0, 0)),
            pl.BlockSpec((1, N2), lambda i: (0, 0)),
            pl.BlockSpec((KF, 256), lambda i: (0, 0)),
            pl.BlockSpec((1, 256), lambda i: (0, 0)),
            pl.BlockSpec((256, HEAD_PAD), lambda i: (0, 0)),
            pl.BlockSpec((1, HEAD_PAD), lambda i: (0, 0)),
        ],
        out_specs=pl.BlockSpec((1, TB, HEAD_PAD), lambda i: (i, 0, 0)),
        scratch_shapes=[
            pltpu.VMEM((20 * TB, N1), jnp.float32),   # conv1 activation
            pltpu.VMEM((9 * TB, N2), jnp.float32),    # conv2 activation
        ],
        compiler_params=pltpu.CompilerParams(
            dimension_semantics=("parallel",),        # v7x: shard tiles over 2 TCs
            vmem_limit_bytes=32 * 1024 * 1024,
        ),
    )(p1, prep["w1"], prep["b1"], prep["w2"], prep["b2"],
      prep["wf"], prep["bf"], prep["wh"], prep["bh"])


# --------------------------------------------------------------------------
# Host-side glue and one-time parameter preparation.
# --------------------------------------------------------------------------
def _conv1_patches(x_nhwc, nt, TB):
    """(Bp, 84, 84, 4) -> (nt, 20*TB, 2688) bf16 conv1 input strips.

    Row order within a tile = (h-parity, h_out//2, batch); K order = (kh, x, ci).
    Built from 2 slices + reshapes only (no per-tap strided slices).
    """
    Bp = x_nhwc.shape[0]
    even = x_nhwc[:, 0:80].reshape(Bp, 10, K1)     # h_out even: rows 8*hh .. +8
    odd = x_nhwc[:, 4:84].reshape(Bp, 10, K1)      # h_out odd : rows 8*hh+4 .. +8
    p = jnp.stack([even, odd], axis=1)             # (Bp, hp, hh, K)
    p = p.reshape(nt, TB, 2, 10, K1)
    p = p.transpose(0, 2, 3, 1, 4)                 # (nt, hp, hh, b, K)
    return p.reshape(nt, 20 * TB, K1).astype(jnp.bfloat16)


def prepare_params(params):
    """One-time weight prep (hoisted out of the jitted forward)."""
    f32 = jnp.float32
    a = NUM_ACTIONS

    # conv1 -> width-expanded (2688, 384) block matrix; padded w cols are zero.
    w1_hwio = params["conv1_w"].transpose(2, 3, 1, 0)          # (kh, kw, ci, co)
    w1e = jnp.zeros((8, 84, 4, 24, 16), f32)
    for w1 in range(20):
        w1e = w1e.at[:, 4 * w1:4 * w1 + 8, :, w1, :].set(w1_hwio)
    w1e = w1e.reshape(K1, N1).astype(jnp.bfloat16)
    b1e = jnp.zeros((24, 16), f32).at[:20, :].set(
        params["conv1_b"][None, :]).reshape(1, N1)

    # conv2 -> width-expanded (1536, 384); K order = (dh, w1_pad, ci).
    w2_hwio = params["conv2_w"].transpose(2, 3, 1, 0)          # (dh, dw, ci, co)
    w2e = jnp.zeros((4, 24, 16, 12, 32), f32)
    for w2 in range(9):
        w2e = w2e.at[:, 2 * w2:2 * w2 + 4, :, w2, :].set(w2_hwio)
    w2e = w2e.reshape(K2, N2).astype(jnp.bfloat16)
    b2e = jnp.zeros((12, 32), f32).at[:9, :].set(
        params["conv2_b"][None, :]).reshape(1, N2)

    # fc1: permute columns from PyTorch NCHW flatten (c, h, w) to the kernel's
    # (h, w_pad, c) order; zero rows at padded w positions; bf16.
    wf = params["fc1_w"].reshape(256, 32, 9, 9).transpose(2, 3, 1, 0)  # (h,w,c,n)
    wfp = jnp.zeros((9, 12, 32, 256), f32).at[:, :9].set(wf)
    wfp = wfp.reshape(KF, 256).astype(jnp.bfloat16)

    # merged actor + critic head, zero padded to 128 lanes (f32 for accuracy).
    wh = jnp.zeros((256, HEAD_PAD), f32)
    wh = wh.at[:, :a].set(params["actor_w"].T)
    wh = wh.at[:, a].set(params["critic_w"][0])
    bh = jnp.zeros((HEAD_PAD,), f32)
    bh = bh.at[:a].set(params["actor_b"])
    bh = bh.at[a].set(params["critic_b"][0])

    return {"w1": w1e, "b1": b1e, "w2": w2e, "b2": b2e,
            "wf": wfp, "bf": params["fc1_b"].reshape(1, 256),
            "wh": wh, "bh": bh.reshape(1, HEAD_PAD)}


def init_params(key):
    ks = jax.random.split(key, 10)

    def rnd(k, shape, fan_in):
        bound = 1.0 / jnp.sqrt(fan_in)
        return jax.random.uniform(k, shape, jnp.float32, -bound, bound)

    return {
        "conv1_w": rnd(ks[0], (16, 4, 8, 8), 4 * 8 * 8),
        "conv1_b": rnd(ks[1], (16,), 4 * 8 * 8),
        "conv2_w": rnd(ks[2], (32, 16, 4, 4), 16 * 4 * 4),
        "conv2_b": rnd(ks[3], (32,), 16 * 4 * 4),
        "fc1_w": rnd(ks[4], (256, 2592), 2592),
        "fc1_b": rnd(ks[5], (256,), 2592),
        "actor_w": rnd(ks[6], (NUM_ACTIONS, 256), 256),
        "actor_b": rnd(ks[7], (NUM_ACTIONS,), 256),
        "critic_w": rnd(ks[8], (1, 256), 256),
        "critic_b": rnd(ks[9], (1,), 256),
    }


@jax.jit
def forward_pallas(x, prep):
    """x: (B, 4, 84, 84) NCHW (PyTorch layout). Returns (probs (B,A), value (B,1))."""
    B = x.shape[0]
    TB = B if B <= MAX_TILE_B else MAX_TILE_B
    if TB % 2:
        TB += 1                                     # keep sublane counts even
    Bp = ((B + TB - 1) // TB) * TB
    if Bp != B:
        x = jnp.concatenate(
            [x, jnp.zeros((Bp - B,) + x.shape[1:], x.dtype)], axis=0)
    nt = Bp // TB

    x_nhwc = jnp.transpose(x, (0, 2, 3, 1))         # only the raw input is transposed
    p1 = _conv1_patches(x_nhwc, nt, TB)             # (nt, 20*TB, 2688) bf16
    out = _fused_forward(p1, prep, nt, TB)          # (nt, TB, 128) lane-dense slab
    out = out.reshape(Bp, HEAD_PAD)[:B]
    probs = out[:, :NUM_ACTIONS]
    value = out[:, NUM_ACTIONS:NUM_ACTIONS + 1]
    return probs, value


def forward_reference(x, params):
    """Pure-JAX reference mirroring the PyTorch forward.

    Uses the same bf16-rounded conv/fc1 weights as the kernel (so the check
    isolates kernel/layout correctness); activations stay f32 at HIGHEST.
    """
    hi = jax.lax.Precision.HIGHEST
    dn = ("NCHW", "OIHW", "NCHW")
    rt = lambda w: w.astype(jnp.bfloat16).astype(jnp.float32)
    y = jax.lax.conv_general_dilated(x, rt(params["conv1_w"]), (4, 4), "VALID",
                                     dimension_numbers=dn, precision=hi)
    y = jnp.maximum(y + params["conv1_b"][None, :, None, None], 0.0)
    y = jax.lax.conv_general_dilated(y, rt(params["conv2_w"]), (2, 2), "VALID",
                                     dimension_numbers=dn, precision=hi)
    y = jnp.maximum(y + params["conv2_b"][None, :, None, None], 0.0)
    y = y.reshape(y.shape[0], -1)
    y = jnp.maximum(jnp.dot(y, rt(params["fc1_w"]).T, precision=hi)
                    + params["fc1_b"], 0.0)
    logits = jnp.dot(y, params["actor_w"].T, precision=hi) + params["actor_b"]
    probs = jax.nn.softmax(logits, axis=1)
    value = jnp.dot(y, params["critic_w"].T, precision=hi) + params["critic_b"]
    return probs, value


if __name__ == "__main__":
    key = jax.random.PRNGKey(0)
    kp, kx = jax.random.split(key)
    params = init_params(kp)
    prep = prepare_params(params)        # one-time weight prep (hoisted)
    # fc1 in_features = 2592 = 32*9*9 forces 84x84 Atari frames; batch kept small.
    x = jax.random.uniform(kx, (2, 4, 84, 84), jnp.float32)

    probs, value = forward_pallas(x, prep)
    probs, value = jax.block_until_ready(probs), jax.block_until_ready(value)

    ref_probs, ref_value = forward_reference(x, params)
    assert probs.shape == (2, NUM_ACTIONS) and value.shape == (2, 1)
    assert jnp.allclose(jnp.sum(probs, axis=1), 1.0, atol=1e-4)
    # bf16 input/activation storage in the kernel vs f32 activations in the
    # reference -> allow ~1e-2; a layout/permutation bug would be O(1) off.
    assert jnp.allclose(probs, ref_probs, atol=1e-2, rtol=1e-2)
    assert jnp.allclose(value, ref_value, atol=1e-2, rtol=1e-2)

    print("KERNEL_OK")
</pallas_src>

<mosaic_0001>
module attributes {stable_mosaic.version = 11 : i64} {
  func.func @_fused_kernel(%arg0: i32, %arg1: memref<1x40x2688xbf16, #tpu.memory_space<vmem>>, %arg2: memref<2688x384xbf16, #tpu.memory_space<vmem>>, %arg3: memref<1x384xf32, #tpu.memory_space<vmem>>, %arg4: memref<1536x384xbf16, #tpu.memory_space<vmem>>, %arg5: memref<1x384xf32, #tpu.memory_space<vmem>>, %arg6: memref<3456x256xbf16, #tpu.memory_space<vmem>>, %arg7: memref<1x256xf32, #tpu.memory_space<vmem>>, %arg8: memref<256x128xf32, #tpu.memory_space<vmem>>, %arg9: memref<1x128xf32, #tpu.memory_space<vmem>>, %arg10: memref<1x2x128xf32, #tpu.memory_space<vmem>>, %arg11: memref<40x384xf32, #tpu.memory_space<vmem>>, %arg12: memref<18x384xf32, #tpu.memory_space<vmem>>) attributes {dimension_semantics = [#tpu.dimension_semantics<parallel>], iteration_bounds = array<i64: 1>, scalar_prefetch = 0 : i64, scratch_operands = 2 : i64, tpu.core_type = #tpu.core_type<tc>, window_params = [{transform_indices = @transform_0, window_bounds = array<i64: 1, 40, 2688>}, {pipeline_mode = #tpu.pipeline_mode<synchronous>, transform_indices = @transform_1, window_bounds = array<i64: 2688, 384>}, {pipeline_mode = #tpu.pipeline_mode<synchronous>, transform_indices = @transform_2, window_bounds = array<i64: 1, 384>}, {pipeline_mode = #tpu.pipeline_mode<synchronous>, transform_indices = @transform_3, window_bounds = array<i64: 1536, 384>}, {pipeline_mode = #tpu.pipeline_mode<synchronous>, transform_indices = @transform_4, window_bounds = array<i64: 1, 384>}, {pipeline_mode = #tpu.pipeline_mode<synchronous>, transform_indices = @transform_5, window_bounds = array<i64: 3456, 256>}, {pipeline_mode = #tpu.pipeline_mode<synchronous>, transform_indices = @transform_6, window_bounds = array<i64: 1, 256>}, {pipeline_mode = #tpu.pipeline_mode<synchronous>, transform_indices = @transform_7, window_bounds = array<i64: 256, 128>}, {pipeline_mode = #tpu.pipeline_mode<synchronous>, transform_indices = @transform_8, window_bounds = array<i64: 1, 128>}, {transform_indices = @transform_9, window_bounds = array<i64: 1, 2, 128>}]} {
    %c0 = arith.constant 0 : index
    %c0_0 = arith.constant 0 : index
    %c0_1 = arith.constant 0 : index
    %0 = vector.load %arg1[%c0, %c0_0, %c0_1] : memref<1x40x2688xbf16, #tpu.memory_space<vmem>>, vector<1x40x2688xbf16>
    %1 = vector.shape_cast %0 : vector<1x40x2688xbf16> to vector<40x2688xbf16>
    %c0_2 = arith.constant 0 : index
    %c0_3 = arith.constant 0 : index
    %2 = vector.load %arg2[%c0_2, %c0_3] : memref<2688x384xbf16, #tpu.memory_space<vmem>>, vector<2688x384xbf16>
    %cst = arith.constant dense<0.000000e+00> : vector<40x384xf32>
    %3 = tpu.matmul %1, %2, %cst {dimension_numbers = #tpu.dot_dimension_numbers<[1], [0], [0], [1], [0, 0, 1, 1], [], []>} : vector<40x2688xbf16>, vector<2688x384xbf16>, vector<40x384xf32> -> vector<40x384xf32>
    %c0_4 = arith.constant 0 : index
    %c0_5 = arith.constant 0 : index
    %4 = vector.load %arg3[%c0_4, %c0_5] : memref<1x384xf32, #tpu.memory_space<vmem>>, vector<1x384xf32>
    %5 = vector.broadcast %4 : vector<1x384xf32> to vector<40x384xf32>
    %6 = arith.addf %3, %5 : vector<40x384xf32>
    %cst_6 = arith.constant 0.000000e+00 : f32
    %7 = vector.broadcast %cst_6 : f32 to vector<40x384xf32>
    %8 = arith.maximumf %6, %7 : vector<40x384xf32>
    %c0_7 = arith.constant 0 : index
    %c0_8 = arith.constant 0 : index
    %9 = vector.load %arg11[%c0_7, %c0_8] : memref<40x384xf32, #tpu.memory_space<vmem>>, vector<40x384xf32>
    tpu.vector_store %arg11[%c0_7, %c0_8], %8 {strides = array<i32>} : memref<40x384xf32, #tpu.memory_space<vmem>>, vector<40x384xf32>,
    %c0_9 = arith.constant 0 : index
    %c0_10 = arith.constant 0 : index
    %10 = vector.load %arg11[%c0_9, %c0_10] : memref<40x384xf32, #tpu.memory_space<vmem>>, vector<18x384xf32>
    %c20 = arith.constant 20 : index
    %c0_11 = arith.constant 0 : index
    %11 = vector.load %arg11[%c20, %c0_11] : memref<40x384xf32, #tpu.memory_space<vmem>>, vector<18x384xf32>
    %c2 = arith.constant 2 : index
    %c0_12 = arith.constant 0 : index
    %12 = vector.load %arg11[%c2, %c0_12] : memref<40x384xf32, #tpu.memory_space<vmem>>, vector<18x384xf32>
    %c22 = arith.constant 22 : index
    %c0_13 = arith.constant 0 : index
    %13 = vector.load %arg11[%c22, %c0_13] : memref<40x384xf32, #tpu.memory_space<vmem>>, vector<18x384xf32>
    %14 = tpu.concatenate %10, %11, %12, %13 in 1 : vector<18x384xf32>, vector<18x384xf32>, vector<18x384xf32>, vector<18x384xf32> -> vector<18x1536xf32>
    %15 = arith.truncf %14 : vector<18x1536xf32> to vector<18x1536xbf16>
    %c0_14 = arith.constant 0 : index
    %c0_15 = arith.constant 0 : index
    %16 = vector.load %arg4[%c0_14, %c0_15] : memref<1536x384xbf16, #tpu.memory_space<vmem>>, vector<1536x384xbf16>
    %cst_16 = arith.constant dense<0.000000e+00> : vector<18x384xf32>
    %17 = tpu.matmul %15, %16, %cst_16 {dimension_numbers = #tpu.dot_dimension_numbers<[1], [0], [0], [1], [0, 0, 1, 1], [], []>} : vector<18x1536xbf16>, vector<1536x384xbf16>, vector<18x384xf32> -> vector<18x384xf32>
    %c0_17 = arith.constant 0 : index
    %c0_18 = arith.constant 0 : index
    %18 = vector.load %arg5[%c0_17, %c0_18] : memref<1x384xf32, #tpu.memory_space<vmem>>, vector<1x384xf32>
    %19 = vector.broadcast %18 : vector<1x384xf32> to vector<18x384xf32>
    %20 = arith.addf %17, %19 : vector<18x384xf32>
    %cst_19 = arith.constant 0.000000e+00 : f32
    %21 = vector.broadcast %cst_19 : f32 to vector<18x384xf32>
    %22 = arith.maximumf %20, %21 : vector<18x384xf32>
    %c0_20 = arith.constant 0 : index
    %c0_21 = arith.constant 0 : index
    %23 = vector.load %arg12[%c0_20, %c0_21] : memref<18x384xf32, #tpu.memory_space<vmem>>, vector<18x384xf32>
    tpu.vector_store %arg12[%c0_20, %c0_21], %22 {strides = array<i32>} : memref<18x384xf32, #tpu.memory_space<vmem>>, vector<18x384xf32>,
    %c0_22 = arith.constant 0 : index
    %c0_23 = arith.constant 0 : index
    %24 = vector.load %arg12[%c0_22, %c0_23] : memref<18x384xf32, #tpu.memory_space<vmem>>, vector<2x384xf32>
    %c2_24 = arith.constant 2 : index
    %c0_25 = arith.constant 0 : index
    %25 = vector.load %arg12[%c2_24, %c0_25] : memref<18x384xf32, #tpu.memory_space<vmem>>, vector<2x384xf32>
    %c4 = arith.constant 4 : index
    %c0_26 = arith.constant 0 : index
    %26 = vector.load %arg12[%c4, %c0_26] : memref<18x384xf32, #tpu.memory_space<vmem>>, vector<2x384xf32>
    %c6 = arith.constant 6 : index
    %c0_27 = arith.constant 0 : index
    %27 = vector.load %arg12[%c6, %c0_27] : memref<18x384xf32, #tpu.memory_space<vmem>>, vector<2x384xf32>
    %c8 = arith.constant 8 : index
    %c0_28 = arith.constant 0 : index
    %28 = vector.load %arg12[%c8, %c0_28] : memref<18x384xf32, #tpu.memory_space<vmem>>, vector<2x384xf32>
    %c10 = arith.constant 10 : index
    %c0_29 = arith.constant 0 : index
    %29 = vector.load %arg12[%c10, %c0_29] : memref<18x384xf32, #tpu.memory_space<vmem>>, vector<2x384xf32>
    %c12 = arith.constant 12 : index
    %c0_30 = arith.constant 0 : index
    %30 = vector.load %arg12[%c12, %c0_30] : memref<18x384xf32, #tpu.memory_space<vmem>>, vector<2x384xf32>
    %c14 = arith.constant 14 : index
    %c0_31 = arith.constant 0 : index
    %31 = vector.load %arg12[%c14, %c0_31] : memref<18x384xf32, #tpu.memory_space<vmem>>, vector<2x384xf32>
    %c16 = arith.constant 16 : index
    %c0_32 = arith.constant 0 : index
    %32 = vector.load %arg12[%c16, %c0_32] : memref<18x384xf32, #tpu.memory_space<vmem>>, vector<2x384xf32>
    %33 = tpu.concatenate %24, %25, %26, %27, %28, %29, %30, %31, %32 in 1 : vector<2x384xf32>, vector<2x384xf32>, vector<2x384xf32>, vector<2x384xf32>, vector<2x384xf32>, vector<2x384xf32>, vector<2x384xf32>, vector<2x384xf32>, vector<2x384xf32> -> vector<2x3456xf32>
    %34 = arith.truncf %33 : vector<2x3456xf32> to vector<2x3456xbf16>
    %c0_33 = arith.constant 0 : index
    %c0_34 = arith.constant 0 : index
    %35 = vector.load %arg6[%c0_33, %c0_34] : memref<3456x256xbf16, #tpu.memory_space<vmem>>, vector<3456x256xbf16>
    %cst_35 = arith.constant dense<0.000000e+00> : vector<2x256xf32>
    %36 = tpu.matmul %34, %35, %cst_35 {dimension_numbers = #tpu.dot_dimension_numbers<[1], [0], [0], [1], [0, 0, 1, 1], [], []>} : vector<2x3456xbf16>, vector<3456x256xbf16>, vector<2x256xf32> -> vector<2x256xf32>
    %c0_36 = arith.constant 0 : index
    %c0_37 = arith.constant 0 : index
    %37 = vector.load %arg7[%c0_36, %c0_37] : memref<1x256xf32, #tpu.memory_space<vmem>>, vector<1x256xf32>
    %38 = vector.broadcast %37 : vector<1x256xf32> to vector<2x256xf32>
    %39 = arith.addf %36, %38 : vector<2x256xf32>
    %cst_38 = arith.constant 0.000000e+00 : f32
    %40 = vector.broadcast %cst_38 : f32 to vector<2x256xf32>
    %41 = arith.maximumf %39, %40 : vector<2x256xf32>
    %c0_39 = arith.constant 0 : index
    %c0_40 = arith.constant 0 : index
    %42 = vector.load %arg8[%c0_39, %c0_40] : memref<256x128xf32, #tpu.memory_space<vmem>>, vector<256x128xf32>
    %cst_41 = arith.constant dense<0.000000e+00> : vector<2x128xf32>
    %43 = tpu.matmul %41, %42, %cst_41 {dimension_numbers = #tpu.dot_dimension_numbers<[1], [0], [0], [1], [0, 0, 1, 1], [], []>} : vector<2x256xf32>, vector<256x128xf32>, vector<2x128xf32> -> vector<2x128xf32>
    %c0_42 = arith.constant 0 : index
    %c0_43 = arith.constant 0 : index
    %44 = vector.load %arg9[%c0_42, %c0_43] : memref<1x128xf32, #tpu.memory_space<vmem>>, vector<1x128xf32>
    %45 = vector.broadcast %44 : vector<1x128xf32> to vector<2x128xf32>
    %46 = arith.addf %43, %45 : vector<2x128xf32>
    %47 = tpu.iota {dimensions = array<i32: 1>} : vector<2x128xi32>
    %c6_i32 = arith.constant 6 : i32
    %48 = vector.broadcast %c6_i32 : i32 to vector<2x128xi32>
    %49 = arith.cmpi slt, %47, %48 : vector<2x128xi32>
    %cst_44 = arith.constant -1.000000e+30 : f32
    %50 = vector.broadcast %cst_44 : f32 to vector<2x128xf32>
    %51 = arith.select %49, %46, %50 : vector<2x128xi1>, vector<2x128xf32>
    %cst_45 = arith.constant dense<0xFF800000> : vector<2xf32>
    %52 = vector.multi_reduction <maximumf>, %51, %cst_45 [1] : vector<2x128xf32> to vector<2xf32>
    %53 = vector.shape_cast %52 : vector<2xf32> to vector<2x1xf32>
    %54 = vector.broadcast %53 : vector<2x1xf32> to vector<2x128xf32>
    %55 = arith.subf %51, %54 : vector<2x128xf32>
    %56 = math.exp %55 : vector<2x128xf32>
    %cst_46 = arith.constant dense<0.000000e+00> : vector<2xf32>
    %57 = vector.multi_reduction <add>, %56, %cst_46 [1] : vector<2x128xf32> to vector<2xf32>
    %58 = vector.shape_cast %57 : vector<2xf32> to vector<2x1xf32>
    %59 = tpu.reciprocal %58 {approx = true} : vector<2x1xf32> -> vector<2x1xf32>
    %60 = arith.mulf %58, %59 : vector<2x1xf32>
    %cst_47 = arith.constant 2.000000e+00 : f32
    %61 = vector.broadcast %cst_47 : f32 to vector<2x1xf32>
    %62 = arith.subf %61, %60 : vector<2x1xf32>
    %63 = arith.mulf %59, %62 : vector<2x1xf32>
    %64 = vector.broadcast %63 : vector<2x1xf32> to vector<2x128xf32>
    %65 = arith.mulf %56, %64 : vector<2x128xf32>
    %c6_i32_48 = arith.constant 6 : i32
    %66 = vector.broadcast %c6_i32_48 : i32 to vector<2x128xi32>
    %67 = arith.cmpi eq, %47, %66 : vector<2x128xi32>
    %68 = arith.select %67, %46, %65 : vector<2x128xi1>, vector<2x128xf32>
    %c0_49 = arith.constant 0 : index
    %c0_50 = arith.constant 0 : index
    %c0_51 = arith.constant 0 : index
    %69 = vector.load %arg10[%c0_49, %c0_50, %c0_51] : memref<1x2x128xf32, #tpu.memory_space<vmem>>, vector<1x2x128xf32>
    %70 = vector.shape_cast %69 : vector<1x2x128xf32> to vector<2x128xf32>
    %71 = vector.shape_cast %68 : vector<2x128xf32> to vector<1x2x128xf32>
    tpu.vector_store %arg10[%c0_49, %c0_50, %c0_51], %71 {strides = array<i32>} : memref<1x2x128xf32, #tpu.memory_space<vmem>>, vector<1x2x128xf32>,
    return
  }
  func.func @transform_0(%arg0: i32) -> (i32, i32, i32) {
    %c0_i32 = arith.constant 0 : i32
    %c0_i32_0 = arith.constant 0 : i32
    %c0_i32_1 = arith.constant 0 : i32
    return %arg0, %c0_i32, %c0_i32_0 : i32, i32, i32
  }
  func.func @transform_1(%arg0: i32) -> (i32, i32) {
    %c0_i32 = arith.constant 0 : i32
    %c0_i32_0 = arith.constant 0 : i32
    %c0_i32_1 = arith.constant 0 : i32
    return %c0_i32, %c0_i32_0 : i32, i32
  }
  func.func @transform_2(%arg0: i32) -> (i32, i32) {
    %c0_i32 = arith.constant 0 : i32
    %c0_i32_0 = arith.constant 0 : i32
    %c0_i32_1 = arith.constant 0 : i32
    return %c0_i32, %c0_i32_0 : i32, i32
  }
  func.func @transform_3(%arg0: i32) -> (i32, i32) {
    %c0_i32 = arith.constant 0 : i32
    %c0_i32_0 = arith.constant 0 : i32
    %c0_i32_1 = arith.constant 0 : i32
    return %c0_i32, %c0_i32_0 : i32, i32
  }
  func.func @transform_4(%arg0: i32) -> (i32, i32) {
    %c0_i32 = arith.constant 0 : i32
    %c0_i32_0 = arith.constant 0 : i32
    %c0_i32_1 = arith.constant 0 : i32
    return %c0_i32, %c0_i32_0 : i32, i32
  }
  func.func @transform_5(%arg0: i32) -> (i32, i32) {
    %c0_i32 = arith.constant 0 : i32
    %c0_i32_0 = arith.constant 0 : i32
    %c0_i32_1 = arith.constant 0 : i32
    return %c0_i32, %c0_i32_0 : i32, i32
  }
  func.func @transform_6(%arg0: i32) -> (i32, i32) {
    %c0_i32 = arith.constant 0 : i32
    %c0_i32_0 = arith.constant 0 : i32
    %c0_i32_1 = arith.constant 0 : i32
    return %c0_i32, %c0_i32_0 : i32, i32
  }
  func.func @transform_7(%arg0: i32) -> (i32, i32) {
    %c0_i32 = arith.constant 0 : i32
    %c0_i32_0 = arith.constant 0 : i32
    %c0_i32_1 = arith.constant 0 : i32
    return %c0_i32, %c0_i32_0 : i32, i32
  }
  func.func @transform_8(%arg0: i32) -> (i32, i32) {
    %c0_i32 = arith.constant 0 : i32
    %c0_i32_0 = arith.constant 0 : i32
    %c0_i32_1 = arith.constant 0 : i32
    return %c0_i32, %c0_i32_0 : i32, i32
  }
  func.func @transform_9(%arg0: i32) -> (i32, i32, i32) {
    %c0_i32 = arith.constant 0 : i32
    %c0_i32_0 = arith.constant 0 : i32
    %c0_i32_1 = arith.constant 0 : i32
    return %arg0, %c0_i32, %c0_i32_0 : i32, i32, i32
  }
}

</mosaic_0001>

<llo_original>
// kernel: forward_pallas.1
$region0: #{forward_pallas.1}
  #allocation0 [shape = 'u32[]', space=smem, size = 0x4, offset = 0x4, fixed_abs, tag = 'smem constant byte address 0x4 - core index']
  #allocation1 [shape = 'u32[144,128]{1,0:T(1,128)}', space=vmem, size = 0x12000, scoped, tag = 'internal scratch']
  #allocation2 [shape = 'f32[40,384]{1,0:T(8,128)}', space=vmem, size = 0xf000, scoped, tag = 'scratch operand']
  #allocation3 [shape = 'f32[18,384]{1,0:T(8,128)}', space=vmem, size = 0x9000, scoped, tag = 'scratch operand']
  %s0 = inlined_call_operand.vmem [shape: bf16[1,40,2688], index: 0, kind: input, shape index: {}]
  %s1 = inlined_call_operand.vmem [shape: bf16[2688,384], index: 1, kind: input, shape index: {}]
  %s2 = inlined_call_operand.vmem [shape: f32[1,384], index: 2, kind: input, shape index: {}]
  %s3 = inlined_call_operand.vmem [shape: bf16[1536,384], index: 3, kind: input, shape index: {}]
  %s4 = inlined_call_operand.vmem [shape: f32[1,384], index: 4, kind: input, shape index: {}]
  %s5 = inlined_call_operand.vmem [shape: bf16[3456,256], index: 5, kind: input, shape index: {}]
  %s6 = inlined_call_operand.vmem [shape: f32[1,256], index: 6, kind: input, shape index: {}]
  %s7 = inlined_call_operand.vmem [shape: f32[256,128], index: 7, kind: input, shape index: {}]
  %s8 = inlined_call_operand.vmem [shape: f32[1,128], index: 8, kind: input, shape index: {}]
  %s9 = inlined_call_operand.vmem [shape: f32[1,2,128], index: 9, kind: output, shape index: {}]
  %s10 = sld [smem:[#allocation0]]
  $region46: #{forward_pallas.1} parent=0
    _
  %s12 = ssub.s32 1, %s10
  %s13 = scalar_select 0, %s12, %s10
  // Predicated region
  $region2: #{forward_pallas.1} parent=0 // pred_check
    _
  $region3: #{forward_pallas.1} parent=0 // pred_check_branch
    %15 = sbr.rel (0) target = $region5
  $region4: #{forward_pallas.1} parent=0 // pred_region
    _
  $region5: #{forward_pallas.1} parent=0 // pred_fallthru
    _
  // Predicated region
  $region6: #{forward_pallas.1} parent=0 // pred_check
    _
  $region7: #{forward_pallas.1} parent=0 // pred_check_branch
    %17 = sbr.rel (0) target = $region9
  $region8: #{forward_pallas.1} parent=0 // pred_region
    _
  $region9: #{forward_pallas.1} parent=0 // pred_fallthru
    _
  // Predicated region
  $region10: #{forward_pallas.1} parent=0 // pred_check
    _
  $region11: #{forward_pallas.1} parent=0 // pred_check_branch
    %19 = sbr.rel (0) target = $region13
  $region12: #{forward_pallas.1} parent=0 // pred_region
    _
  $region13: #{forward_pallas.1} parent=0 // pred_fallthru
    _
  // Predicated region
  $region14: #{forward_pallas.1} parent=0 // pred_check
    _
  $region15: #{forward_pallas.1} parent=0 // pred_check_branch
    %21 = sbr.rel (0) target = $region17
  $region16: #{forward_pallas.1} parent=0 // pred_region
    _
  $region17: #{forward_pallas.1} parent=0 // pred_fallthru
    _
  // Predicated region
  $region18: #{forward_pallas.1} parent=0 // pred_check
    _
  $region19: #{forward_pallas.1} parent=0 // pred_check_branch
    %23 = sbr.rel (0) target = $region21
  $region20: #{forward_pallas.1} parent=0 // pred_region
    _
  $region21: #{forward_pallas.1} parent=0 // pred_fallthru
    _
  // Predicated region
  $region22: #{forward_pallas.1} parent=0 // pred_check
    _
  $region23: #{forward_pallas.1} parent=0 // pred_check_branch
    %25 = sbr.rel (0) target = $region25
  $region24: #{forward_pallas.1} parent=0 // pred_region
    _
  $region25: #{forward_pallas.1} parent=0 // pred_fallthru
    _
  // Predicated region
  $region26: #{forward_pallas.1} parent=0 // pred_check
    _
  $region27: #{forward_pallas.1} parent=0 // pred_check_branch
    %27 = sbr.rel (0) target = $region29
  $region28: #{forward_pallas.1} parent=0 // pred_region
    _
  $region29: #{forward_pallas.1} parent=0 // pred_fallthru
    _
  // Predicated region
  $region30: #{forward_pallas.1} parent=0 // pred_check
    _
  $region31: #{forward_pallas.1} parent=0 // pred_check_branch
    %29 = sbr.rel (0) target = $region33
  $region32: #{forward_pallas.1} parent=0 // pred_region
    _
  $region33: #{forward_pallas.1} parent=0 // pred_fallthru
    _
  // Predicated region
  $region34: #{forward_pallas.1} parent=0 // pred_check
    _
  $region35: #{forward_pallas.1} parent=0 // pred_check_branch
    %31 = sbr.rel (0) target = $region37
  $region36: #{forward_pallas.1} parent=0 // pred_region
    _
  $region37: #{forward_pallas.1} parent=0 // pred_fallthru
    _
  %v33 = vld [vmem:[%s0] sm:$0xff]
  %v34 = vld [vmem:[%s0 + $0x8] sm:$0xff]
  %v35 = vld [vmem:[%s0 + $0x10] sm:$0xff]
  %v36 = vld [vmem:[%s0 + $0x18] sm:$0xff]
  %v37 = vld [vmem:[%s0 + $0x20] sm:$0xff]
  %v38 = vld [vmem:[%s0 + $0x28] sm:$0xff]
  %v39 = vld [vmem:[%s0 + $0x30] sm:$0xff]
  %v40 = vld [vmem:[%s0 + $0x38] sm:$0xff]
  %v41 = vld [vmem:[%s0 + $0x40] sm:$0xff]
  %v42 = vld [vmem:[%s0 + $0x48] sm:$0xff]
  %v43 = vld [vmem:[%s0 + $0x50] sm:$0xf]
  %v44 = vld [vmem:[%s0 + $0x54] sm:$0xff]
  %v45 = vld [vmem:[%s0 + $0x5c] sm:$0xff]
  %v46 = vld [vmem:[%s0 + $0x64] sm:$0xff]
  %v47 = vld [vmem:[%s0 + $0x6c] sm:$0xff]
  %v48 = vld [vmem:[%s0 + $0x74] sm:$0xff]
  %v49 = vld [vmem:[%s0 + $0x7c] sm:$0xff]
  %v50 = vld [vmem:[%s0 + $0x84] sm:$0xff]
  %v51 = vld [vmem:[%s0 + $0x8c] sm:$0xff]
  %v52 = vld [vmem:[%s0 + $0x94] sm:$0xff]
  %v53 = vld [vmem:[%s0 + $0x9c] sm:$0xff]
  %v54 = vld [vmem:[%s0 + $0xa4] sm:$0xf]
  %v55 = vld [vmem:[%s0 + $0xa8] sm:$0xff]
  %v56 = vld [vmem:[%s0 + $0xb0] sm:$0xff]
  %v57 = vld [vmem:[%s0 + $0xb8] sm:$0xff]
  %v58 = vld [vmem:[%s0 + $0xc0] sm:$0xff]
  %v59 = vld [vmem:[%s0 + $0xc8] sm:$0xff]
  %v60 = vld [vmem:[%s0 + $0xd0] sm:$0xff]
  %v61 = vld [vmem:[%s0 + $0xd8] sm:$0xff]
  %v62 = vld [vmem:[%s0 + $0xe0] sm:$0xff]
  %v63 = vld [vmem:[%s0 + $0xe8] sm:$0xff]
  %v64 = vld [vmem:[%s0 + $0xf0] sm:$0xff]
  %v65 = vld [vmem:[%s0 + $0xf8] sm:$0xf]
  %v66 = vld [vmem:[%s0 + $0xfc] sm:$0xff]
  %v67 = vld [vmem:[%s0 + $0x104] sm:$0xff]
  %v68 = vld [vmem:[%s0 + $0x10c] sm:$0xff]
  %v69 = vld [vmem:[%s0 + $0x114] sm:$0xff]
  %v70 = vld [vmem:[%s0 + $0x11c] sm:$0xff]
  %v71 = vld [vmem:[%s0 + $0x124] sm:$0xff]
  %v72 = vld [vmem:[%s0 + $0x12c] sm:$0xff]
  %v73 = vld [vmem:[%s0 + $0x134] sm:$0xff]
  %v74 = vld [vmem:[%s0 + $0x13c] sm:$0xff]
  %v75 = vld [vmem:[%s0 + $0x144] sm:$0xff]
  %v76 = vld [vmem:[%s0 + $0x14c] sm:$0xf]
  %v77 = vld [vmem:[%s0 + $0x150] sm:$0xff]
  %v78 = vld [vmem:[%s0 + $0x158] sm:$0xff]
  %v79 = vld [vmem:[%s0 + $0x160] sm:$0xff]
  %v80 = vld [vmem:[%s0 + $0x168] sm:$0xff]
  %v81 = vld [vmem:[%s0 + $0x170] sm:$0xff]
  %v82 = vld [vmem:[%s0 + $0x178] sm:$0xff]
  %v83 = vld [vmem:[%s0 + $0x180] sm:$0xff]
  %v84 = vld [vmem:[%s0 + $0x188] sm:$0xff]
  %v85 = vld [vmem:[%s0 + $0x190] sm:$0xff]
  %v86 = vld [vmem:[%s0 + $0x198] sm:$0xff]
  %v87 = vld [vmem:[%s0 + $0x1a0] sm:$0xf]
  %v88 = vld [vmem:[%s1] sm:$0xff]
  %v89 = vld [vmem:[%s1 + $0x8] sm:$0xf]
  %v90 = vld [vmem:[%s1 + $0xc] sm:$0xff]
  %v91 = vld [vmem:[%s1 + $0x14] sm:$0xf]
  %v92 = vld [vmem:[%s1 + $0x18] sm:$0xff]
  %v93 = vld [vmem:[%s1 + $0x20] sm:$0xf]
  %v94 = vld [vmem:[%s1 + $0x24] sm:$0xff]
  %v95 = vld [vmem:[%s1 + $0x2c] sm:$0xf]
  %v96 = vld [vmem:[%s1 + $0x30] sm:$0xff]
  %v97 = vld [vmem:[%s1 + $0x38] sm:$0xf]
  %v98 = vld [vmem:[%s1 + $0x3c] sm:$0xff]
  %v99 = vld [vmem:[%s1 + $0x44] sm:$0xf]
  %v100 = vld [vmem:[%s1 + $0x48] sm:$0xff]
  %v101 = vld [vmem:[%s1 + $0x50] sm:$0xf]
  %v102 = vld [vmem:[%s1 + $0x54] sm:$0xff]
  %v103 = vld [vmem:[%s1 + $0x5c] sm:$0xf]
  %v104 = vld [vmem:[%s1 + $0x60] sm:$0xff]
  %v105 = vld [vmem:[%s1 + $0x68] sm:$0xf]
  %v106 = vld [vmem:[%s1 + $0x6c] sm:$0xff]
  %v107 = vld [vmem:[%s1 + $0x74] sm:$0xf]
  %v108 = vld [vmem:[%s1 + $0x78] sm:$0xff]
  %v109 = vld [vmem:[%s1 + $0x80] sm:$0xf]
  %v110 = vld [vmem:[%s1 + $0x84] sm:$0xff]
  %v111 = vld [vmem:[%s1 + $0x8c] sm:$0xf]
  %v112 = vld [vmem:[%s1 + $0x90] sm:$0xff]
  %v113 = vld [vmem:[%s1 + $0x98] sm:$0xf]
  %v114 = vld [vmem:[%s1 + $0x9c] sm:$0xff]
  %v115 = vld [vmem:[%s1 + $0xa4] sm:$0xf]
  %v116 = vld [vmem:[%s1 + $0xa8] sm:$0xff]
  %v117 = vld [vmem:[%s1 + $0xb0] sm:$0xf]
  %v118 = vld [vmem:[%s1 + $0xb4] sm:$0xff]
  %v119 = vld [vmem:[%s1 + $0xbc] sm:$0xf]
  %v120 = vld [vmem:[%s1 + $0xc0] sm:$0xff]
  %v121 = vld [vmem:[%s1 + $0xc8] sm:$0xf]
  %v122 = vld [vmem:[%s1 + $0xcc] sm:$0xff]
  %v123 = vld [vmem:[%s1 + $0xd4] sm:$0xf]
  %v124 = vld [vmem:[%s1 + $0xd8] sm:$0xff]
  %v125 = vld [vmem:[%s1 + $0xe0] sm:$0xf]
  %v126 = vld [vmem:[%s1 + $0xe4] sm:$0xff]
  %v127 = vld [vmem:[%s1 + $0xec] sm:$0xf]
  %v128 = vld [vmem:[%s1 + $0xf0] sm:$0xff]
  %v129 = vld [vmem:[%s1 + $0xf8] sm:$0xf]
  %v130 = vld [vmem:[%s1 + $0xfc] sm:$0xff]
  %v131 = vld [vmem:[%s1 + $0x104] sm:$0xf]
  %v132 = vld [vmem:[%s1 + $0x108] sm:$0xff]
  %v133 = vld [vmem:[%s1 + $0x110] sm:$0xf]
  %v134 = vld [vmem:[%s1 + $0x114] sm:$0xff]
  %v135 = vld [vmem:[%s1 + $0x11c] sm:$0xf]
  %v136 = vld [vmem:[%s1 + $0x120] sm:$0xff]
  %v137 = vld [vmem:[%s1 + $0x128] sm:$0xf]
  %v138 = vld [vmem:[%s1 + $0x12c] sm:$0xff]
  %v139 = vld [vmem:[%s1 + $0x134] sm:$0xf]
  %v140 = vld [vmem:[%s1 + $0x138] sm:$0xff]
  %v141 = vld [vmem:[%s1 + $0x140] sm:$0xf]
  %v142 = vld [vmem:[%s1 + $0x144] sm:$0xff]
  %v143 = vld [vmem:[%s1 + $0x14c] sm:$0xf]
  %v144 = vld [vmem:[%s1 + $0x150] sm:$0xff]
  %v145 = vld [vmem:[%s1 + $0x158] sm:$0xf]
  %v146 = vld [vmem:[%s1 + $0x15c] sm:$0xff]
  %v147 = vld [vmem:[%s1 + $0x164] sm:$0xf]
  %v148 = vld [vmem:[%s1 + $0x168] sm:$0xff]
  %v149 = vld [vmem:[%s1 + $0x170] sm:$0xf]
  %v150 = vld [vmem:[%s1 + $0x174] sm:$0xff]
  %v151 = vld [vmem:[%s1 + $0x17c] sm:$0xf]
  %v152 = vld [vmem:[%s1 + $0x180] sm:$0xff]
  %v153 = vld [vmem:[%s1 + $0x188] sm:$0xf]
  %v154 = vld [vmem:[%s1 + $0x18c] sm:$0xff]
  %v155 = vld [vmem:[%s1 + $0x194] sm:$0xf]
  %v156 = vld [vmem:[%s1 + $0x198] sm:$0xff]
  %v157 = vld [vmem:[%s1 + $0x1a0] sm:$0xf]
  %v158 = vld [vmem:[%s1 + $0x1a4] sm:$0xff]
  %v159 = vld [vmem:[%s1 + $0x1ac] sm:$0xf]
  %v160 = vld [vmem:[%s1 + $0x1b0] sm:$0xff]
  %v161 = vld [vmem:[%s1 + $0x1b8] sm:$0xf]
  %v162 = vld [vmem:[%s1 + $0x1bc] sm:$0xff]
  %v163 = vld [vmem:[%s1 + $0x1c4] sm:$0xf]
  %v164 = vld [vmem:[%s1 + $0x1c8] sm:$0xff]
  %v165 = vld [vmem:[%s1 + $0x1d0] sm:$0xf]
  %v166 = vld [vmem:[%s1 + $0x1d4] sm:$0xff]
  %v167 = vld [vmem:[%s1 + $0x1dc] sm:$0xf]
  %v168 = vld [vmem:[%s1 + $0x1e0] sm:$0xff]
  %v169 = vld [vmem:[%s1 + $0x1e8] sm:$0xf]
  %v170 = vld [vmem:[%s1 + $0x1ec] sm:$0xff]
  %v171 = vld [vmem:[%s1 + $0x1f4] sm:$0xf]
  %v172 = vld [vmem:[%s1 + $0x1f8] sm:$0xff]
  %v173 = vld [vmem:[%s1 + $0x200] sm:$0xf]
  %v174 = vld [vmem:[%s1 + $0x204] sm:$0xff]
  %v175 = vld [vmem:[%s1 + $0x20c] sm:$0xf]
  %v176 = vld [vmem:[%s1 + $0x210] sm:$0xff]
  %v177 = vld [vmem:[%s1 + $0x218] sm:$0xf]
  %v178 = vld [vmem:[%s1 + $0x21c] sm:$0xff]
  %v179 = vld [vmem:[%s1 + $0x224] sm:$0xf]
  %v180 = vld [vmem:[%s1 + $0x228] sm:$0xff]
  %v181 = vld [vmem:[%s1 + $0x230] sm:$0xf]
  %v182 = vld [vmem:[%s1 + $0x234] sm:$0xff]
  %v183 = vld [vmem:[%s1 + $0x23c] sm:$0xf]
  %v184 = vld [vmem:[%s1 + $0x240] sm:$0xff]
  %v185 = vld [vmem:[%s1 + $0x248] sm:$0xf]
  %v186 = vld [vmem:[%s1 + $0x24c] sm:$0xff]
  %v187 = vld [vmem:[%s1 + $0x254] sm:$0xf]
  %v188 = vld [vmem:[%s1 + $0x258] sm:$0xff]
  %v189 = vld [vmem:[%s1 + $0x260] sm:$0xf]
  %v190 = vld [vmem:[%s1 + $0x264] sm:$0xff]
  %v191 = vld [vmem:[%s1 + $0x26c] sm:$0xf]
  %v192 = vld [vmem:[%s1 + $0x270] sm:$0xff]
  %v193 = vld [vmem:[%s1 + $0x278] sm:$0xf]
  %v194 = vld [vmem:[%s1 + $0x27c] sm:$0xff]
  %v195 = vld [vmem:[%s1 + $0x284] sm:$0xf]
  %v196 = vld [vmem:[%s1 + $0x288] sm:$0xff]
  %v197 = vld [vmem:[%s1 + $0x290] sm:$0xf]
  %v198 = vld [vmem:[%s1 + $0x294] sm:$0xff]
  %v199 = vld [vmem:[%s1 + $0x29c] sm:$0xf]
  %v200 = vld [vmem:[%s1 + $0x2a0] sm:$0xff]
  %v201 = vld [vmem:[%s1 + $0x2a8] sm:$0xf]
  %v202 = vld [vmem:[%s1 + $0x2ac] sm:$0xff]
  %v203 = vld [vmem:[%s1 + $0x2b4] sm:$0xf]
  %v204 = vld [vmem:[%s1 + $0x2b8] sm:$0xff]
  %v205 = vld [vmem:[%s1 + $0x2c0] sm:$0xf]
  %v206 = vld [vmem:[%s1 + $0x2c4] sm:$0xff]
  %v207 = vld [vmem:[%s1 + $0x2cc] sm:$0xf]
  %v208 = vld [vmem:[%s1 + $0x2d0] sm:$0xff]
  %v209 = vld [vmem:[%s1 + $0x2d8] sm:$0xf]
  %v210 = vld [vmem:[%s1 + $0x2dc] sm:$0xff]
  %v211 = vld [vmem:[%s1 + $0x2e4] sm:$0xf]
  %v212 = vld [vmem:[%s1 + $0x2e8] sm:$0xff]
  %v213 = vld [vmem:[%s1 + $0x2f0] sm:$0xf]
  %v214 = vld [vmem:[%s1 + $0x2f4] sm:$0xff]
  %v215 = vld [vmem:[%s1 + $0x2fc] sm:$0xf]
  %v216 = vld [vmem:[%s1 + $0x300] sm:$0xff]
  %v217 = vld [vmem:[%s1 + $0x308] sm:$0xf]
  %v218 = vld [vmem:[%s1 + $0x30c] sm:$0xff]
  %v219 = vld [vmem:[%s1 + $0x314] sm:$0xf]
  %v220 = vld [vmem:[%s1 + $0x318] sm:$0xff]
  %v221 = vld [vmem:[%s1 + $0x320] sm:$0xf]
  %v222 = vld [vmem:[%s1 + $0x324] sm:$0xff]
  %v223 = vld [vmem:[%s1 + $0x32c] sm:$0xf]
  %v224 = vld [vmem:[%s1 + $0x330] sm:$0xff]
  %v225 = vld [vmem:[%s1 + $0x338] sm:$0xf]
  %v226 = vld [vmem:[%s1 + $0x33c] sm:$0xff]
  %v227 = vld [vmem:[%s1 + $0x344] sm:$0xf]
  %v228 = vld [vmem:[%s1 + $0x348] sm:$0xff]
  %v229 = vld [vmem:[%s1 + $0x350] sm:$0xf]
  %v230 = vld [vmem:[%s1 + $0x354] sm:$0xff]
  %v231 = vld [vmem:[%s1 + $0x35c] sm:$0xf]
  %v232 = vld [vmem:[%s1 + $0x360] sm:$0xff]
  %v233 = vld [vmem:[%s1 + $0x368] sm:$0xf]
  %v234 = vld [vmem:[%s1 + $0x36c] sm:$0xff]
  %v235 = vld [vmem:[%s1 + $0x374] sm:$0xf]
  %v236 = vld [vmem:[%s1 + $0x378] sm:$0xff]
  %v237 = vld [vmem:[%s1 + $0x380] sm:$0xf]
  %v238 = vld [vmem:[%s1 + $0x384] sm:$0xff]
  %v239 = vld [vmem:[%s1 + $0x38c] sm:$0xf]
  %v240 = vld [vmem:[%s1 + $0x390] sm:$0xff]
  %v241 = vld [vmem:[%s1 + $0x398] sm:$0xf]
  %v242 = vld [vmem:[%s1 + $0x39c] sm:$0xff]
  %v243 = vld [vmem:[%s1 + $0x3a4] sm:$0xf]
  %v244 = vld [vmem:[%s1 + $0x3a8] sm:$0xff]
  %v245 = vld [vmem:[%s1 + $0x3b0] sm:$0xf]
  %v246 = vld [vmem:[%s1 + $0x3b4] sm:$0xff]
  %v247 = vld [vmem:[%s1 + $0x3bc] sm:$0xf]
  %v248 = vld [vmem:[%s1 + $0x3c0] sm:$0xff]
  %v249 = vld [vmem:[%s1 + $0x3c8] sm:$0xf]
  %v250 = vld [vmem:[%s1 + $0x3cc] sm:$0xff]
  %v251 = vld [vmem:[%s1 + $0x3d4] sm:$0xf]
  %v252 = vld [vmem:[%s1 + $0x3d8] sm:$0xff]
  %v253 = vld [vmem:[%s1 + $0x3e0] sm:$0xf]
  %v254 = vld [vmem:[%s1 + $0x3e4] sm:$0xff]
  %v255 = vld [vmem:[%s1 + $0x3ec] sm:$0xf]
  %v256 = vld [vmem:[%s1 + $0x3f0] sm:$0xff]
  %v257 = vld [vmem:[%s1 + $0x3f8] sm:$0xf]
  %v258 = vld [vmem:[%s1 + $0x3fc] sm:$0xff]
  %v259 = vld [vmem:[%s1 + $0x404] sm:$0xf]
  %v260 = vld [vmem:[%s1 + $0x408] sm:$0xff]
  %v261 = vld [vmem:[%s1 + $0x410] sm:$0xf]
  %v262 = vld [vmem:[%s1 + $0x414] sm:$0xff]
  %v263 = vld [vmem:[%s1 + $0x41c] sm:$0xf]
  %v264 = vld [vmem:[%s1 + $0x420] sm:$0xff]
  %v265 = vld [vmem:[%s1 + $0x428] sm:$0xf]
  %v266 = vld [vmem:[%s1 + $0x42c] sm:$0xff]
  %v267 = vld [vmem:[%s1 + $0x434] sm:$0xf]
  %v268 = vld [vmem:[%s1 + $0x438] sm:$0xff]
  %v269 = vld [vmem:[%s1 + $0x440] sm:$0xf]
  %v270 = vld [vmem:[%s1 + $0x444] sm:$0xff]
  %v271 = vld [vmem:[%s1 + $0x44c] sm:$0xf]
  %v272 = vld [vmem:[%s1 + $0x450] sm:$0xff]
  %v273 = vld [vmem:[%s1 + $0x458] sm:$0xf]
  %v274 = vld [vmem:[%s1 + $0x45c] sm:$0xff]
  %v275 = vld [vmem:[%s1 + $0x464] sm:$0xf]
  %v276 = vld [vmem:[%s1 + $0x468] sm:$0xff]
  %v277 = vld [vmem:[%s1 + $0x470] sm:$0xf]
  %v278 = vld [vmem:[%s1 + $0x474] sm:$0xff]
  %v279 = vld [vmem:[%s1 + $0x47c] sm:$0xf]
  %v280 = vld [vmem:[%s1 + $0x480] sm:$0xff]
  %v281 = vld [vmem:[%s1 + $0x488] sm:$0xf]
  %v282 = vld [vmem:[%s1 + $0x48c] sm:$0xff]
  %v283 = vld [vmem:[%s1 + $0x494] sm:$0xf]
  %v284 = vld [vmem:[%s1 + $0x498] sm:$0xff]
  %v285 = vld [vmem:[%s1 + $0x4a0] sm:$0xf]
  %v286 = vld [vmem:[%s1 + $0x4a4] sm:$0xff]
  %v287 = vld [vmem:[%s1 + $0x4ac] sm:$0xf]
  %v288 = vld [vmem:[%s1 + $0x4b0] sm:$0xff]
  %v289 = vld [vmem:[%s1 + $0x4b8] sm:$0xf]
  %v290 = vld [vmem:[%s1 + $0x4bc] sm:$0xff]
  %v291 = vld [vmem:[%s1 + $0x4c4] sm:$0xf]
  %v292 = vld [vmem:[%s1 + $0x4c8] sm:$0xff]
  %v293 = vld [vmem:[%s1 + $0x4d0] sm:$0xf]
  %v294 = vld [vmem:[%s1 + $0x4d4] sm:$0xff]
  %v295 = vld [vmem:[%s1 + $0x4dc] sm:$0xf]
  %v296 = vld [vmem:[%s1 + $0x4e0] sm:$0xff]
  %v297 = vld [vmem:[%s1 + $0x4e8] sm:$0xf]
  %v298 = vld [vmem:[%s1 + $0x4ec] sm:$0xff]
  %v299 = vld [vmem:[%s1 + $0x4f4] sm:$0xf]
  %v300 = vld [vmem:[%s1 + $0x4f8] sm:$0xff]
  %v301 = vld [vmem:[%s1 + $0x500] sm:$0xf]
  %v302 = vld [vmem:[%s1 + $0x504] sm:$0xff]
  %v303 = vld [vmem:[%s1 + $0x50c] sm:$0xf]
  %v304 = vld [vmem:[%s1 + $0x510] sm:$0xff]
  %v305 = vld [vmem:[%s1 + $0x518] sm:$0xf]
  %v306 = vld [vmem:[%s1 + $0x51c] sm:$0xff]
  %v307 = vld [vmem:[%s1 + $0x524] sm:$0xf]
  %v308 = vld [vmem:[%s1 + $0x528] sm:$0xff]
  %v309 = vld [vmem:[%s1 + $0x530] sm:$0xf]
  %v310 = vld [vmem:[%s1 + $0x534] sm:$0xff]
  %v311 = vld [vmem:[%s1 + $0x53c] sm:$0xf]
  %v312 = vld [vmem:[%s1 + $0x540] sm:$0xff]
  %v313 = vld [vmem:[%s1 + $0x548] sm:$0xf]
  %v314 = vld [vmem:[%s1 + $0x54c] sm:$0xff]
  %v315 = vld [vmem:[%s1 + $0x554] sm:$0xf]
  %v316 = vld [vmem:[%s1 + $0x558] sm:$0xff]
  %v317 = vld [vmem:[%s1 + $0x560] sm:$0xf]
  %v318 = vld [vmem:[%s1 + $0x564] sm:$0xff]
  %v319 = vld [vmem:[%s1 + $0x56c] sm:$0xf]
  %v320 = vld [vmem:[%s1 + $0x570] sm:$0xff]
  %v321 = vld [vmem:[%s1 + $0x578] sm:$0xf]
  %v322 = vld [vmem:[%s1 + $0x57c] sm:$0xff]
  %v323 = vld [vmem:[%s1 + $0x584] sm:$0xf]
  %v324 = vld [vmem:[%s1 + $0x588] sm:$0xff]
  %v325 = vld [vmem:[%s1 + $0x590] sm:$0xf]
  %v326 = vld [vmem:[%s1 + $0x594] sm:$0xff]
  %v327 = vld [vmem:[%s1 + $0x59c] sm:$0xf]
  %v328 = vld [vmem:[%s1 + $0x5a0] sm:$0xff]
  %v329 = vld [vmem:[%s1 + $0x5a8] sm:$0xf]
  %v330 = vld [vmem:[%s1 + $0x5ac] sm:$0xff]
  %v331 = vld [vmem:[%s1 + $0x5b4] sm:$0xf]
  %v332 = vld [vmem:[%s1 + $0x5b8] sm:$0xff]
  %v333 = vld [vmem:[%s1 + $0x5c0] sm:$0xf]
  %v334 = vld [vmem:[%s1 + $0x5c4] sm:$0xff]
  %v335 = vld [vmem:[%s1 + $0x5cc] sm:$0xf]
  %v336 = vld [vmem:[%s1 + $0x5d0] sm:$0xff]
  %v337 = vld [vmem:[%s1 + $0x5d8] sm:$0xf]
  %v338 = vld [vmem:[%s1 + $0x5dc] sm:$0xff]
  %v339 = vld [vmem:[%s1 + $0x5e4] sm:$0xf]
  %v340 = vld [vmem:[%s1 + $0x5e8] sm:$0xff]
  %v341 = vld [vmem:[%s1 + $0x5f0] sm:$0xf]
  %v342 = vld [vmem:[%s1 + $0x5f4] sm:$0xff]
  %v343 = vld [vmem:[%s1 + $0x5fc] sm:$0xf]
  %v344 = vld [vmem:[%s1 + $0x600] sm:$0xff]
  %v345 = vld [vmem:[%s1 + $0x608] sm:$0xf]
  %v346 = vld [vmem:[%s1 + $0x60c] sm:$0xff]
  %v347 = vld [vmem:[%s1 + $0x614] sm:$0xf]
  %v348 = vld [vmem:[%s1 + $0x618] sm:$0xff]
  %v349 = vld [vmem:[%s1 + $0x620] sm:$0xf]
  %v350 = vld [vmem:[%s1 + $0x624] sm:$0xff]
  %v351 = vld [vmem:[%s1 + $0x62c] sm:$0xf]
  %v352 = vld [vmem:[%s1 + $0x630] sm:$0xff]
  %v353 = vld [vmem:[%s1 + $0x638] sm:$0xf]
  %v354 = vld [vmem:[%s1 + $0x63c] sm:$0xff]
  %v355 = vld [vmem:[%s1 + $0x644] sm:$0xf]
  %v356 = vld [vmem:[%s1 + $0x648] sm:$0xff]
  %v357 = vld [vmem:[%s1 + $0x650] sm:$0xf]
  %v358 = vld [vmem:[%s1 + $0x654] sm:$0xff]
  %v359 = vld [vmem:[%s1 + $0x65c] sm:$0xf]
  %v360 = vld [vmem:[%s1 + $0x660] sm:$0xff]
  %v361 = vld [vmem:[%s1 + $0x668] sm:$0xf]
  %v362 = vld [vmem:[%s1 + $0x66c] sm:$0xff]
  %v363 = vld [vmem:[%s1 + $0x674] sm:$0xf]
  %v364 = vld [vmem:[%s1 + $0x678] sm:$0xff]
  %v365 = vld [vmem:[%s1 + $0x680] sm:$0xf]
  %v366 = vld [vmem:[%s1 + $0x684] sm:$0xff]
  %v367 = vld [vmem:[%s1 + $0x68c] sm:$0xf]
  %v368 = vld [vmem:[%s1 + $0x690] sm:$0xff]
  %v369 = vld [vmem:[%s1 + $0x698] sm:$0xf]
  %v370 = vld [vmem:[%s1 + $0x69c] sm:$0xff]
  %v371 = vld [vmem:[%s1 + $0x6a4] sm:$0xf]
  %v372 = vld [vmem:[%s1 + $0x6a8] sm:$0xff]
  %v373 = vld [vmem:[%s1 + $0x6b0] sm:$0xf]
  %v374 = vld [vmem:[%s1 + $0x6b4] sm:$0xff]
  %v375 = vld [vmem:[%s1 + $0x6bc] sm:$0xf]
  %v376 = vld [vmem:[%s1 + $0x6c0] sm:$0xff]
  %v377 = vld [vmem:[%s1 + $0x6c8] sm:$0xf]
  %v378 = vld [vmem:[%s1 + $0x6cc] sm:$0xff]
  %v379 = vld [vmem:[%s1 + $0x6d4] sm:$0xf]
  %v380 = vld [vmem:[%s1 + $0x6d8] sm:$0xff]
  %v381 = vld [vmem:[%s1 + $0x6e0] sm:$0xf]
  %v382 = vld [vmem:[%s1 + $0x6e4] sm:$0xff]
  %v383 = vld [vmem:[%s1 + $0x6ec] sm:$0xf]
  %v384 = vld [vmem:[%s1 + $0x6f0] sm:$0xff]
  %v385 = vld [vmem:[%s1 + $0x6f8] sm:$0xf]
  %v386 = vld [vmem:[%s1 + $0x6fc] sm:$0xff]
  %v387 = vld [vmem:[%s1 + $0x704] sm:$0xf]
  %v388 = vld [vmem:[%s1 + $0x708] sm:$0xff]
  %v389 = vld [vmem:[%s1 + $0x710] sm:$0xf]
  %v390 = vld [vmem:[%s1 + $0x714] sm:$0xff]
  %v391 = vld [vmem:[%s1 + $0x71c] sm:$0xf]
  %v392 = vld [vmem:[%s1 + $0x720] sm:$0xff]
  %v393 = vld [vmem:[%s1 + $0x728] sm:$0xf]
  %v394 = vld [vmem:[%s1 + $0x72c] sm:$0xff]
  %v395 = vld [vmem:[%s1 + $0x734] sm:$0xf]
  %v396 = vld [vmem:[%s1 + $0x738] sm:$0xff]
  %v397 = vld [vmem:[%s1 + $0x740] sm:$0xf]
  %v398 = vld [vmem:[%s1 + $0x744] sm:$0xff]
  %v399 = vld [vmem:[%s1 + $0x74c] sm:$0xf]
  %v400 = vld [vmem:[%s1 + $0x750] sm:$0xff]
  %v401 = vld [vmem:[%s1 + $0x758] sm:$0xf]
  %v402 = vld [vmem:[%s1 + $0x75c] sm:$0xff]
  %v403 = vld [vmem:[%s1 + $0x764] sm:$0xf]
  %v404 = vld [vmem:[%s1 + $0x768] sm:$0xff]
  %v405 = vld [vmem:[%s1 + $0x770] sm:$0xf]
  %v406 = vld [vmem:[%s1 + $0x774] sm:$0xff]
  %v407 = vld [vmem:[%s1 + $0x77c] sm:$0xf]
  %v408 = vld [vmem:[%s1 + $0x780] sm:$0xff]
  %v409 = vld [vmem:[%s1 + $0x788] sm:$0xf]
  %v410 = vld [vmem:[%s1 + $0x78c] sm:$0xff]
  %v411 = vld [vmem:[%s1 + $0x794] sm:$0xf]
  %v412 = vld [vmem:[%s1 + $0x798] sm:$0xff]
  %v413 = vld [vmem:[%s1 + $0x7a0] sm:$0xf]
  %v414 = vld [vmem:[%s1 + $0x7a4] sm:$0xff]
  %v415 = vld [vmem:[%s1 + $0x7ac] sm:$0xf]
  %v416 = vld [vmem:[%s1 + $0x7b0] sm:$0xff]
  %v417 = vld [vmem:[%s1 + $0x7b8] sm:$0xf]
  %v418 = vld [vmem:[%s1 + $0x7bc] sm:$0xff]
  %v419 = vld [vmem:[%s1 + $0x7c4] sm:$0xf]
  %v420 = vld [vmem:[%s1 + $0x7c8] sm:$0xff]
  %v421 = vld [vmem:[%s1 + $0x7d0] sm:$0xf]
  %v422 = vld [vmem:[%s1 + $0x7d4] sm:$0xff]
  %v423 = vld [vmem:[%s1 + $0x7dc] sm:$0xf]
  %v424 = vld [vmem:[%s1 + $0x7e0] sm:$0xff]
  %v425 = vld [vmem:[%s1 + $0x7e8] sm:$0xf]
  %v426 = vld [vmem:[%s1 + $0x7ec] sm:$0xff]
  %v427 = vld [vmem:[%s1 + $0x7f4] sm:$0xf]
  %v428 = vld [vmem:[%s1 + $0x7f8] sm:$0xff]
  %v429 = vld [vmem:[%s1 + $0x800] sm:$0xf]
  %v430 = vld [vmem:[%s1 + $0x804] sm:$0xff]
  %v431 = vld [vmem:[%s1 + $0x80c] sm:$0xf]
  %v432 = vld [vmem:[%s1 + $0x810] sm:$0xff]
  %v433 = vld [vmem:[%s1 + $0x818] sm:$0xf]
  %v434 = vld [vmem:[%s1 + $0x81c] sm:$0xff]
  %v435 = vld [vmem:[%s1 + $0x824] sm:$0xf]
  %v436 = vld [vmem:[%s1 + $0x828] sm:$0xff]
  %v437 = vld [vmem:[%s1 + $0x830] sm:$0xf]
  %v438 = vld [vmem:[%s1 + $0x834] sm:$0xff]
  %v439 = vld [vmem:[%s1 + $0x83c] sm:$0xf]
  %v440 = vld [vmem:[%s1 + $0x840] sm:$0xff]
  %v441 = vld [vmem:[%s1 + $0x848] sm:$0xf]
  %v442 = vld [vmem:[%s1 + $0x84c] sm:$0xff]
  %v443 = vld [vmem:[%s1 + $0x854] sm:$0xf]
  %v444 = vld [vmem:[%s1 + $0x858] sm:$0xff]
  %v445 = vld [vmem:[%s1 + $0x860] sm:$0xf]
  %v446 = vld [vmem:[%s1 + $0x864] sm:$0xff]
  %v447 = vld [vmem:[%s1 + $0x86c] sm:$0xf]
  %v448 = vld [vmem:[%s1 + $0x870] sm:$0xff]
  %v449 = vld [vmem:[%s1 + $0x878] sm:$0xf]
  %v450 = vld [vmem:[%s1 + $0x87c] sm:$0xff]
  %v451 = vld [vmem:[%s1 + $0x884] sm:$0xf]
  %v452 = vld [vmem:[%s1 + $0x888] sm:$0xff]
  %v453 = vld [vmem:[%s1 + $0x890] sm:$0xf]
  %v454 = vld [vmem:[%s1 + $0x894] sm:$0xff]
  %v455 = vld [vmem:[%s1 + $0x89c] sm:$0xf]
  %v456 = vld [vmem:[%s1 + $0x8a0] sm:$0xff]
  %v457 = vld [vmem:[%s1 + $0x8a8] sm:$0xf]
  %v458 = vld [vmem:[%s1 + $0x8ac] sm:$0xff]
  %v459 = vld [vmem:[%s1 + $0x8b4] sm:$0xf]
  %v460 = vld [vmem:[%s1 + $0x8b8] sm:$0xff]
  %v461 = vld [vmem:[%s1 + $0x8c0] sm:$0xf]
  %v462 = vld [vmem:[%s1 + $0x8c4] sm:$0xff]
  %v463 = vld [vmem:[%s1 + $0x8cc] sm:$0xf]
  %v464 = vld [vmem:[%s1 + $0x8d0] sm:$0xff]
  %v465 = vld [vmem:[%s1 + $0x8d8] sm:$0xf]
  %v466 = vld [vmem:[%s1 + $0x8dc] sm:$0xff]
  %v467 = vld [vmem:[%s1 + $0x8e4] sm:$0xf]
  %v468 = vld [vmem:[%s1 + $0x8e8] sm:$0xff]
  %v469 = vld [vmem:[%s1 + $0x8f0] sm:$0xf]
  %v470 = vld [vmem:[%s1 + $0x8f4] sm:$0xff]
  %v471 = vld [vmem:[%s1 + $0x8fc] sm:$0xf]
  %v472 = vld [vmem:[%s1 + $0x900] sm:$0xff]
  %v473 = vld [vmem:[%s1 + $0x908] sm:$0xf]
  %v474 = vld [vmem:[%s1 + $0x90c] sm:$0xff]
  %v475 = vld [vmem:[%s1 + $0x914] sm:$0xf]
  %v476 = vld [vmem:[%s1 + $0x918] sm:$0xff]
  %v477 = vld [vmem:[%s1 + $0x920] sm:$0xf]
  %v478 = vld [vmem:[%s1 + $0x924] sm:$0xff]
  %v479 = vld [vmem:[%s1 + $0x92c] sm:$0xf]
  %v480 = vld [vmem:[%s1 + $0x930] sm:$0xff]
  %v481 = vld [vmem:[%s1 + $0x938] sm:$0xf]
  %v482 = vld [vmem:[%s1 + $0x93c] sm:$0xff]
  %v483 = vld [vmem:[%s1 + $0x944] sm:$0xf]
  %v484 = vld [vmem:[%s1 + $0x948] sm:$0xff]
  %v485 = vld [vmem:[%s1 + $0x950] sm:$0xf]
  %v486 = vld [vmem:[%s1 + $0x954] sm:$0xff]
  %v487 = vld [vmem:[%s1 + $0x95c] sm:$0xf]
  %v488 = vld [vmem:[%s1 + $0x960] sm:$0xff]
  %v489 = vld [vmem:[%s1 + $0x968] sm:$0xf]
  %v490 = vld [vmem:[%s1 + $0x96c] sm:$0xff]
  %v491 = vld [vmem:[%s1 + $0x974] sm:$0xf]
  %v492 = vld [vmem:[%s1 + $0x978] sm:$0xff]
  %v493 = vld [vmem:[%s1 + $0x980] sm:$0xf]
  %v494 = vld [vmem:[%s1 + $0x984] sm:$0xff]
  %v495 = vld [vmem:[%s1 + $0x98c] sm:$0xf]
  %v496 = vld [vmem:[%s1 + $0x990] sm:$0xff]
  %v497 = vld [vmem:[%s1 + $0x998] sm:$0xf]
  %v498 = vld [vmem:[%s1 + $0x99c] sm:$0xff]
  %v499 = vld [vmem:[%s1 + $0x9a4] sm:$0xf]
  %v500 = vld [vmem:[%s1 + $0x9a8] sm:$0xff]
  %v501 = vld [vmem:[%s1 + $0x9b0] sm:$0xf]
  %v502 = vld [vmem:[%s1 + $0x9b4] sm:$0xff]
  %v503 = vld [vmem:[%s1 + $0x9bc] sm:$0xf]
  %v504 = vld [vmem:[%s1 + $0x9c0] sm:$0xff]
  %v505 = vld [vmem:[%s1 + $0x9c8] sm:$0xf]
  %v506 = vld [vmem:[%s1 + $0x9cc] sm:$0xff]
  %v507 = vld [vmem:[%s1 + $0x9d4] sm:$0xf]
  %v508 = vld [vmem:[%s1 + $0x9d8] sm:$0xff]
  %v509 = vld [vmem:[%s1 + $0x9e0] sm:$0xf]
  %v510 = vld [vmem:[%s1 + $0x9e4] sm:$0xff]
  %v511 = vld [vmem:[%s1 + $0x9ec] sm:$0xf]
  %v512 = vld [vmem:[%s1 + $0x9f0] sm:$0xff]
  %v513 = vld [vmem:[%s1 + $0x9f8] sm:$0xf]
  %v514 = vld [vmem:[%s1 + $0x9fc] sm:$0xff]
  %v515 = vld [vmem:[%s1 + $0xa04] sm:$0xf]
  %v516 = vld [vmem:[%s1 + $0xa08] sm:$0xff]
  %v517 = vld [vmem:[%s1 + $0xa10] sm:$0xf]
  %v518 = vld [vmem:[%s1 + $0xa14] sm:$0xff]
  %v519 = vld [vmem:[%s1 + $0xa1c] sm:$0xf]
  %v520 = vld [vmem:[%s1 + $0xa20] sm:$0xff]
  %v521 = vld [vmem:[%s1 + $0xa28] sm:$0xf]
  %v522 = vld [vmem:[%s1 + $0xa2c] sm:$0xff]
  %v523 = vld [vmem:[%s1 + $0xa34] sm:$0xf]
  %v524 = vld [vmem:[%s1 + $0xa38] sm:$0xff]
  %v525 = vld [vmem:[%s1 + $0xa40] sm:$0xf]
  %v526 = vld [vmem:[%s1 + $0xa44] sm:$0xff]
  %v527 = vld [vmem:[%s1 + $0xa4c] sm:$0xf]
  %v528 = vld [vmem:[%s1 + $0xa50] sm:$0xff]
  %v529 = vld [vmem:[%s1 + $0xa58] sm:$0xf]
  %v530 = vld [vmem:[%s1 + $0xa5c] sm:$0xff]
  %v531 = vld [vmem:[%s1 + $0xa64] sm:$0xf]
  %v532 = vld [vmem:[%s1 + $0xa68] sm:$0xff]
  %v533 = vld [vmem:[%s1 + $0xa70] sm:$0xf]
  %v534 = vld [vmem:[%s1 + $0xa74] sm:$0xff]
  %v535 = vld [vmem:[%s1 + $0xa7c] sm:$0xf]
  %v536 = vld [vmem:[%s1 + $0xa80] sm:$0xff]
  %v537 = vld [vmem:[%s1 + $0xa88] sm:$0xf]
  %v538 = vld [vmem:[%s1 + $0xa8c] sm:$0xff]
  %v539 = vld [vmem:[%s1 + $0xa94] sm:$0xf]
  %v540 = vld [vmem:[%s1 + $0xa98] sm:$0xff]
  %v541 = vld [vmem:[%s1 + $0xaa0] sm:$0xf]
  %v542 = vld [vmem:[%s1 + $0xaa4] sm:$0xff]
  %v543 = vld [vmem:[%s1 + $0xaac] sm:$0xf]
  %v544 = vld [vmem:[%s1 + $0xab0] sm:$0xff]
  %v545 = vld [vmem:[%s1 + $0xab8] sm:$0xf]
  %v546 = vld [vmem:[%s1 + $0xabc] sm:$0xff]
  %v547 = vld [vmem:[%s1 + $0xac4] sm:$0xf]
  %v548 = vld [vmem:[%s1 + $0xac8] sm:$0xff]
  %v549 = vld [vmem:[%s1 + $0xad0] sm:$0xf]
  %v550 = vld [vmem:[%s1 + $0xad4] sm:$0xff]
  %v551 = vld [vmem:[%s1 + $0xadc] sm:$0xf]
  %v552 = vld [vmem:[%s1 + $0xae0] sm:$0xff]
  %v553 = vld [vmem:[%s1 + $0xae8] sm:$0xf]
  %v554 = vld [vmem:[%s1 + $0xaec] sm:$0xff]
  %v555 = vld [vmem:[%s1 + $0xaf4] sm:$0xf]
  %v556 = vld [vmem:[%s1 + $0xaf8] sm:$0xff]
  %v557 = vld [vmem:[%s1 + $0xb00] sm:$0xf]
  %v558 = vld [vmem:[%s1 + $0xb04] sm:$0xff]
  %v559 = vld [vmem:[%s1 + $0xb0c] sm:$0xf]
  %v560 = vld [vmem:[%s1 + $0xb10] sm:$0xff]
  %v561 = vld [vmem:[%s1 + $0xb18] sm:$0xf]
  %v562 = vld [vmem:[%s1 + $0xb1c] sm:$0xff]
  %v563 = vld [vmem:[%s1 + $0xb24] sm:$0xf]
  %v564 = vld [vmem:[%s1 + $0xb28] sm:$0xff]
  %v565 = vld [vmem:[%s1 + $0xb30] sm:$0xf]
  %v566 = vld [vmem:[%s1 + $0xb34] sm:$0xff]
  %v567 = vld [vmem:[%s1 + $0xb3c] sm:$0xf]
  %v568 = vld [vmem:[%s1 + $0xb40] sm:$0xff]
  %v569 = vld [vmem:[%s1 + $0xb48] sm:$0xf]
  %v570 = vld [vmem:[%s1 + $0xb4c] sm:$0xff]
  %v571 = vld [vmem:[%s1 + $0xb54] sm:$0xf]
  %v572 = vld [vmem:[%s1 + $0xb58] sm:$0xff]
  %v573 = vld [vmem:[%s1 + $0xb60] sm:$0xf]
  %v574 = vld [vmem:[%s1 + $0xb64] sm:$0xff]
  %v575 = vld [vmem:[%s1 + $0xb6c] sm:$0xf]
  %v576 = vld [vmem:[%s1 + $0xb70] sm:$0xff]
  %v577 = vld [vmem:[%s1 + $0xb78] sm:$0xf]
  %v578 = vld [vmem:[%s1 + $0xb7c] sm:$0xff]
  %v579 = vld [vmem:[%s1 + $0xb84] sm:$0xf]
  %v580 = vld [vmem:[%s1 + $0xb88] sm:$0xff]
  %v581 = vld [vmem:[%s1 + $0xb90] sm:$0xf]
  %v582 = vld [vmem:[%s1 + $0xb94] sm:$0xff]
  %v583 = vld [vmem:[%s1 + $0xb9c] sm:$0xf]
  %v584 = vld [vmem:[%s1 + $0xba0] sm:$0xff]
  %v585 = vld [vmem:[%s1 + $0xba8] sm:$0xf]
  %v586 = vld [vmem:[%s1 + $0xbac] sm:$0xff]
  %v587 = vld [vmem:[%s1 + $0xbb4] sm:$0xf]
  %v588 = vld [vmem:[%s1 + $0xbb8] sm:$0xff]
  %v589 = vld [vmem:[%s1 + $0xbc0] sm:$0xf]
  %v590 = vld [vmem:[%s1 + $0xbc4] sm:$0xff]
  %v591 = vld [vmem:[%s1 + $0xbcc] sm:$0xf]
  %v592 = vld [vmem:[%s1 + $0xbd0] sm:$0xff]
  %v593 = vld [vmem:[%s1 + $0xbd8] sm:$0xf]
  %v594 = vld [vmem:[%s1 + $0xbdc] sm:$0xff]
  %v595 = vld [vmem:[%s1 + $0xbe4] sm:$0xf]
  %v596 = vld [vmem:[%s1 + $0xbe8] sm:$0xff]
  %v597 = vld [vmem:[%s1 + $0xbf0] sm:$0xf]
  %v598 = vld [vmem:[%s1 + $0xbf4] sm:$0xff]
  %v599 = vld [vmem:[%s1 + $0xbfc] sm:$0xf]
  %v600 = vld [vmem:[%s1 + $0xc00] sm:$0xff]
  %v601 = vld [vmem:[%s1 + $0xc08] sm:$0xf]
  %v602 = vld [vmem:[%s1 + $0xc0c] sm:$0xff]
  %v603 = vld [vmem:[%s1 + $0xc14] sm:$0xf]
  %v604 = vld [vmem:[%s1 + $0xc18] sm:$0xff]
  %v605 = vld [vmem:[%s1 + $0xc20] sm:$0xf]
  %v606 = vld [vmem:[%s1 + $0xc24] sm:$0xff]
  %v607 = vld [vmem:[%s1 + $0xc2c] sm:$0xf]
  %v608 = vld [vmem:[%s1 + $0xc30] sm:$0xff]
  %v609 = vld [vmem:[%s1 + $0xc38] sm:$0xf]
  %v610 = vld [vmem:[%s1 + $0xc3c] sm:$0xff]
  %v611 = vld [vmem:[%s1 + $0xc44] sm:$0xf]
  %v612 = vld [vmem:[%s1 + $0xc48] sm:$0xff]
  %v613 = vld [vmem:[%s1 + $0xc50] sm:$0xf]
  %v614 = vld [vmem:[%s1 + $0xc54] sm:$0xff]
  %v615 = vld [vmem:[%s1 + $0xc5c] sm:$0xf]
  %v616 = vld [vmem:[%s1 + $0xc60] sm:$0xff]
  %v617 = vld [vmem:[%s1 + $0xc68] sm:$0xf]
  %v618 = vld [vmem:[%s1 + $0xc6c] sm:$0xff]
  %v619 = vld [vmem:[%s1 + $0xc74] sm:$0xf]
  %v620 = vld [vmem:[%s1 + $0xc78] sm:$0xff]
  %v621 = vld [vmem:[%s1 + $0xc80] sm:$0xf]
  %v622 = vld [vmem:[%s1 + $0xc84] sm:$0xff]
  %v623 = vld [vmem:[%s1 + $0xc8c] sm:$0xf]
  %v624 = vld [vmem:[%s1 + $0xc90] sm:$0xff]
  %v625 = vld [vmem:[%s1 + $0xc98] sm:$0xf]
  %v626 = vld [vmem:[%s1 + $0xc9c] sm:$0xff]
  %v627 = vld [vmem:[%s1 + $0xca4] sm:$0xf]
  %v628 = vld [vmem:[%s1 + $0xca8] sm:$0xff]
  %v629 = vld [vmem:[%s1 + $0xcb0] sm:$0xf]
  %v630 = vld [vmem:[%s1 + $0xcb4] sm:$0xff]
  %v631 = vld [vmem:[%s1 + $0xcbc] sm:$0xf]
  %v632 = vld [vmem:[%s1 + $0xcc0] sm:$0xff]
  %v633 = vld [vmem:[%s1 + $0xcc8] sm:$0xf]
  %v634 = vld [vmem:[%s1 + $0xccc] sm:$0xff]
  %v635 = vld [vmem:[%s1 + $0xcd4] sm:$0xf]
  %v636 = vld [vmem:[%s1 + $0xcd8] sm:$0xff]
  %v637 = vld [vmem:[%s1 + $0xce0] sm:$0xf]
  %v638 = vld [vmem:[%s1 + $0xce4] sm:$0xff]
  %v639 = vld [vmem:[%s1 + $0xcec] sm:$0xf]
  %v640 = vld [vmem:[%s1 + $0xcf0] sm:$0xff]
  %v641 = vld [vmem:[%s1 + $0xcf8] sm:$0xf]
  %v642 = vld [vmem:[%s1 + $0xcfc] sm:$0xff]
  %v643 = vld [vmem:[%s1 + $0xd04] sm:$0xf]
  %v644 = vld [vmem:[%s1 + $0xd08] sm:$0xff]
  %v645 = vld [vmem:[%s1 + $0xd10] sm:$0xf]
  %v646 = vld [vmem:[%s1 + $0xd14] sm:$0xff]
  %v647 = vld [vmem:[%s1 + $0xd1c] sm:$0xf]
  %v648 = vld [vmem:[%s1 + $0xd20] sm:$0xff]
  %v649 = vld [vmem:[%s1 + $0xd28] sm:$0xf]
  %v650 = vld [vmem:[%s1 + $0xd2c] sm:$0xff]
  %v651 = vld [vmem:[%s1 + $0xd34] sm:$0xf]
  %v652 = vld [vmem:[%s1 + $0xd38] sm:$0xff]
  %v653 = vld [vmem:[%s1 + $0xd40] sm:$0xf]
  %v654 = vld [vmem:[%s1 + $0xd44] sm:$0xff]
  %v655 = vld [vmem:[%s1 + $0xd4c] sm:$0xf]
  %v656 = vld [vmem:[%s1 + $0xd50] sm:$0xff]
  %v657 = vld [vmem:[%s1 + $0xd58] sm:$0xf]
  %v658 = vld [vmem:[%s1 + $0xd5c] sm:$0xff]
  %v659 = vld [vmem:[%s1 + $0xd64] sm:$0xf]
  %v660 = vld [vmem:[%s1 + $0xd68] sm:$0xff]
  %v661 = vld [vmem:[%s1 + $0xd70] sm:$0xf]
  %v662 = vld [vmem:[%s1 + $0xd74] sm:$0xff]
  %v663 = vld [vmem:[%s1 + $0xd7c] sm:$0xf]
  %v664 = vld [vmem:[%s1 + $0xd80] sm:$0xff]
  %v665 = vld [vmem:[%s1 + $0xd88] sm:$0xf]
  %v666 = vld [vmem:[%s1 + $0xd8c] sm:$0xff]
  %v667 = vld [vmem:[%s1 + $0xd94] sm:$0xf]
  %v668 = vld [vmem:[%s1 + $0xd98] sm:$0xff]
  %v669 = vld [vmem:[%s1 + $0xda0] sm:$0xf]
  %v670 = vld [vmem:[%s1 + $0xda4] sm:$0xff]
  %v671 = vld [vmem:[%s1 + $0xdac] sm:$0xf]
  %v672 = vld [vmem:[%s1 + $0xdb0] sm:$0xff]
  %v673 = vld [vmem:[%s1 + $0xdb8] sm:$0xf]
  %v674 = vld [vmem:[%s1 + $0xdbc] sm:$0xff]
  %v675 = vld [vmem:[%s1 + $0xdc4] sm:$0xf]
  %v676 = vld [vmem:[%s1 + $0xdc8] sm:$0xff]
  %v677 = vld [vmem:[%s1 + $0xdd0] sm:$0xf]
  %v678 = vld [vmem:[%s1 + $0xdd4] sm:$0xff]
  %v679 = vld [vmem:[%s1 + $0xddc] sm:$0xf]
  %v680 = vld [vmem:[%s1 + $0xde0] sm:$0xff]
  %v681 = vld [vmem:[%s1 + $0xde8] sm:$0xf]
  %v682 = vld [vmem:[%s1 + $0xdec] sm:$0xff]
  %v683 = vld [vmem:[%s1 + $0xdf4] sm:$0xf]
  %v684 = vld [vmem:[%s1 + $0xdf8] sm:$0xff]
  %v685 = vld [vmem:[%s1 + $0xe00] sm:$0xf]
  %v686 = vld [vmem:[%s1 + $0xe04] sm:$0xff]
  %v687 = vld [vmem:[%s1 + $0xe0c] sm:$0xf]
  %v688 = vld [vmem:[%s1 + $0xe10] sm:$0xff]
  %v689 = vld [vmem:[%s1 + $0xe18] sm:$0xf]
  %v690 = vld [vmem:[%s1 + $0xe1c] sm:$0xff]
  %v691 = vld [vmem:[%s1 + $0xe24] sm:$0xf]
  %v692 = vld [vmem:[%s1 + $0xe28] sm:$0xff]
  %v693 = vld [vmem:[%s1 + $0xe30] sm:$0xf]
  %v694 = vld [vmem:[%s1 + $0xe34] sm:$0xff]
  %v695 = vld [vmem:[%s1 + $0xe3c] sm:$0xf]
  %v696 = vld [vmem:[%s1 + $0xe40] sm:$0xff]
  %v697 = vld [vmem:[%s1 + $0xe48] sm:$0xf]
  %v698 = vld [vmem:[%s1 + $0xe4c] sm:$0xff]
  %v699 = vld [vmem:[%s1 + $0xe54] sm:$0xf]
  %v700 = vld [vmem:[%s1 + $0xe58] sm:$0xff]
  %v701 = vld [vmem:[%s1 + $0xe60] sm:$0xf]
  %v702 = vld [vmem:[%s1 + $0xe64] sm:$0xff]
  %v703 = vld [vmem:[%s1 + $0xe6c] sm:$0xf]
  %v704 = vld [vmem:[%s1 + $0xe70] sm:$0xff]
  %v705 = vld [vmem:[%s1 + $0xe78] sm:$0xf]
  %v706 = vld [vmem:[%s1 + $0xe7c] sm:$0xff]
  %v707 = vld [vmem:[%s1 + $0xe84] sm:$0xf]
  %v708 = vld [vmem:[%s1 + $0xe88] sm:$0xff]
  %v709 = vld [vmem:[%s1 + $0xe90] sm:$0xf]
  %v710 = vld [vmem:[%s1 + $0xe94] sm:$0xff]
  %v711 = vld [vmem:[%s1 + $0xe9c] sm:$0xf]
  %v712 = vld [vmem:[%s1 + $0xea0] sm:$0xff]
  %v713 = vld [vmem:[%s1 + $0xea8] sm:$0xf]
  %v714 = vld [vmem:[%s1 + $0xeac] sm:$0xff]
  %v715 = vld [vmem:[%s1 + $0xeb4] sm:$0xf]
  %v716 = vld [vmem:[%s1 + $0xeb8] sm:$0xff]
  %v717 = vld [vmem:[%s1 + $0xec0] sm:$0xf]
  %v718 = vld [vmem:[%s1 + $0xec4] sm:$0xff]
  %v719 = vld [vmem:[%s1 + $0xecc] sm:$0xf]
  %v720 = vld [vmem:[%s1 + $0xed0] sm:$0xff]
  %v721 = vld [vmem:[%s1 + $0xed8] sm:$0xf]
  %v722 = vld [vmem:[%s1 + $0xedc] sm:$0xff]
  %v723 = vld [vmem:[%s1 + $0xee4] sm:$0xf]
  %v724 = vld [vmem:[%s1 + $0xee8] sm:$0xff]
  %v725 = vld [vmem:[%s1 + $0xef0] sm:$0xf]
  %v726 = vld [vmem:[%s1 + $0xef4] sm:$0xff]
  %v727 = vld [vmem:[%s1 + $0xefc] sm:$0xf]
  %v728 = vld [vmem:[%s1 + $0xf00] sm:$0xff]
  %v729 = vld [vmem:[%s1 + $0xf08] sm:$0xf]
  %v730 = vld [vmem:[%s1 + $0xf0c] sm:$0xff]
  %v731 = vld [vmem:[%s1 + $0xf14] sm:$0xf]
  %v732 = vld [vmem:[%s1 + $0xf18] sm:$0xff]
  %v733 = vld [vmem:[%s1 + $0xf20] sm:$0xf]
  %v734 = vld [vmem:[%s1 + $0xf24] sm:$0xff]
  %v735 = vld [vmem:[%s1 + $0xf2c] sm:$0xf]
  %v736 = vld [vmem:[%s1 + $0xf30] sm:$0xff]
  %v737 = vld [vmem:[%s1 + $0xf38] sm:$0xf]
  %v738 = vld [vmem:[%s1 + $0xf3c] sm:$0xff]
  %v739 = vld [vmem:[%s1 + $0xf44] sm:$0xf]
  %v740 = vld [vmem:[%s1 + $0xf48] sm:$0xff]
  %v741 = vld [vmem:[%s1 + $0xf50] sm:$0xf]
  %v742 = vld [vmem:[%s1 + $0xf54] sm:$0xff]
  %v743 = vld [vmem:[%s1 + $0xf5c] sm:$0xf]
  %v744 = vld [vmem:[%s1 + $0xf60] sm:$0xff]
  %v745 = vld [vmem:[%s1 + $0xf68] sm:$0xf]
  %v746 = vld [vmem:[%s1 + $0xf6c] sm:$0xff]
  %v747 = vld [vmem:[%s1 + $0xf74] sm:$0xf]
  %v748 = vld [vmem:[%s1 + $0xf78] sm:$0xff]
  %v749 = vld [vmem:[%s1 + $0xf80] sm:$0xf]
  %v750 = vld [vmem:[%s1 + $0xf84] sm:$0xff]
  %v751 = vld [vmem:[%s1 + $0xf8c] sm:$0xf]
  %v752 = vld [vmem:[%s1 + $0xf90] sm:$0xff]
  %v753 = vld [vmem:[%s1 + $0xf98] sm:$0xf]
  %v754 = vld [vmem:[%s1 + $0xf9c] sm:$0xff]
  %v755 = vld [vmem:[%s1 + $0xfa4] sm:$0xf]
  %v756 = vld [vmem:[%s1 + $0xfa8] sm:$0xff]
  %v757 = vld [vmem:[%s1 + $0xfb0] sm:$0xf]
  %v758 = vld [vmem:[%s1 + $0xfb4] sm:$0xff]
  %v759 = vld [vmem:[%s1 + $0xfbc] sm:$0xf]
  %v760 = vld [vmem:[%s2] sm:$0x7]
  %v762 = vlaneseq
  %v763 = vshrl.u32 %v762, 7
  %v764 = vsub.s32 0, %v763
  %v765 = vrot.slane %v760, %v764
  %v766 = vlaneseq
  %v767 = vshrl.u32 %v766, 7
  %v768 = vsub.s32 1, %v767
  %v769 = vrot.slane %v760, %v768
  %v770 = vlaneseq
  %v771 = vshrl.u32 %v770, 7
  %v772 = vsub.s32 2, %v771
  %v773 = vrot.slane %v760, %v772
  %v832 = vunpack.c.l.b16 %v33
  %v833 = vunpack.c.h.b16 %v33
  %v834 = vunpack.c.l.b16 %v34
  %v835 = vunpack.c.h.b16 %v34
  %v836 = vunpack.c.l.b16 %v35
  %v837 = vunpack.c.h.b16 %v35
  %v838 = vunpack.c.l.b16 %v36
  %v839 = vunpack.c.h.b16 %v36
  %v840 = vunpack.c.l.b16 %v37
  %v841 = vunpack.c.h.b16 %v37
  %v842 = vunpack.c.l.b16 %v38
  %v843 = vunpack.c.h.b16 %v38
  %v844 = vunpack.c.l.b16 %v39
  %v845 = vunpack.c.h.b16 %v39
  %v846 = vunpack.c.l.b16 %v40
  %v847 = vunpack.c.h.b16 %v40
  %v848 = vunpack.c.l.b16 %v41
  %v849 = vunpack.c.h.b16 %v41
  %v850 = vunpack.c.l.b16 %v42
  %v851 = vunpack.c.h.b16 %v42
  %v852 = vunpack.c.l.b16 %v43
  %v853 = vunpack.c.l.b16 %v44
  %v854 = vunpack.c.h.b16 %v44
  %v855 = vunpack.c.l.b16 %v45
  %v856 = vunpack.c.h.b16 %v45
  %v857 = vunpack.c.l.b16 %v46
  %v858 = vunpack.c.h.b16 %v46
  %v859 = vunpack.c.l.b16 %v47
  %v860 = vunpack.c.h.b16 %v47
  %v861 = vunpack.c.l.b16 %v48
  %v862 = vunpack.c.h.b16 %v48
  %v863 = vunpack.c.l.b16 %v49
  %v864 = vunpack.c.h.b16 %v49
  %v865 = vunpack.c.l.b16 %v50
  %v866 = vunpack.c.h.b16 %v50
  %v867 = vunpack.c.l.b16 %v51
  %v868 = vunpack.c.h.b16 %v51
  %v869 = vunpack.c.l.b16 %v52
  %v870 = vunpack.c.h.b16 %v52
  %v871 = vunpack.c.l.b16 %v53
  %v872 = vunpack.c.h.b16 %v53
  %v873 = vunpack.c.l.b16 %v54
  %v874 = vunpack.c.l.b16 %v55
  %v875 = vunpack.c.h.b16 %v55
  %v876 = vunpack.c.l.b16 %v56
  %v877 = vunpack.c.h.b16 %v56
  %v878 = vunpack.c.l.b16 %v57
  %v879 = vunpack.c.h.b16 %v57
  %v880 = vunpack.c.l.b16 %v58
  %v881 = vunpack.c.h.b16 %v58
  %v882 = vunpack.c.l.b16 %v59
  %v883 = vunpack.c.h.b16 %v59
  %v884 = vunpack.c.l.b16 %v60
  %v885 = vunpack.c.h.b16 %v60
  %v886 = vunpack.c.l.b16 %v61
  %v887 = vunpack.c.h.b16 %v61
  %v888 = vunpack.c.l.b16 %v62
  %v889 = vunpack.c.h.b16 %v62
  %v890 = vunpack.c.l.b16 %v63
  %v891 = vunpack.c.h.b16 %v63
  %v892 = vunpack.c.l.b16 %v64
  %v893 = vunpack.c.h.b16 %v64
  %v894 = vunpack.c.l.b16 %v65
  %v895 = vunpack.c.l.b16 %v66
  %v896 = vunpack.c.h.b16 %v66
  %v897 = vunpack.c.l.b16 %v67
  %v898 = vunpack.c.h.b16 %v67
  %v899 = vunpack.c.l.b16 %v68
  %v900 = vunpack.c.h.b16 %v68
  %v901 = vunpack.c.l.b16 %v69
  %v902 = vunpack.c.h.b16 %v69
  %v903 = vunpack.c.l.b16 %v70
  %v904 = vunpack.c.h.b16 %v70
  %v905 = vunpack.c.l.b16 %v71
  %v906 = vunpack.c.h.b16 %v71
  %v907 = vunpack.c.l.b16 %v72
  %v908 = vunpack.c.h.b16 %v72
  %v909 = vunpack.c.l.b16 %v73
  %v910 = vunpack.c.h.b16 %v73
  %v911 = vunpack.c.l.b16 %v74
  %v912 = vunpack.c.h.b16 %v74
  %v913 = vunpack.c.l.b16 %v75
  %v914 = vunpack.c.h.b16 %v75
  %v915 = vunpack.c.l.b16 %v76
  %v916 = vunpack.c.l.b16 %v77
  %v917 = vunpack.c.h.b16 %v77
  %v918 = vunpack.c.l.b16 %v78
  %v919 = vunpack.c.h.b16 %v78
  %v920 = vunpack.c.l.b16 %v79
  %v921 = vunpack.c.h.b16 %v79
  %v922 = vunpack.c.l.b16 %v80
  %v923 = vunpack.c.h.b16 %v80
  %v924 = vunpack.c.l.b16 %v81
  %v925 = vunpack.c.h.b16 %v81
  %v926 = vunpack.c.l.b16 %v82
  %v927 = vunpack.c.h.b16 %v82
  %v928 = vunpack.c.l.b16 %v83
  %v929 = vunpack.c.h.b16 %v83
  %v930 = vunpack.c.l.b16 %v84
  %v931 = vunpack.c.h.b16 %v84
  %v932 = vunpack.c.l.b16 %v85
  %v933 = vunpack.c.h.b16 %v85
  %v934 = vunpack.c.l.b16 %v86
  %v935 = vunpack.c.h.b16 %v86
  %v936 = vunpack.c.l.b16 %v87
  %v937 = vpack.c.b16 %v853, %v832
  %v938 = vpack.c.b16 %v854, %v833
  %v939 = vpack.c.b16 %v855, %v834
  %v940 = vpack.c.b16 %v856, %v835
  %v941 = vpack.c.b16 %v857, %v836
  %v942 = vpack.c.b16 %v858, %v837
  %v943 = vpack.c.b16 %v859, %v838
  %v944 = vpack.c.b16 %v860, %v839
  %v945 = vpack.c.b16 %v861, %v840
  %v946 = vpack.c.b16 %v862, %v841
  %v947 = vpack.c.b16 %v863, %v842
  %v948 = vpack.c.b16 %v864, %v843
  %v949 = vpack.c.b16 %v865, %v844
  %v950 = vpack.c.b16 %v866, %v845
  %v951 = vpack.c.b16 %v867, %v846
  %v952 = vpack.c.b16 %v868, %v847
  %v953 = vpack.c.b16 %v869, %v848
  %v954 = vpack.c.b16 %v870, %v849
  %v955 = vpack.c.b16 %v871, %v850
  %v956 = vpack.c.b16 %v872, %v851
  %v957 = vpack.c.b16 %v873, %v852
  %v958 = vpack.c.b16 %v895, %v874
  %v959 = vpack.c.b16 %v896, %v875
  %v960 = vpack.c.b16 %v897, %v876
  %v961 = vpack.c.b16 %v898, %v877
  %v962 = vpack.c.b16 %v899, %v878
  %v963 = vpack.c.b16 %v900, %v879
  %v964 = vpack.c.b16 %v901, %v880
  %v965 = vpack.c.b16 %v902, %v881
  %v966 = vpack.c.b16 %v903, %v882
  %v967 = vpack.c.b16 %v904, %v883
  %v968 = vpack.c.b16 %v905, %v884
  %v969 = vpack.c.b16 %v906, %v885
  %v970 = vpack.c.b16 %v907, %v886
  %v971 = vpack.c.b16 %v908, %v887
  %v972 = vpack.c.b16 %v909, %v888
  %v973 = vpack.c.b16 %v910, %v889
  %v974 = vpack.c.b16 %v911, %v890
  %v975 = vpack.c.b16 %v912, %v891
  %v976 = vpack.c.b16 %v913, %v892
  %v977 = vpack.c.b16 %v914, %v893
  %v978 = vpack.c.b16 %v915, %v894
  %v979 = vpack.c.b16 %v916, %v916
  %v980 = vpack.c.b16 %v917, %v917
  %v981 = vpack.c.b16 %v918, %v918
  %v982 = vpack.c.b16 %v919, %v919
  %v983 = vpack.c.b16 %v920, %v920
  %v984 = vpack.c.b16 %v921, %v921
  %v985 = vpack.c.b16 %v922, %v922
  %v986 = vpack.c.b16 %v923, %v923
  %v987 = vpack.c.b16 %v924, %v924
  %v988 = vpack.c.b16 %v925, %v925
  %v989 = vpack.c.b16 %v926, %v926
  %v990 = vpack.c.b16 %v927, %v927
  %v991 = vpack.c.b16 %v928, %v928
  %v992 = vpack.c.b16 %v929, %v929
  %v993 = vpack.c.b16 %v930, %v930
  %v994 = vpack.c.b16 %v931, %v931
  %v995 = vpack.c.b16 %v932, %v932
  %v996 = vpack.c.b16 %v933, %v933
  %v997 = vpack.c.b16 %v934, %v934
  %v998 = vpack.c.b16 %v935, %v935
  %v999 = vpack.c.b16 %v936, %v936
  %v1735 = vunpack.c.l.b16 %v88
  %v1736 = vunpack.c.h.b16 %v88
  %v1737 = vunpack.c.l.b16 %v89
  %v1738 = vunpack.c.l.b16 %v90
  %v1739 = vunpack.c.h.b16 %v90
  %v1740 = vunpack.c.l.b16 %v91
  %v1741 = vunpack.c.l.b16 %v92
  %v1742 = vunpack.c.h.b16 %v92
  %v1743 = vunpack.c.l.b16 %v93
  %v1744 = vunpack.c.l.b16 %v94
  %v1745 = vunpack.c.h.b16 %v94
  %v1746 = vunpack.c.l.b16 %v95
  %v1747 = vunpack.c.l.b16 %v96
  %v1748 = vunpack.c.h.b16 %v96
  %v1749 = vunpack.c.l.b16 %v97
  %v1750 = vunpack.c.l.b16 %v98
  %v1751 = vunpack.c.h.b16 %v98
  %v1752 = vunpack.c.l.b16 %v99
  %v1753 = vunpack.c.l.b16 %v100
  %v1754 = vunpack.c.h.b16 %v100
  %v1755 = vunpack.c.l.b16 %v101
  %v1756 = vunpack.c.l.b16 %v102
  %v1757 = vunpack.c.h.b16 %v102
  %v1758 = vunpack.c.l.b16 %v103
  %v1759 = vunpack.c.l.b16 %v104
  %v1760 = vunpack.c.h.b16 %v104
  %v1761 = vunpack.c.l.b16 %v105
  %v1762 = vunpack.c.l.b16 %v106
  %v1763 = vunpack.c.h.b16 %v106
  %v1764 = vunpack.c.l.b16 %v107
  %v1765 = vunpack.c.l.b16 %v108
  %v1766 = vunpack.c.h.b16 %v108
  %v1767 = vunpack.c.l.b16 %v109
  %v1768 = vunpack.c.l.b16 %v110
  %v1769 = vunpack.c.h.b16 %v110
  %v1770 = vunpack.c.l.b16 %v111
  %v1771 = vunpack.c.l.b16 %v112
  %v1772 = vunpack.c.h.b16 %v112
  %v1773 = vunpack.c.l.b16 %v113
  %v1774 = vunpack.c.l.b16 %v114
  %v1775 = vunpack.c.h.b16 %v114
  %v1776 = vunpack.c.l.b16 %v115
  %v1777 = vunpack.c.l.b16 %v116
  %v1778 = vunpack.c.h.b16 %v116
  %v1779 = vunpack.c.l.b16 %v117
  %v1780 = vunpack.c.l.b16 %v118
  %v1781 = vunpack.c.h.b16 %v118
  %v1782 = vunpack.c.l.b16 %v119
  %v1783 = vunpack.c.l.b16 %v120
  %v1784 = vunpack.c.h.b16 %v120
  %v1785 = vunpack.c.l.b16 %v121
  %v1786 = vunpack.c.l.b16 %v122
  %v1787 = vunpack.c.h.b16 %v122
  %v1788 = vunpack.c.l.b16 %v123
  %v1789 = vunpack.c.l.b16 %v124
  %v1790 = vunpack.c.h.b16 %v124
  %v1791 = vunpack.c.l.b16 %v125
  %v1792 = vunpack.c.l.b16 %v126
  %v1793 = vunpack.c.h.b16 %v126
  %v1794 = vunpack.c.l.b16 %v127
  %v1795 = vunpack.c.l.b16 %v128
  %v1796 = vunpack.c.h.b16 %v128
  %v1797 = vunpack.c.l.b16 %v129
  %v1798 = vunpack.c.l.b16 %v130
  %v1799 = vunpack.c.h.b16 %v130
  %v1800 = vunpack.c.l.b16 %v131
  %v1801 = vunpack.c.l.b16 %v132
  %v1802 = vunpack.c.h.b16 %v132
  %v1803 = vunpack.c.l.b16 %v133
  %v1804 = vunpack.c.l.b16 %v134
  %v1805 = vunpack.c.h.b16 %v134
  %v1806 = vunpack.c.l.b16 %v135
  %v1807 = vunpack.c.l.b16 %v136
  %v1808 = vunpack.c.h.b16 %v136
  %v1809 = vunpack.c.l.b16 %v137
  %v1810 = vunpack.c.l.b16 %v138
  %v1811 = vunpack.c.h.b16 %v138
  %v1812 = vunpack.c.l.b16 %v139
  %v1813 = vunpack.c.l.b16 %v140
  %v1814 = vunpack.c.h.b16 %v140
  %v1815 = vunpack.c.l.b16 %v141
  %v1816 = vunpack.c.l.b16 %v142
  %v1817 = vunpack.c.h.b16 %v142
  %v1818 = vunpack.c.l.b16 %v143
  %v1819 = vunpack.c.l.b16 %v144
  %v1820 = vunpack.c.h.b16 %v144
  %v1821 = vunpack.c.l.b16 %v145
  %v1822 = vunpack.c.l.b16 %v146
  %v1823 = vunpack.c.h.b16 %v146
  %v1824 = vunpack.c.l.b16 %v147
  %v1825 = vunpack.c.l.b16 %v148
  %v1826 = vunpack.c.h.b16 %v148
  %v1827 = vunpack.c.l.b16 %v149
  %v1828 = vunpack.c.l.b16 %v150
  %v1829 = vunpack.c.h.b16 %v150
  %v1830 = vunpack.c.l.b16 %v151
  %v1831 = vunpack.c.l.b16 %v152
  %v1832 = vunpack.c.h.b16 %v152
  %v1833 = vunpack.c.l.b16 %v153
  %v1834 = vunpack.c.l.b16 %v154
  %v1835 = vunpack.c.h.b16 %v154
  %v1836 = vunpack.c.l.b16 %v155
  %v1837 = vunpack.c.l.b16 %v156
  %v1838 = vunpack.c.h.b16 %v156
  %v1839 = vunpack.c.l.b16 %v157
  %v1840 = vunpack.c.l.b16 %v158
  %v1841 = vunpack.c.h.b16 %v158
  %v1842 = vunpack.c.l.b16 %v159
  %v1843 = vunpack.c.l.b16 %v160
  %v1844 = vunpack.c.h.b16 %v160
  %v1845 = vunpack.c.l.b16 %v161
  %v1846 = vunpack.c.l.b16 %v162
  %v1847 = vunpack.c.h.b16 %v162
  %v1848 = vunpack.c.l.b16 %v163
  %v1849 = vunpack.c.l.b16 %v164
  %v1850 = vunpack.c.h.b16 %v164
  %v1851 = vunpack.c.l.b16 %v165
  %v1852 = vunpack.c.l.b16 %v166
  %v1853 = vunpack.c.h.b16 %v166
  %v1854 = vunpack.c.l.b16 %v167
  %v1855 = vunpack.c.l.b16 %v168
  %v1856 = vunpack.c.h.b16 %v168
  %v1857 = vunpack.c.l.b16 %v169
  %v1858 = vunpack.c.l.b16 %v170
  %v1859 = vunpack.c.h.b16 %v170
  %v1860 = vunpack.c.l.b16 %v171
  %v1861 = vunpack.c.l.b16 %v172
  %v1862 = vunpack.c.h.b16 %v172
  %v1863 = vunpack.c.l.b16 %v173
  %v1864 = vunpack.c.l.b16 %v174
  %v1865 = vunpack.c.h.b16 %v174
  %v1866 = vunpack.c.l.b16 %v175
  %v1867 = vunpack.c.l.b16 %v176
  %v1868 = vunpack.c.h.b16 %v176
  %v1869 = vunpack.c.l.b16 %v177
  %v1870 = vunpack.c.l.b16 %v178
  %v1871 = vunpack.c.h.b16 %v178
  %v1872 = vunpack.c.l.b16 %v179
  %v1873 = vunpack.c.l.b16 %v180
  %v1874 = vunpack.c.h.b16 %v180
  %v1875 = vunpack.c.l.b16 %v181
  %v1876 = vunpack.c.l.b16 %v182
  %v1877 = vunpack.c.h.b16 %v182
  %v1878 = vunpack.c.l.b16 %v183
  %v1879 = vunpack.c.l.b16 %v184
  %v1880 = vunpack.c.h.b16 %v184
  %v1881 = vunpack.c.l.b16 %v185
  %v1882 = vunpack.c.l.b16 %v186
  %v1883 = vunpack.c.h.b16 %v186
  %v1884 = vunpack.c.l.b16 %v187
  %v1885 = vunpack.c.l.b16 %v188
  %v1886 = vunpack.c.h.b16 %v188
  %v1887 = vunpack.c.l.b16 %v189
  %v1888 = vunpack.c.l.b16 %v190
  %v1889 = vunpack.c.h.b16 %v190
  %v1890 = vunpack.c.l.b16 %v191
  %v1891 = vunpack.c.l.b16 %v192
  %v1892 = vunpack.c.h.b16 %v192
  %v1893 = vunpack.c.l.b16 %v193
  %v1894 = vunpack.c.l.b16 %v194
  %v1895 = vunpack.c.h.b16 %v194
  %v1896 = vunpack.c.l.b16 %v195
  %v1897 = vunpack.c.l.b16 %v196
  %v1898 = vunpack.c.h.b16 %v196
  %v1899 = vunpack.c.l.b16 %v197
  %v1900 = vunpack.c.l.b16 %v198
  %v1901 = vunpack.c.h.b16 %v198
  %v1902 = vunpack.c.l.b16 %v199
  %v1903 = vunpack.c.l.b16 %v200
  %v1904 = vunpack.c.h.b16 %v200
  %v1905 = vunpack.c.l.b16 %v201
  %v1906 = vunpack.c.l.b16 %v202
  %v1907 = vunpack.c.h.b16 %v202
  %v1908 = vunpack.c.l.b16 %v203
  %v1909 = vunpack.c.l.b16 %v204
  %v1910 = vunpack.c.h.b16 %v204
  %v1911 = vunpack.c.l.b16 %v205
  %v1912 = vunpack.c.l.b16 %v206
  %v1913 = vunpack.c.h.b16 %v206
  %v1914 = vunpack.c.l.b16 %v207
  %v1915 = vunpack.c.l.b16 %v208
  %v1916 = vunpack.c.h.b16 %v208
  %v1917 = vunpack.c.l.b16 %v209
  %v1918 = vunpack.c.l.b16 %v210
  %v1919 = vunpack.c.h.b16 %v210
  %v1920 = vunpack.c.l.b16 %v211
  %v1921 = vunpack.c.l.b16 %v212
  %v1922 = vunpack.c.h.b16 %v212
  %v1923 = vunpack.c.l.b16 %v213
  %v1924 = vunpack.c.l.b16 %v214
  %v1925 = vunpack.c.h.b16 %v214
  %v1926 = vunpack.c.l.b16 %v215
  %v1927 = vunpack.c.l.b16 %v216
  %v1928 = vunpack.c.h.b16 %v216
  %v1929 = vunpack.c.l.b16 %v217
  %v1930 = vunpack.c.l.b16 %v218
  %v1931 = vunpack.c.h.b16 %v218
  %v1932 = vunpack.c.l.b16 %v219
  %v1933 = vunpack.c.l.b16 %v220
  %v1934 = vunpack.c.h.b16 %v220
  %v1935 = vunpack.c.l.b16 %v221
  %v1936 = vunpack.c.l.b16 %v222
  %v1937 = vunpack.c.h.b16 %v222
  %v1938 = vunpack.c.l.b16 %v223
  %v1939 = vunpack.c.l.b16 %v224
  %v1940 = vunpack.c.h.b16 %v224
  %v1941 = vunpack.c.l.b16 %v225
  %v1942 = vunpack.c.l.b16 %v226
  %v1943 = vunpack.c.h.b16 %v226
  %v1944 = vunpack.c.l.b16 %v227
  %v1945 = vunpack.c.l.b16 %v228
  %v1946 = vunpack.c.h.b16 %v228
  %v1947 = vunpack.c.l.b16 %v229
  %v1948 = vunpack.c.l.b16 %v230
  %v1949 = vunpack.c.h.b16 %v230
  %v1950 = vunpack.c.l.b16 %v231
  %v1951 = vunpack.c.l.b16 %v232
  %v1952 = vunpack.c.h.b16 %v232
  %v1953 = vunpack.c.l.b16 %v233
  %v1954 = vunpack.c.l.b16 %v234
  %v1955 = vunpack.c.h.b16 %v234
  %v1956 = vunpack.c.l.b16 %v235
  %v1957 = vunpack.c.l.b16 %v236
  %v1958 = vunpack.c.h.b16 %v236
  %v1959 = vunpack.c.l.b16 %v237
  %v1960 = vunpack.c.l.b16 %v238
  %v1961 = vunpack.c.h.b16 %v238
  %v1962 = vunpack.c.l.b16 %v239
  %v1963 = vunpack.c.l.b16 %v240
  %v1964 = vunpack.c.h.b16 %v240
  %v1965 = vunpack.c.l.b16 %v241
  %v1966 = vunpack.c.l.b16 %v242
  %v1967 = vunpack.c.h.b16 %v242
  %v1968 = vunpack.c.l.b16 %v243
  %v1969 = vunpack.c.l.b16 %v244
  %v1970 = vunpack.c.h.b16 %v244
  %v1971 = vunpack.c.l.b16 %v245
  %v1972 = vunpack.c.l.b16 %v246
  %v1973 = vunpack.c.h.b16 %v246
  %v1974 = vunpack.c.l.b16 %v247
  %v1975 = vunpack.c.l.b16 %v248
  %v1976 = vunpack.c.h.b16 %v248
  %v1977 = vunpack.c.l.b16 %v249
  %v1978 = vunpack.c.l.b16 %v250
  %v1979 = vunpack.c.h.b16 %v250
  %v1980 = vunpack.c.l.b16 %v251
  %v1981 = vunpack.c.l.b16 %v252
  %v1982 = vunpack.c.h.b16 %v252
  %v1983 = vunpack.c.l.b16 %v253
  %v1984 = vunpack.c.l.b16 %v254
  %v1985 = vunpack.c.h.b16 %v254
  %v1986 = vunpack.c.l.b16 %v255
  %v1987 = vunpack.c.l.b16 %v256
  %v1988 = vunpack.c.h.b16 %v256
  %v1989 = vunpack.c.l.b16 %v257
  %v1990 = vunpack.c.l.b16 %v258
  %v1991 = vunpack.c.h.b16 %v258
  %v1992 = vunpack.c.l.b16 %v259
  %v1993 = vunpack.c.l.b16 %v260
  %v1994 = vunpack.c.h.b16 %v260
  %v1995 = vunpack.c.l.b16 %v261
  %v1996 = vunpack.c.l.b16 %v262
  %v1997 = vunpack.c.h.b16 %v262
  %v1998 = vunpack.c.l.b16 %v263
  %v1999 = vunpack.c.l.b16 %v264
  %v2000 = vunpack.c.h.b16 %v264
  %v2001 = vunpack.c.l.b16 %v265
  %v2002 = vunpack.c.l.b16 %v266
  %v2003 = vunpack.c.h.b16 %v266
  %v2004 = vunpack.c.l.b16 %v267
  %v2005 = vunpack.c.l.b16 %v268
  %v2006 = vunpack.c.h.b16 %v268
  %v2007 = vunpack.c.l.b16 %v269
  %v2008 = vunpack.c.l.b16 %v270
  %v2009 = vunpack.c.h.b16 %v270
  %v2010 = vunpack.c.l.b16 %v271
  %v2011 = vunpack.c.l.b16 %v272
  %v2012 = vunpack.c.h.b16 %v272
  %v2013 = vunpack.c.l.b16 %v273
  %v2014 = vunpack.c.l.b16 %v274
  %v2015 = vunpack.c.h.b16 %v274
  %v2016 = vunpack.c.l.b16 %v275
  %v2017 = vunpack.c.l.b16 %v276
  %v2018 = vunpack.c.h.b16 %v276
  %v2019 = vunpack.c.l.b16 %v277
  %v2020 = vunpack.c.l.b16 %v278
  %v2021 = vunpack.c.h.b16 %v278
  %v2022 = vunpack.c.l.b16 %v279
  %v2023 = vunpack.c.l.b16 %v280
  %v2024 = vunpack.c.h.b16 %v280
  %v2025 = vunpack.c.l.b16 %v281
  %v2026 = vunpack.c.l.b16 %v282
  %v2027 = vunpack.c.h.b16 %v282
  %v2028 = vunpack.c.l.b16 %v283
  %v2029 = vunpack.c.l.b16 %v284
  %v2030 = vunpack.c.h.b16 %v284
  %v2031 = vunpack.c.l.b16 %v285
  %v2032 = vunpack.c.l.b16 %v286
  %v2033 = vunpack.c.h.b16 %v286
  %v2034 = vunpack.c.l.b16 %v287
  %v2035 = vunpack.c.l.b16 %v288
  %v2036 = vunpack.c.h.b16 %v288
  %v2037 = vunpack.c.l.b16 %v289
  %v2038 = vunpack.c.l.b16 %v290
  %v2039 = vunpack.c.h.b16 %v290
  %v2040 = vunpack.c.l.b16 %v291
  %v2041 = vunpack.c.l.b16 %v292
  %v2042 = vunpack.c.h.b16 %v292
  %v2043 = vunpack.c.l.b16 %v293
  %v2044 = vunpack.c.l.b16 %v294
  %v2045 = vunpack.c.h.b16 %v294
  %v2046 = vunpack.c.l.b16 %v295
  %v2047 = vunpack.c.l.b16 %v296
  %v2048 = vunpack.c.h.b16 %v296
  %v2049 = vunpack.c.l.b16 %v297
  %v2050 = vunpack.c.l.b16 %v298
  %v2051 = vunpack.c.h.b16 %v298
  %v2052 = vunpack.c.l.b16 %v299
  %v2053 = vunpack.c.l.b16 %v300
  %v2054 = vunpack.c.h.b16 %v300
  %v2055 = vunpack.c.l.b16 %v301
  %v2056 = vunpack.c.l.b16 %v302
  %v2057 = vunpack.c.h.b16 %v302
  %v2058 = vunpack.c.l.b16 %v303
  %v2059 = vunpack.c.l.b16 %v304
  %v2060 = vunpack.c.h.b16 %v304
  %v2061 = vunpack.c.l.b16 %v305
  %v2062 = vunpack.c.l.b16 %v306
  %v2063 = vunpack.c.h.b16 %v306
  %v2064 = vunpack.c.l.b16 %v307
  %v2065 = vunpack.c.l.b16 %v308
  %v2066 = vunpack.c.h.b16 %v308
  %v2067 = vunpack.c.l.b16 %v309
  %v2068 = vunpack.c.l.b16 %v310
  %v2069 = vunpack.c.h.b16 %v310
  %v2070 = vunpack.c.l.b16 %v311
  %v2071 = vunpack.c.l.b16 %v312
  %v2072 = vunpack.c.h.b16 %v312
  %v2073 = vunpack.c.l.b16 %v313
  %v2074 = vunpack.c.l.b16 %v314
  %v2075 = vunpack.c.h.b16 %v314
  %v2076 = vunpack.c.l.b16 %v315
  %v2077 = vunpack.c.l.b16 %v316
  %v2078 = vunpack.c.h.b16 %v316
  %v2079 = vunpack.c.l.b16 %v317
  %v2080 = vunpack.c.l.b16 %v318
  %v2081 = vunpack.c.h.b16 %v318
  %v2082 = vunpack.c.l.b16 %v319
  %v2083 = vunpack.c.l.b16 %v320
  %v2084 = vunpack.c.h.b16 %v320
  %v2085 = vunpack.c.l.b16 %v321
  %v2086 = vunpack.c.l.b16 %v322
  %v2087 = vunpack.c.h.b16 %v322
  %v2088 = vunpack.c.l.b16 %v323
  %v2089 = vunpack.c.l.b16 %v324
  %v2090 = vunpack.c.h.b16 %v324
  %v2091 = vunpack.c.l.b16 %v325
  %v2092 = vunpack.c.l.b16 %v326
  %v2093 = vunpack.c.h.b16 %v326
  %v2094 = vunpack.c.l.b16 %v327
  %v2095 = vunpack.c.l.b16 %v328
  %v2096 = vunpack.c.h.b16 %v328
  %v2097 = vunpack.c.l.b16 %v329
  %v2098 = vunpack.c.l.b16 %v330
  %v2099 = vunpack.c.h.b16 %v330
  %v2100 = vunpack.c.l.b16 %v331
  %v2101 = vunpack.c.l.b16 %v332
  %v2102 = vunpack.c.h.b16 %v332
  %v2103 = vunpack.c.l.b16 %v333
  %v2104 = vunpack.c.l.b16 %v334
  %v2105 = vunpack.c.h.b16 %v334
  %v2106 = vunpack.c.l.b16 %v335
  %v2107 = vunpack.c.l.b16 %v336
  %v2108 = vunpack.c.h.b16 %v336
  %v2109 = vunpack.c.l.b16 %v337
  %v2110 = vunpack.c.l.b16 %v338
  %v2111 = vunpack.c.h.b16 %v338
  %v2112 = vunpack.c.l.b16 %v339
  %v2113 = vunpack.c.l.b16 %v340
  %v2114 = vunpack.c.h.b16 %v340
  %v2115 = vunpack.c.l.b16 %v341
  %v2116 = vunpack.c.l.b16 %v342
  %v2117 = vunpack.c.h.b16 %v342
  %v2118 = vunpack.c.l.b16 %v343
  %v2119 = vunpack.c.l.b16 %v344
  %v2120 = vunpack.c.h.b16 %v344
  %v2121 = vunpack.c.l.b16 %v345
  %v2122 = vunpack.c.l.b16 %v346
  %v2123 = vunpack.c.h.b16 %v346
  %v2124 = vunpack.c.l.b16 %v347
  %v2125 = vunpack.c.l.b16 %v348
  %v2126 = vunpack.c.h.b16 %v348
  %v2127 = vunpack.c.l.b16 %v349
  %v2128 = vunpack.c.l.b16 %v350
  %v2129 = vunpack.c.h.b16 %v350
  %v2130 = vunpack.c.l.b16 %v351
  %v2131 = vunpack.c.l.b16 %v352
  %v2132 = vunpack.c.h.b16 %v352
  %v2133 = vunpack.c.l.b16 %v353
  %v2134 = vunpack.c.l.b16 %v354
  %v2135 = vunpack.c.h.b16 %v354
  %v2136 = vunpack.c.l.b16 %v355
  %v2137 = vunpack.c.l.b16 %v356
  %v2138 = vunpack.c.h.b16 %v356
  %v2139 = vunpack.c.l.b16 %v357
  %v2140 = vunpack.c.l.b16 %v358
  %v2141 = vunpack.c.h.b16 %v358
  %v2142 = vunpack.c.l.b16 %v359
  %v2143 = vunpack.c.l.b16 %v360
  %v2144 = vunpack.c.h.b16 %v360
  %v2145 = vunpack.c.l.b16 %v361
  %v2146 = vunpack.c.l.b16 %v362
  %v2147 = vunpack.c.h.b16 %v362
  %v2148 = vunpack.c.l.b16 %v363
  %v2149 = vunpack.c.l.b16 %v364
  %v2150 = vunpack.c.h.b16 %v364
  %v2151 = vunpack.c.l.b16 %v365
  %v2152 = vunpack.c.l.b16 %v366
  %v2153 = vunpack.c.h.b16 %v366
  %v2154 = vunpack.c.l.b16 %v367
  %v2155 = vunpack.c.l.b16 %v368
  %v2156 = vunpack.c.h.b16 %v368
  %v2157 = vunpack.c.l.b16 %v369
  %v2158 = vunpack.c.l.b16 %v370
  %v2159 = vunpack.c.h.b16 %v370
  %v2160 = vunpack.c.l.b16 %v371
  %v2161 = vunpack.c.l.b16 %v372
  %v2162 = vunpack.c.h.b16 %v372
  %v2163 = vunpack.c.l.b16 %v373
  %v2164 = vunpack.c.l.b16 %v374
  %v2165 = vunpack.c.h.b16 %v374
  %v2166 = vunpack.c.l.b16 %v375
  %v2167 = vunpack.c.l.b16 %v376
  %v2168 = vunpack.c.h.b16 %v376
  %v2169 = vunpack.c.l.b16 %v377
  %v2170 = vunpack.c.l.b16 %v378
  %v2171 = vunpack.c.h.b16 %v378
  %v2172 = vunpack.c.l.b16 %v379
  %v2173 = vunpack.c.l.b16 %v380
  %v2174 = vunpack.c.h.b16 %v380
  %v2175 = vunpack.c.l.b16 %v381
  %v2176 = vunpack.c.l.b16 %v382
  %v2177 = vunpack.c.h.b16 %v382
  %v2178 = vunpack.c.l.b16 %v383
  %v2179 = vunpack.c.l.b16 %v384
  %v2180 = vunpack.c.h.b16 %v384
  %v2181 = vunpack.c.l.b16 %v385
  %v2182 = vunpack.c.l.b16 %v386
  %v2183 = vunpack.c.h.b16 %v386
  %v2184 = vunpack.c.l.b16 %v387
  %v2185 = vunpack.c.l.b16 %v388
  %v2186 = vunpack.c.h.b16 %v388
  %v2187 = vunpack.c.l.b16 %v389
  %v2188 = vunpack.c.l.b16 %v390
  %v2189 = vunpack.c.h.b16 %v390
  %v2190 = vunpack.c.l.b16 %v391
  %v2191 = vunpack.c.l.b16 %v392
  %v2192 = vunpack.c.h.b16 %v392
  %v2193 = vunpack.c.l.b16 %v393
  %v2194 = vunpack.c.l.b16 %v394
  %v2195 = vunpack.c.h.b16 %v394
  %v2196 = vunpack.c.l.b16 %v395
  %v2197 = vunpack.c.l.b16 %v396
  %v2198 = vunpack.c.h.b16 %v396
  %v2199 = vunpack.c.l.b16 %v397
  %v2200 = vunpack.c.l.b16 %v398
  %v2201 = vunpack.c.h.b16 %v398
  %v2202 = vunpack.c.l.b16 %v399
  %v2203 = vunpack.c.l.b16 %v400
  %v2204 = vunpack.c.h.b16 %v400
  %v2205 = vunpack.c.l.b16 %v401
  %v2206 = vunpack.c.l.b16 %v402
  %v2207 = vunpack.c.h.b16 %v402
  %v2208 = vunpack.c.l.b16 %v403
  %v2209 = vunpack.c.l.b16 %v404
  %v2210 = vunpack.c.h.b16 %v404
  %v2211 = vunpack.c.l.b16 %v405
  %v2212 = vunpack.c.l.b16 %v406
  %v2213 = vunpack.c.h.b16 %v406
  %v2214 = vunpack.c.l.b16 %v407
  %v2215 = vunpack.c.l.b16 %v408
  %v2216 = vunpack.c.h.b16 %v408
  %v2217 = vunpack.c.l.b16 %v409
  %v2218 = vunpack.c.l.b16 %v410
  %v2219 = vunpack.c.h.b16 %v410
  %v2220 = vunpack.c.l.b16 %v411
  %v2221 = vunpack.c.l.b16 %v412
  %v2222 = vunpack.c.h.b16 %v412
  %v2223 = vunpack.c.l.b16 %v413
  %v2224 = vunpack.c.l.b16 %v414
  %v2225 = vunpack.c.h.b16 %v414
  %v2226 = vunpack.c.l.b16 %v415
  %v2227 = vunpack.c.l.b16 %v416
  %v2228 = vunpack.c.h.b16 %v416
  %v2229 = vunpack.c.l.b16 %v417
  %v2230 = vunpack.c.l.b16 %v418
  %v2231 = vunpack.c.h.b16 %v418
  %v2232 = vunpack.c.l.b16 %v419
  %v2233 = vunpack.c.l.b16 %v420
  %v2234 = vunpack.c.h.b16 %v420
  %v2235 = vunpack.c.l.b16 %v421
  %v2236 = vunpack.c.l.b16 %v422
  %v2237 = vunpack.c.h.b16 %v422
  %v2238 = vunpack.c.l.b16 %v423
  %v2239 = vunpack.c.l.b16 %v424
  %v2240 = vunpack.c.h.b16 %v424
  %v2241 = vunpack.c.l.b16 %v425
  %v2242 = vunpack.c.l.b16 %v426
  %v2243 = vunpack.c.h.b16 %v426
  %v2244 = vunpack.c.l.b16 %v427
  %v2245 = vunpack.c.l.b16 %v428
  %v2246 = vunpack.c.h.b16 %v428
  %v2247 = vunpack.c.l.b16 %v429
  %v2248 = vunpack.c.l.b16 %v430
  %v2249 = vunpack.c.h.b16 %v430
  %v2250 = vunpack.c.l.b16 %v431
  %v2251 = vunpack.c.l.b16 %v432
  %v2252 = vunpack.c.h.b16 %v432
  %v2253 = vunpack.c.l.b16 %v433
  %v2254 = vunpack.c.l.b16 %v434
  %v2255 = vunpack.c.h.b16 %v434
  %v2256 = vunpack.c.l.b16 %v435
  %v2257 = vunpack.c.l.b16 %v436
  %v2258 = vunpack.c.h.b16 %v436
  %v2259 = vunpack.c.l.b16 %v437
  %v2260 = vunpack.c.l.b16 %v438
  %v2261 = vunpack.c.h.b16 %v438
  %v2262 = vunpack.c.l.b16 %v439
  %v2263 = vunpack.c.l.b16 %v440
  %v2264 = vunpack.c.h.b16 %v440
  %v2265 = vunpack.c.l.b16 %v441
  %v2266 = vunpack.c.l.b16 %v442
  %v2267 = vunpack.c.h.b16 %v442
  %v2268 = vunpack.c.l.b16 %v443
  %v2269 = vunpack.c.l.b16 %v444
  %v2270 = vunpack.c.h.b16 %v444
  %v2271 = vunpack.c.l.b16 %v445
  %v2272 = vunpack.c.l.b16 %v446
  %v2273 = vunpack.c.h.b16 %v446
  %v2274 = vunpack.c.l.b16 %v447
  %v2275 = vunpack.c.l.b16 %v448
  %v2276 = vunpack.c.h.b16 %v448
  %v2277 = vunpack.c.l.b16 %v449
  %v2278 = vunpack.c.l.b16 %v450
  %v2279 = vunpack.c.h.b16 %v450
  %v2280 = vunpack.c.l.b16 %v451
  %v2281 = vunpack.c.l.b16 %v452
  %v2282 = vunpack.c.h.b16 %v452
  %v2283 = vunpack.c.l.b16 %v453
  %v2284 = vunpack.c.l.b16 %v454
  %v2285 = vunpack.c.h.b16 %v454
  %v2286 = vunpack.c.l.b16 %v455
  %v2287 = vunpack.c.l.b16 %v456
  %v2288 = vunpack.c.h.b16 %v456
  %v2289 = vunpack.c.l.b16 %v457
  %v2290 = vunpack.c.l.b16 %v458
  %v2291 = vunpack.c.h.b16 %v458
  %v2292 = vunpack.c.l.b16 %v459
  %v2293 = vunpack.c.l.b16 %v460
  %v2294 = vunpack.c.h.b16 %v460
  %v2295 = vunpack.c.l.b16 %v461
  %v2296 = vunpack.c.l.b16 %v462
  %v2297 = vunpack.c.h.b16 %v462
  %v2298 = vunpack.c.l.b16 %v463
  %v2299 = vunpack.c.l.b16 %v464
  %v2300 = vunpack.c.h.b16 %v464
  %v2301 = vunpack.c.l.b16 %v465
  %v2302 = vunpack.c.l.b16 %v466
  %v2303 = vunpack.c.h.b16 %v466
  %v2304 = vunpack.c.l.b16 %v467
  %v2305 = vunpack.c.l.b16 %v468
  %v2306 = vunpack.c.h.b16 %v468
  %v2307 = vunpack.c.l.b16 %v469
  %v2308 = vunpack.c.l.b16 %v470
  %v2309 = vunpack.c.h.b16 %v470
  %v2310 = vunpack.c.l.b16 %v471
  %v2311 = vunpack.c.l.b16 %v472
  %v2312 = vunpack.c.h.b16 %v472
  %v2313 = vunpack.c.l.b16 %v473
  %v2314 = vunpack.c.l.b16 %v474
  %v2315 = vunpack.c.h.b16 %v474
  %v2316 = vunpack.c.l.b16 %v475
  %v2317 = vunpack.c.l.b16 %v476
  %v2318 = vunpack.c.h.b16 %v476
  %v2319 = vunpack.c.l.b16 %v477
  %v2320 = vunpack.c.l.b16 %v478
  %v2321 = vunpack.c.h.b16 %v478
  %v2322 = vunpack.c.l.b16 %v479
  %v2323 = vunpack.c.l.b16 %v480
  %v2324 = vunpack.c.h.b16 %v480
  %v2325 = vunpack.c.l.b16 %v481
  %v2326 = vunpack.c.l.b16 %v482
  %v2327 = vunpack.c.h.b16 %v482
  %v2328 = vunpack.c.l.b16 %v483
  %v2329 = vunpack.c.l.b16 %v484
  %v2330 = vunpack.c.h.b16 %v484
  %v2331 = vunpack.c.l.b16 %v485
  %v2332 = vunpack.c.l.b16 %v486
  %v2333 = vunpack.c.h.b16 %v486
  %v2334 = vunpack.c.l.b16 %v487
  %v2335 = vunpack.c.l.b16 %v488
  %v2336 = vunpack.c.h.b16 %v488
  %v2337 = vunpack.c.l.b16 %v489
  %v2338 = vunpack.c.l.b16 %v490
  %v2339 = vunpack.c.h.b16 %v490
  %v2340 = vunpack.c.l.b16 %v491
  %v2341 = vunpack.c.l.b16 %v492
  %v2342 = vunpack.c.h.b16 %v492
  %v2343 = vunpack.c.l.b16 %v493
  %v2344 = vunpack.c.l.b16 %v494
  %v2345 = vunpack.c.h.b16 %v494
  %v2346 = vunpack.c.l.b16 %v495
  %v2347 = vunpack.c.l.b16 %v496
  %v2348 = vunpack.c.h.b16 %v496
  %v2349 = vunpack.c.l.b16 %v497
  %v2350 = vunpack.c.l.b16 %v498
  %v2351 = vunpack.c.h.b16 %v498
  %v2352 = vunpack.c.l.b16 %v499
  %v2353 = vunpack.c.l.b16 %v500
  %v2354 = vunpack.c.h.b16 %v500
  %v2355 = vunpack.c.l.b16 %v501
  %v2356 = vunpack.c.l.b16 %v502
  %v2357 = vunpack.c.h.b16 %v502
  %v2358 = vunpack.c.l.b16 %v503
  %v2359 = vunpack.c.l.b16 %v504
  %v2360 = vunpack.c.h.b16 %v504
  %v2361 = vunpack.c.l.b16 %v505
  %v2362 = vunpack.c.l.b16 %v506
  %v2363 = vunpack.c.h.b16 %v506
  %v2364 = vunpack.c.l.b16 %v507
  %v2365 = vunpack.c.l.b16 %v508
  %v2366 = vunpack.c.h.b16 %v508
  %v2367 = vunpack.c.l.b16 %v509
  %v2368 = vunpack.c.l.b16 %v510
  %v2369 = vunpack.c.h.b16 %v510
  %v2370 = vunpack.c.l.b16 %v511
  %v2371 = vunpack.c.l.b16 %v512
  %v2372 = vunpack.c.h.b16 %v512
  %v2373 = vunpack.c.l.b16 %v513
  %v2374 = vunpack.c.l.b16 %v514
  %v2375 = vunpack.c.h.b16 %v514
  %v2376 = vunpack.c.l.b16 %v515
  %v2377 = vunpack.c.l.b16 %v516
  %v2378 = vunpack.c.h.b16 %v516
  %v2379 = vunpack.c.l.b16 %v517
  %v2380 = vunpack.c.l.b16 %v518
  %v2381 = vunpack.c.h.b16 %v518
  %v2382 = vunpack.c.l.b16 %v519
  %v2383 = vunpack.c.l.b16 %v520
  %v2384 = vunpack.c.h.b16 %v520
  %v2385 = vunpack.c.l.b16 %v521
  %v2386 = vunpack.c.l.b16 %v522
  %v2387 = vunpack.c.h.b16 %v522
  %v2388 = vunpack.c.l.b16 %v523
  %v2389 = vunpack.c.l.b16 %v524
  %v2390 = vunpack.c.h.b16 %v524
  %v2391 = vunpack.c.l.b16 %v525
  %v2392 = vunpack.c.l.b16 %v526
  %v2393 = vunpack.c.h.b16 %v526
  %v2394 = vunpack.c.l.b16 %v527
  %v2395 = vunpack.c.l.b16 %v528
  %v2396 = vunpack.c.h.b16 %v528
  %v2397 = vunpack.c.l.b16 %v529
  %v2398 = vunpack.c.l.b16 %v530
  %v2399 = vunpack.c.h.b16 %v530
  %v2400 = vunpack.c.l.b16 %v531
  %v2401 = vunpack.c.l.b16 %v532
  %v2402 = vunpack.c.h.b16 %v532
  %v2403 = vunpack.c.l.b16 %v533
  %v2404 = vunpack.c.l.b16 %v534
  %v2405 = vunpack.c.h.b16 %v534
  %v2406 = vunpack.c.l.b16 %v535
  %v2407 = vunpack.c.l.b16 %v536
  %v2408 = vunpack.c.h.b16 %v536
  %v2409 = vunpack.c.l.b16 %v537
  %v2410 = vunpack.c.l.b16 %v538
  %v2411 = vunpack.c.h.b16 %v538
  %v2412 = vunpack.c.l.b16 %v539
  %v2413 = vunpack.c.l.b16 %v540
  %v2414 = vunpack.c.h.b16 %v540
  %v2415 = vunpack.c.l.b16 %v541
  %v2416 = vunpack.c.l.b16 %v542
  %v2417 = vunpack.c.h.b16 %v542
  %v2418 = vunpack.c.l.b16 %v543
  %v2419 = vunpack.c.l.b16 %v544
  %v2420 = vunpack.c.h.b16 %v544
  %v2421 = vunpack.c.l.b16 %v545
  %v2422 = vunpack.c.l.b16 %v546
  %v2423 = vunpack.c.h.b16 %v546
  %v2424 = vunpack.c.l.b16 %v547
  %v2425 = vunpack.c.l.b16 %v548
  %v2426 = vunpack.c.h.b16 %v548
  %v2427 = vunpack.c.l.b16 %v549
  %v2428 = vunpack.c.l.b16 %v550
  %v2429 = vunpack.c.h.b16 %v550
  %v2430 = vunpack.c.l.b16 %v551
  %v2431 = vunpack.c.l.b16 %v552
  %v2432 = vunpack.c.h.b16 %v552
  %v2433 = vunpack.c.l.b16 %v553
  %v2434 = vunpack.c.l.b16 %v554
  %v2435 = vunpack.c.h.b16 %v554
  %v2436 = vunpack.c.l.b16 %v555
  %v2437 = vunpack.c.l.b16 %v556
  %v2438 = vunpack.c.h.b16 %v556
  %v2439 = vunpack.c.l.b16 %v557
  %v2440 = vunpack.c.l.b16 %v558
  %v2441 = vunpack.c.h.b16 %v558
  %v2442 = vunpack.c.l.b16 %v559
  %v2443 = vunpack.c.l.b16 %v560
  %v2444 = vunpack.c.h.b16 %v560
  %v2445 = vunpack.c.l.b16 %v561
  %v2446 = vunpack.c.l.b16 %v562
  %v2447 = vunpack.c.h.b16 %v562
  %v2448 = vunpack.c.l.b16 %v563
  %v2449 = vunpack.c.l.b16 %v564
  %v2450 = vunpack.c.h.b16 %v564
  %v2451 = vunpack.c.l.b16 %v565
  %v2452 = vunpack.c.l.b16 %v566
  %v2453 = vunpack.c.h.b16 %v566
  %v2454 = vunpack.c.l.b16 %v567
  %v2455 = vunpack.c.l.b16 %v568
  %v2456 = vunpack.c.h.b16 %v568
  %v2457 = vunpack.c.l.b16 %v569
  %v2458 = vunpack.c.l.b16 %v570
  %v2459 = vunpack.c.h.b16 %v570
  %v2460 = vunpack.c.l.b16 %v571
  %v2461 = vunpack.c.l.b16 %v572
  %v2462 = vunpack.c.h.b16 %v572
  %v2463 = vunpack.c.l.b16 %v573
  %v2464 = vunpack.c.l.b16 %v574
  %v2465 = vunpack.c.h.b16 %v574
  %v2466 = vunpack.c.l.b16 %v575
  %v2467 = vunpack.c.l.b16 %v576
  %v2468 = vunpack.c.h.b16 %v576
  %v2469 = vunpack.c.l.b16 %v577
  %v2470 = vunpack.c.l.b16 %v578
  %v2471 = vunpack.c.h.b16 %v578
  %v2472 = vunpack.c.l.b16 %v579
  %v2473 = vunpack.c.l.b16 %v580
  %v2474 = vunpack.c.h.b16 %v580
  %v2475 = vunpack.c.l.b16 %v581
  %v2476 = vunpack.c.l.b16 %v582
  %v2477 = vunpack.c.h.b16 %v582
  %v2478 = vunpack.c.l.b16 %v583
  %v2479 = vunpack.c.l.b16 %v584
  %v2480 = vunpack.c.h.b16 %v584
  %v2481 = vunpack.c.l.b16 %v585
  %v2482 = vunpack.c.l.b16 %v586
  %v2483 = vunpack.c.h.b16 %v586
  %v2484 = vunpack.c.l.b16 %v587
  %v2485 = vunpack.c.l.b16 %v588
  %v2486 = vunpack.c.h.b16 %v588
  %v2487 = vunpack.c.l.b16 %v589
  %v2488 = vunpack.c.l.b16 %v590
  %v2489 = vunpack.c.h.b16 %v590
  %v2490 = vunpack.c.l.b16 %v591
  %v2491 = vunpack.c.l.b16 %v592
  %v2492 = vunpack.c.h.b16 %v592
  %v2493 = vunpack.c.l.b16 %v593
  %v2494 = vunpack.c.l.b16 %v594
  %v2495 = vunpack.c.h.b16 %v594
  %v2496 = vunpack.c.l.b16 %v595
  %v2497 = vunpack.c.l.b16 %v596
  %v2498 = vunpack.c.h.b16 %v596
  %v2499 = vunpack.c.l.b16 %v597
  %v2500 = vunpack.c.l.b16 %v598
  %v2501 = vunpack.c.h.b16 %v598
  %v2502 = vunpack.c.l.b16 %v599
  %v2503 = vunpack.c.l.b16 %v600
  %v2504 = vunpack.c.h.b16 %v600
  %v2505 = vunpack.c.l.b16 %v601
  %v2506 = vunpack.c.l.b16 %v602
  %v2507 = vunpack.c.h.b16 %v602
  %v2508 = vunpack.c.l.b16 %v603
  %v2509 = vunpack.c.l.b16 %v604
  %v2510 = vunpack.c.h.b16 %v604
  %v2511 = vunpack.c.l.b16 %v605
  %v2512 = vunpack.c.l.b16 %v606
  %v2513 = vunpack.c.h.b16 %v606
  %v2514 = vunpack.c.l.b16 %v607
  %v2515 = vunpack.c.l.b16 %v608
  %v2516 = vunpack.c.h.b16 %v608
  %v2517 = vunpack.c.l.b16 %v609
  %v2518 = vunpack.c.l.b16 %v610
  %v2519 = vunpack.c.h.b16 %v610
  %v2520 = vunpack.c.l.b16 %v611
  %v2521 = vunpack.c.l.b16 %v612
  %v2522 = vunpack.c.h.b16 %v612
  %v2523 = vunpack.c.l.b16 %v613
  %v2524 = vunpack.c.l.b16 %v614
  %v2525 = vunpack.c.h.b16 %v614
  %v2526 = vunpack.c.l.b16 %v615
  %v2527 = vunpack.c.l.b16 %v616
  %v2528 = vunpack.c.h.b16 %v616
  %v2529 = vunpack.c.l.b16 %v617
  %v2530 = vunpack.c.l.b16 %v618
  %v2531 = vunpack.c.h.b16 %v618
  %v2532 = vunpack.c.l.b16 %v619
  %v2533 = vunpack.c.l.b16 %v620
  %v2534 = vunpack.c.h.b16 %v620
  %v2535 = vunpack.c.l.b16 %v621
  %v2536 = vunpack.c.l.b16 %v622
  %v2537 = vunpack.c.h.b16 %v622
  %v2538 = vunpack.c.l.b16 %v623
  %v2539 = vunpack.c.l.b16 %v624
  %v2540 = vunpack.c.h.b16 %v624
  %v2541 = vunpack.c.l.b16 %v625
  %v2542 = vunpack.c.l.b16 %v626
  %v2543 = vunpack.c.h.b16 %v626
  %v2544 = vunpack.c.l.b16 %v627
  %v2545 = vunpack.c.l.b16 %v628
  %v2546 = vunpack.c.h.b16 %v628
  %v2547 = vunpack.c.l.b16 %v629
  %v2548 = vunpack.c.l.b16 %v630
  %v2549 = vunpack.c.h.b16 %v630
  %v2550 = vunpack.c.l.b16 %v631
  %v2551 = vunpack.c.l.b16 %v632
  %v2552 = vunpack.c.h.b16 %v632
  %v2553 = vunpack.c.l.b16 %v633
  %v2554 = vunpack.c.l.b16 %v634
  %v2555 = vunpack.c.h.b16 %v634
  %v2556 = vunpack.c.l.b16 %v635
  %v2557 = vunpack.c.l.b16 %v636
  %v2558 = vunpack.c.h.b16 %v636
  %v2559 = vunpack.c.l.b16 %v637
  %v2560 = vunpack.c.l.b16 %v638
  %v2561 = vunpack.c.h.b16 %v638
  %v2562 = vunpack.c.l.b16 %v639
  %v2563 = vunpack.c.l.b16 %v640
  %v2564 = vunpack.c.h.b16 %v640
  %v2565 = vunpack.c.l.b16 %v641
  %v2566 = vunpack.c.l.b16 %v642
  %v2567 = vunpack.c.h.b16 %v642
  %v2568 = vunpack.c.l.b16 %v643
  %v2569 = vunpack.c.l.b16 %v644
  %v2570 = vunpack.c.h.b16 %v644
  %v2571 = vunpack.c.l.b16 %v645
  %v2572 = vunpack.c.l.b16 %v646
  %v2573 = vunpack.c.h.b16 %v646
  %v2574 = vunpack.c.l.b16 %v647
  %v2575 = vunpack.c.l.b16 %v648
  %v2576 = vunpack.c.h.b16 %v648
  %v2577 = vunpack.c.l.b16 %v649
  %v2578 = vunpack.c.l.b16 %v650
  %v2579 = vunpack.c.h.b16 %v650
  %v2580 = vunpack.c.l.b16 %v651
  %v2581 = vunpack.c.l.b16 %v652
  %v2582 = vunpack.c.h.b16 %v652
  %v2583 = vunpack.c.l.b16 %v653
  %v2584 = vunpack.c.l.b16 %v654
  %v2585 = vunpack.c.h.b16 %v654
  %v2586 = vunpack.c.l.b16 %v655
  %v2587 = vunpack.c.l.b16 %v656
  %v2588 = vunpack.c.h.b16 %v656
  %v2589 = vunpack.c.l.b16 %v657
  %v2590 = vunpack.c.l.b16 %v658
  %v2591 = vunpack.c.h.b16 %v658
  %v2592 = vunpack.c.l.b16 %v659
  %v2593 = vunpack.c.l.b16 %v660
  %v2594 = vunpack.c.h.b16 %v660
  %v2595 = vunpack.c.l.b16 %v661
  %v2596 = vunpack.c.l.b16 %v662
  %v2597 = vunpack.c.h.b16 %v662
  %v2598 = vunpack.c.l.b16 %v663
  %v2599 = vunpack.c.l.b16 %v664
  %v2600 = vunpack.c.h.b16 %v664
  %v2601 = vunpack.c.l.b16 %v665
  %v2602 = vunpack.c.l.b16 %v666
  %v2603 = vunpack.c.h.b16 %v666
  %v2604 = vunpack.c.l.b16 %v667
  %v2605 = vunpack.c.l.b16 %v668
  %v2606 = vunpack.c.h.b16 %v668
  %v2607 = vunpack.c.l.b16 %v669
  %v2608 = vunpack.c.l.b16 %v670
  %v2609 = vunpack.c.h.b16 %v670
  %v2610 = vunpack.c.l.b16 %v671
  %v2611 = vunpack.c.l.b16 %v672
  %v2612 = vunpack.c.h.b16 %v672
  %v2613 = vunpack.c.l.b16 %v673
  %v2614 = vunpack.c.l.b16 %v674
  %v2615 = vunpack.c.h.b16 %v674
  %v2616 = vunpack.c.l.b16 %v675
  %v2617 = vunpack.c.l.b16 %v676
  %v2618 = vunpack.c.h.b16 %v676
  %v2619 = vunpack.c.l.b16 %v677
  %v2620 = vunpack.c.l.b16 %v678
  %v2621 = vunpack.c.h.b16 %v678
  %v2622 = vunpack.c.l.b16 %v679
  %v2623 = vunpack.c.l.b16 %v680
  %v2624 = vunpack.c.h.b16 %v680
  %v2625 = vunpack.c.l.b16 %v681
  %v2626 = vunpack.c.l.b16 %v682
  %v2627 = vunpack.c.h.b16 %v682
  %v2628 = vunpack.c.l.b16 %v683
  %v2629 = vunpack.c.l.b16 %v684
  %v2630 = vunpack.c.h.b16 %v684
  %v2631 = vunpack.c.l.b16 %v685
  %v2632 = vunpack.c.l.b16 %v686
  %v2633 = vunpack.c.h.b16 %v686
  %v2634 = vunpack.c.l.b16 %v687
  %v2635 = vunpack.c.l.b16 %v688
  %v2636 = vunpack.c.h.b16 %v688
  %v2637 = vunpack.c.l.b16 %v689
  %v2638 = vunpack.c.l.b16 %v690
  %v2639 = vunpack.c.h.b16 %v690
  %v2640 = vunpack.c.l.b16 %v691
  %v2641 = vunpack.c.l.b16 %v692
  %v2642 = vunpack.c.h.b16 %v692
  %v2643 = vunpack.c.l.b16 %v693
  %v2644 = vunpack.c.l.b16 %v694
  %v2645 = vunpack.c.h.b16 %v694
  %v2646 = vunpack.c.l.b16 %v695
  %v2647 = vunpack.c.l.b16 %v696
  %v2648 = vunpack.c.h.b16 %v696
  %v2649 = vunpack.c.l.b16 %v697
  %v2650 = vunpack.c.l.b16 %v698
  %v2651 = vunpack.c.h.b16 %v698
  %v2652 = vunpack.c.l.b16 %v699
  %v2653 = vunpack.c.l.b16 %v700
  %v2654 = vunpack.c.h.b16 %v700
  %v2655 = vunpack.c.l.b16 %v701
  %v2656 = vunpack.c.l.b16 %v702
  %v2657 = vunpack.c.h.b16 %v702
  %v2658 = vunpack.c.l.b16 %v703
  %v2659 = vunpack.c.l.b16 %v704
  %v2660 = vunpack.c.h.b16 %v704
  %v2661 = vunpack.c.l.b16 %v705
  %v2662 = vunpack.c.l.b16 %v706
  %v2663 = vunpack.c.h.b16 %v706
  %v2664 = vunpack.c.l.b16 %v707
  %v2665 = vunpack.c.l.b16 %v708
  %v2666 = vunpack.c.h.b16 %v708
  %v2667 = vunpack.c.l.b16 %v709
  %v2668 = vunpack.c.l.b16 %v710
  %v2669 = vunpack.c.h.b16 %v710
  %v2670 = vunpack.c.l.b16 %v711
  %v2671 = vunpack.c.l.b16 %v712
  %v2672 = vunpack.c.h.b16 %v712
  %v2673 = vunpack.c.l.b16 %v713
  %v2674 = vunpack.c.l.b16 %v714
  %v2675 = vunpack.c.h.b16 %v714
  %v2676 = vunpack.c.l.b16 %v715
  %v2677 = vunpack.c.l.b16 %v716
  %v2678 = vunpack.c.h.b16 %v716
  %v2679 = vunpack.c.l.b16 %v717
  %v2680 = vunpack.c.l.b16 %v718
  %v2681 = vunpack.c.h.b16 %v718
  %v2682 = vunpack.c.l.b16 %v719
  %v2683 = vunpack.c.l.b16 %v720
  %v2684 = vunpack.c.h.b16 %v720
  %v2685 = vunpack.c.l.b16 %v721
  %v2686 = vunpack.c.l.b16 %v722
  %v2687 = vunpack.c.h.b16 %v722
  %v2688 = vunpack.c.l.b16 %v723
  %v2689 = vunpack.c.l.b16 %v724
  %v2690 = vunpack.c.h.b16 %v724
  %v2691 = vunpack.c.l.b16 %v725
  %v2692 = vunpack.c.l.b16 %v726
  %v2693 = vunpack.c.h.b16 %v726
  %v2694 = vunpack.c.l.b16 %v727
  %v2695 = vunpack.c.l.b16 %v728
  %v2696 = vunpack.c.h.b16 %v728
  %v2697 = vunpack.c.l.b16 %v729
  %v2698 = vunpack.c.l.b16 %v730
  %v2699 = vunpack.c.h.b16 %v730
  %v2700 = vunpack.c.l.b16 %v731
  %v2701 = vunpack.c.l.b16 %v732
  %v2702 = vunpack.c.h.b16 %v732
  %v2703 = vunpack.c.l.b16 %v733
  %v2704 = vunpack.c.l.b16 %v734
  %v2705 = vunpack.c.h.b16 %v734
  %v2706 = vunpack.c.l.b16 %v735
  %v2707 = vunpack.c.l.b16 %v736
  %v2708 = vunpack.c.h.b16 %v736
  %v2709 = vunpack.c.l.b16 %v737
  %v2710 = vunpack.c.l.b16 %v738
  %v2711 = vunpack.c.h.b16 %v738
  %v2712 = vunpack.c.l.b16 %v739
  %v2713 = vunpack.c.l.b16 %v740
  %v2714 = vunpack.c.h.b16 %v740
  %v2715 = vunpack.c.l.b16 %v741
  %v2716 = vunpack.c.l.b16 %v742
  %v2717 = vunpack.c.h.b16 %v742
  %v2718 = vunpack.c.l.b16 %v743
  %v2719 = vunpack.c.l.b16 %v744
  %v2720 = vunpack.c.h.b16 %v744
  %v2721 = vunpack.c.l.b16 %v745
  %v2722 = vunpack.c.l.b16 %v746
  %v2723 = vunpack.c.h.b16 %v746
  %v2724 = vunpack.c.l.b16 %v747
  %v2725 = vunpack.c.l.b16 %v748
  %v2726 = vunpack.c.h.b16 %v748
  %v2727 = vunpack.c.l.b16 %v749
  %v2728 = vunpack.c.l.b16 %v750
  %v2729 = vunpack.c.h.b16 %v750
  %v2730 = vunpack.c.l.b16 %v751
  %v2731 = vunpack.c.l.b16 %v752
  %v2732 = vunpack.c.h.b16 %v752
  %v2733 = vunpack.c.l.b16 %v753
  %v2734 = vunpack.c.l.b16 %v754
  %v2735 = vunpack.c.h.b16 %v754
  %v2736 = vunpack.c.l.b16 %v755
  %v2737 = vunpack.c.l.b16 %v756
  %v2738 = vunpack.c.h.b16 %v756
  %v2739 = vunpack.c.l.b16 %v757
  %v2740 = vunpack.c.l.b16 %v758
  %v2741 = vunpack.c.h.b16 %v758
  %v2742 = vunpack.c.l.b16 %v759
  %v2743 = vpack.c.b16 %v1738, %v1735
  %v2744 = vpack.c.b16 %v1739, %v1736
  %v2745 = vpack.c.b16 %v1740, %v1737
  %v2746 = vpack.c.b16 %v1744, %v1741
  %v2747 = vpack.c.b16 %v1745, %v1742
  %v2748 = vpack.c.b16 %v1746, %v1743
  %v2749 = vpack.c.b16 %v1750, %v1747
  %v2750 = vpack.c.b16 %v1751, %v1748
  %v2751 = vpack.c.b16 %v1752, %v1749
  %v2752 = vpack.c.b16 %v1756, %v1753
  %v2753 = vpack.c.b16 %v1757, %v1754
  %v2754 = vpack.c.b16 %v1758, %v1755
  %v2755 = vpack.c.b16 %v1762, %v1759
  %v2756 = vpack.c.b16 %v1763, %v1760
  %v2757 = vpack.c.b16 %v1764, %v1761
  %v2758 = vpack.c.b16 %v1768, %v1765
  %v2759 = vpack.c.b16 %v1769, %v1766
  %v2760 = vpack.c.b16 %v1770, %v1767
  %v2761 = vpack.c.b16 %v1774, %v1771
  %v2762 = vpack.c.b16 %v1775, %v1772
  %v2763 = vpack.c.b16 %v1776, %v1773
  %v2764 = vpack.c.b16 %v1780, %v1777
  %v2765 = vpack.c.b16 %v1781, %v1778
  %v2766 = vpack.c.b16 %v1782, %v1779
  %v2767 = vpack.c.b16 %v1786, %v1783
  %v2768 = vpack.c.b16 %v1787, %v1784
  %v2769 = vpack.c.b16 %v1788, %v1785
  %v2770 = vpack.c.b16 %v1792, %v1789
  %v2771 = vpack.c.b16 %v1793, %v1790
  %v2772 = vpack.c.b16 %v1794, %v1791
  %v2773 = vpack.c.b16 %v1798, %v1795
  %v2774 = vpack.c.b16 %v1799, %v1796
  %v2775 = vpack.c.b16 %v1800, %v1797
  %v2776 = vpack.c.b16 %v1804, %v1801
  %v2777 = vpack.c.b16 %v1805, %v1802
  %v2778 = vpack.c.b16 %v1806, %v1803
  %v2779 = vpack.c.b16 %v1810, %v1807
  %v2780 = vpack.c.b16 %v1811, %v1808
  %v2781 = vpack.c.b16 %v1812, %v1809
  %v2782 = vpack.c.b16 %v1816, %v1813
  %v2783 = vpack.c.b16 %v1817, %v1814
  %v2784 = vpack.c.b16 %v1818, %v1815
  %v2785 = vpack.c.b16 %v1822, %v1819
  %v2786 = vpack.c.b16 %v1823, %v1820
  %v2787 = vpack.c.b16 %v1824, %v1821
  %v2788 = vpack.c.b16 %v1828, %v1825
  %v2789 = vpack.c.b16 %v1829, %v1826
  %v2790 = vpack.c.b16 %v1830, %v1827
  %v2791 = vpack.c.b16 %v1834, %v1831
  %v2792 = vpack.c.b16 %v1835, %v1832
  %v2793 = vpack.c.b16 %v1836, %v1833
  %v2794 = vpack.c.b16 %v1840, %v1837
  %v2795 = vpack.c.b16 %v1841, %v1838
  %v2796 = vpack.c.b16 %v1842, %v1839
  %v2797 = vpack.c.b16 %v1846, %v1843
  %v2798 = vpack.c.b16 %v1847, %v1844
  %v2799 = vpack.c.b16 %v1848, %v1845
  %v2800 = vpack.c.b16 %v1852, %v1849
  %v2801 = vpack.c.b16 %v1853, %v1850
  %v2802 = vpack.c.b16 %v1854, %v1851
  %v2803 = vpack.c.b16 %v1858, %v1855
  %v2804 = vpack.c.b16 %v1859, %v1856
  %v2805 = vpack.c.b16 %v1860, %v1857
  %v2806 = vpack.c.b16 %v1864, %v1861
  %v2807 = vpack.c.b16 %v1865, %v1862
  %v2808 = vpack.c.b16 %v1866, %v1863
  %v2809 = vpack.c.b16 %v1870, %v1867
  %v2810 = vpack.c.b16 %v1871, %v1868
  %v2811 = vpack.c.b16 %v1872, %v1869
  %v2812 = vpack.c.b16 %v1876, %v1873
  %v2813 = vpack.c.b16 %v1877, %v1874
  %v2814 = vpack.c.b16 %v1878, %v1875
  %v2815 = vpack.c.b16 %v1882, %v1879
  %v2816 = vpack.c.b16 %v1883, %v1880
  %v2817 = vpack.c.b16 %v1884, %v1881
  %v2818 = vpack.c.b16 %v1888, %v1885
  %v2819 = vpack.c.b16 %v1889, %v1886
  %v2820 = vpack.c.b16 %v1890, %v1887
  %v2821 = vpack.c.b16 %v1894, %v1891
  %v2822 = vpack.c.b16 %v1895, %v1892
  %v2823 = vpack.c.b16 %v1896, %v1893
  %v2824 = vpack.c.b16 %v1900, %v1897
  %v2825 = vpack.c.b16 %v1901, %v1898
  %v2826 = vpack.c.b16 %v1902, %v1899
  %v2827 = vpack.c.b16 %v1906, %v1903
  %v2828 = vpack.c.b16 %v1907, %v1904
  %v2829 = vpack.c.b16 %v1908, %v1905
  %v2830 = vpack.c.b16 %v1912, %v1909
  %v2831 = vpack.c.b16 %v1913, %v1910
  %v2832 = vpack.c.b16 %v1914, %v1911
  %v2833 = vpack.c.b16 %v1918, %v1915
  %v2834 = vpack.c.b16 %v1919, %v1916
  %v2835 = vpack.c.b16 %v1920, %v1917
  %v2836 = vpack.c.b16 %v1924, %v1921
  %v2837 = vpack.c.b16 %v1925, %v1922
  %v2838 = vpack.c.b16 %v1926, %v1923
  %v2839 = vpack.c.b16 %v1930, %v1927
  %v2840 = vpack.c.b16 %v1931, %v1928
  %v2841 = vpack.c.b16 %v1932, %v1929
  %v2842 = vpack.c.b16 %v1936, %v1933
  %v2843 = vpack.c.b16 %v1937, %v1934
  %v2844 = vpack.c.b16 %v1938, %v1935
  %v2845 = vpack.c.b16 %v1942, %v1939
  %v2846 = vpack.c.b16 %v1943, %v1940
  %v2847 = vpack.c.b16 %v1944, %v1941
  %v2848 = vpack.c.b16 %v1948, %v1945
  %v2849 = vpack.c.b16 %v1949, %v1946
  %v2850 = vpack.c.b16 %v1950, %v1947
  %v2851 = vpack.c.b16 %v1954, %v1951
  %v2852 = vpack.c.b16 %v1955, %v1952
  %v2853 = vpack.c.b16 %v1956, %v1953
  %v2854 = vpack.c.b16 %v1960, %v1957
  %v2855 = vpack.c.b16 %v1961, %v1958
  %v2856 = vpack.c.b16 %v1962, %v1959
  %v2857 = vpack.c.b16 %v1966, %v1963
  %v2858 = vpack.c.b16 %v1967, %v1964
  %v2859 = vpack.c.b16 %v1968, %v1965
  %v2860 = vpack.c.b16 %v1972, %v1969
  %v2861 = vpack.c.b16 %v1973, %v1970
  %v2862 = vpack.c.b16 %v1974, %v1971
  %v2863 = vpack.c.b16 %v1978, %v1975
  %v2864 = vpack.c.b16 %v1979, %v1976
  %v2865 = vpack.c.b16 %v1980, %v1977
  %v2866 = vpack.c.b16 %v1984, %v1981
  %v2867 = vpack.c.b16 %v1985, %v1982
  %v2868 = vpack.c.b16 %v1986, %v1983
  %v2869 = vpack.c.b16 %v1990, %v1987
  %v2870 = vpack.c.b16 %v1991, %v1988
  %v2871 = vpack.c.b16 %v1992, %v1989
  %v2872 = vpack.c.b16 %v1996, %v1993
  %v2873 = vpack.c.b16 %v1997, %v1994
  %v2874 = vpack.c.b16 %v1998, %v1995
  %v2875 = vpack.c.b16 %v2002, %v1999
  %v2876 = vpack.c.b16 %v2003, %v2000
  %v2877 = vpack.c.b16 %v2004, %v2001
  %v2878 = vpack.c.b16 %v2008, %v2005
  %v2879 = vpack.c.b16 %v2009, %v2006
  %v2880 = vpack.c.b16 %v2010, %v2007
  %v2881 = vpack.c.b16 %v2014, %v2011
  %v2882 = vpack.c.b16 %v2015, %v2012
  %v2883 = vpack.c.b16 %v2016, %v2013
  %v2884 = vpack.c.b16 %v2020, %v2017
  %v2885 = vpack.c.b16 %v2021, %v2018
  %v2886 = vpack.c.b16 %v2022, %v2019
  %v2887 = vpack.c.b16 %v2026, %v2023
  %v2888 = vpack.c.b16 %v2027, %v2024
  %v2889 = vpack.c.b16 %v2028, %v2025
  %v2890 = vpack.c.b16 %v2032, %v2029
  %v2891 = vpack.c.b16 %v2033, %v2030
  %v2892 = vpack.c.b16 %v2034, %v2031
  %v2893 = vpack.c.b16 %v2038, %v2035
  %v2894 = vpack.c.b16 %v2039, %v2036
  %v2895 = vpack.c.b16 %v2040, %v2037
  %v2896 = vpack.c.b16 %v2044, %v2041
  %v2897 = vpack.c.b16 %v2045, %v2042
  %v2898 = vpack.c.b16 %v2046, %v2043
  %v2899 = vpack.c.b16 %v2050, %v2047
  %v2900 = vpack.c.b16 %v2051, %v2048
  %v2901 = vpack.c.b16 %v2052, %v2049
  %v2902 = vpack.c.b16 %v2056, %v2053
  %v2903 = vpack.c.b16 %v2057, %v2054
  %v2904 = vpack.c.b16 %v2058, %v2055
  %v2905 = vpack.c.b16 %v2062, %v2059
  %v2906 = vpack.c.b16 %v2063, %v2060
  %v2907 = vpack.c.b16 %v2064, %v2061
  %v2908 = vpack.c.b16 %v2068, %v2065
  %v2909 = vpack.c.b16 %v2069, %v2066
  %v2910 = vpack.c.b16 %v2070, %v2067
  %v2911 = vpack.c.b16 %v2074, %v2071
  %v2912 = vpack.c.b16 %v2075, %v2072
  %v2913 = vpack.c.b16 %v2076, %v2073
  %v2914 = vpack.c.b16 %v2080, %v2077
  %v2915 = vpack.c.b16 %v2081, %v2078
  %v2916 = vpack.c.b16 %v2082, %v2079
  %v2917 = vpack.c.b16 %v2086, %v2083
  %v2918 = vpack.c.b16 %v2087, %v2084
  %v2919 = vpack.c.b16 %v2088, %v2085
  %v2920 = vpack.c.b16 %v2092, %v2089
  %v2921 = vpack.c.b16 %v2093, %v2090
  %v2922 = vpack.c.b16 %v2094, %v2091
  %v2923 = vpack.c.b16 %v2098, %v2095
  %v2924 = vpack.c.b16 %v2099, %v2096
  %v2925 = vpack.c.b16 %v2100, %v2097
  %v2926 = vpack.c.b16 %v2104, %v2101
  %v2927 = vpack.c.b16 %v2105, %v2102
  %v2928 = vpack.c.b16 %v2106, %v2103
  %v2929 = vpack.c.b16 %v2110, %v2107
  %v2930 = vpack.c.b16 %v2111, %v2108
  %v2931 = vpack.c.b16 %v2112, %v2109
  %v2932 = vpack.c.b16 %v2116, %v2113
  %v2933 = vpack.c.b16 %v2117, %v2114
  %v2934 = vpack.c.b16 %v2118, %v2115
  %v2935 = vpack.c.b16 %v2122, %v2119
  %v2936 = vpack.c.b16 %v2123, %v2120
  %v2937 = vpack.c.b16 %v2124, %v2121
  %v2938 = vpack.c.b16 %v2128, %v2125
  %v2939 = vpack.c.b16 %v2129, %v2126
  %v2940 = vpack.c.b16 %v2130, %v2127
  %v2941 = vpack.c.b16 %v2134, %v2131
  %v2942 = vpack.c.b16 %v2135, %v2132
  %v2943 = vpack.c.b16 %v2136, %v2133
  %v2944 = vpack.c.b16 %v2140, %v2137
  %v2945 = vpack.c.b16 %v2141, %v2138
  %v2946 = vpack.c.b16 %v2142, %v2139
  %v2947 = vpack.c.b16 %v2146, %v2143
  %v2948 = vpack.c.b16 %v2147, %v2144
  %v2949 = vpack.c.b16 %v2148, %v2145
  %v2950 = vpack.c.b16 %v2152, %v2149
  %v2951 = vpack.c.b16 %v2153, %v2150
  %v2952 = vpack.c.b16 %v2154, %v2151
  %v2953 = vpack.c.b16 %v2158, %v2155
  %v2954 = vpack.c.b16 %v2159, %v2156
  %v2955 = vpack.c.b16 %v2160, %v2157
  %v2956 = vpack.c.b16 %v2164, %v2161
  %v2957 = vpack.c.b16 %v2165, %v2162
  %v2958 = vpack.c.b16 %v2166, %v2163
  %v2959 = vpack.c.b16 %v2170, %v2167
  %v2960 = vpack.c.b16 %v2171, %v2168
  %v2961 = vpack.c.b16 %v2172, %v2169
  %v2962 = vpack.c.b16 %v2176, %v2173
  %v2963 = vpack.c.b16 %v2177, %v2174
  %v2964 = vpack.c.b16 %v2178, %v2175
  %v2965 = vpack.c.b16 %v2182, %v2179
  %v2966 = vpack.c.b16 %v2183, %v2180
  %v2967 = vpack.c.b16 %v2184, %v2181
  %v2968 = vpack.c.b16 %v2188, %v2185
  %v2969 = vpack.c.b16 %v2189, %v2186
  %v2970 = vpack.c.b16 %v2190, %v2187
  %v2971 = vpack.c.b16 %v2194, %v2191
  %v2972 = vpack.c.b16 %v2195, %v2192
  %v2973 = vpack.c.b16 %v2196, %v2193
  %v2974 = vpack.c.b16 %v2200, %v2197
  %v2975 = vpack.c.b16 %v2201, %v2198
  %v2976 = vpack.c.b16 %v2202, %v2199
  %v2977 = vpack.c.b16 %v2206, %v2203
  %v2978 = vpack.c.b16 %v2207, %v2204
  %v2979 = vpack.c.b16 %v2208, %v2205
  %v2980 = vpack.c.b16 %v2212, %v2209
  %v2981 = vpack.c.b16 %v2213, %v2210
  %v2982 = vpack.c.b16 %v2214, %v2211
  %v2983 = vpack.c.b16 %v2218, %v2215
  %v2984 = vpack.c.b16 %v2219, %v2216
  %v2985 = vpack.c.b16 %v2220, %v2217
  %v2986 = vpack.c.b16 %v2224, %v2221
  %v2987 = vpack.c.b16 %v2225, %v2222
  %v2988 = vpack.c.b16 %v2226, %v2223
  %v2989 = vpack.c.b16 %v2230, %v2227
  %v2990 = vpack.c.b16 %v2231, %v2228
  %v2991 = vpack.c.b16 %v2232, %v2229
  %v2992 = vpack.c.b16 %v2236, %v2233
  %v2993 = vpack.c.b16 %v2237, %v2234
  %v2994 = vpack.c.b16 %v2238, %v2235
  %v2995 = vpack.c.b16 %v2242, %v2239
  %v2996 = vpack.c.b16 %v2243, %v2240
  %v2997 = vpack.c.b16 %v2244, %v2241
  %v2998 = vpack.c.b16 %v2248, %v2245
  %v2999 = vpack.c.b16 %v2249, %v2246
  %v3000 = vpack.c.b16 %v2250, %v2247
  %v3001 = vpack.c.b16 %v2254, %v2251
  %v3002 = vpack.c.b16 %v2255, %v2252
  %v3003 = vpack.c.b16 %v2256, %v2253
  %v3004 = vpack.c.b16 %v2260, %v2257
  %v3005 = vpack.c.b16 %v2261, %v2258
  %v3006 = vpack.c.b16 %v2262, %v2259
  %v3007 = vpack.c.b16 %v2266, %v2263
  %v3008 = vpack.c.b16 %v2267, %v2264
  %v3009 = vpack.c.b16 %v2268, %v2265
  %v3010 = vpack.c.b16 %v2272, %v2269
  %v3011 = vpack.c.b16 %v2273, %v2270
  %v3012 = vpack.c.b16 %v2274, %v2271
  %v3013 = vpack.c.b16 %v2278, %v2275
  %v3014 = vpack.c.b16 %v2279, %v2276
  %v3015 = vpack.c.b16 %v2280, %v2277
  %v3016 = vpack.c.b16 %v2284, %v2281
  %v3017 = vpack.c.b16 %v2285, %v2282
  %v3018 = vpack.c.b16 %v2286, %v2283
  %v3019 = vpack.c.b16 %v2290, %v2287
  %v3020 = vpack.c.b16 %v2291, %v2288
  %v3021 = vpack.c.b16 %v2292, %v2289
  %v3022 = vpack.c.b16 %v2296, %v2293
  %v3023 = vpack.c.b16 %v2297, %v2294
  %v3024 = vpack.c.b16 %v2298, %v2295
  %v3025 = vpack.c.b16 %v2302, %v2299
  %v3026 = vpack.c.b16 %v2303, %v2300
  %v3027 = vpack.c.b16 %v2304, %v2301
  %v3028 = vpack.c.b16 %v2308, %v2305
  %v3029 = vpack.c.b16 %v2309, %v2306
  %v3030 = vpack.c.b16 %v2310, %v2307
  %v3031 = vpack.c.b16 %v2314, %v2311
  %v3032 = vpack.c.b16 %v2315, %v2312
  %v3033 = vpack.c.b16 %v2316, %v2313
  %v3034 = vpack.c.b16 %v2320, %v2317
  %v3035 = vpack.c.b16 %v2321, %v2318
  %v3036 = vpack.c.b16 %v2322, %v2319
  %v3037 = vpack.c.b16 %v2326, %v2323
  %v3038 = vpack.c.b16 %v2327, %v2324
  %v3039 = vpack.c.b16 %v2328, %v2325
  %v3040 = vpack.c.b16 %v2332, %v2329
  %v3041 = vpack.c.b16 %v2333, %v2330
  %v3042 = vpack.c.b16 %v2334, %v2331
  %v3043 = vpack.c.b16 %v2338, %v2335
  %v3044 = vpack.c.b16 %v2339, %v2336
  %v3045 = vpack.c.b16 %v2340, %v2337
  %v3046 = vpack.c.b16 %v2344, %v2341
  %v3047 = vpack.c.b16 %v2345, %v2342
  %v3048 = vpack.c.b16 %v2346, %v2343
  %v3049 = vpack.c.b16 %v2350, %v2347
  %v3050 = vpack.c.b16 %v2351, %v2348
  %v3051 = vpack.c.b16 %v2352, %v2349
  %v3052 = vpack.c.b16 %v2356, %v2353
  %v3053 = vpack.c.b16 %v2357, %v2354
  %v3054 = vpack.c.b16 %v2358, %v2355
  %v3055 = vpack.c.b16 %v2362, %v2359
  %v3056 = vpack.c.b16 %v2363, %v2360
  %v3057 = vpack.c.b16 %v2364, %v2361
  %v3058 = vpack.c.b16 %v2368, %v2365
  %v3059 = vpack.c.b16 %v2369, %v2366
  %v3060 = vpack.c.b16 %v2370, %v2367
  %v3061 = vpack.c.b16 %v2374, %v2371
  %v3062 = vpack.c.b16 %v2375, %v2372
  %v3063 = vpack.c.b16 %v2376, %v2373
  %v3064 = vpack.c.b16 %v2380, %v2377
  %v3065 = vpack.c.b16 %v2381, %v2378
  %v3066 = vpack.c.b16 %v2382, %v2379
  %v3067 = vpack.c.b16 %v2386, %v2383
  %v3068 = vpack.c.b16 %v2387, %v2384
  %v3069 = vpack.c.b16 %v2388, %v2385
  %v3070 = vpack.c.b16 %v2392, %v2389
  %v3071 = vpack.c.b16 %v2393, %v2390
  %v3072 = vpack.c.b16 %v2394, %v2391
  %v3073 = vpack.c.b16 %v2398, %v2395
  %v3074 = vpack.c.b16 %v2399, %v2396
  %v3075 = vpack.c.b16 %v2400, %v2397
  %v3076 = vpack.c.b16 %v2404, %v2401
  %v3077 = vpack.c.b16 %v2405, %v2402
  %v3078 = vpack.c.b16 %v2406, %v2403
  %v3079 = vpack.c.b16 %v2410, %v2407
  %v3080 = vpack.c.b16 %v2411, %v2408
  %v3081 = vpack.c.b16 %v2412, %v2409
  %v3082 = vpack.c.b16 %v2416, %v2413
  %v3083 = vpack.c.b16 %v2417, %v2414
  %v3084 = vpack.c.b16 %v2418, %v2415
  %v3085 = vpack.c.b16 %v2422, %v2419
  %v3086 = vpack.c.b16 %v2423, %v2420
  %v3087 = vpack.c.b16 %v2424, %v2421
  %v3088 = vpack.c.b16 %v2428, %v2425
  %v3089 = vpack.c.b16 %v2429, %v2426
  %v3090 = vpack.c.b16 %v2430, %v2427
  %v3091 = vpack.c.b16 %v2434, %v2431
  %v3092 = vpack.c.b16 %v2435, %v2432
  %v3093 = vpack.c.b16 %v2436, %v2433
  %v3094 = vpack.c.b16 %v2440, %v2437
  %v3095 = vpack.c.b16 %v2441, %v2438
  %v3096 = vpack.c.b16 %v2442, %v2439
  %v3097 = vpack.c.b16 %v2446, %v2443
  %v3098 = vpack.c.b16 %v2447, %v2444
  %v3099 = vpack.c.b16 %v2448, %v2445
  %v3100 = vpack.c.b16 %v2452, %v2449
  %v3101 = vpack.c.b16 %v2453, %v2450
  %v3102 = vpack.c.b16 %v2454, %v2451
  %v3103 = vpack.c.b16 %v2458, %v2455
  %v3104 = vpack.c.b16 %v2459, %v2456
  %v3105 = vpack.c.b16 %v2460, %v2457
  %v3106 = vpack.c.b16 %v2464, %v2461
  %v3107 = vpack.c.b16 %v2465, %v2462
  %v3108 = vpack.c.b16 %v2466, %v2463
  %v3109 = vpack.c.b16 %v2470, %v2467
  %v3110 = vpack.c.b16 %v2471, %v2468
  %v3111 = vpack.c.b16 %v2472, %v2469
  %v3112 = vpack.c.b16 %v2476, %v2473
  %v3113 = vpack.c.b16 %v2477, %v2474
  %v3114 = vpack.c.b16 %v2478, %v2475
  %v3115 = vpack.c.b16 %v2482, %v2479
  %v3116 = vpack.c.b16 %v2483, %v2480
  %v3117 = vpack.c.b16 %v2484, %v2481
  %v3118 = vpack.c.b16 %v2488, %v2485
  %v3119 = vpack.c.b16 %v2489, %v2486
  %v3120 = vpack.c.b16 %v2490, %v2487
  %v3121 = vpack.c.b16 %v2494, %v2491
  %v3122 = vpack.c.b16 %v2495, %v2492
  %v3123 = vpack.c.b16 %v2496, %v2493
  %v3124 = vpack.c.b16 %v2500, %v2497
  %v3125 = vpack.c.b16 %v2501, %v2498
  %v3126 = vpack.c.b16 %v2502, %v2499
  %v3127 = vpack.c.b16 %v2506, %v2503
  %v3128 = vpack.c.b16 %v2507, %v2504
  %v3129 = vpack.c.b16 %v2508, %v2505
  %v3130 = vpack.c.b16 %v2512, %v2509
  %v3131 = vpack.c.b16 %v2513, %v2510
  %v3132 = vpack.c.b16 %v2514, %v2511
  %v3133 = vpack.c.b16 %v2518, %v2515
  %v3134 = vpack.c.b16 %v2519, %v2516
  %v3135 = vpack.c.b16 %v2520, %v2517
  %v3136 = vpack.c.b16 %v2524, %v2521
  %v3137 = vpack.c.b16 %v2525, %v2522
  %v3138 = vpack.c.b16 %v2526, %v2523
  %v3139 = vpack.c.b16 %v2530, %v2527
  %v3140 = vpack.c.b16 %v2531, %v2528
  %v3141 = vpack.c.b16 %v2532, %v2529
  %v3142 = vpack.c.b16 %v2536, %v2533
  %v3143 = vpack.c.b16 %v2537, %v2534
  %v3144 = vpack.c.b16 %v2538, %v2535
  %v3145 = vpack.c.b16 %v2542, %v2539
  %v3146 = vpack.c.b16 %v2543, %v2540
  %v3147 = vpack.c.b16 %v2544, %v2541
  %v3148 = vpack.c.b16 %v2548, %v2545
  %v3149 = vpack.c.b16 %v2549, %v2546
  %v3150 = vpack.c.b16 %v2550, %v2547
  %v3151 = vpack.c.b16 %v2554, %v2551
  %v3152 = vpack.c.b16 %v2555, %v2552
  %v3153 = vpack.c.b16 %v2556, %v2553
  %v3154 = vpack.c.b16 %v2560, %v2557
  %v3155 = vpack.c.b16 %v2561, %v2558
  %v3156 = vpack.c.b16 %v2562, %v2559
  %v3157 = vpack.c.b16 %v2566, %v2563
  %v3158 = vpack.c.b16 %v2567, %v2564
  %v3159 = vpack.c.b16 %v2568, %v2565
  %v3160 = vpack.c.b16 %v2572, %v2569
  %v3161 = vpack.c.b16 %v2573, %v2570
  %v3162 = vpack.c.b16 %v2574, %v2571
  %v3163 = vpack.c.b16 %v2578, %v2575
  %v3164 = vpack.c.b16 %v2579, %v2576
  %v3165 = vpack.c.b16 %v2580, %v2577
  %v3166 = vpack.c.b16 %v2584, %v2581
  %v3167 = vpack.c.b16 %v2585, %v2582
  %v3168 = vpack.c.b16 %v2586, %v2583
  %v3169 = vpack.c.b16 %v2590, %v2587
  %v3170 = vpack.c.b16 %v2591, %v2588
  %v3171 = vpack.c.b16 %v2592, %v2589
  %v3172 = vpack.c.b16 %v2596, %v2593
  %v3173 = vpack.c.b16 %v2597, %v2594
  %v3174 = vpack.c.b16 %v2598, %v2595
  %v3175 = vpack.c.b16 %v2602, %v2599
  %v3176 = vpack.c.b16 %v2603, %v2600
  %v3177 = vpack.c.b16 %v2604, %v2601
  %v3178 = vpack.c.b16 %v2608, %v2605
  %v3179 = vpack.c.b16 %v2609, %v2606
  %v3180 = vpack.c.b16 %v2610, %v2607
  %v3181 = vpack.c.b16 %v2614, %v2611
  %v3182 = vpack.c.b16 %v2615, %v2612
  %v3183 = vpack.c.b16 %v2616, %v2613
  %v3184 = vpack.c.b16 %v2620, %v2617
  %v3185 = vpack.c.b16 %v2621, %v2618
  %v3186 = vpack.c.b16 %v2622, %v2619
  %v3187 = vpack.c.b16 %v2626, %v2623
  %v3188 = vpack.c.b16 %v2627, %v2624
  %v3189 = vpack.c.b16 %v2628, %v2625
  %v3190 = vpack.c.b16 %v2632, %v2629
  %v3191 = vpack.c.b16 %v2633, %v2630
  %v3192 = vpack.c.b16 %v2634, %v2631
  %v3193 = vpack.c.b16 %v2638, %v2635
  %v3194 = vpack.c.b16 %v2639, %v2636
  %v3195 = vpack.c.b16 %v2640, %v2637
  %v3196 = vpack.c.b16 %v2644, %v2641
  %v3197 = vpack.c.b16 %v2645, %v2642
  %v3198 = vpack.c.b16 %v2646, %v2643
  %v3199 = vpack.c.b16 %v2650, %v2647
  %v3200 = vpack.c.b16 %v2651, %v2648
  %v3201 = vpack.c.b16 %v2652, %v2649
  %v3202 = vpack.c.b16 %v2656, %v2653
  %v3203 = vpack.c.b16 %v2657, %v2654
  %v3204 = vpack.c.b16 %v2658, %v2655
  %v3205 = vpack.c.b16 %v2662, %v2659
  %v3206 = vpack.c.b16 %v2663, %v2660
  %v3207 = vpack.c.b16 %v2664, %v2661
  %v3208 = vpack.c.b16 %v2668, %v2665
  %v3209 = vpack.c.b16 %v2669, %v2666
  %v3210 = vpack.c.b16 %v2670, %v2667
  %v3211 = vpack.c.b16 %v2674, %v2671
  %v3212 = vpack.c.b16 %v2675, %v2672
  %v3213 = vpack.c.b16 %v2676, %v2673
  %v3214 = vpack.c.b16 %v2680, %v2677
  %v3215 = vpack.c.b16 %v2681, %v2678
  %v3216 = vpack.c.b16 %v2682, %v2679
  %v3217 = vpack.c.b16 %v2686, %v2683
  %v3218 = vpack.c.b16 %v2687, %v2684
  %v3219 = vpack.c.b16 %v2688, %v2685
  %v3220 = vpack.c.b16 %v2692, %v2689
  %v3221 = vpack.c.b16 %v2693, %v2690
  %v3222 = vpack.c.b16 %v2694, %v2691
  %v3223 = vpack.c.b16 %v2698, %v2695
  %v3224 = vpack.c.b16 %v2699, %v2696
  %v3225 = vpack.c.b16 %v2700, %v2697
  %v3226 = vpack.c.b16 %v2704, %v2701
  %v3227 = vpack.c.b16 %v2705, %v2702
  %v3228 = vpack.c.b16 %v2706, %v2703
  %v3229 = vpack.c.b16 %v2710, %v2707
  %v3230 = vpack.c.b16 %v2711, %v2708
  %v3231 = vpack.c.b16 %v2712, %v2709
  %v3232 = vpack.c.b16 %v2716, %v2713
  %v3233 = vpack.c.b16 %v2717, %v2714
  %v3234 = vpack.c.b16 %v2718, %v2715
  %v3235 = vpack.c.b16 %v2722, %v2719
  %v3236 = vpack.c.b16 %v2723, %v2720
  %v3237 = vpack.c.b16 %v2724, %v2721
  %v3238 = vpack.c.b16 %v2728, %v2725
  %v3239 = vpack.c.b16 %v2729, %v2726
  %v3240 = vpack.c.b16 %v2730, %v2727
  %v3241 = vpack.c.b16 %v2734, %v2731
  %v3242 = vpack.c.b16 %v2735, %v2732
  %v3243 = vpack.c.b16 %v2736, %v2733
  %v3244 = vpack.c.b16 %v2740, %v2737
  %v3245 = vpack.c.b16 %v2741, %v2738
  %v3246 = vpack.c.b16 %v2742, %v2739
  %3751 = vmatprep.subr.bf16.mxu0 %v2744
  %3752 = vmatpush1.bf16.msra.mxu0 %v2743
  %3753 = vmatprep.subr.bf16.mxu0 %v2747
  %3754 = vmatpush1.bf16.msra.mxu0 %v2746
  %3755 = vmatprep.subr.bf16.mxu0 %v2750
  %3756 = vmatpush1.bf16.msra.mxu0 %v2749
  %3757 = vmatprep.subr.bf16.mxu0 %v2753
  %3758 = vmatpush1.bf16.msra.mxu0 %v2752
  %3759 = vmatprep.subr.bf16.mxu0 %v2756
  %3760 = vmatpush1.bf16.msra.mxu0 %v2755
  %3761 = vmatprep.subr.bf16.mxu0 %v2759
  %3762 = vmatpush1.bf16.msra.mxu0 %v2758
  %3763 = vmatprep.subr.bf16.mxu0 %v2762
  %3764 = vmatpush1.bf16.msra.mxu0 %v2761
  %3765 = vmatprep.subr.bf16.mxu0 %v2765
  %3766 = vmatpush1.bf16.msra.mxu0 %v2764
  %3767 = vmatprep.subr.bf16.mxu0 %v2768
  %3768 = vmatpush1.bf16.msra.mxu0 %v2767
  %3769 = vmatprep.subr.bf16.mxu0 %v2771
  %3770 = vmatpush1.bf16.msra.mxu0 %v2770
  %3771 = vmatprep.subr.bf16.mxu0 %v2774
  %3772 = vmatpush1.bf16.msra.mxu0 %v2773
  %3773 = vmatprep.subr.bf16.mxu0 %v2777
  %3774 = vmatpush1.bf16.msra.mxu0 %v2776
  %3775 = vmatprep.subr.bf16.mxu0 %v2780
  %3776 = vmatpush1.bf16.msra.mxu0 %v2779
  %3777 = vmatprep.subr.bf16.mxu0 %v2783
  %3778 = vmatpush1.bf16.msra.mxu0 %v2782
  %3779 = vmatprep.subr.bf16.mxu0 %v2786
  %3780 = vmatpush1.bf16.msra.mxu0 %v2785
  %3781 = vmatprep.subr.bf16.mxu0 %v2789
  %3782 = vmatpush1.bf16.msra.mxu0 %v2788
  %3783 = vmatprep.mubr.bf16.mxu0 %v938
  %3784 = vmatmul.mubr.bf16.gmra.mrb[0].mxu0 %v937
  %v3785 = vpop.f32.mrb[0].mxu0
  %v3786 = vadd.f32 %v765, %v3785
  %v3787 = vpop.f32.mrb[0].mxu0
  %v3788 = vadd.f32 %v769, %v3787
  %v3789 = vpop.f32.mrb[0].mxu0
  %v3790 = vadd.f32 %v765, %v3789
  %v3791 = vpop.f32.mrb[0].mxu0
  %v3792 = vadd.f32 %v769, %v3791
  %3793 = vmatprep.mubr.bf16.mxu0 %v959
  %3794 = vmatmul.mubr.bf16.gmra.mrb[0].mxu0 %v958
  %v3795 = vpop.f32.mrb[0].mxu0
  %v3796 = vadd.f32 %v765, %v3795
  %v3797 = vpop.f32.mrb[0].mxu0
  %v3798 = vadd.f32 %v769, %v3797
  %v3799 = vpop.f32.mrb[0].mxu0
  %v3800 = vadd.f32 %v765, %v3799
  %v3801 = vpop.f32.mrb[0].mxu0
  %v3802 = vadd.f32 %v769, %v3801
  %3803 = vmatprep.mubr.bf16.mxu0 %v980
  %3804 = vmatmul.mubr.bf16.gmra.mrb[0].mxu0 %v979
  %v3805 = vpop.f32.mrb[0].mxu0
  %v3806 = vadd.f32 %v765, %v3805
  %v3807 = vpop.f32.mrb[0].mxu0
  %v3808 = vadd.f32 %v769, %v3807
  %v3809 = vpop.f32.mrb[0].mxu0
  %v3810 = vpop.f32.mrb[0].mxu0
  %3811 = vdwg.mxu0
  %3812 = vmatprep.subr.bf16.mxu0 %v2792
  %3813 = vmatpush1.bf16.msra.mxu0 %v2791
  %3814 = vmatprep.subr.bf16.mxu0 %v2795
  %3815 = vmatpush1.bf16.msra.mxu0 %v2794
  %3816 = vmatprep.subr.bf16.mxu0 %v2798
  %3817 = vmatpush1.bf16.msra.mxu0 %v2797
  %3818 = vmatprep.subr.bf16.mxu0 %v2801
  %3819 = vmatpush1.bf16.msra.mxu0 %v2800
  %3820 = vmatprep.subr.bf16.mxu0 %v2804
  %3821 = vmatpush1.bf16.msra.mxu0 %v2803
  %3822 = vmatprep.subr.bf16.mxu0 %v2807
  %3823 = vmatpush1.bf16.msra.mxu0 %v2806
  %3824 = vmatprep.subr.bf16.mxu0 %v2810
  %3825 = vmatpush1.bf16.msra.mxu0 %v2809
  %3826 = vmatprep.subr.bf16.mxu0 %v2813
  %3827 = vmatpush1.bf16.msra.mxu0 %v2812
  %3828 = vmatprep.subr.bf16.mxu0 %v2816
  %3829 = vmatpush1.bf16.msra.mxu0 %v2815
  %3830 = vmatprep.subr.bf16.mxu0 %v2819
  %3831 = vmatpush1.bf16.msra.mxu0 %v2818
  %3832 = vmatprep.subr.bf16.mxu0 %v2822
  %3833 = vmatpush1.bf16.msra.mxu0 %v2821
  %3834 = vmatprep.subr.bf16.mxu0 %v2825
  %3835 = vmatpush1.bf16.msra.mxu0 %v2824
  %3836 = vmatprep.subr.bf16.mxu0 %v2828
  %3837 = vmatpush1.bf16.msra.mxu0 %v2827
  %3838 = vmatprep.subr.bf16.mxu0 %v2831
  %3839 = vmatpush1.bf16.msra.mxu0 %v2830
  %3840 = vmatprep.subr.bf16.mxu0 %v2834
  %3841 = vmatpush1.bf16.msra.mxu0 %v2833
  %3842 = vmatprep.subr.bf16.mxu0 %v2837
  %3843 = vmatpush1.bf16.msra.mxu0 %v2836
  %3844 = vmatprep.mubr.bf16.mxu0 %v940
  %3845 = vmatmul.mubr.bf16.gmra.mrb[0].mxu0 %v939
  %v3846 = vpop.f32.mrb[0].mxu0
  %v3847 = vadd.f32 %v3786, %v3846
  %v3848 = vpop.f32.mrb[0].mxu0
  %v3849 = vadd.f32 %v3788, %v3848
  %v3850 = vpop.f32.mrb[0].mxu0
  %v3851 = vadd.f32 %v3790, %v3850
  %v3852 = vpop.f32.mrb[0].mxu0
  %v3853 = vadd.f32 %v3792, %v3852
  %3854 = vmatprep.mubr.bf16.mxu0 %v961
  %3855 = vmatmul.mubr.bf16.gmra.mrb[0].mxu0 %v960
  %v3856 = vpop.f32.mrb[0].mxu0
  %v3857 = vadd.f32 %v3796, %v3856
  %v3858 = vpop.f32.mrb[0].mxu0
  %v3859 = vadd.f32 %v3798, %v3858
  %v3860 = vpop.f32.mrb[0].mxu0
  %v3861 = vadd.f32 %v3800, %v3860
  %v3862 = vpop.f32.mrb[0].mxu0
  %v3863 = vadd.f32 %v3802, %v3862
  %3864 = vmatprep.mubr.bf16.mxu0 %v982
  %3865 = vmatmul.mubr.bf16.gmra.mrb[0].mxu0 %v981
  %v3866 = vpop.f32.mrb[0].mxu0
  %v3867 = vadd.f32 %v3806, %v3866
  %v3868 = vpop.f32.mrb[0].mxu0
  %v3869 = vadd.f32 %v3808, %v3868
  %v3870 = vpop.f32.mrb[0].mxu0
  %v3871 = vpop.f32.mrb[0].mxu0
  %3872 = vdwg.mxu0
  %3873 = vmatprep.subr.bf16.mxu0 %v2840
  %3874 = vmatpush1.bf16.msra.mxu0 %v2839
  %3875 = vmatprep.subr.bf16.mxu0 %v2843
  %3876 = vmatpush1.bf16.msra.mxu0 %v2842
  %3877 = vmatprep.subr.bf16.mxu0 %v2846
  %3878 = vmatpush1.bf16.msra.mxu0 %v2845
  %3879 = vmatprep.subr.bf16.mxu0 %v2849
  %3880 = vmatpush1.bf16.msra.mxu0 %v2848
  %3881 = vmatprep.subr.bf16.mxu0 %v2852
  %3882 = vmatpush1.bf16.msra.mxu0 %v2851
  %3883 = vmatprep.subr.bf16.mxu0 %v2855
  %3884 = vmatpush1.bf16.msra.mxu0 %v2854
  %3885 = vmatprep.subr.bf16.mxu0 %v2858
  %3886 = vmatpush1.bf16.msra.mxu0 %v2857
  %3887 = vmatprep.subr.bf16.mxu0 %v2861
  %3888 = vmatpush1.bf16.msra.mxu0 %v2860
  %3889 = vmatprep.subr.bf16.mxu0 %v2864
  %3890 = vmatpush1.bf16.msra.mxu0 %v2863
  %3891 = vmatprep.subr.bf16.mxu0 %v2867
  %3892 = vmatpush1.bf16.msra.mxu0 %v2866
  %3893 = vmatprep.subr.bf16.mxu0 %v2870
  %3894 = vmatpush1.bf16.msra.mxu0 %v2869
  %3895 = vmatprep.subr.bf16.mxu0 %v2873
  %3896 = vmatpush1.bf16.msra.mxu0 %v2872
  %3897 = vmatprep.subr.bf16.mxu0 %v2876
  %3898 = vmatpush1.bf16.msra.mxu0 %v2875
  %3899 = vmatprep.subr.bf16.mxu0 %v2879
  %3900 = vmatpush1.bf16.msra.mxu0 %v2878
  %3901 = vmatprep.subr.bf16.mxu0 %v2882
  %3902 = vmatpush1.bf16.msra.mxu0 %v2881
  %3903 = vmatprep.subr.bf16.mxu0 %v2885
  %3904 = vmatpush1.bf16.msra.mxu0 %v2884
  %3905 = vmatprep.mubr.bf16.mxu0 %v942
  %3906 = vmatmul.mubr.bf16.gmra.mrb[0].mxu0 %v941
  %v3907 = vpop.f32.mrb[0].mxu0
  %v3908 = vadd.f32 %v3847, %v3907
  %v3909 = vpop.f32.mrb[0].mxu0
  %v3910 = vadd.f32 %v3849, %v3909
  %v3911 = vpop.f32.mrb[0].mxu0
  %v3912 = vadd.f32 %v3851, %v3911
  %v3913 = vpop.f32.mrb[0].mxu0
  %v3914 = vadd.f32 %v3853, %v3913
  %3915 = vmatprep.mubr.bf16.mxu0 %v963
  %3916 = vmatmul.mubr.bf16.gmra.mrb[0].mxu0 %v962
  %v3917 = vpop.f32.mrb[0].mxu0
  %v3918 = vadd.f32 %v3857, %v3917
  %v3919 = vpop.f32.mrb[0].mxu0
  %v3920 = vadd.f32 %v3859, %v3919
  %v3921 = vpop.f32.mrb[0].mxu0
  %v3922 = vadd.f32 %v3861, %v3921
  %v3923 = vpop.f32.mrb[0].mxu0
  %v3924 = vadd.f32 %v3863, %v3923
  %3925 = vmatprep.mubr.bf16.mxu0 %v984
  %3926 = vmatmul.mubr.bf16.gmra.mrb[0].mxu0 %v983
  %v3927 = vpop.f32.mrb[0].mxu0
  %v3928 = vadd.f32 %v3867, %v3927
  %v3929 = vpop.f32.mrb[0].mxu0
  %v3930 = vadd.f32 %v3869, %v3929
  %v3931 = vpop.f32.mrb[0].mxu0
  %v3932 = vpop.f32.mrb[0].mxu0
  %3933 = vdwg.mxu0
  %3934 = vmatprep.subr.bf16.mxu0 %v2888
  %3935 = vmatpush1.bf16.msra.mxu0 %v2887
  %3936 = vmatprep.subr.bf16.mxu0 %v2891
  %3937 = vmatpush1.bf16.msra.mxu0 %v2890
  %3938 = vmatprep.subr.bf16.mxu0 %v2894
  %3939 = vmatpush1.bf16.msra.mxu0 %v2893
  %3940 = vmatprep.subr.bf16.mxu0 %v2897
  %3941 = vmatpush1.bf16.msra.mxu0 %v2896
  %3942 = vmatprep.subr.bf16.mxu0 %v2900
  %3943 = vmatpush1.bf16.msra.mxu0 %v2899
  %3944 = vmatprep.subr.bf16.mxu0 %v2903
  %3945 = vmatpush1.bf16.msra.mxu0 %v2902
  %3946 = vmatprep.subr.bf16.mxu0 %v2906
  %3947 = vmatpush1.bf16.msra.mxu0 %v2905
  %3948 = vmatprep.subr.bf16.mxu0 %v2909
  %3949 = vmatpush1.bf16.msra.mxu0 %v2908
  %3950 = vmatprep.subr.bf16.mxu0 %v2912
  %3951 = vmatpush1.bf16.msra.mxu0 %v2911
  %3952 = vmatprep.subr.bf16.mxu0 %v2915
  %3953 = vmatpush1.bf16.msra.mxu0 %v2914
  %3954 = vmatprep.subr.bf16.mxu0 %v2918
  %3955 = vmatpush1.bf16.msra.mxu0 %v2917
  %3956 = vmatprep.subr.bf16.mxu0 %v2921
  %3957 = vmatpush1.bf16.msra.mxu0 %v2920
  %3958 = vmatprep.subr.bf16.mxu0 %v2924
  %3959 = vmatpush1.bf16.msra.mxu0 %v2923
  %3960 = vmatprep.subr.bf16.mxu0 %v2927
  %3961 = vmatpush1.bf16.msra.mxu0 %v2926
  %3962 = vmatprep.subr.bf16.mxu0 %v2930
  %3963 = vmatpush1.bf16.msra.mxu0 %v2929
  %3964 = vmatprep.subr.bf16.mxu0 %v2933
  %3965 = vmatpush1.bf16.msra.mxu0 %v2932
  %3966 = vmatprep.mubr.bf16.mxu0 %v944
  %3967 = vmatmul.mubr.bf16.gmra.mrb[0].mxu0 %v943
  %v3968 = vpop.f32.mrb[0].mxu0
  %v3969 = vadd.f32 %v3908, %v3968
  %v3970 = vpop.f32.mrb[0].mxu0
  %v3971 = vadd.f32 %v3910, %v3970
  %v3972 = vpop.f32.mrb[0].mxu0
  %v3973 = vadd.f32 %v3912, %v3972
  %v3974 = vpop.f32.mrb[0].mxu0
  %v3975 = vadd.f32 %v3914, %v3974
  %3976 = vmatprep.mubr.bf16.mxu0 %v965
  %3977 = vmatmul.mubr.bf16.gmra.mrb[0].mxu0 %v964
  %v3978 = vpop.f32.mrb[0].mxu0
  %v3979 = vadd.f32 %v3918, %v3978
  %v3980 = vpop.f32.mrb[0].mxu0
  %v3981 = vadd.f32 %v3920, %v3980
  %v3982 = vpop.f32.mrb[0].mxu0
  %v3983 = vadd.f32 %v3922, %v3982
  %v3984 = vpop.f32.mrb[0].mxu0
  %v3985 = vadd.f32 %v3924, %v3984
  %3986 = vmatprep.mubr.bf16.mxu0 %v986
  %3987 = vmatmul.mubr.bf16.gmra.mrb[0].mxu0 %v985
  %v3988 = vpop.f32.mrb[0].mxu0
  %v3989 = vadd.f32 %v3928, %v3988
  %v3990 = vpop.f32.mrb[0].mxu0
  %v3991 = vadd.f32 %v3930, %v3990
  %v3992 = vpop.f32.mrb[0].mxu0
  %v3993 = vpop.f32.mrb[0].mxu0
  %3994 = vdwg.mxu0
  %3995 = vmatprep.subr.bf16.mxu0 %v2936
  %3996 = vmatpush1.bf16.msra.mxu0 %v2935
  %3997 = vmatprep.subr.bf16.mxu0 %v2939
  %3998 = vmatpush1.bf16.msra.mxu0 %v2938
  %3999 = vmatprep.subr.bf16.mxu0 %v2942
  %4000 = vmatpush1.bf16.msra.mxu0 %v2941
  %4001 = vmatprep.subr.bf16.mxu0 %v2945
  %4002 = vmatpush1.bf16.msra.mxu0 %v2944
  %4003 = vmatprep.subr.bf16.mxu0 %v2948
  %4004 = vmatpush1.bf16.msra.mxu0 %v2947
  %4005 = vmatprep.subr.bf16.mxu0 %v2951
  %4006 = vmatpush1.bf16.msra.mxu0 %v2950
  %4007 = vmatprep.subr.bf16.mxu0 %v2954
  %4008 = vmatpush1.bf16.msra.mxu0 %v2953
  %4009 = vmatprep.subr.bf16.mxu0 %v2957
  %4010 = vmatpush1.bf16.msra.mxu0 %v2956
  %4011 = vmatprep.subr.bf16.mxu0 %v2960
  %4012 = vmatpush1.bf16.msra.mxu0 %v2959
  %4013 = vmatprep.subr.bf16.mxu0 %v2963
  %4014 = vmatpush1.bf16.msra.mxu0 %v2962
  %4015 = vmatprep.subr.bf16.mxu0 %v2966
  %4016 = vmatpush1.bf16.msra.mxu0 %v2965
  %4017 = vmatprep.subr.bf16.mxu0 %v2969
  %4018 = vmatpush1.bf16.msra.mxu0 %v2968
  %4019 = vmatprep.subr.bf16.mxu0 %v2972
  %4020 = vmatpush1.bf16.msra.mxu0 %v2971
  %4021 = vmatprep.subr.bf16.mxu0 %v2975
  %4022 = vmatpush1.bf16.msra.mxu0 %v2974
  %4023 = vmatprep.subr.bf16.mxu0 %v2978
  %4024 = vmatpush1.bf16.msra.mxu0 %v2977
  %4025 = vmatprep.subr.bf16.mxu0 %v2981
  %4026 = vmatpush1.bf16.msra.mxu0 %v2980
  %4027 = vmatprep.mubr.bf16.mxu0 %v946
  %4028 = vmatmul.mubr.bf16.gmra.mrb[0].mxu0 %v945
  %v4029 = vpop.f32.mrb[0].mxu0
  %v4030 = vadd.f32 %v3969, %v4029
  %v4031 = vpop.f32.mrb[0].mxu0
  %v4032 = vadd.f32 %v3971, %v4031
  %v4033 = vpop.f32.mrb[0].mxu0
  %v4034 = vadd.f32 %v3973, %v4033
  %v4035 = vpop.f32.mrb[0].mxu0
  %v4036 = vadd.f32 %v3975, %v4035
  %4037 = vmatprep.mubr.bf16.mxu0 %v967
  %4038 = vmatmul.mubr.bf16.gmra.mrb[0].mxu0 %v966
  %v4039 = vpop.f32.mrb[0].mxu0
  %v4040 = vadd.f32 %v3979, %v4039
  %v4041 = vpop.f32.mrb[0].mxu0
  %v4042 = vadd.f32 %v3981, %v4041
  %v4043 = vpop.f32.mrb[0].mxu0
  %v4044 = vadd.f32 %v3983, %v4043
  %v4045 = vpop.f32.mrb[0].mxu0
  %v4046 = vadd.f32 %v3985, %v4045
  %4047 = vmatprep.mubr.bf16.mxu0 %v988
  %4048 = vmatmul.mubr.bf16.gmra.mrb[0].mxu0 %v987
  %v4049 = vpop.f32.mrb[0].mxu0
  %v4050 = vadd.f32 %v3989, %v4049
  %v4051 = vpop.f32.mrb[0].mxu0
  %v4052 = vadd.f32 %v3991, %v4051
  %v4053 = vpop.f32.mrb[0].mxu0
  %v4054 = vpop.f32.mrb[0].mxu0
  %4055 = vdwg.mxu0
  %4056 = vmatprep.subr.bf16.mxu0 %v2984
  %4057 = vmatpush1.bf16.msra.mxu0 %v2983
  %4058 = vmatprep.subr.bf16.mxu0 %v2987
  %4059 = vmatpush1.bf16.msra.mxu0 %v2986
  %4060 = vmatprep.subr.bf16.mxu0 %v2990
  %4061 = vmatpush1.bf16.msra.mxu0 %v2989
  %4062 = vmatprep.subr.bf16.mxu0 %v2993
  %4063 = vmatpush1.bf16.msra.mxu0 %v2992
  %4064 = vmatprep.subr.bf16.mxu0 %v2996
  %4065 = vmatpush1.bf16.msra.mxu0 %v2995
  %4066 = vmatprep.subr.bf16.mxu0 %v2999
  %4067 = vmatpush1.bf16.msra.mxu0 %v2998
  %4068 = vmatprep.subr.bf16.mxu0 %v3002
  %4069 = vmatpush1.bf16.msra.mxu0 %v3001
  %4070 = vmatprep.subr.bf16.mxu0 %v3005
  %4071 = vmatpush1.bf16.msra.mxu0 %v3004
  %4072 = vmatprep.subr.bf16.mxu0 %v3008
  %4073 = vmatpush1.bf16.msra.mxu0 %v3007
  %4074 = vmatprep.subr.bf16.mxu0 %v3011
  %4075 = vmatpush1.bf16.msra.mxu0 %v3010
  %4076 = vmatprep.subr.bf16.mxu0 %v3014
  %4077 = vmatpush1.bf16.msra.mxu0 %v3013
  %4078 = vmatprep.subr.bf16.mxu0 %v3017
  %4079 = vmatpush1.bf16.msra.mxu0 %v3016
  %4080 = vmatprep.subr.bf16.mxu0 %v3020
  %4081 = vmatpush1.bf16.msra.mxu0 %v3019
  %4082 = vmatprep.subr.bf16.mxu0 %v3023
  %4083 = vmatpush1.bf16.msra.mxu0 %v3022
  %4084 = vmatprep.subr.bf16.mxu0 %v3026
  %4085 = vmatpush1.bf16.msra.mxu0 %v3025
  %4086 = vmatprep.subr.bf16.mxu0 %v3029
  %4087 = vmatpush1.bf16.msra.mxu0 %v3028
  %4088 = vmatprep.mubr.bf16.mxu0 %v948
  %4089 = vmatmul.mubr.bf16.gmra.mrb[0].mxu0 %v947
  %v4090 = vpop.f32.mrb[0].mxu0
  %v4091 = vadd.f32 %v4030, %v4090
  %v4092 = vpop.f32.mrb[0].mxu0
  %v4093 = vadd.f32 %v4032, %v4092
  %v4094 = vpop.f32.mrb[0].mxu0
  %v4095 = vadd.f32 %v4034, %v4094
  %v4096 = vpop.f32.mrb[0].mxu0
  %v4097 = vadd.f32 %v4036, %v4096
  %4098 = vmatprep.mubr.bf16.mxu0 %v969
  %4099 = vmatmul.mubr.bf16.gmra.mrb[0].mxu0 %v968
  %v4100 = vpop.f32.mrb[0].mxu0
  %v4101 = vadd.f32 %v4040, %v4100
  %v4102 = vpop.f32.mrb[0].mxu0
  %v4103 = vadd.f32 %v4042, %v4102
  %v4104 = vpop.f32.mrb[0].mxu0
  %v4105 = vadd.f32 %v4044, %v4104
  %v4106 = vpop.f32.mrb[0].mxu0
  %v4107 = vadd.f32 %v4046, %v4106
  %4108 = vmatprep.mubr.bf16.mxu0 %v990
  %4109 = vmatmul.mubr.bf16.gmra.mrb[0].mxu0 %v989
  %v4110 = vpop.f32.mrb[0].mxu0
  %v4111 = vadd.f32 %v4050, %v4110
  %v4112 = vpop.f32.mrb[0].mxu0
  %v4113 = vadd.f32 %v4052, %v4112
  %v4114 = vpop.f32.mrb[0].mxu0
  %v4115 = vpop.f32.mrb[0].mxu0
  %4116 = vdwg.mxu0
  %4117 = vmatprep.subr.bf16.mxu0 %v3032
  %4118 = vmatpush1.bf16.msra.mxu0 %v3031
  %4119 = vmatprep.subr.bf16.mxu0 %v3035
  %4120 = vmatpush1.bf16.msra.mxu0 %v3034
  %4121 = vmatprep.subr.bf16.mxu0 %v3038
  %4122 = vmatpush1.bf16.msra.mxu0 %v3037
  %4123 = vmatprep.subr.bf16.mxu0 %v3041
  %4124 = vmatpush1.bf16.msra.mxu0 %v3040
  %4125 = vmatprep.subr.bf16.mxu0 %v3044
  %4126 = vmatpush1.bf16.msra.mxu0 %v3043
  %4127 = vmatprep.subr.bf16.mxu0 %v3047
  %4128 = vmatpush1.bf16.msra.mxu0 %v3046
  %4129 = vmatprep.subr.bf16.mxu0 %v3050
  %4130 = vmatpush1.bf16.msra.mxu0 %v3049
  %4131 = vmatprep.subr.bf16.mxu0 %v3053
  %4132 = vmatpush1.bf16.msra.mxu0 %v3052
  %4133 = vmatprep.subr.bf16.mxu0 %v3056
  %4134 = vmatpush1.bf16.msra.mxu0 %v3055
  %4135 = vmatprep.subr.bf16.mxu0 %v3059
  %4136 = vmatpush1.bf16.msra.mxu0 %v3058
  %4137 = vmatprep.subr.bf16.mxu0 %v3062
  %4138 = vmatpush1.bf16.msra.mxu0 %v3061
  %4139 = vmatprep.subr.bf16.mxu0 %v3065
  %4140 = vmatpush1.bf16.msra.mxu0 %v3064
  %4141 = vmatprep.subr.bf16.mxu0 %v3068
  %4142 = vmatpush1.bf16.msra.mxu0 %v3067
  %4143 = vmatprep.subr.bf16.mxu0 %v3071
  %4144 = vmatpush1.bf16.msra.mxu0 %v3070
  %4145 = vmatprep.subr.bf16.mxu0 %v3074
  %4146 = vmatpush1.bf16.msra.mxu0 %v3073
  %4147 = vmatprep.subr.bf16.mxu0 %v3077
  %4148 = vmatpush1.bf16.msra.mxu0 %v3076
  %4149 = vmatprep.mubr.bf16.mxu0 %v950
  %4150 = vmatmul.mubr.bf16.gmra.mrb[0].mxu0 %v949
  %v4151 = vpop.f32.mrb[0].mxu0
  %v4152 = vadd.f32 %v4091, %v4151
  %v4153 = vpop.f32.mrb[0].mxu0
  %v4154 = vadd.f32 %v4093, %v4153
  %v4155 = vpop.f32.mrb[0].mxu0
  %v4156 = vadd.f32 %v4095, %v4155
  %v4157 = vpop.f32.mrb[0].mxu0
  %v4158 = vadd.f32 %v4097, %v4157
  %4159 = vmatprep.mubr.bf16.mxu0 %v971
  %4160 = vmatmul.mubr.bf16.gmra.mrb[0].mxu0 %v970
  %v4161 = vpop.f32.mrb[0].mxu0
  %v4162 = vadd.f32 %v4101, %v4161
  %v4163 = vpop.f32.mrb[0].mxu0
  %v4164 = vadd.f32 %v4103, %v4163
  %v4165 = vpop.f32.mrb[0].mxu0
  %v4166 = vadd.f32 %v4105, %v4165
  %v4167 = vpop.f32.mrb[0].mxu0
  %v4168 = vadd.f32 %v4107, %v4167
  %4169 = vmatprep.mubr.bf16.mxu0 %v992
  %4170 = vmatmul.mubr.bf16.gmra.mrb[0].mxu0 %v991
  %v4171 = vpop.f32.mrb[0].mxu0
  %v4172 = vadd.f32 %v4111, %v4171
  %v4173 = vpop.f32.mrb[0].mxu0
  %v4174 = vadd.f32 %v4113, %v4173
  %v4175 = vpop.f32.mrb[0].mxu0
  %v4176 = vpop.f32.mrb[0].mxu0
  %4177 = vdwg.mxu0
  %4178 = vmatprep.subr.bf16.mxu0 %v3080
  %4179 = vmatpush1.bf16.msra.mxu0 %v3079
  %4180 = vmatprep.subr.bf16.mxu0 %v3083
  %4181 = vmatpush1.bf16.msra.mxu0 %v3082
  %4182 = vmatprep.subr.bf16.mxu0 %v3086
  %4183 = vmatpush1.bf16.msra.mxu0 %v3085
  %4184 = vmatprep.subr.bf16.mxu0 %v3089
  %4185 = vmatpush1.bf16.msra.mxu0 %v3088
  %4186 = vmatprep.subr.bf16.mxu0 %v3092
  %4187 = vmatpush1.bf16.msra.mxu0 %v3091
  %4188 = vmatprep.subr.bf16.mxu0 %v3095
  %4189 = vmatpush1.bf16.msra.mxu0 %v3094
  %4190 = vmatprep.subr.bf16.mxu0 %v3098
  %4191 = vmatpush1.bf16.msra.mxu0 %v3097
  %4192 = vmatprep.subr.bf16.mxu0 %v3101
  %4193 = vmatpush1.bf16.msra.mxu0 %v3100
  %4194 = vmatprep.subr.bf16.mxu0 %v3104
  %4195 = vmatpush1.bf16.msra.mxu0 %v3103
  %4196 = vmatprep.subr.bf16.mxu0 %v3107
  %4197 = vmatpush1.bf16.msra.mxu0 %v3106
  %4198 = vmatprep.subr.bf16.mxu0 %v3110
  %4199 = vmatpush1.bf16.msra.mxu0 %v3109
  %4200 = vmatprep.subr.bf16.mxu0 %v3113
  %4201 = vmatpush1.bf16.msra.mxu0 %v3112
  %4202 = vmatprep.subr.bf16.mxu0 %v3116
  %4203 = vmatpush1.bf16.msra.mxu0 %v3115
  %4204 = vmatprep.subr.bf16.mxu0 %v3119
  %4205 = vmatpush1.bf16.msra.mxu0 %v3118
  %4206 = vmatprep.subr.bf16.mxu0 %v3122
  %4207 = vmatpush1.bf16.msra.mxu0 %v3121
  %4208 = vmatprep.subr.bf16.mxu0 %v3125
  %4209 = vmatpush1.bf16.msra.mxu0 %v3124
  %4210 = vmatprep.mubr.bf16.mxu0 %v952
  %4211 = vmatmul.mubr.bf16.gmra.mrb[0].mxu0 %v951
  %v4212 = vpop.f32.mrb[0].mxu0
  %v4213 = vadd.f32 %v4152, %v4212
  %v4214 = vpop.f32.mrb[0].mxu0
  %v4215 = vadd.f32 %v4154, %v4214
  %v4216 = vpop.f32.mrb[0].mxu0
  %v4217 = vadd.f32 %v4156, %v4216
  %v4218 = vpop.f32.mrb[0].mxu0
  %v4219 = vadd.f32 %v4158, %v4218
  %4220 = vmatprep.mubr.bf16.mxu0 %v973
  %4221 = vmatmul.mubr.bf16.gmra.mrb[0].mxu0 %v972
  %v4222 = vpop.f32.mrb[0].mxu0
  %v4223 = vadd.f32 %v4162, %v4222
  %v4224 = vpop.f32.mrb[0].mxu0
  %v4225 = vadd.f32 %v4164, %v4224
  %v4226 = vpop.f32.mrb[0].mxu0
  %v4227 = vadd.f32 %v4166, %v4226
  %v4228 = vpop.f32.mrb[0].mxu0
  %v4229 = vadd.f32 %v4168, %v4228
  %4230 = vmatprep.mubr.bf16.mxu0 %v994
  %4231 = vmatmul.mubr.bf16.gmra.mrb[0].mxu0 %v993
  %v4232 = vpop.f32.mrb[0].mxu0
  %v4233 = vadd.f32 %v4172, %v4232
  %v4234 = vpop.f32.mrb[0].mxu0
  %v4235 = vadd.f32 %v4174, %v4234
  %v4236 = vpop.f32.mrb[0].mxu0
  %v4237 = vpop.f32.mrb[0].mxu0
  %4238 = vdwg.mxu0
  %4239 = vmatprep.subr.bf16.mxu0 %v3128
  %4240 = vmatpush1.bf16.msra.mxu0 %v3127
  %4241 = vmatprep.subr.bf16.mxu0 %v3131
  %4242 = vmatpush1.bf16.msra.mxu0 %v3130
  %4243 = vmatprep.subr.bf16.mxu0 %v3134
  %4244 = vmatpush1.bf16.msra.mxu0 %v3133
  %4245 = vmatprep.subr.bf16.mxu0 %v3137
  %4246 = vmatpush1.bf16.msra.mxu0 %v3136
  %4247 = vmatprep.subr.bf16.mxu0 %v3140
  %4248 = vmatpush1.bf16.msra.mxu0 %v3139
  %4249 = vmatprep.subr.bf16.mxu0 %v3143
  %4250 = vmatpush1.bf16.msra.mxu0 %v3142
  %4251 = vmatprep.subr.bf16.mxu0 %v3146
  %4252 = vmatpush1.bf16.msra.mxu0 %v3145
  %4253 = vmatprep.subr.bf16.mxu0 %v3149
  %4254 = vmatpush1.bf16.msra.mxu0 %v3148
  %4255 = vmatprep.subr.bf16.mxu0 %v3152
  %4256 = vmatpush1.bf16.msra.mxu0 %v3151
  %4257 = vmatprep.subr.bf16.mxu0 %v3155
  %4258 = vmatpush1.bf16.msra.mxu0 %v3154
  %4259 = vmatprep.subr.bf16.mxu0 %v3158
  %4260 = vmatpush1.bf16.msra.mxu0 %v3157
  %4261 = vmatprep.subr.bf16.mxu0 %v3161
  %4262 = vmatpush1.bf16.msra.mxu0 %v3160
  %4263 = vmatprep.subr.bf16.mxu0 %v3164
  %4264 = vmatpush1.bf16.msra.mxu0 %v3163
  %4265 = vmatprep.subr.bf16.mxu0 %v3167
  %4266 = vmatpush1.bf16.msra.mxu0 %v3166
  %4267 = vmatprep.subr.bf16.mxu0 %v3170
  %4268 = vmatpush1.bf16.msra.mxu0 %v3169
  %4269 = vmatprep.subr.bf16.mxu0 %v3173
  %4270 = vmatpush1.bf16.msra.mxu0 %v3172
  %4271 = vmatprep.mubr.bf16.mxu0 %v954
  %4272 = vmatmul.mubr.bf16.gmra.mrb[0].mxu0 %v953
  %v4273 = vpop.f32.mrb[0].mxu0
  %v4274 = vadd.f32 %v4213, %v4273
  %v4275 = vpop.f32.mrb[0].mxu0
  %v4276 = vadd.f32 %v4215, %v4275
  %v4277 = vpop.f32.mrb[0].mxu0
  %v4278 = vadd.f32 %v4217, %v4277
  %v4279 = vpop.f32.mrb[0].mxu0
  %v4280 = vadd.f32 %v4219, %v4279
  %4281 = vmatprep.mubr.bf16.mxu0 %v975
  %4282 = vmatmul.mubr.bf16.gmra.mrb[0].mxu0 %v974
  %v4283 = vpop.f32.mrb[0].mxu0
  %v4284 = vadd.f32 %v4223, %v4283
  %v4285 = vpop.f32.mrb[0].mxu0
  %v4286 = vadd.f32 %v4225, %v4285
  %v4287 = vpop.f32.mrb[0].mxu0
  %v4288 = vadd.f32 %v4227, %v4287
  %v4289 = vpop.f32.mrb[0].mxu0
  %v4290 = vadd.f32 %v4229, %v4289
  %4291 = vmatprep.mubr.bf16.mxu0 %v996
  %4292 = vmatmul.mubr.bf16.gmra.mrb[0].mxu0 %v995
  %v4293 = vpop.f32.mrb[0].mxu0
  %v4294 = vadd.f32 %v4233, %v4293
  %v4295 = vpop.f32.mrb[0].mxu0
  %v4296 = vadd.f32 %v4235, %v4295
  %v4297 = vpop.f32.mrb[0].mxu0
  %v4298 = vpop.f32.mrb[0].mxu0
  %4299 = vdwg.mxu0
  %4300 = vmatprep.subr.bf16.mxu0 %v3176
  %4301 = vmatpush1.bf16.msra.mxu0 %v3175
  %4302 = vmatprep.subr.bf16.mxu0 %v3179
  %4303 = vmatpush1.bf16.msra.mxu0 %v3178
  %4304 = vmatprep.subr.bf16.mxu0 %v3182
  %4305 = vmatpush1.bf16.msra.mxu0 %v3181
  %4306 = vmatprep.subr.bf16.mxu0 %v3185
  %4307 = vmatpush1.bf16.msra.mxu0 %v3184
  %4308 = vmatprep.subr.bf16.mxu0 %v3188
  %4309 = vmatpush1.bf16.msra.mxu0 %v3187
  %4310 = vmatprep.subr.bf16.mxu0 %v3191
  %4311 = vmatpush1.bf16.msra.mxu0 %v3190
  %4312 = vmatprep.subr.bf16.mxu0 %v3194
  %4313 = vmatpush1.bf16.msra.mxu0 %v3193
  %4314 = vmatprep.subr.bf16.mxu0 %v3197
  %4315 = vmatpush1.bf16.msra.mxu0 %v3196
  %4316 = vmatprep.subr.bf16.mxu0 %v3200
  %4317 = vmatpush1.bf16.msra.mxu0 %v3199
  %4318 = vmatprep.subr.bf16.mxu0 %v3203
  %4319 = vmatpush1.bf16.msra.mxu0 %v3202
  %4320 = vmatprep.subr.bf16.mxu0 %v3206
  %4321 = vmatpush1.bf16.msra.mxu0 %v3205
  %4322 = vmatprep.subr.bf16.mxu0 %v3209
  %4323 = vmatpush1.bf16.msra.mxu0 %v3208
  %4324 = vmatprep.subr.bf16.mxu0 %v3212
  %4325 = vmatpush1.bf16.msra.mxu0 %v3211
  %4326 = vmatprep.subr.bf16.mxu0 %v3215
  %4327 = vmatpush1.bf16.msra.mxu0 %v3214
  %4328 = vmatprep.subr.bf16.mxu0 %v3218
  %4329 = vmatpush1.bf16.msra.mxu0 %v3217
  %4330 = vmatprep.subr.bf16.mxu0 %v3221
  %4331 = vmatpush1.bf16.msra.mxu0 %v3220
  %4332 = vmatprep.mubr.bf16.mxu0 %v956
  %4333 = vmatmul.mubr.bf16.gmra.mrb[0].mxu0 %v955
  %v4334 = vpop.f32.mrb[0].mxu0
  %v4335 = vadd.f32 %v4274, %v4334
  %v4336 = vpop.f32.mrb[0].mxu0
  %v4337 = vadd.f32 %v4276, %v4336
  %v4338 = vpop.f32.mrb[0].mxu0
  %v4339 = vadd.f32 %v4278, %v4338
  %v4340 = vpop.f32.mrb[0].mxu0
  %v4341 = vadd.f32 %v4280, %v4340
  %4342 = vmatprep.mubr.bf16.mxu0 %v977
  %4343 = vmatmul.mubr.bf16.gmra.mrb[0].mxu0 %v976
  %v4344 = vpop.f32.mrb[0].mxu0
  %v4345 = vadd.f32 %v4284, %v4344
  %v4346 = vpop.f32.mrb[0].mxu0
  %v4347 = vadd.f32 %v4286, %v4346
  %v4348 = vpop.f32.mrb[0].mxu0
  %v4349 = vadd.f32 %v4288, %v4348
  %v4350 = vpop.f32.mrb[0].mxu0
  %v4351 = vadd.f32 %v4290, %v4350
  %4352 = vmatprep.mubr.bf16.mxu0 %v998
  %4353 = vmatmul.mubr.bf16.gmra.mrb[0].mxu0 %v997
  %v4354 = vpop.f32.mrb[0].mxu0
  %v4355 = vadd.f32 %v4294, %v4354
  %v4356 = vpop.f32.mrb[0].mxu0
  %v4357 = vadd.f32 %v4296, %v4356
  %v4358 = vpop.f32.mrb[0].mxu0
  %v4359 = vpop.f32.mrb[0].mxu0
  %4360 = vdwg.mxu0
  %4361 = vmatprep.subr.bf16.mxu0 %v3224
  %4362 = vmatpush1.bf16.msra.mxu0 %v3223
  %4363 = vmatprep.subr.bf16.mxu0 %v3227
  %4364 = vmatpush1.bf16.msra.mxu0 %v3226
  %4365 = vmatprep.subr.bf16.mxu0 %v3230
  %4366 = vmatpush1.bf16.msra.mxu0 %v3229
  %4367 = vmatprep.subr.bf16.mxu0 %v3233
  %4368 = vmatpush1.bf16.msra.mxu0 %v3232
  %4369 = vmatprep.subr.bf16.mxu0 %v3236
  %4370 = vmatpush1.bf16.msra.mxu0 %v3235
  %4371 = vmatprep.subr.bf16.mxu0 %v3239
  %4372 = vmatpush1.bf16.msra.mxu0 %v3238
  %4373 = vmatprep.subr.bf16.mxu0 %v3242
  %4374 = vmatpush1.bf16.msra.mxu0 %v3241
  %4375 = vmatprep.subr.bf16.mxu0 %v3245
  %4376 = vmatpush1.bf16.msra.mxu0 %v3244
  %4377 = vmatprep.subr.bf16.mxu0 0
  %4378 = vmatpush1.bf16.msra.mxu0 0
  %4379 = vmatprep.subr.bf16.mxu0 0
  %4380 = vmatpush1.bf16.msra.mxu0 0
  %4381 = vmatprep.subr.bf16.mxu0 0
  %4382 = vmatpush1.bf16.msra.mxu0 0
  %4383 = vmatprep.subr.bf16.mxu0 0
  %4384 = vmatpush1.bf16.msra.mxu0 0
  %4385 = vmatprep.subr.bf16.mxu0 0
  %4386 = vmatpush1.bf16.msra.mxu0 0
  %4387 = vmatprep.subr.bf16.mxu0 0
  %4388 = vmatpush1.bf16.msra.mxu0 0
  %4389 = vmatprep.subr.bf16.mxu0 0
  %4390 = vmatpush1.bf16.msra.mxu0 0
  %4391 = vmatprep.subr.bf16.mxu0 0
  %4392 = vmatpush1.bf16.msra.mxu0 0
  %4393 = vmatprep.mubr.bf16.mxu0 0
  %4394 = vmatmul.mubr.bf16.gmra.mrb[0].mxu0 %v957
  %v4395 = vpop.f32.mrb[0].mxu0
  %v4396 = vadd.f32 %v4335, %v4395
  %v4397 = vpop.f32.mrb[0].mxu0
  %v4398 = vadd.f32 %v4337, %v4397
  %v4399 = vpop.f32.mrb[0].mxu0
  %v4400 = vadd.f32 %v4339, %v4399
  %v4401 = vpop.f32.mrb[0].mxu0
  %v4402 = vadd.f32 %v4341, %v4401
  %4403 = vmatprep.mubr.bf16.mxu0 0
  %4404 = vmatmul.mubr.bf16.gmra.mrb[0].mxu0 %v978
  %v4405 = vpop.f32.mrb[0].mxu0
  %v4406 = vadd.f32 %v4345, %v4405
  %v4407 = vpop.f32.mrb[0].mxu0
  %v4408 = vadd.f32 %v4347, %v4407
  %v4409 = vpop.f32.mrb[0].mxu0
  %v4410 = vadd.f32 %v4349, %v4409
  %v4411 = vpop.f32.mrb[0].mxu0
  %v4412 = vadd.f32 %v4351, %v4411
  %4413 = vmatprep.mubr.bf16.mxu0 0
  %4414 = vmatmul.mubr.bf16.gmra.mrb[0].mxu0 %v999
  %v4415 = vpop.f32.mrb[0].mxu0
  %v4416 = vadd.f32 %v4355, %v4415
  %v4417 = vpop.f32.mrb[0].mxu0
  %v4418 = vadd.f32 %v4357, %v4417
  %v4419 = vpop.f32.mrb[0].mxu0
  %v4420 = vpop.f32.mrb[0].mxu0
  %4421 = vdwg.mxu0
  %4422 = vmatprep.subr.bf16.mxu0 0
  %4423 = vmatpush1.bf16.msra.mxu0 %v2745
  %4424 = vmatprep.subr.bf16.mxu0 0
  %4425 = vmatpush1.bf16.msra.mxu0 %v2748
  %4426 = vmatprep.subr.bf16.mxu0 0
  %4427 = vmatpush1.bf16.msra.mxu0 %v2751
  %4428 = vmatprep.subr.bf16.mxu0 0
  %4429 = vmatpush1.bf16.msra.mxu0 %v2754
  %4430 = vmatprep.subr.bf16.mxu0 0
  %4431 = vmatpush1.bf16.msra.mxu0 %v2757
  %4432 = vmatprep.subr.bf16.mxu0 0
  %4433 = vmatpush1.bf16.msra.mxu0 %v2760
  %4434 = vmatprep.subr.bf16.mxu0 0
  %4435 = vmatpush1.bf16.msra.mxu0 %v2763
  %4436 = vmatprep.subr.bf16.mxu0 0
  %4437 = vmatpush1.bf16.msra.mxu0 %v2766
  %4438 = vmatprep.subr.bf16.mxu0 0
  %4439 = vmatpush1.bf16.msra.mxu0 %v2769
  %4440 = vmatprep.subr.bf16.mxu0 0
  %4441 = vmatpush1.bf16.msra.mxu0 %v2772
  %4442 = vmatprep.subr.bf16.mxu0 0
  %4443 = vmatpush1.bf16.msra.mxu0 %v2775
  %4444 = vmatprep.subr.bf16.mxu0 0
  %4445 = vmatpush1.bf16.msra.mxu0 %v2778
  %4446 = vmatprep.subr.bf16.mxu0 0
  %4447 = vmatpush1.bf16.msra.mxu0 %v2781
  %4448 = vmatprep.subr.bf16.mxu0 0
  %4449 = vmatpush1.bf16.msra.mxu0 %v2784
  %4450 = vmatprep.subr.bf16.mxu0 0
  %4451 = vmatpush1.bf16.msra.mxu0 %v2787
  %4452 = vmatprep.subr.bf16.mxu0 0
  %4453 = vmatpush1.bf16.msra.mxu0 %v2790
  %4454 = vmatprep.mubr.bf16.mxu0 %v938
  %4455 = vmatmul.mubr.bf16.gmra.mrb[0].mxu0 %v937
  %v4456 = vpop.f32.mrb[0].mxu0
  %v4457 = vadd.f32 %v773, %v4456
  %v4458 = vpop.f32.mrb[0].mxu0
  %v4459 = vpop.f32.mrb[0].mxu0
  %v4460 = vadd.f32 %v773, %v4459
  %v4461 = vpop.f32.mrb[0].mxu0
  %4462 = vmatprep.mubr.bf16.mxu0 %v959
  %4463 = vmatmul.mubr.bf16.gmra.mrb[0].mxu0 %v958
  %v4464 = vpop.f32.mrb[0].mxu0
  %v4465 = vadd.f32 %v773, %v4464
  %v4466 = vpop.f32.mrb[0].mxu0
  %v4467 = vpop.f32.mrb[0].mxu0
  %v4468 = vadd.f32 %v773, %v4467
  %v4469 = vpop.f32.mrb[0].mxu0
  %4470 = vmatprep.mubr.bf16.mxu0 %v980
  %4471 = vmatmul.mubr.bf16.gmra.mrb[0].mxu0 %v979
  %v4472 = vpop.f32.mrb[0].mxu0
  %v4473 = vadd.f32 %v773, %v4472
  %v4474 = vpop.f32.mrb[0].mxu0
  %v4475 = vpop.f32.mrb[0].mxu0
  %v4476 = vpop.f32.mrb[0].mxu0
  %4477 = vdwg.mxu0
  %4478 = vmatprep.subr.bf16.mxu0 0
  %4479 = vmatpush1.bf16.msra.mxu0 %v2793
  %4480 = vmatprep.subr.bf16.mxu0 0
  %4481 = vmatpush1.bf16.msra.mxu0 %v2796
  %4482 = vmatprep.subr.bf16.mxu0 0
  %4483 = vmatpush1.bf16.msra.mxu0 %v2799
  %4484 = vmatprep.subr.bf16.mxu0 0
  %4485 = vmatpush1.bf16.msra.mxu0 %v2802
  %4486 = vmatprep.subr.bf16.mxu0 0
  %4487 = vmatpush1.bf16.msra.mxu0 %v2805
  %4488 = vmatprep.subr.bf16.mxu0 0
  %4489 = vmatpush1.bf16.msra.mxu0 %v2808
  %4490 = vmatprep.subr.bf16.mxu0 0
  %4491 = vmatpush1.bf16.msra.mxu0 %v2811
  %4492 = vmatprep.subr.bf16.mxu0 0
  %4493 = vmatpush1.bf16.msra.mxu0 %v2814
  %4494 = vmatprep.subr.bf16.mxu0 0
  %4495 = vmatpush1.bf16.msra.mxu0 %v2817
  %4496 = vmatprep.subr.bf16.mxu0 0
  %4497 = vmatpush1.bf16.msra.mxu0 %v2820
  %4498 = vmatprep.subr.bf16.mxu0 0
  %4499 = vmatpush1.bf16.msra.mxu0 %v2823
  %4500 = vmatprep.subr.bf16.mxu0 0
  %4501 = vmatpush1.bf16.msra.mxu0 %v2826
  %4502 = vmatprep.subr.bf16.mxu0 0
  %4503 = vmatpush1.bf16.msra.mxu0 %v2829
  %4504 = vmatprep.subr.bf16.mxu0 0
  %4505 = vmatpush1.bf16.msra.mxu0 %v2832
  %4506 = vmatprep.subr.bf16.mxu0 0
  %4507 = vmatpush1.bf16.msra.mxu0 %v2835
  %4508 = vmatprep.subr.bf16.mxu0 0
  %4509 = vmatpush1.bf16.msra.mxu0 %v2838
  %4510 = vmatprep.mubr.bf16.mxu0 %v940
  %4511 = vmatmul.mubr.bf16.gmra.mrb[0].mxu0 %v939
  %v4512 = vpop.f32.mrb[0].mxu0
  %v4513 = vadd.f32 %v4457, %v4512
  %v4514 = vpop.f32.mrb[0].mxu0
  %v4515 = vpop.f32.mrb[0].mxu0
  %v4516 = vadd.f32 %v4460, %v4515
  %v4517 = vpop.f32.mrb[0].mxu0
  %4518 = vmatprep.mubr.bf16.mxu0 %v961
  %4519 = vmatmul.mubr.bf16.gmra.mrb[0].mxu0 %v960
  %v4520 = vpop.f32.mrb[0].mxu0
  %v4521 = vadd.f32 %v4465, %v4520
  %v4522 = vpop.f32.mrb[0].mxu0
  %v4523 = vpop.f32.mrb[0].mxu0
  %v4524 = vadd.f32 %v4468, %v4523
  %v4525 = vpop.f32.mrb[0].mxu0
  %4526 = vmatprep.mubr.bf16.mxu0 %v982
  %4527 = vmatmul.mubr.bf16.gmra.mrb[0].mxu0 %v981
  %v4528 = vpop.f32.mrb[0].mxu0
  %v4529 = vadd.f32 %v4473, %v4528
  %v4530 = vpop.f32.mrb[0].mxu0
  %v4531 = vpop.f32.mrb[0].mxu0
  %v4532 = vpop.f32.mrb[0].mxu0
  %4533 = vdwg.mxu0
  %4534 = vmatprep.subr.bf16.mxu0 0
  %4535 = vmatpush1.bf16.msra.mxu0 %v2841
  %4536 = vmatprep.subr.bf16.mxu0 0
  %4537 = vmatpush1.bf16.msra.mxu0 %v2844
  %4538 = vmatprep.subr.bf16.mxu0 0
  %4539 = vmatpush1.bf16.msra.mxu0 %v2847
  %4540 = vmatprep.subr.bf16.mxu0 0
  %4541 = vmatpush1.bf16.msra.mxu0 %v2850
  %4542 = vmatprep.subr.bf16.mxu0 0
  %4543 = vmatpush1.bf16.msra.mxu0 %v2853
  %4544 = vmatprep.subr.bf16.mxu0 0
  %4545 = vmatpush1.bf16.msra.mxu0 %v2856
  %4546 = vmatprep.subr.bf16.mxu0 0
  %4547 = vmatpush1.bf16.msra.mxu0 %v2859
  %4548 = vmatprep.subr.bf16.mxu0 0
  %4549 = vmatpush1.bf16.msra.mxu0 %v2862
  %4550 = vmatprep.subr.bf16.mxu0 0
  %4551 = vmatpush1.bf16.msra.mxu0 %v2865
  %4552 = vmatprep.subr.bf16.mxu0 0
  %4553 = vmatpush1.bf16.msra.mxu0 %v2868
  %4554 = vmatprep.subr.bf16.mxu0 0
  %4555 = vmatpush1.bf16.msra.mxu0 %v2871
  %4556 = vmatprep.subr.bf16.mxu0 0
  %4557 = vmatpush1.bf16.msra.mxu0 %v2874
  %4558 = vmatprep.subr.bf16.mxu0 0
  %4559 = vmatpush1.bf16.msra.mxu0 %v2877
  %4560 = vmatprep.subr.bf16.mxu0 0
  %4561 = vmatpush1.bf16.msra.mxu0 %v2880
  %4562 = vmatprep.subr.bf16.mxu0 0
  %4563 = vmatpush1.bf16.msra.mxu0 %v2883
  %4564 = vmatprep.subr.bf16.mxu0 0
  %4565 = vmatpush1.bf16.msra.mxu0 %v2886
  %4566 = vmatprep.mubr.bf16.mxu0 %v942
  %4567 = vmatmul.mubr.bf16.gmra.mrb[0].mxu0 %v941
  %v4568 = vpop.f32.mrb[0].mxu0
  %v4569 = vadd.f32 %v4513, %v4568
  %v4570 = vpop.f32.mrb[0].mxu0
  %v4571 = vpop.f32.mrb[0].mxu0
  %v4572 = vadd.f32 %v4516, %v4571
  %v4573 = vpop.f32.mrb[0].mxu0
  %4574 = vmatprep.mubr.bf16.mxu0 %v963
  %4575 = vmatmul.mubr.bf16.gmra.mrb[0].mxu0 %v962
  %v4576 = vpop.f32.mrb[0].mxu0
  %v4577 = vadd.f32 %v4521, %v4576
  %v4578 = vpop.f32.mrb[0].mxu0
  %v4579 = vpop.f32.mrb[0].mxu0
  %v4580 = vadd.f32 %v4524, %v4579
  %v4581 = vpop.f32.mrb[0].mxu0
  %4582 = vmatprep.mubr.bf16.mxu0 %v984
  %4583 = vmatmul.mubr.bf16.gmra.mrb[0].mxu0 %v983
  %v4584 = vpop.f32.mrb[0].mxu0
  %v4585 = vadd.f32 %v4529, %v4584
  %v4586 = vpop.f32.mrb[0].mxu0
  %v4587 = vpop.f32.mrb[0].mxu0
  %v4588 = vpop.f32.mrb[0].mxu0
  %4589 = vdwg.mxu0
  %4590 = vmatprep.subr.bf16.mxu0 0
  %4591 = vmatpush1.bf16.msra.mxu0 %v2889
  %4592 = vmatprep.subr.bf16.mxu0 0
  %4593 = vmatpush1.bf16.msra.mxu0 %v2892
  %4594 = vmatprep.subr.bf16.mxu0 0
  %4595 = vmatpush1.bf16.msra.mxu0 %v2895
  %4596 = vmatprep.subr.bf16.mxu0 0
  %4597 = vmatpush1.bf16.msra.mxu0 %v2898
  %4598 = vmatprep.subr.bf16.mxu0 0
  %4599 = vmatpush1.bf16.msra.mxu0 %v2901
  %4600 = vmatprep.subr.bf16.mxu0 0
  %4601 = vmatpush1.bf16.msra.mxu0 %v2904
  %4602 = vmatprep.subr.bf16.mxu0 0
  %4603 = vmatpush1.bf16.msra.mxu0 %v2907
  %4604 = vmatprep.subr.bf16.mxu0 0
  %4605 = vmatpush1.bf16.msra.mxu0 %v2910
  %4606 = vmatprep.subr.bf16.mxu0 0
  %4607 = vmatpush1.bf16.msra.mxu0 %v2913
  %4608 = vmatprep.subr.bf16.mxu0 0
  %4609 = vmatpush1.bf16.msra.mxu0 %v2916
  %4610 = vmatprep.subr.bf16.mxu0 0
  %4611 = vmatpush1.bf16.msra.mxu0 %v2919
  %4612 = vmatprep.subr.bf16.mxu0 0
  %4613 = vmatpush1.bf16.msra.mxu0 %v2922
  %4614 = vmatprep.subr.bf16.mxu0 0
  %4615 = vmatpush1.bf16.msra.mxu0 %v2925
  %4616 = vmatprep.subr.bf16.mxu0 0
  %4617 = vmatpush1.bf16.msra.mxu0 %v2928
  %4618 = vmatprep.subr.bf16.mxu0 0
  %4619 = vmatpush1.bf16.msra.mxu0 %v2931
  %4620 = vmatprep.subr.bf16.mxu0 0
  %4621 = vmatpush1.bf16.msra.mxu0 %v2934
  %4622 = vmatprep.mubr.bf16.mxu0 %v944
  %4623 = vmatmul.mubr.bf16.gmra.mrb[0].mxu0 %v943
  %v4624 = vpop.f32.mrb[0].mxu0
  %v4625 = vadd.f32 %v4569, %v4624
  %v4626 = vpop.f32.mrb[0].mxu0
  %v4627 = vpop.f32.mrb[0].mxu0
  %v4628 = vadd.f32 %v4572, %v4627
  %v4629 = vpop.f32.mrb[0].mxu0
  %4630 = vmatprep.mubr.bf16.mxu0 %v965
  %4631 = vmatmul.mubr.bf16.gmra.mrb[0].mxu0 %v964
  %v4632 = vpop.f32.mrb[0].mxu0
  %v4633 = vadd.f32 %v4577, %v4632
  %v4634 = vpop.f32.mrb[0].mxu0
  %v4635 = vpop.f32.mrb[0].mxu0
  %v4636 = vadd.f32 %v4580, %v4635
  %v4637 = vpop.f32.mrb[0].mxu0
  %4638 = vmatprep.mubr.bf16.mxu0 %v986
  %4639 = vmatmul.mubr.bf16.gmra.mrb[0].mxu0 %v985
  %v4640 = vpop.f32.mrb[0].mxu0
  %v4641 = vadd.f32 %v4585, %v4640
  %v4642 = vpop.f32.mrb[0].mxu0
  %v4643 = vpop.f32.mrb[0].mxu0
  %v4644 = vpop.f32.mrb[0].mxu0
  %4645 = vdwg.mxu0
  %4646 = vmatprep.subr.bf16.mxu0 0
  %4647 = vmatpush1.bf16.msra.mxu0 %v2937
  %4648 = vmatprep.subr.bf16.mxu0 0
  %4649 = vmatpush1.bf16.msra.mxu0 %v2940
  %4650 = vmatprep.subr.bf16.mxu0 0
  %4651 = vmatpush1.bf16.msra.mxu0 %v2943
  %4652 = vmatprep.subr.bf16.mxu0 0
  %4653 = vmatpush1.bf16.msra.mxu0 %v2946
  %4654 = vmatprep.subr.bf16.mxu0 0
  %4655 = vmatpush1.bf16.msra.mxu0 %v2949
  %4656 = vmatprep.subr.bf16.mxu0 0
  %4657 = vmatpush1.bf16.msra.mxu0 %v2952
  %4658 = vmatprep.subr.bf16.mxu0 0
  %4659 = vmatpush1.bf16.msra.mxu0 %v2955
  %4660 = vmatprep.subr.bf16.mxu0 0
  %4661 = vmatpush1.bf16.msra.mxu0 %v2958
  %4662 = vmatprep.subr.bf16.mxu0 0
  %4663 = vmatpush1.bf16.msra.mxu0 %v2961
  %4664 = vmatprep.subr.bf16.mxu0 0
  %4665 = vmatpush1.bf16.msra.mxu0 %v2964
  %4666 = vmatprep.subr.bf16.mxu0 0
  %4667 = vmatpush1.bf16.msra.mxu0 %v2967
  %4668 = vmatprep.subr.bf16.mxu0 0
  %4669 = vmatpush1.bf16.msra.mxu0 %v2970
  %4670 = vmatprep.subr.bf16.mxu0 0
  %4671 = vmatpush1.bf16.msra.mxu0 %v2973
  %4672 = vmatprep.subr.bf16.mxu0 0
  %4673 = vmatpush1.bf16.msra.mxu0 %v2976
  %4674 = vmatprep.subr.bf16.mxu0 0
  %4675 = vmatpush1.bf16.msra.mxu0 %v2979
  %4676 = vmatprep.subr.bf16.mxu0 0
  %4677 = vmatpush1.bf16.msra.mxu0 %v2982
  %4678 = vmatprep.mubr.bf16.mxu0 %v946
  %4679 = vmatmul.mubr.bf16.gmra.mrb[0].mxu0 %v945
  %v4680 = vpop.f32.mrb[0].mxu0
  %v4681 = vadd.f32 %v4625, %v4680
  %v4682 = vpop.f32.mrb[0].mxu0
  %v4683 = vpop.f32.mrb[0].mxu0
  %v4684 = vadd.f32 %v4628, %v4683
  %v4685 = vpop.f32.mrb[0].mxu0
  %4686 = vmatprep.mubr.bf16.mxu0 %v967
  %4687 = vmatmul.mubr.bf16.gmra.mrb[0].mxu0 %v966
  %v4688 = vpop.f32.mrb[0].mxu0
  %v4689 = vadd.f32 %v4633, %v4688
  %v4690 = vpop.f32.mrb[0].mxu0
  %v4691 = vpop.f32.mrb[0].mxu0
  %v4692 = vadd.f32 %v4636, %v4691
  %v4693 = vpop.f32.mrb[0].mxu0
  %4694 = vmatprep.mubr.bf16.mxu0 %v988
  %4695 = vmatmul.mubr.bf16.gmra.mrb[0].mxu0 %v987
  %v4696 = vpop.f32.mrb[0].mxu0
  %v4697 = vadd.f32 %v4641, %v4696
  %v4698 = vpop.f32.mrb[0].mxu0
  %v4699 = vpop.f32.mrb[0].mxu0
  %v4700 = vpop.f32.mrb[0].mxu0
  %4701 = vdwg.mxu0
  %4702 = vmatprep.subr.bf16.mxu0 0
  %4703 = vmatpush1.bf16.msra.mxu0 %v2985
  %4704 = vmatprep.subr.bf16.mxu0 0
  %4705 = vmatpush1.bf16.msra.mxu0 %v2988
  %4706 = vmatprep.subr.bf16.mxu0 0
  %4707 = vmatpush1.bf16.msra.mxu0 %v2991
  %4708 = vmatprep.subr.bf16.mxu0 0
  %4709 = vmatpush1.bf16.msra.mxu0 %v2994
  %4710 = vmatprep.subr.bf16.mxu0 0
  %4711 = vmatpush1.bf16.msra.mxu0 %v2997
  %4712 = vmatprep.subr.bf16.mxu0 0
  %4713 = vmatpush1.bf16.msra.mxu0 %v3000
  %4714 = vmatprep.subr.bf16.mxu0 0
  %4715 = vmatpush1.bf16.msra.mxu0 %v3003
  %4716 = vmatprep.subr.bf16.mxu0 0
  %4717 = vmatpush1.bf16.msra.mxu0 %v3006
  %4718 = vmatprep.subr.bf16.mxu0 0
  %4719 = vmatpush1.bf16.msra.mxu0 %v3009
  %4720 = vmatprep.subr.bf16.mxu0 0
  %4721 = vmatpush1.bf16.msra.mxu0 %v3012
  %4722 = vmatprep.subr.bf16.mxu0 0
  %4723 = vmatpush1.bf16.msra.mxu0 %v3015
  %4724 = vmatprep.subr.bf16.mxu0 0
  %4725 = vmatpush1.bf16.msra.mxu0 %v3018
  %4726 = vmatprep.subr.bf16.mxu0 0
  %4727 = vmatpush1.bf16.msra.mxu0 %v3021
  %4728 = vmatprep.subr.bf16.mxu0 0
  %4729 = vmatpush1.bf16.msra.mxu0 %v3024
  %4730 = vmatprep.subr.bf16.mxu0 0
  %4731 = vmatpush1.bf16.msra.mxu0 %v3027
  %4732 = vmatprep.subr.bf16.mxu0 0
  %4733 = vmatpush1.bf16.msra.mxu0 %v3030
  %4734 = vmatprep.mubr.bf16.mxu0 %v948
  %4735 = vmatmul.mubr.bf16.gmra.mrb[0].mxu0 %v947
  %v4736 = vpop.f32.mrb[0].mxu0
  %v4737 = vadd.f32 %v4681, %v4736
  %v4738 = vpop.f32.mrb[0].mxu0
  %v4739 = vpop.f32.mrb[0].mxu0
  %v4740 = vadd.f32 %v4684, %v4739
  %v4741 = vpop.f32.mrb[0].mxu0
  %4742 = vmatprep.mubr.bf16.mxu0 %v969
  %4743 = vmatmul.mubr.bf16.gmra.mrb[0].mxu0 %v968
  %v4744 = vpop.f32.mrb[0].mxu0
  %v4745 = vadd.f32 %v4689, %v4744
  %v4746 = vpop.f32.mrb[0].mxu0
  %v4747 = vpop.f32.mrb[0].mxu0
  %v4748 = vadd.f32 %v4692, %v4747
  %v4749 = vpop.f32.mrb[0].mxu0
  %4750 = vmatprep.mubr.bf16.mxu0 %v990
  %4751 = vmatmul.mubr.bf16.gmra.mrb[0].mxu0 %v989
  %v4752 = vpop.f32.mrb[0].mxu0
  %v4753 = vadd.f32 %v4697, %v4752
  %v4754 = vpop.f32.mrb[0].mxu0
  %v4755 = vpop.f32.mrb[0].mxu0
  %v4756 = vpop.f32.mrb[0].mxu0
  %4757 = vdwg.mxu0
  %4758 = vmatprep.subr.bf16.mxu0 0
  %4759 = vmatpush1.bf16.msra.mxu0 %v3033
  %4760 = vmatprep.subr.bf16.mxu0 0
  %4761 = vmatpush1.bf16.msra.mxu0 %v3036
  %4762 = vmatprep.subr.bf16.mxu0 0
  %4763 = vmatpush1.bf16.msra.mxu0 %v3039
  %4764 = vmatprep.subr.bf16.mxu0 0
  %4765 = vmatpush1.bf16.msra.mxu0 %v3042
  %4766 = vmatprep.subr.bf16.mxu0 0
  %4767 = vmatpush1.bf16.msra.mxu0 %v3045
  %4768 = vmatprep.subr.bf16.mxu0 0
  %4769 = vmatpush1.bf16.msra.mxu0 %v3048
  %4770 = vmatprep.subr.bf16.mxu0 0
  %4771 = vmatpush1.bf16.msra.mxu0 %v3051
  %4772 = vmatprep.subr.bf16.mxu0 0
  %4773 = vmatpush1.bf16.msra.mxu0 %v3054
  %4774 = vmatprep.subr.bf16.mxu0 0
  %4775 = vmatpush1.bf16.msra.mxu0 %v3057
  %4776 = vmatprep.subr.bf16.mxu0 0
  %4777 = vmatpush1.bf16.msra.mxu0 %v3060
  %4778 = vmatprep.subr.bf16.mxu0 0
  %4779 = vmatpush1.bf16.msra.mxu0 %v3063
  %4780 = vmatprep.subr.bf16.mxu0 0
  %4781 = vmatpush1.bf16.msra.mxu0 %v3066
  %4782 = vmatprep.subr.bf16.mxu0 0
  %4783 = vmatpush1.bf16.msra.mxu0 %v3069
  %4784 = vmatprep.subr.bf16.mxu0 0
  %4785 = vmatpush1.bf16.msra.mxu0 %v3072
  %4786 = vmatprep.subr.bf16.mxu0 0
  %4787 = vmatpush1.bf16.msra.mxu0 %v3075
  %4788 = vmatprep.subr.bf16.mxu0 0
  %4789 = vmatpush1.bf16.msra.mxu0 %v3078
  %4790 = vmatprep.mubr.bf16.mxu0 %v950
  %4791 = vmatmul.mubr.bf16.gmra.mrb[0].mxu0 %v949
  %v4792 = vpop.f32.mrb[0].mxu0
  %v4793 = vadd.f32 %v4737, %v4792
  %v4794 = vpop.f32.mrb[0].mxu0
  %v4795 = vpop.f32.mrb[0].mxu0
  %v4796 = vadd.f32 %v4740, %v4795
  %v4797 = vpop.f32.mrb[0].mxu0
  %4798 = vmatprep.mubr.bf16.mxu0 %v971
  %4799 = vmatmul.mubr.bf16.gmra.mrb[0].mxu0 %v970
  %v4800 = vpop.f32.mrb[0].mxu0
  %v4801 = vadd.f32 %v4745, %v4800
  %v4802 = vpop.f32.mrb[0].mxu0
  %v4803 = vpop.f32.mrb[0].mxu0
  %v4804 = vadd.f32 %v4748, %v4803
  %v4805 = vpop.f32.mrb[0].mxu0
  %4806 = vmatprep.mubr.bf16.mxu0 %v992
  %4807 = vmatmul.mubr.bf16.gmra.mrb[0].mxu0 %v991
  %v4808 = vpop.f32.mrb[0].mxu0
  %v4809 = vadd.f32 %v4753, %v4808
  %v4810 = vpop.f32.mrb[0].mxu0
  %v4811 = vpop.f32.mrb[0].mxu0
  %v4812 = vpop.f32.mrb[0].mxu0
  %4813 = vdwg.mxu0
  %4814 = vmatprep.subr.bf16.mxu0 0
  %4815 = vmatpush1.bf16.msra.mxu0 %v3081
  %4816 = vmatprep.subr.bf16.mxu0 0
  %4817 = vmatpush1.bf16.msra.mxu0 %v3084
  %4818 = vmatprep.subr.bf16.mxu0 0
  %4819 = vmatpush1.bf16.msra.mxu0 %v3087
  %4820 = vmatprep.subr.bf16.mxu0 0
  %4821 = vmatpush1.bf16.msra.mxu0 %v3090
  %4822 = vmatprep.subr.bf16.mxu0 0
  %4823 = vmatpush1.bf16.msra.mxu0 %v3093
  %4824 = vmatprep.subr.bf16.mxu0 0
  %4825 = vmatpush1.bf16.msra.mxu0 %v3096
  %4826 = vmatprep.subr.bf16.mxu0 0
  %4827 = vmatpush1.bf16.msra.mxu0 %v3099
  %4828 = vmatprep.subr.bf16.mxu0 0
  %4829 = vmatpush1.bf16.msra.mxu0 %v3102
  %4830 = vmatprep.subr.bf16.mxu0 0
  %4831 = vmatpush1.bf16.msra.mxu0 %v3105
  %4832 = vmatprep.subr.bf16.mxu0 0
  %4833 = vmatpush1.bf16.msra.mxu0 %v3108
  %4834 = vmatprep.subr.bf16.mxu0 0
  %4835 = vmatpush1.bf16.msra.mxu0 %v3111
  %4836 = vmatprep.subr.bf16.mxu0 0
  %4837 = vmatpush1.bf16.msra.mxu0 %v3114
  %4838 = vmatprep.subr.bf16.mxu0 0
  %4839 = vmatpush1.bf16.msra.mxu0 %v3117
  %4840 = vmatprep.subr.bf16.mxu0 0
  %4841 = vmatpush1.bf16.msra.mxu0 %v3120
  %4842 = vmatprep.subr.bf16.mxu0 0
  %4843 = vmatpush1.bf16.msra.mxu0 %v3123
  %4844 = vmatprep.subr.bf16.mxu0 0
  %4845 = vmatpush1.bf16.msra.mxu0 %v3126
  %4846 = vmatprep.mubr.bf16.mxu0 %v952
  %4847 = vmatmul.mubr.bf16.gmra.mrb[0].mxu0 %v951
  %v4848 = vpop.f32.mrb[0].mxu0
  %v4849 = vadd.f32 %v4793, %v4848
  %v4850 = vpop.f32.mrb[0].mxu0
  %v4851 = vpop.f32.mrb[0].mxu0
  %v4852 = vadd.f32 %v4796, %v4851
  %v4853 = vpop.f32.mrb[0].mxu0
  %4854 = vmatprep.mubr.bf16.mxu0 %v973
  %4855 = vmatmul.mubr.bf16.gmra.mrb[0].mxu0 %v972
  %v4856 = vpop.f32.mrb[0].mxu0
  %v4857 = vadd.f32 %v4801, %v4856
  %v4858 = vpop.f32.mrb[0].mxu0
  %v4859 = vpop.f32.mrb[0].mxu0
  %v4860 = vadd.f32 %v4804, %v4859
  %v4861 = vpop.f32.mrb[0].mxu0
  %4862 = vmatprep.mubr.bf16.mxu0 %v994
  %4863 = vmatmul.mubr.bf16.gmra.mrb[0].mxu0 %v993
  %v4864 = vpop.f32.mrb[0].mxu0
  %v4865 = vadd.f32 %v4809, %v4864
  %v4866 = vpop.f32.mrb[0].mxu0
  %v4867 = vpop.f32.mrb[0].mxu0
  %v4868 = vpop.f32.mrb[0].mxu0
  %4869 = vdwg.mxu0
  %4870 = vmatprep.subr.bf16.mxu0 0
  %4871 = vmatpush1.bf16.msra.mxu0 %v3129
  %4872 = vmatprep.subr.bf16.mxu0 0
  %4873 = vmatpush1.bf16.msra.mxu0 %v3132
  %4874 = vmatprep.subr.bf16.mxu0 0
  %4875 = vmatpush1.bf16.msra.mxu0 %v3135
  %4876 = vmatprep.subr.bf16.mxu0 0
  %4877 = vmatpush1.bf16.msra.mxu0 %v3138
  %4878 = vmatprep.subr.bf16.mxu0 0
  %4879 = vmatpush1.bf16.msra.mxu0 %v3141
  %4880 = vmatprep.subr.bf16.mxu0 0
  %4881 = vmatpush1.bf16.msra.mxu0 %v3144
  %4882 = vmatprep.subr.bf16.mxu0 0
  %4883 = vmatpush1.bf16.msra.mxu0 %v3147
  %4884 = vmatprep.subr.bf16.mxu0 0
  %4885 = vmatpush1.bf16.msra.mxu0 %v3150
  %4886 = vmatprep.subr.bf16.mxu0 0
  %4887 = vmatpush1.bf16.msra.mxu0 %v3153
  %4888 = vmatprep.subr.bf16.mxu0 0
  %4889 = vmatpush1.bf16.msra.mxu0 %v3156
  %4890 = vmatprep.subr.bf16.mxu0 0
  %4891 = vmatpush1.bf16.msra.mxu0 %v3159
  %4892 = vmatprep.subr.bf16.mxu0 0
  %4893 = vmatpush1.bf16.msra.mxu0 %v3162
  %4894 = vmatprep.subr.bf16.mxu0 0
  %4895 = vmatpush1.bf16.msra.mxu0 %v3165
  %4896 = vmatprep.subr.bf16.mxu0 0
  %4897 = vmatpush1.bf16.msra.mxu0 %v3168
  %4898 = vmatprep.subr.bf16.mxu0 0
  %4899 = vmatpush1.bf16.msra.mxu0 %v3171
  %4900 = vmatprep.subr.bf16.mxu0 0
  %4901 = vmatpush1.bf16.msra.mxu0 %v3174
  %4902 = vmatprep.mubr.bf16.mxu0 %v954
  %4903 = vmatmul.mubr.bf16.gmra.mrb[0].mxu0 %v953
  %v4904 = vpop.f32.mrb[0].mxu0
  %v4905 = vadd.f32 %v4849, %v4904
  %v4906 = vpop.f32.mrb[0].mxu0
  %v4907 = vpop.f32.mrb[0].mxu0
  %v4908 = vadd.f32 %v4852, %v4907
  %v4909 = vpop.f32.mrb[0].mxu0
  %4910 = vmatprep.mubr.bf16.mxu0 %v975
  %4911 = vmatmul.mubr.bf16.gmra.mrb[0].mxu0 %v974
  %v4912 = vpop.f32.mrb[0].mxu0
  %v4913 = vadd.f32 %v4857, %v4912
  %v4914 = vpop.f32.mrb[0].mxu0
  %v4915 = vpop.f32.mrb[0].mxu0
  %v4916 = vadd.f32 %v4860, %v4915
  %v4917 = vpop.f32.mrb[0].mxu0
  %4918 = vmatprep.mubr.bf16.mxu0 %v996
  %4919 = vmatmul.mubr.bf16.gmra.mrb[0].mxu0 %v995
  %v4920 = vpop.f32.mrb[0].mxu0
  %v4921 = vadd.f32 %v4865, %v4920
  %v4922 = vpop.f32.mrb[0].mxu0
  %v4923 = vpop.f32.mrb[0].mxu0
  %v4924 = vpop.f32.mrb[0].mxu0
  %4925 = vdwg.mxu0
  %4926 = vmatprep.subr.bf16.mxu0 0
  %4927 = vmatpush1.bf16.msra.mxu0 %v3177
  %4928 = vmatprep.subr.bf16.mxu0 0
  %4929 = vmatpush1.bf16.msra.mxu0 %v3180
  %4930 = vmatprep.subr.bf16.mxu0 0
  %4931 = vmatpush1.bf16.msra.mxu0 %v3183
  %4932 = vmatprep.subr.bf16.mxu0 0
  %4933 = vmatpush1.bf16.msra.mxu0 %v3186
  %4934 = vmatprep.subr.bf16.mxu0 0
  %4935 = vmatpush1.bf16.msra.mxu0 %v3189
  %4936 = vmatprep.subr.bf16.mxu0 0
  %4937 = vmatpush1.bf16.msra.mxu0 %v3192
  %4938 = vmatprep.subr.bf16.mxu0 0
  %4939 = vmatpush1.bf16.msra.mxu0 %v3195
  %4940 = vmatprep.subr.bf16.mxu0 0
  %4941 = vmatpush1.bf16.msra.mxu0 %v3198
  %4942 = vmatprep.subr.bf16.mxu0 0
  %4943 = vmatpush1.bf16.msra.mxu0 %v3201
  %4944 = vmatprep.subr.bf16.mxu0 0
  %4945 = vmatpush1.bf16.msra.mxu0 %v3204
  %4946 = vmatprep.subr.bf16.mxu0 0
  %4947 = vmatpush1.bf16.msra.mxu0 %v3207
  %4948 = vmatprep.subr.bf16.mxu0 0
  %4949 = vmatpush1.bf16.msra.mxu0 %v3210
  %4950 = vmatprep.subr.bf16.mxu0 0
  %4951 = vmatpush1.bf16.msra.mxu0 %v3213
  %4952 = vmatprep.subr.bf16.mxu0 0
  %4953 = vmatpush1.bf16.msra.mxu0 %v3216
  %4954 = vmatprep.subr.bf16.mxu0 0
  %4955 = vmatpush1.bf16.msra.mxu0 %v3219
  %4956 = vmatprep.subr.bf16.mxu0 0
  %4957 = vmatpush1.bf16.msra.mxu0 %v3222
  %4958 = vmatprep.mubr.bf16.mxu0 %v956
  %4959 = vmatmul.mubr.bf16.gmra.mrb[0].mxu0 %v955
  %v4960 = vpop.f32.mrb[0].mxu0
  %v4961 = vadd.f32 %v4905, %v4960
  %v4962 = vpop.f32.mrb[0].mxu0
  %v4963 = vpop.f32.mrb[0].mxu0
  %v4964 = vadd.f32 %v4908, %v4963
  %v4965 = vpop.f32.mrb[0].mxu0
  %4966 = vmatprep.mubr.bf16.mxu0 %v977
  %4967 = vmatmul.mubr.bf16.gmra.mrb[0].mxu0 %v976
  %v4968 = vpop.f32.mrb[0].mxu0
  %v4969 = vadd.f32 %v4913, %v4968
  %v4970 = vpop.f32.mrb[0].mxu0
  %v4971 = vpop.f32.mrb[0].mxu0
  %v4972 = vadd.f32 %v4916, %v4971
  %v4973 = vpop.f32.mrb[0].mxu0
  %4974 = vmatprep.mubr.bf16.mxu0 %v998
  %4975 = vmatmul.mubr.bf16.gmra.mrb[0].mxu0 %v997
  %v4976 = vpop.f32.mrb[0].mxu0
  %v4977 = vadd.f32 %v4921, %v4976
  %v4978 = vpop.f32.mrb[0].mxu0
  %v4979 = vpop.f32.mrb[0].mxu0
  %v4980 = vpop.f32.mrb[0].mxu0
  %4981 = vdwg.mxu0
  %4982 = vmatprep.subr.bf16.mxu0 0
  %4983 = vmatpush1.bf16.msra.mxu0 %v3225
  %4984 = vmatprep.subr.bf16.mxu0 0
  %4985 = vmatpush1.bf16.msra.mxu0 %v3228
  %4986 = vmatprep.subr.bf16.mxu0 0
  %4987 = vmatpush1.bf16.msra.mxu0 %v3231
  %4988 = vmatprep.subr.bf16.mxu0 0
  %4989 = vmatpush1.bf16.msra.mxu0 %v3234
  %4990 = vmatprep.subr.bf16.mxu0 0
  %4991 = vmatpush1.bf16.msra.mxu0 %v3237
  %4992 = vmatprep.subr.bf16.mxu0 0
  %4993 = vmatpush1.bf16.msra.mxu0 %v3240
  %4994 = vmatprep.subr.bf16.mxu0 0
  %4995 = vmatpush1.bf16.msra.mxu0 %v3243
  %4996 = vmatprep.subr.bf16.mxu0 0
  %4997 = vmatpush1.bf16.msra.mxu0 %v3246
  %4998 = vmatprep.subr.bf16.mxu0 0
  %4999 = vmatpush1.bf16.msra.mxu0 0
  %5000 = vmatprep.subr.bf16.mxu0 0
  %5001 = vmatpush1.bf16.msra.mxu0 0
  %5002 = vmatprep.subr.bf16.mxu0 0
  %5003 = vmatpush1.bf16.msra.mxu0 0
  %5004 = vmatprep.subr.bf16.mxu0 0
  %5005 = vmatpush1.bf16.msra.mxu0 0
  %5006 = vmatprep.subr.bf16.mxu0 0
  %5007 = vmatpush1.bf16.msra.mxu0 0
  %5008 = vmatprep.subr.bf16.mxu0 0
  %5009 = vmatpush1.bf16.msra.mxu0 0
  %5010 = vmatprep.subr.bf16.mxu0 0
  %5011 = vmatpush1.bf16.msra.mxu0 0
  %5012 = vmatprep.subr.bf16.mxu0 0
  %5013 = vmatpush1.bf16.msra.mxu0 0
  %5014 = vmatprep.mubr.bf16.mxu0 0
  %5015 = vmatmul.mubr.bf16.gmra.mrb[0].mxu0 %v957
  %v5016 = vpop.f32.mrb[0].mxu0
  %v5017 = vadd.f32 %v4961, %v5016
  %v5018 = vpop.f32.mrb[0].mxu0
  %v5019 = vpop.f32.mrb[0].mxu0
  %v5020 = vadd.f32 %v4964, %v5019
  %v5021 = vpop.f32.mrb[0].mxu0
  %5022 = vmatprep.mubr.bf16.mxu0 0
  %5023 = vmatmul.mubr.bf16.gmra.mrb[0].mxu0 %v978
  %v5024 = vpop.f32.mrb[0].mxu0
  %v5025 = vadd.f32 %v4969, %v5024
  %v5026 = vpop.f32.mrb[0].mxu0
  %v5027 = vpop.f32.mrb[0].mxu0
  %v5028 = vadd.f32 %v4972, %v5027
  %v5029 = vpop.f32.mrb[0].mxu0
  %5030 = vmatprep.mubr.bf16.mxu0 0
  %5031 = vmatmul.mubr.bf16.gmra.mrb[0].mxu0 %v999
  %v5032 = vpop.f32.mrb[0].mxu0
  %v5033 = vadd.f32 %v4977, %v5032
  %v5034 = vpop.f32.mrb[0].mxu0
  %v5035 = vpop.f32.mrb[0].mxu0
  %v5036 = vpop.f32.mrb[0].mxu0
  %5037 = vdwg.mxu0
  %v5038 = vmax.f32 %v4396, 0.0
  %v5039 = vmax.f32 %v4398, 0.0
  %v5040 = vmax.f32 %v5017, 0.0
  %v5041 = vmax.f32 %v4400, 0.0
  %v5042 = vmax.f32 %v4402, 0.0
  %v5043 = vmax.f32 %v5020, 0.0
  %v5044 = vmax.f32 %v4406, 0.0
  %v5045 = vmax.f32 %v4408, 0.0
  %v5046 = vmax.f32 %v5025, 0.0
  %v5047 = vmax.f32 %v4410, 0.0
  %v5048 = vmax.f32 %v4412, 0.0
  %v5049 = vmax.f32 %v5028, 0.0
  %v5050 = vmax.f32 %v4416, 0.0
  %v5051 = vmax.f32 %v4418, 0.0
  %v5052 = vmax.f32 %v5033, 0.0
  %5053 = vst [vmem:[#allocation2] sm:$0xff] %v5038
  %5054 = vst [vmem:[#allocation2 + $0x8] sm:$0xff] %v5039
  %5055 = vst [vmem:[#allocation2 + $0x10] sm:$0xff] %v5040
  %5056 = vst [vmem:[#allocation2 + $0x18] sm:$0xff] %v5041
  %5057 = vst [vmem:[#allocation2 + $0x20] sm:$0xff] %v5042
  %5058 = vst [vmem:[#allocation2 + $0x28] sm:$0xff] %v5043
  %5059 = vst [vmem:[#allocation2 + $0x30] sm:$0xff] %v5044
  %5060 = vst [vmem:[#allocation2 + $0x38] sm:$0xff] %v5045
  %5061 = vst [vmem:[#allocation2 + $0x40] sm:$0xff] %v5046
  %5062 = vst [vmem:[#allocation2 + $0x48] sm:$0xff] %v5047
  %5063 = vst [vmem:[#allocation2 + $0x50] sm:$0xff] %v5048
  %5064 = vst [vmem:[#allocation2 + $0x58] sm:$0xff] %v5049
  %5065 = vst [vmem:[#allocation2 + $0x60] sm:$0xff] %v5050
  %5066 = vst [vmem:[#allocation2 + $0x68] sm:$0xff] %v5051
  %5067 = vst [vmem:[#allocation2 + $0x70] sm:$0xff] %v5052
  %v5068 = vld [vmem:[#allocation2] sm:$0xff]
  %v5069 = vld [vmem:[#allocation2 + $0x8] sm:$0xff]
  %v5070 = vld [vmem:[#allocation2 + $0x10] sm:$0xff]
  %v5071 = vld [vmem:[#allocation2 + $0x18] sm:$0xff]
  %v5072 = vld [vmem:[#allocation2 + $0x20] sm:$0xff]
  %v5073 = vld [vmem:[#allocation2 + $0x28] sm:$0xff]
  %v5074 = vld [vmem:[#allocation2 + $0x30] sm:$0x3]
  %v5075 = vld [vmem:[#allocation2 + $0x38] sm:$0x3]
  %v5076 = vld [vmem:[#allocation2 + $0x40] sm:$0x3]
  %v5077 = vld [vmem:[#allocation2 + $0x30] sm:$0xf0]
  %v5078 = vld [vmem:[#allocation2 + $0x38] sm:$0xf0]
  %v5079 = vld [vmem:[#allocation2 + $0x40] sm:$0xf0]
  %v5080 = vld [vmem:[#allocation2 + $0x48] sm:$0xff]
  %v5081 = vld [vmem:[#allocation2 + $0x50] sm:$0xff]
  %v5082 = vld [vmem:[#allocation2 + $0x58] sm:$0xff]
  %v5083 = vld [vmem:[#allocation2 + $0x60] sm:$0x3f]
  %v5084 = vld [vmem:[#allocation2 + $0x68] sm:$0x3f]
  %v5085 = vld [vmem:[#allocation2 + $0x70] sm:$0x3f]
  %v5086 = vld [vmem:[#allocation2] sm:$0xfc]
  %v5087 = vld [vmem:[#allocation2 + $0x8] sm:$0xfc]
  %v5088 = vld [vmem:[#allocation2 + $0x10] sm:$0xfc]
  %v5089 = vld [vmem:[#allocation2 + $0x30] sm:$0xf]
  %v5090 = vld [vmem:[#allocation2 + $0x38] sm:$0xf]
  %v5091 = vld [vmem:[#allocation2 + $0x40] sm:$0xf]
  %v5092 = vld [vmem:[#allocation2 + $0x30] sm:$0xc0]
  %v5093 = vld [vmem:[#allocation2 + $0x38] sm:$0xc0]
  %v5094 = vld [vmem:[#allocation2 + $0x40] sm:$0xc0]
  %v5095 = vld [vmem:[#allocation2 + $0x60] sm:$0xff]
  %v5096 = vld [vmem:[#allocation2 + $0x68] sm:$0xff]
  %v5097 = vld [vmem:[#allocation2 + $0x70] sm:$0xff]
  %vm5107 = vcmask 1043456
  %v5108 = vrot.slane %v5077, 4
  %v5109 = vrot.slane %v5080, 4
  %v5110 = vsel %vm5107, %v5108, %v5109
  %v5111 = vrot.slane %v5078, 4
  %v5112 = vrot.slane %v5081, 4
  %v5113 = vsel %vm5107, %v5111, %v5112
  %v5114 = vrot.slane %v5079, 4
  %v5115 = vrot.slane %v5082, 4
  %v5116 = vsel %vm5107, %v5114, %v5115
  %v5117 = vrot.slane %v5083, 4
  %v5118 = vsel %vm5107, %v5109, %v5117
  %v5119 = vrot.slane %v5084, 4
  %v5120 = vsel %vm5107, %v5112, %v5119
  %v5121 = vrot.slane %v5085, 4
  %v5122 = vsel %vm5107, %v5115, %v5121
  %vm5141 = vcmask 1045504
  %v5142 = vrot.slane %v5086, 2
  %v5143 = vrot.slane %v5071, 2
  %v5144 = vsel %vm5141, %v5142, %v5143
  %v5145 = vrot.slane %v5087, 2
  %v5146 = vrot.slane %v5072, 2
  %v5147 = vsel %vm5141, %v5145, %v5146
  %v5148 = vrot.slane %v5088, 2
  %v5149 = vrot.slane %v5073, 2
  %v5150 = vsel %vm5141, %v5148, %v5149
  %v5151 = vrot.slane %v5089, 2
  %v5152 = vsel %vm5141, %v5143, %v5151
  %v5153 = vrot.slane %v5090, 2
  %v5154 = vsel %vm5141, %v5146, %v5153
  %v5155 = vrot.slane %v5091, 2
  %v5156 = vsel %vm5141, %v5149, %v5155
  %vm5172 = vcmask 1041408
  %v5173 = vrot.slane %v5092, 6
  %v5174 = vrot.slane %v5080, 6
  %v5175 = vsel %vm5172, %v5173, %v5174
  %v5176 = vrot.slane %v5093, 6
  %v5177 = vrot.slane %v5081, 6
  %v5178 = vsel %vm5172, %v5176, %v5177
  %v5179 = vrot.slane %v5094, 6
  %v5180 = vrot.slane %v5082, 6
  %v5181 = vsel %vm5172, %v5179, %v5180
  %v5182 = vrot.slane %v5095, 6
  %v5183 = vsel %vm5172, %v5174, %v5182
  %v5184 = vrot.slane %v5096, 6
  %v5185 = vsel %vm5172, %v5177, %v5184
  %v5186 = vrot.slane %v5097, 6
  %v5187 = vsel %vm5172, %v5180, %v5186
  %v5197 = vpack.c.bf16 %v5071, %v5068
  %v5198 = vpack.c.bf16 %v5072, %v5069
  %v5199 = vpack.c.bf16 %v5073, %v5070
  %v5200 = vpack.c.bf16 %v5118, %v5110
  %v5201 = vpack.c.bf16 %v5120, %v5113
  %v5202 = vpack.c.bf16 %v5122, %v5116
  %v5203 = vpack.c.bf16 %v5152, %v5144
  %v5204 = vpack.c.bf16 %v5154, %v5147
  %v5205 = vpack.c.bf16 %v5156, %v5150
  %v5206 = vpack.c.bf16 %v5183, %v5175
  %v5207 = vpack.c.bf16 %v5185, %v5178
  %v5208 = vpack.c.bf16 %v5187, %v5181
  %v5209 = vpack.c.bf16 %v5074, %v5074
  %v5210 = vpack.c.bf16 %v5075, %v5075
  %v5211 = vpack.c.bf16 %v5076, %v5076
  %v5212 = vpack.c.bf16 %v5117, %v5117
  %v5213 = vpack.c.bf16 %v5119, %v5119
  %v5214 = vpack.c.bf16 %v5121, %v5121
  %v5215 = vpack.c.bf16 %v5151, %v5151
  %v5216 = vpack.c.bf16 %v5153, %v5153
  %v5217 = vpack.c.bf16 %v5155, %v5155
  %v5218 = vpack.c.bf16 %v5182, %v5182
  %v5219 = vpack.c.bf16 %v5184, %v5184
  %v5220 = vpack.c.bf16 %v5186, %v5186
  %v5221 = vld [vmem:[%s3] sm:$0xff]
  %v5222 = vld [vmem:[%s3 + $0x8] sm:$0xf]
  %v5223 = vld [vmem:[%s3 + $0xc] sm:$0xff]
  %v5224 = vld [vmem:[%s3 + $0x14] sm:$0xf]
  %v5225 = vld [vmem:[%s3 + $0x18] sm:$0xff]
  %v5226 = vld [vmem:[%s3 + $0x20] sm:$0xf]
  %v5227 = vld [vmem:[%s3 + $0x24] sm:$0xff]
  %v5228 = vld [vmem:[%s3 + $0x2c] sm:$0xf]
  %v5229 = vld [vmem:[%s3 + $0x30] sm:$0xff]
  %v5230 = vld [vmem:[%s3 + $0x38] sm:$0xf]
  %v5231 = vld [vmem:[%s3 + $0x3c] sm:$0xff]
  %v5232 = vld [vmem:[%s3 + $0x44] sm:$0xf]
  %v5233 = vld [vmem:[%s3 + $0x48] sm:$0xff]
  %v5234 = vld [vmem:[%s3 + $0x50] sm:$0xf]
  %v5235 = vld [vmem:[%s3 + $0x54] sm:$0xff]
  %v5236 = vld [vmem:[%s3 + $0x5c] sm:$0xf]
  %v5237 = vld [vmem:[%s3 + $0x60] sm:$0xff]
  %v5238 = vld [vmem:[%s3 + $0x68] sm:$0xf]
  %v5239 = vld [vmem:[%s3 + $0x6c] sm:$0xff]
  %v5240 = vld [vmem:[%s3 + $0x74] sm:$0xf]
  %v5241 = vld [vmem:[%s3 + $0x78] sm:$0xff]
  %v5242 = vld [vmem:[%s3 + $0x80] sm:$0xf]
  %v5243 = vld [vmem:[%s3 + $0x84] sm:$0xff]
  %v5244 = vld [vmem:[%s3 + $0x8c] sm:$0xf]
  %v5245 = vld [vmem:[%s3 + $0x90] sm:$0xff]
  %v5246 = vld [vmem:[%s3 + $0x98] sm:$0xf]
  %v5247 = vld [vmem:[%s3 + $0x9c] sm:$0xff]
  %v5248 = vld [vmem:[%s3 + $0xa4] sm:$0xf]
  %v5249 = vld [vmem:[%s3 + $0xa8] sm:$0xff]
  %v5250 = vld [vmem:[%s3 + $0xb0] sm:$0xf]
  %v5251 = vld [vmem:[%s3 + $0xb4] sm:$0xff]
  %v5252 = vld [vmem:[%s3 + $0xbc] sm:$0xf]
  %v5253 = vld [vmem:[%s3 + $0xc0] sm:$0xff]
  %v5254 = vld [vmem:[%s3 + $0xc8] sm:$0xf]
  %v5255 = vld [vmem:[%s3 + $0xcc] sm:$0xff]
  %v5256 = vld [vmem:[%s3 + $0xd4] sm:$0xf]
  %v5257 = vld [vmem:[%s3 + $0xd8] sm:$0xff]
  %v5258 = vld [vmem:[%s3 + $0xe0] sm:$0xf]
  %v5259 = vld [vmem:[%s3 + $0xe4] sm:$0xff]
  %v5260 = vld [vmem:[%s3 + $0xec] sm:$0xf]
  %v5261 = vld [vmem:[%s3 + $0xf0] sm:$0xff]
  %v5262 = vld [vmem:[%s3 + $0xf8] sm:$0xf]
  %v5263 = vld [vmem:[%s3 + $0xfc] sm:$0xff]
  %v5264 = vld [vmem:[%s3 + $0x104] sm:$0xf]
  %v5265 = vld [vmem:[%s3 + $0x108] sm:$0xff]
  %v5266 = vld [vmem:[%s3 + $0x110] sm:$0xf]
  %v5267 = vld [vmem:[%s3 + $0x114] sm:$0xff]
  %v5268 = vld [vmem:[%s3 + $0x11c] sm:$0xf]
  %v5269 = vld [vmem:[%s3 + $0x120] sm:$0xff]
  %v5270 = vld [vmem:[%s3 + $0x128] sm:$0xf]
  %v5271 = vld [vmem:[%s3 + $0x12c] sm:$0xff]
  %v5272 = vld [vmem:[%s3 + $0x134] sm:$0xf]
  %v5273 = vld [vmem:[%s3 + $0x138] sm:$0xff]
  %v5274 = vld [vmem:[%s3 + $0x140] sm:$0xf]
  %v5275 = vld [vmem:[%s3 + $0x144] sm:$0xff]
  %v5276 = vld [vmem:[%s3 + $0x14c] sm:$0xf]
  %v5277 = vld [vmem:[%s3 + $0x150] sm:$0xff]
  %v5278 = vld [vmem:[%s3 + $0x158] sm:$0xf]
  %v5279 = vld [vmem:[%s3 + $0x15c] sm:$0xff]
  %v5280 = vld [vmem:[%s3 + $0x164] sm:$0xf]
  %v5281 = vld [vmem:[%s3 + $0x168] sm:$0xff]
  %v5282 = vld [vmem:[%s3 + $0x170] sm:$0xf]
  %v5283 = vld [vmem:[%s3 + $0x174] sm:$0xff]
  %v5284 = vld [vmem:[%s3 + $0x17c] sm:$0xf]
  %v5285 = vld [vmem:[%s3 + $0x180] sm:$0xff]
  %v5286 = vld [vmem:[%s3 + $0x188] sm:$0xf]
  %v5287 = vld [vmem:[%s3 + $0x18c] sm:$0xff]
  %v5288 = vld [vmem:[%s3 + $0x194] sm:$0xf]
  %v5289 = vld [vmem:[%s3 + $0x198] sm:$0xff]
  %v5290 = vld [vmem:[%s3 + $0x1a0] sm:$0xf]
  %v5291 = vld [vmem:[%s3 + $0x1a4] sm:$0xff]
  %v5292 = vld [vmem:[%s3 + $0x1ac] sm:$0xf]
  %v5293 = vld [vmem:[%s3 + $0x1b0] sm:$0xff]
  %v5294 = vld [vmem:[%s3 + $0x1b8] sm:$0xf]
  %v5295 = vld [vmem:[%s3 + $0x1bc] sm:$0xff]
  %v5296 = vld [vmem:[%s3 + $0x1c4] sm:$0xf]
  %v5297 = vld [vmem:[%s3 + $0x1c8] sm:$0xff]
  %v5298 = vld [vmem:[%s3 + $0x1d0] sm:$0xf]
  %v5299 = vld [vmem:[%s3 + $0x1d4] sm:$0xff]
  %v5300 = vld [vmem:[%s3 + $0x1dc] sm:$0xf]
  %v5301 = vld [vmem:[%s3 + $0x1e0] sm:$0xff]
  %v5302 = vld [vmem:[%s3 + $0x1e8] sm:$0xf]
  %v5303 = vld [vmem:[%s3 + $0x1ec] sm:$0xff]
  %v5304 = vld [vmem:[%s3 + $0x1f4] sm:$0xf]
  %v5305 = vld [vmem:[%s3 + $0x1f8] sm:$0xff]
  %v5306 = vld [vmem:[%s3 + $0x200] sm:$0xf]
  %v5307 = vld [vmem:[%s3 + $0x204] sm:$0xff]
  %v5308 = vld [vmem:[%s3 + $0x20c] sm:$0xf]
  %v5309 = vld [vmem:[%s3 + $0x210] sm:$0xff]
  %v5310 = vld [vmem:[%s3 + $0x218] sm:$0xf]
  %v5311 = vld [vmem:[%s3 + $0x21c] sm:$0xff]
  %v5312 = vld [vmem:[%s3 + $0x224] sm:$0xf]
  %v5313 = vld [vmem:[%s3 + $0x228] sm:$0xff]
  %v5314 = vld [vmem:[%s3 + $0x230] sm:$0xf]
  %v5315 = vld [vmem:[%s3 + $0x234] sm:$0xff]
  %v5316 = vld [vmem:[%s3 + $0x23c] sm:$0xf]
  %v5317 = vld [vmem:[%s3 + $0x240] sm:$0xff]
  %v5318 = vld [vmem:[%s3 + $0x248] sm:$0xf]
  %v5319 = vld [vmem:[%s3 + $0x24c] sm:$0xff]
  %v5320 = vld [vmem:[%s3 + $0x254] sm:$0xf]
  %v5321 = vld [vmem:[%s3 + $0x258] sm:$0xff]
  %v5322 = vld [vmem:[%s3 + $0x260] sm:$0xf]
  %v5323 = vld [vmem:[%s3 + $0x264] sm:$0xff]
  %v5324 = vld [vmem:[%s3 + $0x26c] sm:$0xf]
  %v5325 = vld [vmem:[%s3 + $0x270] sm:$0xff]
  %v5326 = vld [vmem:[%s3 + $0x278] sm:$0xf]
  %v5327 = vld [vmem:[%s3 + $0x27c] sm:$0xff]
  %v5328 = vld [vmem:[%s3 + $0x284] sm:$0xf]
  %v5329 = vld [vmem:[%s3 + $0x288] sm:$0xff]
  %v5330 = vld [vmem:[%s3 + $0x290] sm:$0xf]
  %v5331 = vld [vmem:[%s3 + $0x294] sm:$0xff]
  %v5332 = vld [vmem:[%s3 + $0x29c] sm:$0xf]
  %v5333 = vld [vmem:[%s3 + $0x2a0] sm:$0xff]
  %v5334 = vld [vmem:[%s3 + $0x2a8] sm:$0xf]
  %v5335 = vld [vmem:[%s3 + $0x2ac] sm:$0xff]
  %v5336 = vld [vmem:[%s3 + $0x2b4] sm:$0xf]
  %v5337 = vld [vmem:[%s3 + $0x2b8] sm:$0xff]
  %v5338 = vld [vmem:[%s3 + $0x2c0] sm:$0xf]
  %v5339 = vld [vmem:[%s3 + $0x2c4] sm:$0xff]
  %v5340 = vld [vmem:[%s3 + $0x2cc] sm:$0xf]
  %v5341 = vld [vmem:[%s3 + $0x2d0] sm:$0xff]
  %v5342 = vld [vmem:[%s3 + $0x2d8] sm:$0xf]
  %v5343 = vld [vmem:[%s3 + $0x2dc] sm:$0xff]
  %v5344 = vld [vmem:[%s3 + $0x2e4] sm:$0xf]
  %v5345 = vld [vmem:[%s3 + $0x2e8] sm:$0xff]
  %v5346 = vld [vmem:[%s3 + $0x2f0] sm:$0xf]
  %v5347 = vld [vmem:[%s3 + $0x2f4] sm:$0xff]
  %v5348 = vld [vmem:[%s3 + $0x2fc] sm:$0xf]
  %v5349 = vld [vmem:[%s3 + $0x300] sm:$0xff]
  %v5350 = vld [vmem:[%s3 + $0x308] sm:$0xf]
  %v5351 = vld [vmem:[%s3 + $0x30c] sm:$0xff]
  %v5352 = vld [vmem:[%s3 + $0x314] sm:$0xf]
  %v5353 = vld [vmem:[%s3 + $0x318] sm:$0xff]
  %v5354 = vld [vmem:[%s3 + $0x320] sm:$0xf]
  %v5355 = vld [vmem:[%s3 + $0x324] sm:$0xff]
  %v5356 = vld [vmem:[%s3 + $0x32c] sm:$0xf]
  %v5357 = vld [vmem:[%s3 + $0x330] sm:$0xff]
  %v5358 = vld [vmem:[%s3 + $0x338] sm:$0xf]
  %v5359 = vld [vmem:[%s3 + $0x33c] sm:$0xff]
  %v5360 = vld [vmem:[%s3 + $0x344] sm:$0xf]
  %v5361 = vld [vmem:[%s3 + $0x348] sm:$0xff]
  %v5362 = vld [vmem:[%s3 + $0x350] sm:$0xf]
  %v5363 = vld [vmem:[%s3 + $0x354] sm:$0xff]
  %v5364 = vld [vmem:[%s3 + $0x35c] sm:$0xf]
  %v5365 = vld [vmem:[%s3 + $0x360] sm:$0xff]
  %v5366 = vld [vmem:[%s3 + $0x368] sm:$0xf]
  %v5367 = vld [vmem:[%s3 + $0x36c] sm:$0xff]
  %v5368 = vld [vmem:[%s3 + $0x374] sm:$0xf]
  %v5369 = vld [vmem:[%s3 + $0x378] sm:$0xff]
  %v5370 = vld [vmem:[%s3 + $0x380] sm:$0xf]
  %v5371 = vld [vmem:[%s3 + $0x384] sm:$0xff]
  %v5372 = vld [vmem:[%s3 + $0x38c] sm:$0xf]
  %v5373 = vld [vmem:[%s3 + $0x390] sm:$0xff]
  %v5374 = vld [vmem:[%s3 + $0x398] sm:$0xf]
  %v5375 = vld [vmem:[%s3 + $0x39c] sm:$0xff]
  %v5376 = vld [vmem:[%s3 + $0x3a4] sm:$0xf]
  %v5377 = vld [vmem:[%s3 + $0x3a8] sm:$0xff]
  %v5378 = vld [vmem:[%s3 + $0x3b0] sm:$0xf]
  %v5379 = vld [vmem:[%s3 + $0x3b4] sm:$0xff]
  %v5380 = vld [vmem:[%s3 + $0x3bc] sm:$0xf]
  %v5381 = vld [vmem:[%s3 + $0x3c0] sm:$0xff]
  %v5382 = vld [vmem:[%s3 + $0x3c8] sm:$0xf]
  %v5383 = vld [vmem:[%s3 + $0x3cc] sm:$0xff]
  %v5384 = vld [vmem:[%s3 + $0x3d4] sm:$0xf]
  %v5385 = vld [vmem:[%s3 + $0x3d8] sm:$0xff]
  %v5386 = vld [vmem:[%s3 + $0x3e0] sm:$0xf]
  %v5387 = vld [vmem:[%s3 + $0x3e4] sm:$0xff]
  %v5388 = vld [vmem:[%s3 + $0x3ec] sm:$0xf]
  %v5389 = vld [vmem:[%s3 + $0x3f0] sm:$0xff]
  %v5390 = vld [vmem:[%s3 + $0x3f8] sm:$0xf]
  %v5391 = vld [vmem:[%s3 + $0x3fc] sm:$0xff]
  %v5392 = vld [vmem:[%s3 + $0x404] sm:$0xf]
  %v5393 = vld [vmem:[%s3 + $0x408] sm:$0xff]
  %v5394 = vld [vmem:[%s3 + $0x410] sm:$0xf]
  %v5395 = vld [vmem:[%s3 + $0x414] sm:$0xff]
  %v5396 = vld [vmem:[%s3 + $0x41c] sm:$0xf]
  %v5397 = vld [vmem:[%s3 + $0x420] sm:$0xff]
  %v5398 = vld [vmem:[%s3 + $0x428] sm:$0xf]
  %v5399 = vld [vmem:[%s3 + $0x42c] sm:$0xff]
  %v5400 = vld [vmem:[%s3 + $0x434] sm:$0xf]
  %v5401 = vld [vmem:[%s3 + $0x438] sm:$0xff]
  %v5402 = vld [vmem:[%s3 + $0x440] sm:$0xf]
  %v5403 = vld [vmem:[%s3 + $0x444] sm:$0xff]
  %v5404 = vld [vmem:[%s3 + $0x44c] sm:$0xf]
  %v5405 = vld [vmem:[%s3 + $0x450] sm:$0xff]
  %v5406 = vld [vmem:[%s3 + $0x458] sm:$0xf]
  %v5407 = vld [vmem:[%s3 + $0x45c] sm:$0xff]
  %v5408 = vld [vmem:[%s3 + $0x464] sm:$0xf]
  %v5409 = vld [vmem:[%s3 + $0x468] sm:$0xff]
  %v5410 = vld [vmem:[%s3 + $0x470] sm:$0xf]
  %v5411 = vld [vmem:[%s3 + $0x474] sm:$0xff]
  %v5412 = vld [vmem:[%s3 + $0x47c] sm:$0xf]
  %v5413 = vld [vmem:[%s3 + $0x480] sm:$0xff]
  %v5414 = vld [vmem:[%s3 + $0x488] sm:$0xf]
  %v5415 = vld [vmem:[%s3 + $0x48c] sm:$0xff]
  %v5416 = vld [vmem:[%s3 + $0x494] sm:$0xf]
  %v5417 = vld [vmem:[%s3 + $0x498] sm:$0xff]
  %v5418 = vld [vmem:[%s3 + $0x4a0] sm:$0xf]
  %v5419 = vld [vmem:[%s3 + $0x4a4] sm:$0xff]
  %v5420 = vld [vmem:[%s3 + $0x4ac] sm:$0xf]
  %v5421 = vld [vmem:[%s3 + $0x4b0] sm:$0xff]
  %v5422 = vld [vmem:[%s3 + $0x4b8] sm:$0xf]
  %v5423 = vld [vmem:[%s3 + $0x4bc] sm:$0xff]
  %v5424 = vld [vmem:[%s3 + $0x4c4] sm:$0xf]
  %v5425 = vld [vmem:[%s3 + $0x4c8] sm:$0xff]
  %v5426 = vld [vmem:[%s3 + $0x4d0] sm:$0xf]
  %v5427 = vld [vmem:[%s3 + $0x4d4] sm:$0xff]
  %v5428 = vld [vmem:[%s3 + $0x4dc] sm:$0xf]
  %v5429 = vld [vmem:[%s3 + $0x4e0] sm:$0xff]
  %v5430 = vld [vmem:[%s3 + $0x4e8] sm:$0xf]
  %v5431 = vld [vmem:[%s3 + $0x4ec] sm:$0xff]
  %v5432 = vld [vmem:[%s3 + $0x4f4] sm:$0xf]
  %v5433 = vld [vmem:[%s3 + $0x4f8] sm:$0xff]
  %v5434 = vld [vmem:[%s3 + $0x500] sm:$0xf]
  %v5435 = vld [vmem:[%s3 + $0x504] sm:$0xff]
  %v5436 = vld [vmem:[%s3 + $0x50c] sm:$0xf]
  %v5437 = vld [vmem:[%s3 + $0x510] sm:$0xff]
  %v5438 = vld [vmem:[%s3 + $0x518] sm:$0xf]
  %v5439 = vld [vmem:[%s3 + $0x51c] sm:$0xff]
  %v5440 = vld [vmem:[%s3 + $0x524] sm:$0xf]
  %v5441 = vld [vmem:[%s3 + $0x528] sm:$0xff]
  %v5442 = vld [vmem:[%s3 + $0x530] sm:$0xf]
  %v5443 = vld [vmem:[%s3 + $0x534] sm:$0xff]
  %v5444 = vld [vmem:[%s3 + $0x53c] sm:$0xf]
  %v5445 = vld [vmem:[%s3 + $0x540] sm:$0xff]
  %v5446 = vld [vmem:[%s3 + $0x548] sm:$0xf]
  %v5447 = vld [vmem:[%s3 + $0x54c] sm:$0xff]
  %v5448 = vld [vmem:[%s3 + $0x554] sm:$0xf]
  %v5449 = vld [vmem:[%s3 + $0x558] sm:$0xff]
  %v5450 = vld [vmem:[%s3 + $0x560] sm:$0xf]
  %v5451 = vld [vmem:[%s3 + $0x564] sm:$0xff]
  %v5452 = vld [vmem:[%s3 + $0x56c] sm:$0xf]
  %v5453 = vld [vmem:[%s3 + $0x570] sm:$0xff]
  %v5454 = vld [vmem:[%s3 + $0x578] sm:$0xf]
  %v5455 = vld [vmem:[%s3 + $0x57c] sm:$0xff]
  %v5456 = vld [vmem:[%s3 + $0x584] sm:$0xf]
  %v5457 = vld [vmem:[%s3 + $0x588] sm:$0xff]
  %v5458 = vld [vmem:[%s3 + $0x590] sm:$0xf]
  %v5459 = vld [vmem:[%s3 + $0x594] sm:$0xff]
  %v5460 = vld [vmem:[%s3 + $0x59c] sm:$0xf]
  %v5461 = vld [vmem:[%s3 + $0x5a0] sm:$0xff]
  %v5462 = vld [vmem:[%s3 + $0x5a8] sm:$0xf]
  %v5463 = vld [vmem:[%s3 + $0x5ac] sm:$0xff]
  %v5464 = vld [vmem:[%s3 + $0x5b4] sm:$0xf]
  %v5465 = vld [vmem:[%s3 + $0x5b8] sm:$0xff]
  %v5466 = vld [vmem:[%s3 + $0x5c0] sm:$0xf]
  %v5467 = vld [vmem:[%s3 + $0x5c4] sm:$0xff]
  %v5468 = vld [vmem:[%s3 + $0x5cc] sm:$0xf]
  %v5469 = vld [vmem:[%s3 + $0x5d0] sm:$0xff]
  %v5470 = vld [vmem:[%s3 + $0x5d8] sm:$0xf]
  %v5471 = vld [vmem:[%s3 + $0x5dc] sm:$0xff]
  %v5472 = vld [vmem:[%s3 + $0x5e4] sm:$0xf]
  %v5473 = vld [vmem:[%s3 + $0x5e8] sm:$0xff]
  %v5474 = vld [vmem:[%s3 + $0x5f0] sm:$0xf]
  %v5475 = vld [vmem:[%s3 + $0x5f4] sm:$0xff]
  %v5476 = vld [vmem:[%s3 + $0x5fc] sm:$0xf]
  %v5477 = vld [vmem:[%s3 + $0x600] sm:$0xff]
  %v5478 = vld [vmem:[%s3 + $0x608] sm:$0xf]
  %v5479 = vld [vmem:[%s3 + $0x60c] sm:$0xff]
  %v5480 = vld [vmem:[%s3 + $0x614] sm:$0xf]
  %v5481 = vld [vmem:[%s3 + $0x618] sm:$0xff]
  %v5482 = vld [vmem:[%s3 + $0x620] sm:$0xf]
  %v5483 = vld [vmem:[%s3 + $0x624] sm:$0xff]
  %v5484 = vld [vmem:[%s3 + $0x62c] sm:$0xf]
  %v5485 = vld [vmem:[%s3 + $0x630] sm:$0xff]
  %v5486 = vld [vmem:[%s3 + $0x638] sm:$0xf]
  %v5487 = vld [vmem:[%s3 + $0x63c] sm:$0xff]
  %v5488 = vld [vmem:[%s3 + $0x644] sm:$0xf]
  %v5489 = vld [vmem:[%s3 + $0x648] sm:$0xff]
  %v5490 = vld [vmem:[%s3 + $0x650] sm:$0xf]
  %v5491 = vld [vmem:[%s3 + $0x654] sm:$0xff]
  %v5492 = vld [vmem:[%s3 + $0x65c] sm:$0xf]
  %v5493 = vld [vmem:[%s3 + $0x660] sm:$0xff]
  %v5494 = vld [vmem:[%s3 + $0x668] sm:$0xf]
  %v5495 = vld [vmem:[%s3 + $0x66c] sm:$0xff]
  %v5496 = vld [vmem:[%s3 + $0x674] sm:$0xf]
  %v5497 = vld [vmem:[%s3 + $0x678] sm:$0xff]
  %v5498 = vld [vmem:[%s3 + $0x680] sm:$0xf]
  %v5499 = vld [vmem:[%s3 + $0x684] sm:$0xff]
  %v5500 = vld [vmem:[%s3 + $0x68c] sm:$0xf]
  %v5501 = vld [vmem:[%s3 + $0x690] sm:$0xff]
  %v5502 = vld [vmem:[%s3 + $0x698] sm:$0xf]
  %v5503 = vld [vmem:[%s3 + $0x69c] sm:$0xff]
  %v5504 = vld [vmem:[%s3 + $0x6a4] sm:$0xf]
  %v5505 = vld [vmem:[%s3 + $0x6a8] sm:$0xff]
  %v5506 = vld [vmem:[%s3 + $0x6b0] sm:$0xf]
  %v5507 = vld [vmem:[%s3 + $0x6b4] sm:$0xff]
  %v5508 = vld [vmem:[%s3 + $0x6bc] sm:$0xf]
  %v5509 = vld [vmem:[%s3 + $0x6c0] sm:$0xff]
  %v5510 = vld [vmem:[%s3 + $0x6c8] sm:$0xf]
  %v5511 = vld [vmem:[%s3 + $0x6cc] sm:$0xff]
  %v5512 = vld [vmem:[%s3 + $0x6d4] sm:$0xf]
  %v5513 = vld [vmem:[%s3 + $0x6d8] sm:$0xff]
  %v5514 = vld [vmem:[%s3 + $0x6e0] sm:$0xf]
  %v5515 = vld [vmem:[%s3 + $0x6e4] sm:$0xff]
  %v5516 = vld [vmem:[%s3 + $0x6ec] sm:$0xf]
  %v5517 = vld [vmem:[%s3 + $0x6f0] sm:$0xff]
  %v5518 = vld [vmem:[%s3 + $0x6f8] sm:$0xf]
  %v5519 = vld [vmem:[%s3 + $0x6fc] sm:$0xff]
  %v5520 = vld [vmem:[%s3 + $0x704] sm:$0xf]
  %v5521 = vld [vmem:[%s3 + $0x708] sm:$0xff]
  %v5522 = vld [vmem:[%s3 + $0x710] sm:$0xf]
  %v5523 = vld [vmem:[%s3 + $0x714] sm:$0xff]
  %v5524 = vld [vmem:[%s3 + $0x71c] sm:$0xf]
  %v5525 = vld [vmem:[%s3 + $0x720] sm:$0xff]
  %v5526 = vld [vmem:[%s3 + $0x728] sm:$0xf]
  %v5527 = vld [vmem:[%s3 + $0x72c] sm:$0xff]
  %v5528 = vld [vmem:[%s3 + $0x734] sm:$0xf]
  %v5529 = vld [vmem:[%s3 + $0x738] sm:$0xff]
  %v5530 = vld [vmem:[%s3 + $0x740] sm:$0xf]
  %v5531 = vld [vmem:[%s3 + $0x744] sm:$0xff]
  %v5532 = vld [vmem:[%s3 + $0x74c] sm:$0xf]
  %v5533 = vld [vmem:[%s3 + $0x750] sm:$0xff]
  %v5534 = vld [vmem:[%s3 + $0x758] sm:$0xf]
  %v5535 = vld [vmem:[%s3 + $0x75c] sm:$0xff]
  %v5536 = vld [vmem:[%s3 + $0x764] sm:$0xf]
  %v5537 = vld [vmem:[%s3 + $0x768] sm:$0xff]
  %v5538 = vld [vmem:[%s3 + $0x770] sm:$0xf]
  %v5539 = vld [vmem:[%s3 + $0x774] sm:$0xff]
  %v5540 = vld [vmem:[%s3 + $0x77c] sm:$0xf]
  %v5541 = vld [vmem:[%s3 + $0x780] sm:$0xff]
  %v5542 = vld [vmem:[%s3 + $0x788] sm:$0xf]
  %v5543 = vld [vmem:[%s3 + $0x78c] sm:$0xff]
  %v5544 = vld [vmem:[%s3 + $0x794] sm:$0xf]
  %v5545 = vld [vmem:[%s3 + $0x798] sm:$0xff]
  %v5546 = vld [vmem:[%s3 + $0x7a0] sm:$0xf]
  %v5547 = vld [vmem:[%s3 + $0x7a4] sm:$0xff]
  %v5548 = vld [vmem:[%s3 + $0x7ac] sm:$0xf]
  %v5549 = vld [vmem:[%s3 + $0x7b0] sm:$0xff]
  %v5550 = vld [vmem:[%s3 + $0x7b8] sm:$0xf]
  %v5551 = vld [vmem:[%s3 + $0x7bc] sm:$0xff]
  %v5552 = vld [vmem:[%s3 + $0x7c4] sm:$0xf]
  %v5553 = vld [vmem:[%s3 + $0x7c8] sm:$0xff]
  %v5554 = vld [vmem:[%s3 + $0x7d0] sm:$0xf]
  %v5555 = vld [vmem:[%s3 + $0x7d4] sm:$0xff]
  %v5556 = vld [vmem:[%s3 + $0x7dc] sm:$0xf]
  %v5557 = vld [vmem:[%s3 + $0x7e0] sm:$0xff]
  %v5558 = vld [vmem:[%s3 + $0x7e8] sm:$0xf]
  %v5559 = vld [vmem:[%s3 + $0x7ec] sm:$0xff]
  %v5560 = vld [vmem:[%s3 + $0x7f4] sm:$0xf]
  %v5561 = vld [vmem:[%s3 + $0x7f8] sm:$0xff]
  %v5562 = vld [vmem:[%s3 + $0x800] sm:$0xf]
  %v5563 = vld [vmem:[%s3 + $0x804] sm:$0xff]
  %v5564 = vld [vmem:[%s3 + $0x80c] sm:$0xf]
  %v5565 = vld [vmem:[%s3 + $0x810] sm:$0xff]
  %v5566 = vld [vmem:[%s3 + $0x818] sm:$0xf]
  %v5567 = vld [vmem:[%s3 + $0x81c] sm:$0xff]
  %v5568 = vld [vmem:[%s3 + $0x824] sm:$0xf]
  %v5569 = vld [vmem:[%s3 + $0x828] sm:$0xff]
  %v5570 = vld [vmem:[%s3 + $0x830] sm:$0xf]
  %v5571 = vld [vmem:[%s3 + $0x834] sm:$0xff]
  %v5572 = vld [vmem:[%s3 + $0x83c] sm:$0xf]
  %v5573 = vld [vmem:[%s3 + $0x840] sm:$0xff]
  %v5574 = vld [vmem:[%s3 + $0x848] sm:$0xf]
  %v5575 = vld [vmem:[%s3 + $0x84c] sm:$0xff]
  %v5576 = vld [vmem:[%s3 + $0x854] sm:$0xf]
  %v5577 = vld [vmem:[%s3 + $0x858] sm:$0xff]
  %v5578 = vld [vmem:[%s3 + $0x860] sm:$0xf]
  %v5579 = vld [vmem:[%s3 + $0x864] sm:$0xff]
  %v5580 = vld [vmem:[%s3 + $0x86c] sm:$0xf]
  %v5581 = vld [vmem:[%s3 + $0x870] sm:$0xff]
  %v5582 = vld [vmem:[%s3 + $0x878] sm:$0xf]
  %v5583 = vld [vmem:[%s3 + $0x87c] sm:$0xff]
  %v5584 = vld [vmem:[%s3 + $0x884] sm:$0xf]
  %v5585 = vld [vmem:[%s3 + $0x888] sm:$0xff]
  %v5586 = vld [vmem:[%s3 + $0x890] sm:$0xf]
  %v5587 = vld [vmem:[%s3 + $0x894] sm:$0xff]
  %v5588 = vld [vmem:[%s3 + $0x89c] sm:$0xf]
  %v5589 = vld [vmem:[%s3 + $0x8a0] sm:$0xff]
  %v5590 = vld [vmem:[%s3 + $0x8a8] sm:$0xf]
  %v5591 = vld [vmem:[%s3 + $0x8ac] sm:$0xff]
  %v5592 = vld [vmem:[%s3 + $0x8b4] sm:$0xf]
  %v5593 = vld [vmem:[%s3 + $0x8b8] sm:$0xff]
  %v5594 = vld [vmem:[%s3 + $0x8c0] sm:$0xf]
  %v5595 = vld [vmem:[%s3 + $0x8c4] sm:$0xff]
  %v5596 = vld [vmem:[%s3 + $0x8cc] sm:$0xf]
  %v5597 = vld [vmem:[%s3 + $0x8d0] sm:$0xff]
  %v5598 = vld [vmem:[%s3 + $0x8d8] sm:$0xf]
  %v5599 = vld [vmem:[%s3 + $0x8dc] sm:$0xff]
  %v5600 = vld [vmem:[%s3 + $0x8e4] sm:$0xf]
  %v5601 = vld [vmem:[%s3 + $0x8e8] sm:$0xff]
  %v5602 = vld [vmem:[%s3 + $0x8f0] sm:$0xf]
  %v5603 = vld [vmem:[%s3 + $0x8f4] sm:$0xff]
  %v5604 = vld [vmem:[%s3 + $0x8fc] sm:$0xf]
  %v5605 = vld [vmem:[%s4] sm:$0x7]
  %v5607 = vlaneseq
  %v5608 = vshrl.u32 %v5607, 7
  %v5609 = vsub.s32 0, %v5608
  %v5610 = vrot.slane %v5605, %v5609
  %v5611 = vlaneseq
  %v5612 = vshrl.u32 %v5611, 7
  %v5613 = vsub.s32 1, %v5612
  %v5614 = vrot.slane %v5605, %v5613
  %v5615 = vlaneseq
  %v5616 = vshrl.u32 %v5615, 7
  %v5617 = vsub.s32 2, %v5616
  %v5618 = vrot.slane %v5605, %v5617
  %v6006 = vunpack.c.l.b16 %v5221
  %v6007 = vunpack.c.h.b16 %v5221
  %v6008 = vunpack.c.l.b16 %v5222
  %v6009 = vunpack.c.l.b16 %v5223
  %v6010 = vunpack.c.h.b16 %v5223
  %v6011 = vunpack.c.l.b16 %v5224
  %v6012 = vunpack.c.l.b16 %v5225
  %v6013 = vunpack.c.h.b16 %v5225
  %v6014 = vunpack.c.l.b16 %v5226
  %v6015 = vunpack.c.l.b16 %v5227
  %v6016 = vunpack.c.h.b16 %v5227
  %v6017 = vunpack.c.l.b16 %v5228
  %v6018 = vunpack.c.l.b16 %v5229
  %v6019 = vunpack.c.h.b16 %v5229
  %v6020 = vunpack.c.l.b16 %v5230
  %v6021 = vunpack.c.l.b16 %v5231
  %v6022 = vunpack.c.h.b16 %v5231
  %v6023 = vunpack.c.l.b16 %v5232
  %v6024 = vunpack.c.l.b16 %v5233
  %v6025 = vunpack.c.h.b16 %v5233
  %v6026 = vunpack.c.l.b16 %v5234
  %v6027 = vunpack.c.l.b16 %v5235
  %v6028 = vunpack.c.h.b16 %v5235
  %v6029 = vunpack.c.l.b16 %v5236
  %v6030 = vunpack.c.l.b16 %v5237
  %v6031 = vunpack.c.h.b16 %v5237
  %v6032 = vunpack.c.l.b16 %v5238
  %v6033 = vunpack.c.l.b16 %v5239
  %v6034 = vunpack.c.h.b16 %v5239
  %v6035 = vunpack.c.l.b16 %v5240
  %v6036 = vunpack.c.l.b16 %v5241
  %v6037 = vunpack.c.h.b16 %v5241
  %v6038 = vunpack.c.l.b16 %v5242
  %v6039 = vunpack.c.l.b16 %v5243
  %v6040 = vunpack.c.h.b16 %v5243
  %v6041 = vunpack.c.l.b16 %v5244
  %v6042 = vunpack.c.l.b16 %v5245
  %v6043 = vunpack.c.h.b16 %v5245
  %v6044 = vunpack.c.l.b16 %v5246
  %v6045 = vunpack.c.l.b16 %v5247
  %v6046 = vunpack.c.h.b16 %v5247
  %v6047 = vunpack.c.l.b16 %v5248
  %v6048 = vunpack.c.l.b16 %v5249
  %v6049 = vunpack.c.h.b16 %v5249
  %v6050 = vunpack.c.l.b16 %v5250
  %v6051 = vunpack.c.l.b16 %v5251
  %v6052 = vunpack.c.h.b16 %v5251
  %v6053 = vunpack.c.l.b16 %v5252
  %v6054 = vunpack.c.l.b16 %v5253
  %v6055 = vunpack.c.h.b16 %v5253
  %v6056 = vunpack.c.l.b16 %v5254
  %v6057 = vunpack.c.l.b16 %v5255
  %v6058 = vunpack.c.h.b16 %v5255
  %v6059 = vunpack.c.l.b16 %v5256
  %v6060 = vunpack.c.l.b16 %v5257
  %v6061 = vunpack.c.h.b16 %v5257
  %v6062 = vunpack.c.l.b16 %v5258
  %v6063 = vunpack.c.l.b16 %v5259
  %v6064 = vunpack.c.h.b16 %v5259
  %v6065 = vunpack.c.l.b16 %v5260
  %v6066 = vunpack.c.l.b16 %v5261
  %v6067 = vunpack.c.h.b16 %v5261
  %v6068 = vunpack.c.l.b16 %v5262
  %v6069 = vunpack.c.l.b16 %v5263
  %v6070 = vunpack.c.h.b16 %v5263
  %v6071 = vunpack.c.l.b16 %v5264
  %v6072 = vunpack.c.l.b16 %v5265
  %v6073 = vunpack.c.h.b16 %v5265
  %v6074 = vunpack.c.l.b16 %v5266
  %v6075 = vunpack.c.l.b16 %v5267
  %v6076 = vunpack.c.h.b16 %v5267
  %v6077 = vunpack.c.l.b16 %v5268
  %v6078 = vunpack.c.l.b16 %v5269
  %v6079 = vunpack.c.h.b16 %v5269
  %v6080 = vunpack.c.l.b16 %v5270
  %v6081 = vunpack.c.l.b16 %v5271
  %v6082 = vunpack.c.h.b16 %v5271
  %v6083 = vunpack.c.l.b16 %v5272
  %v6084 = vunpack.c.l.b16 %v5273
  %v6085 = vunpack.c.h.b16 %v5273
  %v6086 = vunpack.c.l.b16 %v5274
  %v6087 = vunpack.c.l.b16 %v5275
  %v6088 = vunpack.c.h.b16 %v5275
  %v6089 = vunpack.c.l.b16 %v5276
  %v6090 = vunpack.c.l.b16 %v5277
  %v6091 = vunpack.c.h.b16 %v5277
  %v6092 = vunpack.c.l.b16 %v5278
  %v6093 = vunpack.c.l.b16 %v5279
  %v6094 = vunpack.c.h.b16 %v5279
  %v6095 = vunpack.c.l.b16 %v5280
  %v6096 = vunpack.c.l.b16 %v5281
  %v6097 = vunpack.c.h.b16 %v5281
  %v6098 = vunpack.c.l.b16 %v5282
  %v6099 = vunpack.c.l.b16 %v5283
  %v6100 = vunpack.c.h.b16 %v5283
  %v6101 = vunpack.c.l.b16 %v5284
  %v6102 = vunpack.c.l.b16 %v5285
  %v6103 = vunpack.c.h.b16 %v5285
  %v6104 = vunpack.c.l.b16 %v5286
  %v6105 = vunpack.c.l.b16 %v5287
  %v6106 = vunpack.c.h.b16 %v5287
  %v6107 = vunpack.c.l.b16 %v5288
  %v6108 = vunpack.c.l.b16 %v5289
  %v6109 = vunpack.c.h.b16 %v5289
  %v6110 = vunpack.c.l.b16 %v5290
  %v6111 = vunpack.c.l.b16 %v5291
  %v6112 = vunpack.c.h.b16 %v5291
  %v6113 = vunpack.c.l.b16 %v5292
  %v6114 = vunpack.c.l.b16 %v5293
  %v6115 = vunpack.c.h.b16 %v5293
  %v6116 = vunpack.c.l.b16 %v5294
  %v6117 = vunpack.c.l.b16 %v5295
  %v6118 = vunpack.c.h.b16 %v5295
  %v6119 = vunpack.c.l.b16 %v5296
  %v6120 = vunpack.c.l.b16 %v5297
  %v6121 = vunpack.c.h.b16 %v5297
  %v6122 = vunpack.c.l.b16 %v5298
  %v6123 = vunpack.c.l.b16 %v5299
  %v6124 = vunpack.c.h.b16 %v5299
  %v6125 = vunpack.c.l.b16 %v5300
  %v6126 = vunpack.c.l.b16 %v5301
  %v6127 = vunpack.c.h.b16 %v5301
  %v6128 = vunpack.c.l.b16 %v5302
  %v6129 = vunpack.c.l.b16 %v5303
  %v6130 = vunpack.c.h.b16 %v5303
  %v6131 = vunpack.c.l.b16 %v5304
  %v6132 = vunpack.c.l.b16 %v5305
  %v6133 = vunpack.c.h.b16 %v5305
  %v6134 = vunpack.c.l.b16 %v5306
  %v6135 = vunpack.c.l.b16 %v5307
  %v6136 = vunpack.c.h.b16 %v5307
  %v6137 = vunpack.c.l.b16 %v5308
  %v6138 = vunpack.c.l.b16 %v5309
  %v6139 = vunpack.c.h.b16 %v5309
  %v6140 = vunpack.c.l.b16 %v5310
  %v6141 = vunpack.c.l.b16 %v5311
  %v6142 = vunpack.c.h.b16 %v5311
  %v6143 = vunpack.c.l.b16 %v5312
  %v6144 = vunpack.c.l.b16 %v5313
  %v6145 = vunpack.c.h.b16 %v5313
  %v6146 = vunpack.c.l.b16 %v5314
  %v6147 = vunpack.c.l.b16 %v5315
  %v6148 = vunpack.c.h.b16 %v5315
  %v6149 = vunpack.c.l.b16 %v5316
  %v6150 = vunpack.c.l.b16 %v5317
  %v6151 = vunpack.c.h.b16 %v5317
  %v6152 = vunpack.c.l.b16 %v5318
  %v6153 = vunpack.c.l.b16 %v5319
  %v6154 = vunpack.c.h.b16 %v5319
  %v6155 = vunpack.c.l.b16 %v5320
  %v6156 = vunpack.c.l.b16 %v5321
  %v6157 = vunpack.c.h.b16 %v5321
  %v6158 = vunpack.c.l.b16 %v5322
  %v6159 = vunpack.c.l.b16 %v5323
  %v6160 = vunpack.c.h.b16 %v5323
  %v6161 = vunpack.c.l.b16 %v5324
  %v6162 = vunpack.c.l.b16 %v5325
  %v6163 = vunpack.c.h.b16 %v5325
  %v6164 = vunpack.c.l.b16 %v5326
  %v6165 = vunpack.c.l.b16 %v5327
  %v6166 = vunpack.c.h.b16 %v5327
  %v6167 = vunpack.c.l.b16 %v5328
  %v6168 = vunpack.c.l.b16 %v5329
  %v6169 = vunpack.c.h.b16 %v5329
  %v6170 = vunpack.c.l.b16 %v5330
  %v6171 = vunpack.c.l.b16 %v5331
  %v6172 = vunpack.c.h.b16 %v5331
  %v6173 = vunpack.c.l.b16 %v5332
  %v6174 = vunpack.c.l.b16 %v5333
  %v6175 = vunpack.c.h.b16 %v5333
  %v6176 = vunpack.c.l.b16 %v5334
  %v6177 = vunpack.c.l.b16 %v5335
  %v6178 = vunpack.c.h.b16 %v5335
  %v6179 = vunpack.c.l.b16 %v5336
  %v6180 = vunpack.c.l.b16 %v5337
  %v6181 = vunpack.c.h.b16 %v5337
  %v6182 = vunpack.c.l.b16 %v5338
  %v6183 = vunpack.c.l.b16 %v5339
  %v6184 = vunpack.c.h.b16 %v5339
  %v6185 = vunpack.c.l.b16 %v5340
  %v6186 = vunpack.c.l.b16 %v5341
  %v6187 = vunpack.c.h.b16 %v5341
  %v6188 = vunpack.c.l.b16 %v5342
  %v6189 = vunpack.c.l.b16 %v5343
  %v6190 = vunpack.c.h.b16 %v5343
  %v6191 = vunpack.c.l.b16 %v5344
  %v6192 = vunpack.c.l.b16 %v5345
  %v6193 = vunpack.c.h.b16 %v5345
  %v6194 = vunpack.c.l.b16 %v5346
  %v6195 = vunpack.c.l.b16 %v5347
  %v6196 = vunpack.c.h.b16 %v5347
  %v6197 = vunpack.c.l.b16 %v5348
  %v6198 = vunpack.c.l.b16 %v5349
  %v6199 = vunpack.c.h.b16 %v5349
  %v6200 = vunpack.c.l.b16 %v5350
  %v6201 = vunpack.c.l.b16 %v5351
  %v6202 = vunpack.c.h.b16 %v5351
  %v6203 = vunpack.c.l.b16 %v5352
  %v6204 = vunpack.c.l.b16 %v5353
  %v6205 = vunpack.c.h.b16 %v5353
  %v6206 = vunpack.c.l.b16 %v5354
  %v6207 = vunpack.c.l.b16 %v5355
  %v6208 = vunpack.c.h.b16 %v5355
  %v6209 = vunpack.c.l.b16 %v5356
  %v6210 = vunpack.c.l.b16 %v5357
  %v6211 = vunpack.c.h.b16 %v5357
  %v6212 = vunpack.c.l.b16 %v5358
  %v6213 = vunpack.c.l.b16 %v5359
  %v6214 = vunpack.c.h.b16 %v5359
  %v6215 = vunpack.c.l.b16 %v5360
  %v6216 = vunpack.c.l.b16 %v5361
  %v6217 = vunpack.c.h.b16 %v5361
  %v6218 = vunpack.c.l.b16 %v5362
  %v6219 = vunpack.c.l.b16 %v5363
  %v6220 = vunpack.c.h.b16 %v5363
  %v6221 = vunpack.c.l.b16 %v5364
  %v6222 = vunpack.c.l.b16 %v5365
  %v6223 = vunpack.c.h.b16 %v5365
  %v6224 = vunpack.c.l.b16 %v5366
  %v6225 = vunpack.c.l.b16 %v5367
  %v6226 = vunpack.c.h.b16 %v5367
  %v6227 = vunpack.c.l.b16 %v5368
  %v6228 = vunpack.c.l.b16 %v5369
  %v6229 = vunpack.c.h.b16 %v5369
  %v6230 = vunpack.c.l.b16 %v5370
  %v6231 = vunpack.c.l.b16 %v5371
  %v6232 = vunpack.c.h.b16 %v5371
  %v6233 = vunpack.c.l.b16 %v5372
  %v6234 = vunpack.c.l.b16 %v5373
  %v6235 = vunpack.c.h.b16 %v5373
  %v6236 = vunpack.c.l.b16 %v5374
  %v6237 = vunpack.c.l.b16 %v5375
  %v6238 = vunpack.c.h.b16 %v5375
  %v6239 = vunpack.c.l.b16 %v5376
  %v6240 = vunpack.c.l.b16 %v5377
  %v6241 = vunpack.c.h.b16 %v5377
  %v6242 = vunpack.c.l.b16 %v5378
  %v6243 = vunpack.c.l.b16 %v5379
  %v6244 = vunpack.c.h.b16 %v5379
  %v6245 = vunpack.c.l.b16 %v5380
  %v6246 = vunpack.c.l.b16 %v5381
  %v6247 = vunpack.c.h.b16 %v5381
  %v6248 = vunpack.c.l.b16 %v5382
  %v6249 = vunpack.c.l.b16 %v5383
  %v6250 = vunpack.c.h.b16 %v5383
  %v6251 = vunpack.c.l.b16 %v5384
  %v6252 = vunpack.c.l.b16 %v5385
  %v6253 = vunpack.c.h.b16 %v5385
  %v6254 = vunpack.c.l.b16 %v5386
  %v6255 = vunpack.c.l.b16 %v5387
  %v6256 = vunpack.c.h.b16 %v5387
  %v6257 = vunpack.c.l.b16 %v5388
  %v6258 = vunpack.c.l.b16 %v5389
  %v6259 = vunpack.c.h.b16 %v5389
  %v6260 = vunpack.c.l.b16 %v5390
  %v6261 = vunpack.c.l.b16 %v5391
  %v6262 = vunpack.c.h.b16 %v5391
  %v6263 = vunpack.c.l.b16 %v5392
  %v6264 = vunpack.c.l.b16 %v5393
  %v6265 = vunpack.c.h.b16 %v5393
  %v6266 = vunpack.c.l.b16 %v5394
  %v6267 = vunpack.c.l.b16 %v5395
  %v6268 = vunpack.c.h.b16 %v5395
  %v6269 = vunpack.c.l.b16 %v5396
  %v6270 = vunpack.c.l.b16 %v5397
  %v6271 = vunpack.c.h.b16 %v5397
  %v6272 = vunpack.c.l.b16 %v5398
  %v6273 = vunpack.c.l.b16 %v5399
  %v6274 = vunpack.c.h.b16 %v5399
  %v6275 = vunpack.c.l.b16 %v5400
  %v6276 = vunpack.c.l.b16 %v5401
  %v6277 = vunpack.c.h.b16 %v5401
  %v6278 = vunpack.c.l.b16 %v5402
  %v6279 = vunpack.c.l.b16 %v5403
  %v6280 = vunpack.c.h.b16 %v5403
  %v6281 = vunpack.c.l.b16 %v5404
  %v6282 = vunpack.c.l.b16 %v5405
  %v6283 = vunpack.c.h.b16 %v5405
  %v6284 = vunpack.c.l.b16 %v5406
  %v6285 = vunpack.c.l.b16 %v5407
  %v6286 = vunpack.c.h.b16 %v5407
  %v6287 = vunpack.c.l.b16 %v5408
  %v6288 = vunpack.c.l.b16 %v5409
  %v6289 = vunpack.c.h.b16 %v5409
  %v6290 = vunpack.c.l.b16 %v5410
  %v6291 = vunpack.c.l.b16 %v5411
  %v6292 = vunpack.c.h.b16 %v5411
  %v6293 = vunpack.c.l.b16 %v5412
  %v6294 = vunpack.c.l.b16 %v5413
  %v6295 = vunpack.c.h.b16 %v5413
  %v6296 = vunpack.c.l.b16 %v5414
  %v6297 = vunpack.c.l.b16 %v5415
  %v6298 = vunpack.c.h.b16 %v5415
  %v6299 = vunpack.c.l.b16 %v5416
  %v6300 = vunpack.c.l.b16 %v5417
  %v6301 = vunpack.c.h.b16 %v5417
  %v6302 = vunpack.c.l.b16 %v5418
  %v6303 = vunpack.c.l.b16 %v5419
  %v6304 = vunpack.c.h.b16 %v5419
  %v6305 = vunpack.c.l.b16 %v5420
  %v6306 = vunpack.c.l.b16 %v5421
  %v6307 = vunpack.c.h.b16 %v5421
  %v6308 = vunpack.c.l.b16 %v5422
  %v6309 = vunpack.c.l.b16 %v5423
  %v6310 = vunpack.c.h.b16 %v5423
  %v6311 = vunpack.c.l.b16 %v5424
  %v6312 = vunpack.c.l.b16 %v5425
  %v6313 = vunpack.c.h.b16 %v5425
  %v6314 = vunpack.c.l.b16 %v5426
  %v6315 = vunpack.c.l.b16 %v5427
  %v6316 = vunpack.c.h.b16 %v5427
  %v6317 = vunpack.c.l.b16 %v5428
  %v6318 = vunpack.c.l.b16 %v5429
  %v6319 = vunpack.c.h.b16 %v5429
  %v6320 = vunpack.c.l.b16 %v5430
  %v6321 = vunpack.c.l.b16 %v5431
  %v6322 = vunpack.c.h.b16 %v5431
  %v6323 = vunpack.c.l.b16 %v5432
  %v6324 = vunpack.c.l.b16 %v5433
  %v6325 = vunpack.c.h.b16 %v5433
  %v6326 = vunpack.c.l.b16 %v5434
  %v6327 = vunpack.c.l.b16 %v5435
  %v6328 = vunpack.c.h.b16 %v5435
  %v6329 = vunpack.c.l.b16 %v5436
  %v6330 = vunpack.c.l.b16 %v5437
  %v6331 = vunpack.c.h.b16 %v5437
  %v6332 = vunpack.c.l.b16 %v5438
  %v6333 = vunpack.c.l.b16 %v5439
  %v6334 = vunpack.c.h.b16 %v5439
  %v6335 = vunpack.c.l.b16 %v5440
  %v6336 = vunpack.c.l.b16 %v5441
  %v6337 = vunpack.c.h.b16 %v5441
  %v6338 = vunpack.c.l.b16 %v5442
  %v6339 = vunpack.c.l.b16 %v5443
  %v6340 = vunpack.c.h.b16 %v5443
  %v6341 = vunpack.c.l.b16 %v5444
  %v6342 = vunpack.c.l.b16 %v5445
  %v6343 = vunpack.c.h.b16 %v5445
  %v6344 = vunpack.c.l.b16 %v5446
  %v6345 = vunpack.c.l.b16 %v5447
  %v6346 = vunpack.c.h.b16 %v5447
  %v6347 = vunpack.c.l.b16 %v5448
  %v6348 = vunpack.c.l.b16 %v5449
  %v6349 = vunpack.c.h.b16 %v5449
  %v6350 = vunpack.c.l.b16 %v5450
  %v6351 = vunpack.c.l.b16 %v5451
  %v6352 = vunpack.c.h.b16 %v5451
  %v6353 = vunpack.c.l.b16 %v5452
  %v6354 = vunpack.c.l.b16 %v5453
  %v6355 = vunpack.c.h.b16 %v5453
  %v6356 = vunpack.c.l.b16 %v5454
  %v6357 = vunpack.c.l.b16 %v5455
  %v6358 = vunpack.c.h.b16 %v5455
  %v6359 = vunpack.c.l.b16 %v5456
  %v6360 = vunpack.c.l.b16 %v5457
  %v6361 = vunpack.c.h.b16 %v5457
  %v6362 = vunpack.c.l.b16 %v5458
  %v6363 = vunpack.c.l.b16 %v5459
  %v6364 = vunpack.c.h.b16 %v5459
  %v6365 = vunpack.c.l.b16 %v5460
  %v6366 = vunpack.c.l.b16 %v5461
  %v6367 = vunpack.c.h.b16 %v5461
  %v6368 = vunpack.c.l.b16 %v5462
  %v6369 = vunpack.c.l.b16 %v5463
  %v6370 = vunpack.c.h.b16 %v5463
  %v6371 = vunpack.c.l.b16 %v5464
  %v6372 = vunpack.c.l.b16 %v5465
  %v6373 = vunpack.c.h.b16 %v5465
  %v6374 = vunpack.c.l.b16 %v5466
  %v6375 = vunpack.c.l.b16 %v5467
  %v6376 = vunpack.c.h.b16 %v5467
  %v6377 = vunpack.c.l.b16 %v5468
  %v6378 = vunpack.c.l.b16 %v5469
  %v6379 = vunpack.c.h.b16 %v5469
  %v6380 = vunpack.c.l.b16 %v5470
  %v6381 = vunpack.c.l.b16 %v5471
  %v6382 = vunpack.c.h.b16 %v5471
  %v6383 = vunpack.c.l.b16 %v5472
  %v6384 = vunpack.c.l.b16 %v5473
  %v6385 = vunpack.c.h.b16 %v5473
  %v6386 = vunpack.c.l.b16 %v5474
  %v6387 = vunpack.c.l.b16 %v5475
  %v6388 = vunpack.c.h.b16 %v5475
  %v6389 = vunpack.c.l.b16 %v5476
  %v6390 = vunpack.c.l.b16 %v5477
  %v6391 = vunpack.c.h.b16 %v5477
  %v6392 = vunpack.c.l.b16 %v5478
  %v6393 = vunpack.c.l.b16 %v5479
  %v6394 = vunpack.c.h.b16 %v5479
  %v6395 = vunpack.c.l.b16 %v5480
  %v6396 = vunpack.c.l.b16 %v5481
  %v6397 = vunpack.c.h.b16 %v5481
  %v6398 = vunpack.c.l.b16 %v5482
  %v6399 = vunpack.c.l.b16 %v5483
  %v6400 = vunpack.c.h.b16 %v5483
  %v6401 = vunpack.c.l.b16 %v5484
  %v6402 = vunpack.c.l.b16 %v5485
  %v6403 = vunpack.c.h.b16 %v5485
  %v6404 = vunpack.c.l.b16 %v5486
  %v6405 = vunpack.c.l.b16 %v5487
  %v6406 = vunpack.c.h.b16 %v5487
  %v6407 = vunpack.c.l.b16 %v5488
  %v6408 = vunpack.c.l.b16 %v5489
  %v6409 = vunpack.c.h.b16 %v5489
  %v6410 = vunpack.c.l.b16 %v5490
  %v6411 = vunpack.c.l.b16 %v5491
  %v6412 = vunpack.c.h.b16 %v5491
  %v6413 = vunpack.c.l.b16 %v5492
  %v6414 = vunpack.c.l.b16 %v5493
  %v6415 = vunpack.c.h.b16 %v5493
  %v6416 = vunpack.c.l.b16 %v5494
  %v6417 = vunpack.c.l.b16 %v5495
  %v6418 = vunpack.c.h.b16 %v5495
  %v6419 = vunpack.c.l.b16 %v5496
  %v6420 = vunpack.c.l.b16 %v5497
  %v6421 = vunpack.c.h.b16 %v5497
  %v6422 = vunpack.c.l.b16 %v5498
  %v6423 = vunpack.c.l.b16 %v5499
  %v6424 = vunpack.c.h.b16 %v5499
  %v6425 = vunpack.c.l.b16 %v5500
  %v6426 = vunpack.c.l.b16 %v5501
  %v6427 = vunpack.c.h.b16 %v5501
  %v6428 = vunpack.c.l.b16 %v5502
  %v6429 = vunpack.c.l.b16 %v5503
  %v6430 = vunpack.c.h.b16 %v5503
  %v6431 = vunpack.c.l.b16 %v5504
  %v6432 = vunpack.c.l.b16 %v5505
  %v6433 = vunpack.c.h.b16 %v5505
  %v6434 = vunpack.c.l.b16 %v5506
  %v6435 = vunpack.c.l.b16 %v5507
  %v6436 = vunpack.c.h.b16 %v5507
  %v6437 = vunpack.c.l.b16 %v5508
  %v6438 = vunpack.c.l.b16 %v5509
  %v6439 = vunpack.c.h.b16 %v5509
  %v6440 = vunpack.c.l.b16 %v5510
  %v6441 = vunpack.c.l.b16 %v5511
  %v6442 = vunpack.c.h.b16 %v5511
  %v6443 = vunpack.c.l.b16 %v5512
  %v6444 = vunpack.c.l.b16 %v5513
  %v6445 = vunpack.c.h.b16 %v5513
  %v6446 = vunpack.c.l.b16 %v5514
  %v6447 = vunpack.c.l.b16 %v5515
  %v6448 = vunpack.c.h.b16 %v5515
  %v6449 = vunpack.c.l.b16 %v5516
  %v6450 = vunpack.c.l.b16 %v5517
  %v6451 = vunpack.c.h.b16 %v5517
  %v6452 = vunpack.c.l.b16 %v5518
  %v6453 = vunpack.c.l.b16 %v5519
  %v6454 = vunpack.c.h.b16 %v5519
  %v6455 = vunpack.c.l.b16 %v5520
  %v6456 = vunpack.c.l.b16 %v5521
  %v6457 = vunpack.c.h.b16 %v5521
  %v6458 = vunpack.c.l.b16 %v5522
  %v6459 = vunpack.c.l.b16 %v5523
  %v6460 = vunpack.c.h.b16 %v5523
  %v6461 = vunpack.c.l.b16 %v5524
  %v6462 = vunpack.c.l.b16 %v5525
  %v6463 = vunpack.c.h.b16 %v5525
  %v6464 = vunpack.c.l.b16 %v5526
  %v6465 = vunpack.c.l.b16 %v5527
  %v6466 = vunpack.c.h.b16 %v5527
  %v6467 = vunpack.c.l.b16 %v5528
  %v6468 = vunpack.c.l.b16 %v5529
  %v6469 = vunpack.c.h.b16 %v5529
  %v6470 = vunpack.c.l.b16 %v5530
  %v6471 = vunpack.c.l.b16 %v5531
  %v6472 = vunpack.c.h.b16 %v5531
  %v6473 = vunpack.c.l.b16 %v5532
  %v6474 = vunpack.c.l.b16 %v5533
  %v6475 = vunpack.c.h.b16 %v5533
  %v6476 = vunpack.c.l.b16 %v5534
  %v6477 = vunpack.c.l.b16 %v5535
  %v6478 = vunpack.c.h.b16 %v5535
  %v6479 = vunpack.c.l.b16 %v5536
  %v6480 = vunpack.c.l.b16 %v5537
  %v6481 = vunpack.c.h.b16 %v5537
  %v6482 = vunpack.c.l.b16 %v5538
  %v6483 = vunpack.c.l.b16 %v5539
  %v6484 = vunpack.c.h.b16 %v5539
  %v6485 = vunpack.c.l.b16 %v5540
  %v6486 = vunpack.c.l.b16 %v5541
  %v6487 = vunpack.c.h.b16 %v5541
  %v6488 = vunpack.c.l.b16 %v5542
  %v6489 = vunpack.c.l.b16 %v5543
  %v6490 = vunpack.c.h.b16 %v5543
  %v6491 = vunpack.c.l.b16 %v5544
  %v6492 = vunpack.c.l.b16 %v5545
  %v6493 = vunpack.c.h.b16 %v5545
  %v6494 = vunpack.c.l.b16 %v5546
  %v6495 = vunpack.c.l.b16 %v5547
  %v6496 = vunpack.c.h.b16 %v5547
  %v6497 = vunpack.c.l.b16 %v5548
  %v6498 = vunpack.c.l.b16 %v5549
  %v6499 = vunpack.c.h.b16 %v5549
  %v6500 = vunpack.c.l.b16 %v5550
  %v6501 = vunpack.c.l.b16 %v5551
  %v6502 = vunpack.c.h.b16 %v5551
  %v6503 = vunpack.c.l.b16 %v5552
  %v6504 = vunpack.c.l.b16 %v5553
  %v6505 = vunpack.c.h.b16 %v5553
  %v6506 = vunpack.c.l.b16 %v5554
  %v6507 = vunpack.c.l.b16 %v5555
  %v6508 = vunpack.c.h.b16 %v5555
  %v6509 = vunpack.c.l.b16 %v5556
  %v6510 = vunpack.c.l.b16 %v5557
  %v6511 = vunpack.c.h.b16 %v5557
  %v6512 = vunpack.c.l.b16 %v5558
  %v6513 = vunpack.c.l.b16 %v5559
  %v6514 = vunpack.c.h.b16 %v5559
  %v6515 = vunpack.c.l.b16 %v5560
  %v6516 = vunpack.c.l.b16 %v5561
  %v6517 = vunpack.c.h.b16 %v5561
  %v6518 = vunpack.c.l.b16 %v5562
  %v6519 = vunpack.c.l.b16 %v5563
  %v6520 = vunpack.c.h.b16 %v5563
  %v6521 = vunpack.c.l.b16 %v5564
  %v6522 = vunpack.c.l.b16 %v5565
  %v6523 = vunpack.c.h.b16 %v5565
  %v6524 = vunpack.c.l.b16 %v5566
  %v6525 = vunpack.c.l.b16 %v5567
  %v6526 = vunpack.c.h.b16 %v5567
  %v6527 = vunpack.c.l.b16 %v5568
  %v6528 = vunpack.c.l.b16 %v5569
  %v6529 = vunpack.c.h.b16 %v5569
  %v6530 = vunpack.c.l.b16 %v5570
  %v6531 = vunpack.c.l.b16 %v5571
  %v6532 = vunpack.c.h.b16 %v5571
  %v6533 = vunpack.c.l.b16 %v5572
  %v6534 = vunpack.c.l.b16 %v5573
  %v6535 = vunpack.c.h.b16 %v5573
  %v6536 = vunpack.c.l.b16 %v5574
  %v6537 = vunpack.c.l.b16 %v5575
  %v6538 = vunpack.c.h.b16 %v5575
  %v6539 = vunpack.c.l.b16 %v5576
  %v6540 = vunpack.c.l.b16 %v5577
  %v6541 = vunpack.c.h.b16 %v5577
  %v6542 = vunpack.c.l.b16 %v5578
  %v6543 = vunpack.c.l.b16 %v5579
  %v6544 = vunpack.c.h.b16 %v5579
  %v6545 = vunpack.c.l.b16 %v5580
  %v6546 = vunpack.c.l.b16 %v5581
  %v6547 = vunpack.c.h.b16 %v5581
  %v6548 = vunpack.c.l.b16 %v5582
  %v6549 = vunpack.c.l.b16 %v5583
  %v6550 = vunpack.c.h.b16 %v5583
  %v6551 = vunpack.c.l.b16 %v5584
  %v6552 = vunpack.c.l.b16 %v5585
  %v6553 = vunpack.c.h.b16 %v5585
  %v6554 = vunpack.c.l.b16 %v5586
  %v6555 = vunpack.c.l.b16 %v5587
  %v6556 = vunpack.c.h.b16 %v5587
  %v6557 = vunpack.c.l.b16 %v5588
  %v6558 = vunpack.c.l.b16 %v5589
  %v6559 = vunpack.c.h.b16 %v5589
  %v6560 = vunpack.c.l.b16 %v5590
  %v6561 = vunpack.c.l.b16 %v5591
  %v6562 = vunpack.c.h.b16 %v5591
  %v6563 = vunpack.c.l.b16 %v5592
  %v6564 = vunpack.c.l.b16 %v5593
  %v6565 = vunpack.c.h.b16 %v5593
  %v6566 = vunpack.c.l.b16 %v5594
  %v6567 = vunpack.c.l.b16 %v5595
  %v6568 = vunpack.c.h.b16 %v5595
  %v6569 = vunpack.c.l.b16 %v5596
  %v6570 = vunpack.c.l.b16 %v5597
  %v6571 = vunpack.c.h.b16 %v5597
  %v6572 = vunpack.c.l.b16 %v5598
  %v6573 = vunpack.c.l.b16 %v5599
  %v6574 = vunpack.c.h.b16 %v5599
  %v6575 = vunpack.c.l.b16 %v5600
  %v6576 = vunpack.c.l.b16 %v5601
  %v6577 = vunpack.c.h.b16 %v5601
  %v6578 = vunpack.c.l.b16 %v5602
  %v6579 = vunpack.c.l.b16 %v5603
  %v6580 = vunpack.c.h.b16 %v5603
  %v6581 = vunpack.c.l.b16 %v5604
  %v6582 = vpack.c.b16 %v6009, %v6006
  %v6583 = vpack.c.b16 %v6010, %v6007
  %v6584 = vpack.c.b16 %v6011, %v6008
  %v6585 = vpack.c.b16 %v6015, %v6012
  %v6586 = vpack.c.b16 %v6016, %v6013
  %v6587 = vpack.c.b16 %v6017, %v6014
  %v6588 = vpack.c.b16 %v6021, %v6018
  %v6589 = vpack.c.b16 %v6022, %v6019
  %v6590 = vpack.c.b16 %v6023, %v6020
  %v6591 = vpack.c.b16 %v6027, %v6024
  %v6592 = vpack.c.b16 %v6028, %v6025
  %v6593 = vpack.c.b16 %v6029, %v6026
  %v6594 = vpack.c.b16 %v6033, %v6030
  %v6595 = vpack.c.b16 %v6034, %v6031
  %v6596 = vpack.c.b16 %v6035, %v6032
  %v6597 = vpack.c.b16 %v6039, %v6036
  %v6598 = vpack.c.b16 %v6040, %v6037
  %v6599 = vpack.c.b16 %v6041, %v6038
  %v6600 = vpack.c.b16 %v6045, %v6042
  %v6601 = vpack.c.b16 %v6046, %v6043
  %v6602 = vpack.c.b16 %v6047, %v6044
  %v6603 = vpack.c.b16 %v6051, %v6048
  %v6604 = vpack.c.b16 %v6052, %v6049
  %v6605 = vpack.c.b16 %v6053, %v6050
  %v6606 = vpack.c.b16 %v6057, %v6054
  %v6607 = vpack.c.b16 %v6058, %v6055
  %v6608 = vpack.c.b16 %v6059, %v6056
  %v6609 = vpack.c.b16 %v6063, %v6060
  %v6610 = vpack.c.b16 %v6064, %v6061
  %v6611 = vpack.c.b16 %v6065, %v6062
  %v6612 = vpack.c.b16 %v6069, %v6066
  %v6613 = vpack.c.b16 %v6070, %v6067
  %v6614 = vpack.c.b16 %v6071, %v6068
  %v6615 = vpack.c.b16 %v6075, %v6072
  %v6616 = vpack.c.b16 %v6076, %v6073
  %v6617 = vpack.c.b16 %v6077, %v6074
  %v6618 = vpack.c.b16 %v6081, %v6078
  %v6619 = vpack.c.b16 %v6082, %v6079
  %v6620 = vpack.c.b16 %v6083, %v6080
  %v6621 = vpack.c.b16 %v6087, %v6084
  %v6622 = vpack.c.b16 %v6088, %v6085
  %v6623 = vpack.c.b16 %v6089, %v6086
  %v6624 = vpack.c.b16 %v6093, %v6090
  %v6625 = vpack.c.b16 %v6094, %v6091
  %v6626 = vpack.c.b16 %v6095, %v6092
  %v6627 = vpack.c.b16 %v6099, %v6096
  %v6628 = vpack.c.b16 %v6100, %v6097
  %v6629 = vpack.c.b16 %v6101, %v6098
  %v6630 = vpack.c.b16 %v6105, %v6102
  %v6631 = vpack.c.b16 %v6106, %v6103
  %v6632 = vpack.c.b16 %v6107, %v6104
  %v6633 = vpack.c.b16 %v6111, %v6108
  %v6634 = vpack.c.b16 %v6112, %v6109
  %v6635 = vpack.c.b16 %v6113, %v6110
  %v6636 = vpack.c.b16 %v6117, %v6114
  %v6637 = vpack.c.b16 %v6118, %v6115
  %v6638 = vpack.c.b16 %v6119, %v6116
  %v6639 = vpack.c.b16 %v6123, %v6120
  %v6640 = vpack.c.b16 %v6124, %v6121
  %v6641 = vpack.c.b16 %v6125, %v6122
  %v6642 = vpack.c.b16 %v6129, %v6126
  %v6643 = vpack.c.b16 %v6130, %v6127
  %v6644 = vpack.c.b16 %v6131, %v6128
  %v6645 = vpack.c.b16 %v6135, %v6132
  %v6646 = vpack.c.b16 %v6136, %v6133
  %v6647 = vpack.c.b16 %v6137, %v6134
  %v6648 = vpack.c.b16 %v6141, %v6138
  %v6649 = vpack.c.b16 %v6142, %v6139
  %v6650 = vpack.c.b16 %v6143, %v6140
  %v6651 = vpack.c.b16 %v6147, %v6144
  %v6652 = vpack.c.b16 %v6148, %v6145
  %v6653 = vpack.c.b16 %v6149, %v6146
  %v6654 = vpack.c.b16 %v6153, %v6150
  %v6655 = vpack.c.b16 %v6154, %v6151
  %v6656 = vpack.c.b16 %v6155, %v6152
  %v6657 = vpack.c.b16 %v6159, %v6156
  %v6658 = vpack.c.b16 %v6160, %v6157
  %v6659 = vpack.c.b16 %v6161, %v6158
  %v6660 = vpack.c.b16 %v6165, %v6162
  %v6661 = vpack.c.b16 %v6166, %v6163
  %v6662 = vpack.c.b16 %v6167, %v6164
  %v6663 = vpack.c.b16 %v6171, %v6168
  %v6664 = vpack.c.b16 %v6172, %v6169
  %v6665 = vpack.c.b16 %v6173, %v6170
  %v6666 = vpack.c.b16 %v6177, %v6174
  %v6667 = vpack.c.b16 %v6178, %v6175
  %v6668 = vpack.c.b16 %v6179, %v6176
  %v6669 = vpack.c.b16 %v6183, %v6180
  %v6670 = vpack.c.b16 %v6184, %v6181
  %v6671 = vpack.c.b16 %v6185, %v6182
  %v6672 = vpack.c.b16 %v6189, %v6186
  %v6673 = vpack.c.b16 %v6190, %v6187
  %v6674 = vpack.c.b16 %v6191, %v6188
  %v6675 = vpack.c.b16 %v6195, %v6192
  %v6676 = vpack.c.b16 %v6196, %v6193
  %v6677 = vpack.c.b16 %v6197, %v6194
  %v6678 = vpack.c.b16 %v6201, %v6198
  %v6679 = vpack.c.b16 %v6202, %v6199
  %v6680 = vpack.c.b16 %v6203, %v6200
  %v6681 = vpack.c.b16 %v6207, %v6204
  %v6682 = vpack.c.b16 %v6208, %v6205
  %v6683 = vpack.c.b16 %v6209, %v6206
  %v6684 = vpack.c.b16 %v6213, %v6210
  %v6685 = vpack.c.b16 %v6214, %v6211
  %v6686 = vpack.c.b16 %v6215, %v6212
  %v6687 = vpack.c.b16 %v6219, %v6216
  %v6688 = vpack.c.b16 %v6220, %v6217
  %v6689 = vpack.c.b16 %v6221, %v6218
  %v6690 = vpack.c.b16 %v6225, %v6222
  %v6691 = vpack.c.b16 %v6226, %v6223
  %v6692 = vpack.c.b16 %v6227, %v6224
  %v6693 = vpack.c.b16 %v6231, %v6228
  %v6694 = vpack.c.b16 %v6232, %v6229
  %v6695 = vpack.c.b16 %v6233, %v6230
  %v6696 = vpack.c.b16 %v6237, %v6234
  %v6697 = vpack.c.b16 %v6238, %v6235
  %v6698 = vpack.c.b16 %v6239, %v6236
  %v6699 = vpack.c.b16 %v6243, %v6240
  %v6700 = vpack.c.b16 %v6244, %v6241
  %v6701 = vpack.c.b16 %v6245, %v6242
  %v6702 = vpack.c.b16 %v6249, %v6246
  %v6703 = vpack.c.b16 %v6250, %v6247
  %v6704 = vpack.c.b16 %v6251, %v6248
  %v6705 = vpack.c.b16 %v6255, %v6252
  %v6706 = vpack.c.b16 %v6256, %v6253
  %v6707 = vpack.c.b16 %v6257, %v6254
  %v6708 = vpack.c.b16 %v6261, %v6258
  %v6709 = vpack.c.b16 %v6262, %v6259
  %v6710 = vpack.c.b16 %v6263, %v6260
  %v6711 = vpack.c.b16 %v6267, %v6264
  %v6712 = vpack.c.b16 %v6268, %v6265
  %v6713 = vpack.c.b16 %v6269, %v6266
  %v6714 = vpack.c.b16 %v6273, %v6270
  %v6715 = vpack.c.b16 %v6274, %v6271
  %v6716 = vpack.c.b16 %v6275, %v6272
  %v6717 = vpack.c.b16 %v6279, %v6276
  %v6718 = vpack.c.b16 %v6280, %v6277
  %v6719 = vpack.c.b16 %v6281, %v6278
  %v6720 = vpack.c.b16 %v6285, %v6282
  %v6721 = vpack.c.b16 %v6286, %v6283
  %v6722 = vpack.c.b16 %v6287, %v6284
  %v6723 = vpack.c.b16 %v6291, %v6288
  %v6724 = vpack.c.b16 %v6292, %v6289
  %v6725 = vpack.c.b16 %v6293, %v6290
  %v6726 = vpack.c.b16 %v6297, %v6294
  %v6727 = vpack.c.b16 %v6298, %v6295
  %v6728 = vpack.c.b16 %v6299, %v6296
  %v6729 = vpack.c.b16 %v6303, %v6300
  %v6730 = vpack.c.b16 %v6304, %v6301
  %v6731 = vpack.c.b16 %v6305, %v6302
  %v6732 = vpack.c.b16 %v6309, %v6306
  %v6733 = vpack.c.b16 %v6310, %v6307
  %v6734 = vpack.c.b16 %v6311, %v6308
  %v6735 = vpack.c.b16 %v6315, %v6312
  %v6736 = vpack.c.b16 %v6316, %v6313
  %v6737 = vpack.c.b16 %v6317, %v6314
  %v6738 = vpack.c.b16 %v6321, %v6318
  %v6739 = vpack.c.b16 %v6322, %v6319
  %v6740 = vpack.c.b16 %v6323, %v6320
  %v6741 = vpack.c.b16 %v6327, %v6324
  %v6742 = vpack.c.b16 %v6328, %v6325
  %v6743 = vpack.c.b16 %v6329, %v6326
  %v6744 = vpack.c.b16 %v6333, %v6330
  %v6745 = vpack.c.b16 %v6334, %v6331
  %v6746 = vpack.c.b16 %v6335, %v6332
  %v6747 = vpack.c.b16 %v6339, %v6336
  %v6748 = vpack.c.b16 %v6340, %v6337
  %v6749 = vpack.c.b16 %v6341, %v6338
  %v6750 = vpack.c.b16 %v6345, %v6342
  %v6751 = vpack.c.b16 %v6346, %v6343
  %v6752 = vpack.c.b16 %v6347, %v6344
  %v6753 = vpack.c.b16 %v6351, %v6348
  %v6754 = vpack.c.b16 %v6352, %v6349
  %v6755 = vpack.c.b16 %v6353, %v6350
  %v6756 = vpack.c.b16 %v6357, %v6354
  %v6757 = vpack.c.b16 %v6358, %v6355
  %v6758 = vpack.c.b16 %v6359, %v6356
  %v6759 = vpack.c.b16 %v6363, %v6360
  %v6760 = vpack.c.b16 %v6364, %v6361
  %v6761 = vpack.c.b16 %v6365, %v6362
  %v6762 = vpack.c.b16 %v6369, %v6366
  %v6763 = vpack.c.b16 %v6370, %v6367
  %v6764 = vpack.c.b16 %v6371, %v6368
  %v6765 = vpack.c.b16 %v6375, %v6372
  %v6766 = vpack.c.b16 %v6376, %v6373
  %v6767 = vpack.c.b16 %v6377, %v6374
  %v6768 = vpack.c.b16 %v6381, %v6378
  %v6769 = vpack.c.b16 %v6382, %v6379
  %v6770 = vpack.c.b16 %v6383, %v6380
  %v6771 = vpack.c.b16 %v6387, %v6384
  %v6772 = vpack.c.b16 %v6388, %v6385
  %v6773 = vpack.c.b16 %v6389, %v6386
  %v6774 = vpack.c.b16 %v6393, %v6390
  %v6775 = vpack.c.b16 %v6394, %v6391
  %v6776 = vpack.c.b16 %v6395, %v6392
  %v6777 = vpack.c.b16 %v6399, %v6396
  %v6778 = vpack.c.b16 %v6400, %v6397
  %v6779 = vpack.c.b16 %v6401, %v6398
  %v6780 = vpack.c.b16 %v6405, %v6402
  %v6781 = vpack.c.b16 %v6406, %v6403
  %v6782 = vpack.c.b16 %v6407, %v6404
  %v6783 = vpack.c.b16 %v6411, %v6408
  %v6784 = vpack.c.b16 %v6412, %v6409
  %v6785 = vpack.c.b16 %v6413, %v6410
  %v6786 = vpack.c.b16 %v6417, %v6414
  %v6787 = vpack.c.b16 %v6418, %v6415
  %v6788 = vpack.c.b16 %v6419, %v6416
  %v6789 = vpack.c.b16 %v6423, %v6420
  %v6790 = vpack.c.b16 %v6424, %v6421
  %v6791 = vpack.c.b16 %v6425, %v6422
  %v6792 = vpack.c.b16 %v6429, %v6426
  %v6793 = vpack.c.b16 %v6430, %v6427
  %v6794 = vpack.c.b16 %v6431, %v6428
  %v6795 = vpack.c.b16 %v6435, %v6432
  %v6796 = vpack.c.b16 %v6436, %v6433
  %v6797 = vpack.c.b16 %v6437, %v6434
  %v6798 = vpack.c.b16 %v6441, %v6438
  %v6799 = vpack.c.b16 %v6442, %v6439
  %v6800 = vpack.c.b16 %v6443, %v6440
  %v6801 = vpack.c.b16 %v6447, %v6444
  %v6802 = vpack.c.b16 %v6448, %v6445
  %v6803 = vpack.c.b16 %v6449, %v6446
  %v6804 = vpack.c.b16 %v6453, %v6450
  %v6805 = vpack.c.b16 %v6454, %v6451
  %v6806 = vpack.c.b16 %v6455, %v6452
  %v6807 = vpack.c.b16 %v6459, %v6456
  %v6808 = vpack.c.b16 %v6460, %v6457
  %v6809 = vpack.c.b16 %v6461, %v6458
  %v6810 = vpack.c.b16 %v6465, %v6462
  %v6811 = vpack.c.b16 %v6466, %v6463
  %v6812 = vpack.c.b16 %v6467, %v6464
  %v6813 = vpack.c.b16 %v6471, %v6468
  %v6814 = vpack.c.b16 %v6472, %v6469
  %v6815 = vpack.c.b16 %v6473, %v6470
  %v6816 = vpack.c.b16 %v6477, %v6474
  %v6817 = vpack.c.b16 %v6478, %v6475
  %v6818 = vpack.c.b16 %v6479, %v6476
  %v6819 = vpack.c.b16 %v6483, %v6480
  %v6820 = vpack.c.b16 %v6484, %v6481
  %v6821 = vpack.c.b16 %v6485, %v6482
  %v6822 = vpack.c.b16 %v6489, %v6486
  %v6823 = vpack.c.b16 %v6490, %v6487
  %v6824 = vpack.c.b16 %v6491, %v6488
  %v6825 = vpack.c.b16 %v6495, %v6492
  %v6826 = vpack.c.b16 %v6496, %v6493
  %v6827 = vpack.c.b16 %v6497, %v6494
  %v6828 = vpack.c.b16 %v6501, %v6498
  %v6829 = vpack.c.b16 %v6502, %v6499
  %v6830 = vpack.c.b16 %v6503, %v6500
  %v6831 = vpack.c.b16 %v6507, %v6504
  %v6832 = vpack.c.b16 %v6508, %v6505
  %v6833 = vpack.c.b16 %v6509, %v6506
  %v6834 = vpack.c.b16 %v6513, %v6510
  %v6835 = vpack.c.b16 %v6514, %v6511
  %v6836 = vpack.c.b16 %v6515, %v6512
  %v6837 = vpack.c.b16 %v6519, %v6516
  %v6838 = vpack.c.b16 %v6520, %v6517
  %v6839 = vpack.c.b16 %v6521, %v6518
  %v6840 = vpack.c.b16 %v6525, %v6522
  %v6841 = vpack.c.b16 %v6526, %v6523
  %v6842 = vpack.c.b16 %v6527, %v6524
  %v6843 = vpack.c.b16 %v6531, %v6528
  %v6844 = vpack.c.b16 %v6532, %v6529
  %v6845 = vpack.c.b16 %v6533, %v6530
  %v6846 = vpack.c.b16 %v6537, %v6534
  %v6847 = vpack.c.b16 %v6538, %v6535
  %v6848 = vpack.c.b16 %v6539, %v6536
  %v6849 = vpack.c.b16 %v6543, %v6540
  %v6850 = vpack.c.b16 %v6544, %v6541
  %v6851 = vpack.c.b16 %v6545, %v6542
  %v6852 = vpack.c.b16 %v6549, %v6546
  %v6853 = vpack.c.b16 %v6550, %v6547
  %v6854 = vpack.c.b16 %v6551, %v6548
  %v6855 = vpack.c.b16 %v6555, %v6552
  %v6856 = vpack.c.b16 %v6556, %v6553
  %v6857 = vpack.c.b16 %v6557, %v6554
  %v6858 = vpack.c.b16 %v6561, %v6558
  %v6859 = vpack.c.b16 %v6562, %v6559
  %v6860 = vpack.c.b16 %v6563, %v6560
  %v6861 = vpack.c.b16 %v6567, %v6564
  %v6862 = vpack.c.b16 %v6568, %v6565
  %v6863 = vpack.c.b16 %v6569, %v6566
  %v6864 = vpack.c.b16 %v6573, %v6570
  %v6865 = vpack.c.b16 %v6574, %v6571
  %v6866 = vpack.c.b16 %v6575, %v6572
  %v6867 = vpack.c.b16 %v6579, %v6576
  %v6868 = vpack.c.b16 %v6580, %v6577
  %v6869 = vpack.c.b16 %v6581, %v6578
  %7158 = vmatprep.subr.bf16.mxu0 %v6583
  %7159 = vmatpush1.bf16.msra.mxu0 %v6582
  %7160 = vmatprep.subr.bf16.mxu0 %v6586
  %7161 = vmatpush1.bf16.msra.mxu0 %v6585
  %7162 = vmatprep.subr.bf16.mxu0 %v6589
  %7163 = vmatpush1.bf16.msra.mxu0 %v6588
  %7164 = vmatprep.subr.bf16.mxu0 %v6592
  %7165 = vmatpush1.bf16.msra.mxu0 %v6591
  %7166 = vmatprep.subr.bf16.mxu0 %v6595
  %7167 = vmatpush1.bf16.msra.mxu0 %v6594
  %7168 = vmatprep.subr.bf16.mxu0 %v6598
  %7169 = vmatpush1.bf16.msra.mxu0 %v6597
  %7170 = vmatprep.subr.bf16.mxu0 %v6601
  %7171 = vmatpush1.bf16.msra.mxu0 %v6600
  %7172 = vmatprep.subr.bf16.mxu0 %v6604
  %7173 = vmatpush1.bf16.msra.mxu0 %v6603
  %7174 = vmatprep.subr.bf16.mxu0 %v6607
  %7175 = vmatpush1.bf16.msra.mxu0 %v6606
  %7176 = vmatprep.subr.bf16.mxu0 %v6610
  %7177 = vmatpush1.bf16.msra.mxu0 %v6609
  %7178 = vmatprep.subr.bf16.mxu0 %v6613
  %7179 = vmatpush1.bf16.msra.mxu0 %v6612
  %7180 = vmatprep.subr.bf16.mxu0 %v6616
  %7181 = vmatpush1.bf16.msra.mxu0 %v6615
  %7182 = vmatprep.subr.bf16.mxu0 %v6619
  %7183 = vmatpush1.bf16.msra.mxu0 %v6618
  %7184 = vmatprep.subr.bf16.mxu0 %v6622
  %7185 = vmatpush1.bf16.msra.mxu0 %v6621
  %7186 = vmatprep.subr.bf16.mxu0 %v6625
  %7187 = vmatpush1.bf16.msra.mxu0 %v6624
  %7188 = vmatprep.subr.bf16.mxu0 %v6628
  %7189 = vmatpush1.bf16.msra.mxu0 %v6627
  %7190 = vmatprep.mubr.bf16.mxu0 %v5198
  %7191 = vmatmul.mubr.bf16.gmra.mrb[0].mxu0 %v5197
  %v7192 = vpop.f32.mrb[0].mxu0
  %v7193 = vadd.f32 %v5610, %v7192
  %v7194 = vpop.f32.mrb[0].mxu0
  %v7195 = vadd.f32 %v5614, %v7194
  %v7196 = vpop.f32.mrb[0].mxu0
  %v7197 = vadd.f32 %v5610, %v7196
  %v7198 = vpop.f32.mrb[0].mxu0
  %v7199 = vadd.f32 %v5614, %v7198
  %7200 = vmatprep.mubr.bf16.mxu0 %v5210
  %7201 = vmatmul.mubr.bf16.gmra.mrb[0].mxu0 %v5209
  %v7202 = vpop.f32.mrb[0].mxu0
  %v7203 = vadd.f32 %v5610, %v7202
  %v7204 = vpop.f32.mrb[0].mxu0
  %v7205 = vadd.f32 %v5614, %v7204
  %v7206 = vpop.f32.mrb[0].mxu0
  %v7207 = vpop.f32.mrb[0].mxu0
  %7208 = vdwg.mxu0
  %7209 = vmatprep.subr.bf16.mxu0 %v6631
  %7210 = vmatpush1.bf16.msra.mxu0 %v6630
  %7211 = vmatprep.subr.bf16.mxu0 %v6634
  %7212 = vmatpush1.bf16.msra.mxu0 %v6633
  %7213 = vmatprep.subr.bf16.mxu0 %v6637
  %7214 = vmatpush1.bf16.msra.mxu0 %v6636
  %7215 = vmatprep.subr.bf16.mxu0 %v6640
  %7216 = vmatpush1.bf16.msra.mxu0 %v6639
  %7217 = vmatprep.subr.bf16.mxu0 %v6643
  %7218 = vmatpush1.bf16.msra.mxu0 %v6642
  %7219 = vmatprep.subr.bf16.mxu0 %v6646
  %7220 = vmatpush1.bf16.msra.mxu0 %v6645
  %7221 = vmatprep.subr.bf16.mxu0 %v6649
  %7222 = vmatpush1.bf16.msra.mxu0 %v6648
  %7223 = vmatprep.subr.bf16.mxu0 %v6652
  %7224 = vmatpush1.bf16.msra.mxu0 %v6651
  %7225 = vmatprep.subr.bf16.mxu0 %v6655
  %7226 = vmatpush1.bf16.msra.mxu0 %v6654
  %7227 = vmatprep.subr.bf16.mxu0 %v6658
  %7228 = vmatpush1.bf16.msra.mxu0 %v6657
  %7229 = vmatprep.subr.bf16.mxu0 %v6661
  %7230 = vmatpush1.bf16.msra.mxu0 %v6660
  %7231 = vmatprep.subr.bf16.mxu0 %v6664
  %7232 = vmatpush1.bf16.msra.mxu0 %v6663
  %7233 = vmatprep.subr.bf16.mxu0 %v6667
  %7234 = vmatpush1.bf16.msra.mxu0 %v6666
  %7235 = vmatprep.subr.bf16.mxu0 %v6670
  %7236 = vmatpush1.bf16.msra.mxu0 %v6669
  %7237 = vmatprep.subr.bf16.mxu0 %v6673
  %7238 = vmatpush1.bf16.msra.mxu0 %v6672
  %7239 = vmatprep.subr.bf16.mxu0 %v6676
  %7240 = vmatpush1.bf16.msra.mxu0 %v6675
  %7241 = vmatprep.mubr.bf16.mxu0 %v5200
  %7242 = vmatmul.mubr.bf16.gmra.mrb[0].mxu0 %v5199
  %v7243 = vpop.f32.mrb[0].mxu0
  %v7244 = vadd.f32 %v7193, %v7243
  %v7245 = vpop.f32.mrb[0].mxu0
  %v7246 = vadd.f32 %v7195, %v7245
  %v7247 = vpop.f32.mrb[0].mxu0
  %v7248 = vadd.f32 %v7197, %v7247
  %v7249 = vpop.f32.mrb[0].mxu0
  %v7250 = vadd.f32 %v7199, %v7249
  %7251 = vmatprep.mubr.bf16.mxu0 %v5212
  %7252 = vmatmul.mubr.bf16.gmra.mrb[0].mxu0 %v5211
  %v7253 = vpop.f32.mrb[0].mxu0
  %v7254 = vadd.f32 %v7203, %v7253
  %v7255 = vpop.f32.mrb[0].mxu0
  %v7256 = vadd.f32 %v7205, %v7255
  %v7257 = vpop.f32.mrb[0].mxu0
  %v7258 = vpop.f32.mrb[0].mxu0
  %7259 = vdwg.mxu0
  %7260 = vmatprep.subr.bf16.mxu0 %v6679
  %7261 = vmatpush1.bf16.msra.mxu0 %v6678
  %7262 = vmatprep.subr.bf16.mxu0 %v6682
  %7263 = vmatpush1.bf16.msra.mxu0 %v6681
  %7264 = vmatprep.subr.bf16.mxu0 %v6685
  %7265 = vmatpush1.bf16.msra.mxu0 %v6684
  %7266 = vmatprep.subr.bf16.mxu0 %v6688
  %7267 = vmatpush1.bf16.msra.mxu0 %v6687
  %7268 = vmatprep.subr.bf16.mxu0 %v6691
  %7269 = vmatpush1.bf16.msra.mxu0 %v6690
  %7270 = vmatprep.subr.bf16.mxu0 %v6694
  %7271 = vmatpush1.bf16.msra.mxu0 %v6693
  %7272 = vmatprep.subr.bf16.mxu0 %v6697
  %7273 = vmatpush1.bf16.msra.mxu0 %v6696
  %7274 = vmatprep.subr.bf16.mxu0 %v6700
  %7275 = vmatpush1.bf16.msra.mxu0 %v6699
  %7276 = vmatprep.subr.bf16.mxu0 %v6703
  %7277 = vmatpush1.bf16.msra.mxu0 %v6702
  %7278 = vmatprep.subr.bf16.mxu0 %v6706
  %7279 = vmatpush1.bf16.msra.mxu0 %v6705
  %7280 = vmatprep.subr.bf16.mxu0 %v6709
  %7281 = vmatpush1.bf16.msra.mxu0 %v6708
  %7282 = vmatprep.subr.bf16.mxu0 %v6712
  %7283 = vmatpush1.bf16.msra.mxu0 %v6711
  %7284 = vmatprep.subr.bf16.mxu0 %v6715
  %7285 = vmatpush1.bf16.msra.mxu0 %v6714
  %7286 = vmatprep.subr.bf16.mxu0 %v6718
  %7287 = vmatpush1.bf16.msra.mxu0 %v6717
  %7288 = vmatprep.subr.bf16.mxu0 %v6721
  %7289 = vmatpush1.bf16.msra.mxu0 %v6720
  %7290 = vmatprep.subr.bf16.mxu0 %v6724
  %7291 = vmatpush1.bf16.msra.mxu0 %v6723
  %7292 = vmatprep.mubr.bf16.mxu0 %v5202
  %7293 = vmatmul.mubr.bf16.gmra.mrb[0].mxu0 %v5201
  %v7294 = vpop.f32.mrb[0].mxu0
  %v7295 = vadd.f32 %v7244, %v7294
  %v7296 = vpop.f32.mrb[0].mxu0
  %v7297 = vadd.f32 %v7246, %v7296
  %v7298 = vpop.f32.mrb[0].mxu0
  %v7299 = vadd.f32 %v7248, %v7298
  %v7300 = vpop.f32.mrb[0].mxu0
  %v7301 = vadd.f32 %v7250, %v7300
  %7302 = vmatprep.mubr.bf16.mxu0 %v5214
  %7303 = vmatmul.mubr.bf16.gmra.mrb[0].mxu0 %v5213
  %v7304 = vpop.f32.mrb[0].mxu0
  %v7305 = vadd.f32 %v7254, %v7304
  %v7306 = vpop.f32.mrb[0].mxu0
  %v7307 = vadd.f32 %v7256, %v7306
  %v7308 = vpop.f32.mrb[0].mxu0
  %v7309 = vpop.f32.mrb[0].mxu0
  %7310 = vdwg.mxu0
  %7311 = vmatprep.subr.bf16.mxu0 %v6727
  %7312 = vmatpush1.bf16.msra.mxu0 %v6726
  %7313 = vmatprep.subr.bf16.mxu0 %v6730
  %7314 = vmatpush1.bf16.msra.mxu0 %v6729
  %7315 = vmatprep.subr.bf16.mxu0 %v6733
  %7316 = vmatpush1.bf16.msra.mxu0 %v6732
  %7317 = vmatprep.subr.bf16.mxu0 %v6736
  %7318 = vmatpush1.bf16.msra.mxu0 %v6735
  %7319 = vmatprep.subr.bf16.mxu0 %v6739
  %7320 = vmatpush1.bf16.msra.mxu0 %v6738
  %7321 = vmatprep.subr.bf16.mxu0 %v6742
  %7322 = vmatpush1.bf16.msra.mxu0 %v6741
  %7323 = vmatprep.subr.bf16.mxu0 %v6745
  %7324 = vmatpush1.bf16.msra.mxu0 %v6744
  %7325 = vmatprep.subr.bf16.mxu0 %v6748
  %7326 = vmatpush1.bf16.msra.mxu0 %v6747
  %7327 = vmatprep.subr.bf16.mxu0 %v6751
  %7328 = vmatpush1.bf16.msra.mxu0 %v6750
  %7329 = vmatprep.subr.bf16.mxu0 %v6754
  %7330 = vmatpush1.bf16.msra.mxu0 %v6753
  %7331 = vmatprep.subr.bf16.mxu0 %v6757
  %7332 = vmatpush1.bf16.msra.mxu0 %v6756
  %7333 = vmatprep.subr.bf16.mxu0 %v6760
  %7334 = vmatpush1.bf16.msra.mxu0 %v6759
  %7335 = vmatprep.subr.bf16.mxu0 %v6763
  %7336 = vmatpush1.bf16.msra.mxu0 %v6762
  %7337 = vmatprep.subr.bf16.mxu0 %v6766
  %7338 = vmatpush1.bf16.msra.mxu0 %v6765
  %7339 = vmatprep.subr.bf16.mxu0 %v6769
  %7340 = vmatpush1.bf16.msra.mxu0 %v6768
  %7341 = vmatprep.subr.bf16.mxu0 %v6772
  %7342 = vmatpush1.bf16.msra.mxu0 %v6771
  %7343 = vmatprep.mubr.bf16.mxu0 %v5204
  %7344 = vmatmul.mubr.bf16.gmra.mrb[0].mxu0 %v5203
  %v7345 = vpop.f32.mrb[0].mxu0
  %v7346 = vadd.f32 %v7295, %v7345
  %v7347 = vpop.f32.mrb[0].mxu0
  %v7348 = vadd.f32 %v7297, %v7347
  %v7349 = vpop.f32.mrb[0].mxu0
  %v7350 = vadd.f32 %v7299, %v7349
  %v7351 = vpop.f32.mrb[0].mxu0
  %v7352 = vadd.f32 %v7301, %v7351
  %7353 = vmatprep.mubr.bf16.mxu0 %v5216
  %7354 = vmatmul.mubr.bf16.gmra.mrb[0].mxu0 %v5215
  %v7355 = vpop.f32.mrb[0].mxu0
  %v7356 = vadd.f32 %v7305, %v7355
  %v7357 = vpop.f32.mrb[0].mxu0
  %v7358 = vadd.f32 %v7307, %v7357
  %v7359 = vpop.f32.mrb[0].mxu0
  %v7360 = vpop.f32.mrb[0].mxu0
  %7361 = vdwg.mxu0
  %7362 = vmatprep.subr.bf16.mxu0 %v6775
  %7363 = vmatpush1.bf16.msra.mxu0 %v6774
  %7364 = vmatprep.subr.bf16.mxu0 %v6778
  %7365 = vmatpush1.bf16.msra.mxu0 %v6777
  %7366 = vmatprep.subr.bf16.mxu0 %v6781
  %7367 = vmatpush1.bf16.msra.mxu0 %v6780
  %7368 = vmatprep.subr.bf16.mxu0 %v6784
  %7369 = vmatpush1.bf16.msra.mxu0 %v6783
  %7370 = vmatprep.subr.bf16.mxu0 %v6787
  %7371 = vmatpush1.bf16.msra.mxu0 %v6786
  %7372 = vmatprep.subr.bf16.mxu0 %v6790
  %7373 = vmatpush1.bf16.msra.mxu0 %v6789
  %7374 = vmatprep.subr.bf16.mxu0 %v6793
  %7375 = vmatpush1.bf16.msra.mxu0 %v6792
  %7376 = vmatprep.subr.bf16.mxu0 %v6796
  %7377 = vmatpush1.bf16.msra.mxu0 %v6795
  %7378 = vmatprep.subr.bf16.mxu0 %v6799
  %7379 = vmatpush1.bf16.msra.mxu0 %v6798
  %7380 = vmatprep.subr.bf16.mxu0 %v6802
  %7381 = vmatpush1.bf16.msra.mxu0 %v6801
  %7382 = vmatprep.subr.bf16.mxu0 %v6805
  %7383 = vmatpush1.bf16.msra.mxu0 %v6804
  %7384 = vmatprep.subr.bf16.mxu0 %v6808
  %7385 = vmatpush1.bf16.msra.mxu0 %v6807
  %7386 = vmatprep.subr.bf16.mxu0 %v6811
  %7387 = vmatpush1.bf16.msra.mxu0 %v6810
  %7388 = vmatprep.subr.bf16.mxu0 %v6814
  %7389 = vmatpush1.bf16.msra.mxu0 %v6813
  %7390 = vmatprep.subr.bf16.mxu0 %v6817
  %7391 = vmatpush1.bf16.msra.mxu0 %v6816
  %7392 = vmatprep.subr.bf16.mxu0 %v6820
  %7393 = vmatpush1.bf16.msra.mxu0 %v6819
  %7394 = vmatprep.mubr.bf16.mxu0 %v5206
  %7395 = vmatmul.mubr.bf16.gmra.mrb[0].mxu0 %v5205
  %v7396 = vpop.f32.mrb[0].mxu0
  %v7397 = vadd.f32 %v7346, %v7396
  %v7398 = vpop.f32.mrb[0].mxu0
  %v7399 = vadd.f32 %v7348, %v7398
  %v7400 = vpop.f32.mrb[0].mxu0
  %v7401 = vadd.f32 %v7350, %v7400
  %v7402 = vpop.f32.mrb[0].mxu0
  %v7403 = vadd.f32 %v7352, %v7402
  %7404 = vmatprep.mubr.bf16.mxu0 %v5218
  %7405 = vmatmul.mubr.bf16.gmra.mrb[0].mxu0 %v5217
  %v7406 = vpop.f32.mrb[0].mxu0
  %v7407 = vadd.f32 %v7356, %v7406
  %v7408 = vpop.f32.mrb[0].mxu0
  %v7409 = vadd.f32 %v7358, %v7408
  %v7410 = vpop.f32.mrb[0].mxu0
  %v7411 = vpop.f32.mrb[0].mxu0
  %7412 = vdwg.mxu0
  %7413 = vmatprep.subr.bf16.mxu0 %v6823
  %7414 = vmatpush1.bf16.msra.mxu0 %v6822
  %7415 = vmatprep.subr.bf16.mxu0 %v6826
  %7416 = vmatpush1.bf16.msra.mxu0 %v6825
  %7417 = vmatprep.subr.bf16.mxu0 %v6829
  %7418 = vmatpush1.bf16.msra.mxu0 %v6828
  %7419 = vmatprep.subr.bf16.mxu0 %v6832
  %7420 = vmatpush1.bf16.msra.mxu0 %v6831
  %7421 = vmatprep.subr.bf16.mxu0 %v6835
  %7422 = vmatpush1.bf16.msra.mxu0 %v6834
  %7423 = vmatprep.subr.bf16.mxu0 %v6838
  %7424 = vmatpush1.bf16.msra.mxu0 %v6837
  %7425 = vmatprep.subr.bf16.mxu0 %v6841
  %7426 = vmatpush1.bf16.msra.mxu0 %v6840
  %7427 = vmatprep.subr.bf16.mxu0 %v6844
  %7428 = vmatpush1.bf16.msra.mxu0 %v6843
  %7429 = vmatprep.subr.bf16.mxu0 %v6847
  %7430 = vmatpush1.bf16.msra.mxu0 %v6846
  %7431 = vmatprep.subr.bf16.mxu0 %v6850
  %7432 = vmatpush1.bf16.msra.mxu0 %v6849
  %7433 = vmatprep.subr.bf16.mxu0 %v6853
  %7434 = vmatpush1.bf16.msra.mxu0 %v6852
  %7435 = vmatprep.subr.bf16.mxu0 %v6856
  %7436 = vmatpush1.bf16.msra.mxu0 %v6855
  %7437 = vmatprep.subr.bf16.mxu0 %v6859
  %7438 = vmatpush1.bf16.msra.mxu0 %v6858
  %7439 = vmatprep.subr.bf16.mxu0 %v6862
  %7440 = vmatpush1.bf16.msra.mxu0 %v6861
  %7441 = vmatprep.subr.bf16.mxu0 %v6865
  %7442 = vmatpush1.bf16.msra.mxu0 %v6864
  %7443 = vmatprep.subr.bf16.mxu0 %v6868
  %7444 = vmatpush1.bf16.msra.mxu0 %v6867
  %7445 = vmatprep.mubr.bf16.mxu0 %v5208
  %7446 = vmatmul.mubr.bf16.gmra.mrb[0].mxu0 %v5207
  %v7447 = vpop.f32.mrb[0].mxu0
  %v7448 = vadd.f32 %v7397, %v7447
  %v7449 = vpop.f32.mrb[0].mxu0
  %v7450 = vadd.f32 %v7399, %v7449
  %v7451 = vpop.f32.mrb[0].mxu0
  %v7452 = vadd.f32 %v7401, %v7451
  %v7453 = vpop.f32.mrb[0].mxu0
  %v7454 = vadd.f32 %v7403, %v7453
  %7455 = vmatprep.mubr.bf16.mxu0 %v5220
  %7456 = vmatmul.mubr.bf16.gmra.mrb[0].mxu0 %v5219
  %v7457 = vpop.f32.mrb[0].mxu0
  %v7458 = vadd.f32 %v7407, %v7457
  %v7459 = vpop.f32.mrb[0].mxu0
  %v7460 = vadd.f32 %v7409, %v7459
  %v7461 = vpop.f32.mrb[0].mxu0
  %v7462 = vpop.f32.mrb[0].mxu0
  %7463 = vdwg.mxu0
  %7464 = vmatprep.subr.bf16.mxu0 0
  %7465 = vmatpush1.bf16.msra.mxu0 %v6584
  %7466 = vmatprep.subr.bf16.mxu0 0
  %7467 = vmatpush1.bf16.msra.mxu0 %v6587
  %7468 = vmatprep.subr.bf16.mxu0 0
  %7469 = vmatpush1.bf16.msra.mxu0 %v6590
  %7470 = vmatprep.subr.bf16.mxu0 0
  %7471 = vmatpush1.bf16.msra.mxu0 %v6593
  %7472 = vmatprep.subr.bf16.mxu0 0
  %7473 = vmatpush1.bf16.msra.mxu0 %v6596
  %7474 = vmatprep.subr.bf16.mxu0 0
  %7475 = vmatpush1.bf16.msra.mxu0 %v6599
  %7476 = vmatprep.subr.bf16.mxu0 0
  %7477 = vmatpush1.bf16.msra.mxu0 %v6602
  %7478 = vmatprep.subr.bf16.mxu0 0
  %7479 = vmatpush1.bf16.msra.mxu0 %v6605
  %7480 = vmatprep.subr.bf16.mxu0 0
  %7481 = vmatpush1.bf16.msra.mxu0 %v6608
  %7482 = vmatprep.subr.bf16.mxu0 0
  %7483 = vmatpush1.bf16.msra.mxu0 %v6611
  %7484 = vmatprep.subr.bf16.mxu0 0
  %7485 = vmatpush1.bf16.msra.mxu0 %v6614
  %7486 = vmatprep.subr.bf16.mxu0 0
  %7487 = vmatpush1.bf16.msra.mxu0 %v6617
  %7488 = vmatprep.subr.bf16.mxu0 0
  %7489 = vmatpush1.bf16.msra.mxu0 %v6620
  %7490 = vmatprep.subr.bf16.mxu0 0
  %7491 = vmatpush1.bf16.msra.mxu0 %v6623
  %7492 = vmatprep.subr.bf16.mxu0 0
  %7493 = vmatpush1.bf16.msra.mxu0 %v6626
  %7494 = vmatprep.subr.bf16.mxu0 0
  %7495 = vmatpush1.bf16.msra.mxu0 %v6629
  %7496 = vmatprep.mubr.bf16.mxu0 %v5198
  %7497 = vmatmul.mubr.bf16.gmra.mrb[0].mxu0 %v5197
  %v7498 = vpop.f32.mrb[0].mxu0
  %v7499 = vadd.f32 %v5618, %v7498
  %v7500 = vpop.f32.mrb[0].mxu0
  %v7501 = vpop.f32.mrb[0].mxu0
  %v7502 = vadd.f32 %v5618, %v7501
  %v7503 = vpop.f32.mrb[0].mxu0
  %7504 = vmatprep.mubr.bf16.mxu0 %v5210
  %7505 = vmatmul.mubr.bf16.gmra.mrb[0].mxu0 %v5209
  %v7506 = vpop.f32.mrb[0].mxu0
  %v7507 = vadd.f32 %v5618, %v7506
  %v7508 = vpop.f32.mrb[0].mxu0
  %v7509 = vpop.f32.mrb[0].mxu0
  %v7510 = vpop.f32.mrb[0].mxu0
  %7511 = vdwg.mxu0
  %7512 = vmatprep.subr.bf16.mxu0 0
  %7513 = vmatpush1.bf16.msra.mxu0 %v6632
  %7514 = vmatprep.subr.bf16.mxu0 0
  %7515 = vmatpush1.bf16.msra.mxu0 %v6635
  %7516 = vmatprep.subr.bf16.mxu0 0
  %7517 = vmatpush1.bf16.msra.mxu0 %v6638
  %7518 = vmatprep.subr.bf16.mxu0 0
  %7519 = vmatpush1.bf16.msra.mxu0 %v6641
  %7520 = vmatprep.subr.bf16.mxu0 0
  %7521 = vmatpush1.bf16.msra.mxu0 %v6644
  %7522 = vmatprep.subr.bf16.mxu0 0
  %7523 = vmatpush1.bf16.msra.mxu0 %v6647
  %7524 = vmatprep.subr.bf16.mxu0 0
  %7525 = vmatpush1.bf16.msra.mxu0 %v6650
  %7526 = vmatprep.subr.bf16.mxu0 0
  %7527 = vmatpush1.bf16.msra.mxu0 %v6653
  %7528 = vmatprep.subr.bf16.mxu0 0
  %7529 = vmatpush1.bf16.msra.mxu0 %v6656
  %7530 = vmatprep.subr.bf16.mxu0 0
  %7531 = vmatpush1.bf16.msra.mxu0 %v6659
  %7532 = vmatprep.subr.bf16.mxu0 0
  %7533 = vmatpush1.bf16.msra.mxu0 %v6662
  %7534 = vmatprep.subr.bf16.mxu0 0
  %7535 = vmatpush1.bf16.msra.mxu0 %v6665
  %7536 = vmatprep.subr.bf16.mxu0 0
  %7537 = vmatpush1.bf16.msra.mxu0 %v6668
  %7538 = vmatprep.subr.bf16.mxu0 0
  %7539 = vmatpush1.bf16.msra.mxu0 %v6671
  %7540 = vmatprep.subr.bf16.mxu0 0
  %7541 = vmatpush1.bf16.msra.mxu0 %v6674
  %7542 = vmatprep.subr.bf16.mxu0 0
  %7543 = vmatpush1.bf16.msra.mxu0 %v6677
  %7544 = vmatprep.mubr.bf16.mxu0 %v5200
  %7545 = vmatmul.mubr.bf16.gmra.mrb[0].mxu0 %v5199
  %v7546 = vpop.f32.mrb[0].mxu0
  %v7547 = vadd.f32 %v7499, %v7546
  %v7548 = vpop.f32.mrb[0].mxu0
  %v7549 = vpop.f32.mrb[0].mxu0
  %v7550 = vadd.f32 %v7502, %v7549
  %v7551 = vpop.f32.mrb[0].mxu0
  %7552 = vmatprep.mubr.bf16.mxu0 %v5212
  %7553 = vmatmul.mubr.bf16.gmra.mrb[0].mxu0 %v5211
  %v7554 = vpop.f32.mrb[0].mxu0
  %v7555 = vadd.f32 %v7507, %v7554
  %v7556 = vpop.f32.mrb[0].mxu0
  %v7557 = vpop.f32.mrb[0].mxu0
  %v7558 = vpop.f32.mrb[0].mxu0
  %7559 = vdwg.mxu0
  %7560 = vmatprep.subr.bf16.mxu0 0
  %7561 = vmatpush1.bf16.msra.mxu0 %v6680
  %7562 = vmatprep.subr.bf16.mxu0 0
  %7563 = vmatpush1.bf16.msra.mxu0 %v6683
  %7564 = vmatprep.subr.bf16.mxu0 0
  %7565 = vmatpush1.bf16.msra.mxu0 %v6686
  %7566 = vmatprep.subr.bf16.mxu0 0
  %7567 = vmatpush1.bf16.msra.mxu0 %v6689
  %7568 = vmatprep.subr.bf16.mxu0 0
  %7569 = vmatpush1.bf16.msra.mxu0 %v6692
  %7570 = vmatprep.subr.bf16.mxu0 0
  %7571 = vmatpush1.bf16.msra.mxu0 %v6695
  %7572 = vmatprep.subr.bf16.mxu0 0
  %7573 = vmatpush1.bf16.msra.mxu0 %v6698
  %7574 = vmatprep.subr.bf16.mxu0 0
  %7575 = vmatpush1.bf16.msra.mxu0 %v6701
  %7576 = vmatprep.subr.bf16.mxu0 0
  %7577 = vmatpush1.bf16.msra.mxu0 %v6704
  %7578 = vmatprep.subr.bf16.mxu0 0
  %7579 = vmatpush1.bf16.msra.mxu0 %v6707
  %7580 = vmatprep.subr.bf16.mxu0 0
  %7581 = vmatpush1.bf16.msra.mxu0 %v6710
  %7582 = vmatprep.subr.bf16.mxu0 0
  %7583 = vmatpush1.bf16.msra.mxu0 %v6713
  %7584 = vmatprep.subr.bf16.mxu0 0
  %7585 = vmatpush1.bf16.msra.mxu0 %v6716
  %7586 = vmatprep.subr.bf16.mxu0 0
  %7587 = vmatpush1.bf16.msra.mxu0 %v6719
  %7588 = vmatprep.subr.bf16.mxu0 0
  %7589 = vmatpush1.bf16.msra.mxu0 %v6722
  %7590 = vmatprep.subr.bf16.mxu0 0
  %7591 = vmatpush1.bf16.msra.mxu0 %v6725
  %7592 = vmatprep.mubr.bf16.mxu0 %v5202
  %7593 = vmatmul.mubr.bf16.gmra.mrb[0].mxu0 %v5201
  %v7594 = vpop.f32.mrb[0].mxu0
  %v7595 = vadd.f32 %v7547, %v7594
  %v7596 = vpop.f32.mrb[0].mxu0
  %v7597 = vpop.f32.mrb[0].mxu0
  %v7598 = vadd.f32 %v7550, %v7597
  %v7599 = vpop.f32.mrb[0].mxu0
  %7600 = vmatprep.mubr.bf16.mxu0 %v5214
  %7601 = vmatmul.mubr.bf16.gmra.mrb[0].mxu0 %v5213
  %v7602 = vpop.f32.mrb[0].mxu0
  %v7603 = vadd.f32 %v7555, %v7602
  %v7604 = vpop.f32.mrb[0].mxu0
  %v7605 = vpop.f32.mrb[0].mxu0
  %v7606 = vpop.f32.mrb[0].mxu0
  %7607 = vdwg.mxu0
  %7608 = vmatprep.subr.bf16.mxu0 0
  %7609 = vmatpush1.bf16.msra.mxu0 %v6728
  %7610 = vmatprep.subr.bf16.mxu0 0
  %7611 = vmatpush1.bf16.msra.mxu0 %v6731
  %7612 = vmatprep.subr.bf16.mxu0 0
  %7613 = vmatpush1.bf16.msra.mxu0 %v6734
  %7614 = vmatprep.subr.bf16.mxu0 0
  %7615 = vmatpush1.bf16.msra.mxu0 %v6737
  %7616 = vmatprep.subr.bf16.mxu0 0
  %7617 = vmatpush1.bf16.msra.mxu0 %v6740
  %7618 = vmatprep.subr.bf16.mxu0 0
  %7619 = vmatpush1.bf16.msra.mxu0 %v6743
  %7620 = vmatprep.subr.bf16.mxu0 0
  %7621 = vmatpush1.bf16.msra.mxu0 %v6746
  %7622 = vmatprep.subr.bf16.mxu0 0
  %7623 = vmatpush1.bf16.msra.mxu0 %v6749
  %7624 = vmatprep.subr.bf16.mxu0 0
  %7625 = vmatpush1.bf16.msra.mxu0 %v6752
  %7626 = vmatprep.subr.bf16.mxu0 0
  %7627 = vmatpush1.bf16.msra.mxu0 %v6755
  %7628 = vmatprep.subr.bf16.mxu0 0
  %7629 = vmatpush1.bf16.msra.mxu0 %v6758
  %7630 = vmatprep.subr.bf16.mxu0 0
  %7631 = vmatpush1.bf16.msra.mxu0 %v6761
  %7632 = vmatprep.subr.bf16.mxu0 0
  %7633 = vmatpush1.bf16.msra.mxu0 %v6764
  %7634 = vmatprep.subr.bf16.mxu0 0
  %7635 = vmatpush1.bf16.msra.mxu0 %v6767
  %7636 = vmatprep.subr.bf16.mxu0 0
  %7637 = vmatpush1.bf16.msra.mxu0 %v6770
  %7638 = vmatprep.subr.bf16.mxu0 0
  %7639 = vmatpush1.bf16.msra.mxu0 %v6773
  %7640 = vmatprep.mubr.bf16.mxu0 %v5204
  %7641 = vmatmul.mubr.bf16.gmra.mrb[0].mxu0 %v5203
  %v7642 = vpop.f32.mrb[0].mxu0
  %v7643 = vadd.f32 %v7595, %v7642
  %v7644 = vpop.f32.mrb[0].mxu0
  %v7645 = vpop.f32.mrb[0].mxu0
  %v7646 = vadd.f32 %v7598, %v7645
  %v7647 = vpop.f32.mrb[0].mxu0
  %7648 = vmatprep.mubr.bf16.mxu0 %v5216
  %7649 = vmatmul.mubr.bf16.gmra.mrb[0].mxu0 %v5215
  %v7650 = vpop.f32.mrb[0].mxu0
  %v7651 = vadd.f32 %v7603, %v7650
  %v7652 = vpop.f32.mrb[0].mxu0
  %v7653 = vpop.f32.mrb[0].mxu0
  %v7654 = vpop.f32.mrb[0].mxu0
  %7655 = vdwg.mxu0
  %7656 = vmatprep.subr.bf16.mxu0 0
  %7657 = vmatpush1.bf16.msra.mxu0 %v6776
  %7658 = vmatprep.subr.bf16.mxu0 0
  %7659 = vmatpush1.bf16.msra.mxu0 %v6779
  %7660 = vmatprep.subr.bf16.mxu0 0
  %7661 = vmatpush1.bf16.msra.mxu0 %v6782
  %7662 = vmatprep.subr.bf16.mxu0 0
  %7663 = vmatpush1.bf16.msra.mxu0 %v6785
  %7664 = vmatprep.subr.bf16.mxu0 0
  %7665 = vmatpush1.bf16.msra.mxu0 %v6788
  %7666 = vmatprep.subr.bf16.mxu0 0
  %7667 = vmatpush1.bf16.msra.mxu0 %v6791
  %7668 = vmatprep.subr.bf16.mxu0 0
  %7669 = vmatpush1.bf16.msra.mxu0 %v6794
  %7670 = vmatprep.subr.bf16.mxu0 0
  %7671 = vmatpush1.bf16.msra.mxu0 %v6797
  %7672 = vmatprep.subr.bf16.mxu0 0
  %7673 = vmatpush1.bf16.msra.mxu0 %v6800
  %7674 = vmatprep.subr.bf16.mxu0 0
  %7675 = vmatpush1.bf16.msra.mxu0 %v6803
  %7676 = vmatprep.subr.bf16.mxu0 0
  %7677 = vmatpush1.bf16.msra.mxu0 %v6806
  %7678 = vmatprep.subr.bf16.mxu0 0
  %7679 = vmatpush1.bf16.msra.mxu0 %v6809
  %7680 = vmatprep.subr.bf16.mxu0 0
  %7681 = vmatpush1.bf16.msra.mxu0 %v6812
  %7682 = vmatprep.subr.bf16.mxu0 0
  %7683 = vmatpush1.bf16.msra.mxu0 %v6815
  %7684 = vmatprep.subr.bf16.mxu0 0
  %7685 = vmatpush1.bf16.msra.mxu0 %v6818
  %7686 = vmatprep.subr.bf16.mxu0 0
  %7687 = vmatpush1.bf16.msra.mxu0 %v6821
  %7688 = vmatprep.mubr.bf16.mxu0 %v5206
  %7689 = vmatmul.mubr.bf16.gmra.mrb[0].mxu0 %v5205
  %v7690 = vpop.f32.mrb[0].mxu0
  %v7691 = vadd.f32 %v7643, %v7690
  %v7692 = vpop.f32.mrb[0].mxu0
  %v7693 = vpop.f32.mrb[0].mxu0
  %v7694 = vadd.f32 %v7646, %v7693
  %v7695 = vpop.f32.mrb[0].mxu0
  %7696 = vmatprep.mubr.bf16.mxu0 %v5218
  %7697 = vmatmul.mubr.bf16.gmra.mrb[0].mxu0 %v5217
  %v7698 = vpop.f32.mrb[0].mxu0
  %v7699 = vadd.f32 %v7651, %v7698
  %v7700 = vpop.f32.mrb[0].mxu0
  %v7701 = vpop.f32.mrb[0].mxu0
  %v7702 = vpop.f32.mrb[0].mxu0
  %7703 = vdwg.mxu0
  %7704 = vmatprep.subr.bf16.mxu0 0
  %7705 = vmatpush1.bf16.msra.mxu0 %v6824
  %7706 = vmatprep.subr.bf16.mxu0 0
  %7707 = vmatpush1.bf16.msra.mxu0 %v6827
  %7708 = vmatprep.subr.bf16.mxu0 0
  %7709 = vmatpush1.bf16.msra.mxu0 %v6830
  %7710 = vmatprep.subr.bf16.mxu0 0
  %7711 = vmatpush1.bf16.msra.mxu0 %v6833
  %7712 = vmatprep.subr.bf16.mxu0 0
  %7713 = vmatpush1.bf16.msra.mxu0 %v6836
  %7714 = vmatprep.subr.bf16.mxu0 0
  %7715 = vmatpush1.bf16.msra.mxu0 %v6839
  %7716 = vmatprep.subr.bf16.mxu0 0
  %7717 = vmatpush1.bf16.msra.mxu0 %v6842
  %7718 = vmatprep.subr.bf16.mxu0 0
  %7719 = vmatpush1.bf16.msra.mxu0 %v6845
  %7720 = vmatprep.subr.bf16.mxu0 0
  %7721 = vmatpush1.bf16.msra.mxu0 %v6848
  %7722 = vmatprep.subr.bf16.mxu0 0
  %7723 = vmatpush1.bf16.msra.mxu0 %v6851
  %7724 = vmatprep.subr.bf16.mxu0 0
  %7725 = vmatpush1.bf16.msra.mxu0 %v6854
  %7726 = vmatprep.subr.bf16.mxu0 0
  %7727 = vmatpush1.bf16.msra.mxu0 %v6857
  %7728 = vmatprep.subr.bf16.mxu0 0
  %7729 = vmatpush1.bf16.msra.mxu0 %v6860
  %7730 = vmatprep.subr.bf16.mxu0 0
  %7731 = vmatpush1.bf16.msra.mxu0 %v6863
  %7732 = vmatprep.subr.bf16.mxu0 0
  %7733 = vmatpush1.bf16.msra.mxu0 %v6866
  %7734 = vmatprep.subr.bf16.mxu0 0
  %7735 = vmatpush1.bf16.msra.mxu0 %v6869
  %7736 = vmatprep.mubr.bf16.mxu0 %v5208
  %7737 = vmatmul.mubr.bf16.gmra.mrb[0].mxu0 %v5207
  %v7738 = vpop.f32.mrb[0].mxu0
  %v7739 = vadd.f32 %v7691, %v7738
  %v7740 = vpop.f32.mrb[0].mxu0
  %v7741 = vpop.f32.mrb[0].mxu0
  %v7742 = vadd.f32 %v7694, %v7741
  %v7743 = vpop.f32.mrb[0].mxu0
  %7744 = vmatprep.mubr.bf16.mxu0 %v5220
  %7745 = vmatmul.mubr.bf16.gmra.mrb[0].mxu0 %v5219
  %v7746 = vpop.f32.mrb[0].mxu0
  %v7747 = vadd.f32 %v7699, %v7746
  %v7748 = vpop.f32.mrb[0].mxu0
  %v7749 = vpop.f32.mrb[0].mxu0
  %v7750 = vpop.f32.mrb[0].mxu0
  %7751 = vdwg.mxu0
  %v7752 = vmax.f32 %v7448, 0.0
  %v7753 = vmax.f32 %v7450, 0.0
  %v7754 = vmax.f32 %v7739, 0.0
  %v7755 = vmax.f32 %v7452, 0.0
  %v7756 = vmax.f32 %v7454, 0.0
  %v7757 = vmax.f32 %v7742, 0.0
  %v7758 = vmax.f32 %v7458, 0.0
  %v7759 = vmax.f32 %v7460, 0.0
  %v7760 = vmax.f32 %v7747, 0.0
  %7761 = vst [vmem:[#allocation3] sm:$0xff] %v7752
  %7762 = vst [vmem:[#allocation3 + $0x8] sm:$0xff] %v7753
  %7763 = vst [vmem:[#allocation3 + $0x10] sm:$0xff] %v7754
  %7764 = vst [vmem:[#allocation3 + $0x18] sm:$0xff] %v7755
  %7765 = vst [vmem:[#allocation3 + $0x20] sm:$0xff] %v7756
  %7766 = vst [vmem:[#allocation3 + $0x28] sm:$0xff] %v7757
  %7767 = vst [vmem:[#allocation3 + $0x30] sm:$0x3] %v7758
  %7768 = vst [vmem:[#allocation3 + $0x38] sm:$0x3] %v7759
  %7769 = vst [vmem:[#allocation3 + $0x40] sm:$0x3] %v7760
  %v7770 = vld [vmem:[#allocation3] sm:$0x3]
  %v7771 = vld [vmem:[#allocation3 + $0x8] sm:$0x3]
  %v7772 = vld [vmem:[#allocation3 + $0x10] sm:$0x3]
  %v7773 = vld [vmem:[#allocation3] sm:$0xc]
  %v7774 = vld [vmem:[#allocation3 + $0x8] sm:$0xc]
  %v7775 = vld [vmem:[#allocation3 + $0x10] sm:$0xc]
  %v7776 = vld [vmem:[#allocation3] sm:$0x30]
  %v7777 = vld [vmem:[#allocation3 + $0x8] sm:$0x30]
  %v7778 = vld [vmem:[#allocation3 + $0x10] sm:$0x30]
  %v7779 = vld [vmem:[#allocation3] sm:$0xc0]
  %v7780 = vld [vmem:[#allocation3 + $0x8] sm:$0xc0]
  %v7781 = vld [vmem:[#allocation3 + $0x10] sm:$0xc0]
  %v7782 = vld [vmem:[#allocation3 + $0x18] sm:$0x3]
  %v7783 = vld [vmem:[#allocation3 + $0x20] sm:$0x3]
  %v7784 = vld [vmem:[#allocation3 + $0x28] sm:$0x3]
  %v7785 = vld [vmem:[#allocation3 + $0x18] sm:$0xc]
  %v7786 = vld [vmem:[#allocation3 + $0x20] sm:$0xc]
  %v7787 = vld [vmem:[#allocation3 + $0x28] sm:$0xc]
  %v7788 = vld [vmem:[#allocation3 + $0x18] sm:$0x30]
  %v7789 = vld [vmem:[#allocation3 + $0x20] sm:$0x30]
  %v7790 = vld [vmem:[#allocation3 + $0x28] sm:$0x30]
  %v7791 = vld [vmem:[#allocation3 + $0x18] sm:$0xc0]
  %v7792 = vld [vmem:[#allocation3 + $0x20] sm:$0xc0]
  %v7793 = vld [vmem:[#allocation3 + $0x28] sm:$0xc0]
  %v7794 = vld [vmem:[#allocation3 + $0x30] sm:$0x3]
  %v7795 = vld [vmem:[#allocation3 + $0x38] sm:$0x3]
  %v7796 = vld [vmem:[#allocation3 + $0x40] sm:$0x3]
  %v7800 = vrot.slane %v7773, 2
  %v7801 = vrot.slane %v7774, 2
  %v7802 = vrot.slane %v7775, 2
  %v7809 = vrot.slane %v7776, 4
  %v7810 = vrot.slane %v7777, 4
  %v7811 = vrot.slane %v7778, 4
  %v7818 = vrot.slane %v7779, 6
  %v7819 = vrot.slane %v7780, 6
  %v7820 = vrot.slane %v7781, 6
  %v7827 = vrot.slane %v7785, 2
  %v7828 = vrot.slane %v7786, 2
  %v7829 = vrot.slane %v7787, 2
  %v7836 = vrot.slane %v7788, 4
  %v7837 = vrot.slane %v7789, 4
  %v7838 = vrot.slane %v7790, 4
  %v7845 = vrot.slane %v7791, 6
  %v7846 = vrot.slane %v7792, 6
  %v7847 = vrot.slane %v7793, 6
  %v7851 = vpack.c.bf16 %v7770, %v7770
  %v7852 = vpack.c.bf16 %v7771, %v7771
  %v7853 = vpack.c.bf16 %v7772, %v7772
  %v7854 = vpack.c.bf16 %v7800, %v7800
  %v7855 = vpack.c.bf16 %v7801, %v7801
  %v7856 = vpack.c.bf16 %v7802, %v7802
  %v7857 = vpack.c.bf16 %v7809, %v7809
  %v7858 = vpack.c.bf16 %v7810, %v7810
  %v7859 = vpack.c.bf16 %v7811, %v7811
  %v7860 = vpack.c.bf16 %v7818, %v7818
  %v7861 = vpack.c.bf16 %v7819, %v7819
  %v7862 = vpack.c.bf16 %v7820, %v7820
  %v7863 = vpack.c.bf16 %v7782, %v7782
  %v7864 = vpack.c.bf16 %v7783, %v7783
  %v7865 = vpack.c.bf16 %v7784, %v7784
  %v7866 = vpack.c.bf16 %v7827, %v7827
  %v7867 = vpack.c.bf16 %v7828, %v7828
  %v7868 = vpack.c.bf16 %v7829, %v7829
  %v7869 = vpack.c.bf16 %v7836, %v7836
  %v7870 = vpack.c.bf16 %v7837, %v7837
  %v7871 = vpack.c.bf16 %v7838, %v7838
  %v7872 = vpack.c.bf16 %v7845, %v7845
  %v7873 = vpack.c.bf16 %v7846, %v7846
  %v7874 = vpack.c.bf16 %v7847, %v7847
  %v7875 = vpack.c.bf16 %v7794, %v7794
  %v7876 = vpack.c.bf16 %v7795, %v7795
  %v7877 = vpack.c.bf16 %v7796, %v7796
  %v7878 = vld [vmem:[%s5] sm:$0xff]
  %v7879 = vld [vmem:[%s5 + $0x8] sm:$0xff]
  %v7880 = vld [vmem:[%s5 + $0x10] sm:$0xff]
  %v7881 = vld [vmem:[%s5 + $0x18] sm:$0xff]
  %v7882 = vld [vmem:[%s5 + $0x20] sm:$0xff]
  %v7883 = vld [vmem:[%s5 + $0x28] sm:$0xff]
  %v7884 = vld [vmem:[%s5 + $0x30] sm:$0xff]
  %v7885 = vld [vmem:[%s5 + $0x38] sm:$0xff]
  %v7886 = vld [vmem:[%s5 + $0x40] sm:$0xff]
  %v7887 = vld [vmem:[%s5 + $0x48] sm:$0xff]
  %v7888 = vld [vmem:[%s5 + $0x50] sm:$0xff]
  %v7889 = vld [vmem:[%s5 + $0x58] sm:$0xff]
  %v7890 = vld [vmem:[%s5 + $0x60] sm:$0xff]
  %v7891 = vld [vmem:[%s5 + $0x68] sm:$0xff]
  %v7892 = vld [vmem:[%s5 + $0x70] sm:$0xff]
  %v7893 = vld [vmem:[%s5 + $0x78] sm:$0xff]
  %v7894 = vld [vmem:[%s5 + $0x80] sm:$0xff]
  %v7895 = vld [vmem:[%s5 + $0x88] sm:$0xff]
  %v7896 = vld [vmem:[%s5 + $0x90] sm:$0xff]
  %v7897 = vld [vmem:[%s5 + $0x98] sm:$0xff]
  %v7898 = vld [vmem:[%s5 + $0xa0] sm:$0xff]
  %v7899 = vld [vmem:[%s5 + $0xa8] sm:$0xff]
  %v7900 = vld [vmem:[%s5 + $0xb0] sm:$0xff]
  %v7901 = vld [vmem:[%s5 + $0xb8] sm:$0xff]
  %v7902 = vld [vmem:[%s5 + $0xc0] sm:$0xff]
  %v7903 = vld [vmem:[%s5 + $0xc8] sm:$0xff]
  %v7904 = vld [vmem:[%s5 + $0xd0] sm:$0xff]
  %v7905 = vld [vmem:[%s5 + $0xd8] sm:$0xff]
  %v7906 = vld [vmem:[%s5 + $0xe0] sm:$0xff]
  %v7907 = vld [vmem:[%s5 + $0xe8] sm:$0xff]
  %v7908 = vld [vmem:[%s5 + $0xf0] sm:$0xff]
  %v7909 = vld [vmem:[%s5 + $0xf8] sm:$0xff]
  %v7910 = vld [vmem:[%s5 + $0x100] sm:$0xff]
  %v7911 = vld [vmem:[%s5 + $0x108] sm:$0xff]
  %v7912 = vld [vmem:[%s5 + $0x110] sm:$0xff]
  %v7913 = vld [vmem:[%s5 + $0x118] sm:$0xff]
  %v7914 = vld [vmem:[%s5 + $0x120] sm:$0xff]
  %v7915 = vld [vmem:[%s5 + $0x128] sm:$0xff]
  %v7916 = vld [vmem:[%s5 + $0x130] sm:$0xff]
  %v7917 = vld [vmem:[%s5 + $0x138] sm:$0xff]
  %v7918 = vld [vmem:[%s5 + $0x140] sm:$0xff]
  %v7919 = vld [vmem:[%s5 + $0x148] sm:$0xff]
  %v7920 = vld [vmem:[%s5 + $0x150] sm:$0xff]
  %v7921 = vld [vmem:[%s5 + $0x158] sm:$0xff]
  %v7922 = vld [vmem:[%s5 + $0x160] sm:$0xff]
  %v7923 = vld [vmem:[%s5 + $0x168] sm:$0xff]
  %v7924 = vld [vmem:[%s5 + $0x170] sm:$0xff]
  %v7925 = vld [vmem:[%s5 + $0x178] sm:$0xff]
  %v7926 = vld [vmem:[%s5 + $0x180] sm:$0xff]
  %v7927 = vld [vmem:[%s5 + $0x188] sm:$0xff]
  %v7928 = vld [vmem:[%s5 + $0x190] sm:$0xff]
  %v7929 = vld [vmem:[%s5 + $0x198] sm:$0xff]
  %v7930 = vld [vmem:[%s5 + $0x1a0] sm:$0xff]
  %v7931 = vld [vmem:[%s5 + $0x1a8] sm:$0xff]
  %v7932 = vld [vmem:[%s5 + $0x1b0] sm:$0xff]
  %v7933 = vld [vmem:[%s5 + $0x1b8] sm:$0xff]
  %v7934 = vld [vmem:[%s5 + $0x1c0] sm:$0xff]
  %v7935 = vld [vmem:[%s5 + $0x1c8] sm:$0xff]
  %v7936 = vld [vmem:[%s5 + $0x1d0] sm:$0xff]
  %v7937 = vld [vmem:[%s5 + $0x1d8] sm:$0xff]
  %v7938 = vld [vmem:[%s5 + $0x1e0] sm:$0xff]
  %v7939 = vld [vmem:[%s5 + $0x1e8] sm:$0xff]
  %v7940 = vld [vmem:[%s5 + $0x1f0] sm:$0xff]
  %v7941 = vld [vmem:[%s5 + $0x1f8] sm:$0xff]
  %v7942 = vld [vmem:[%s5 + $0x200] sm:$0xff]
  %v7943 = vld [vmem:[%s5 + $0x208] sm:$0xff]
  %v7944 = vld [vmem:[%s5 + $0x210] sm:$0xff]
  %v7945 = vld [vmem:[%s5 + $0x218] sm:$0xff]
  %v7946 = vld [vmem:[%s5 + $0x220] sm:$0xff]
  %v7947 = vld [vmem:[%s5 + $0x228] sm:$0xff]
  %v7948 = vld [vmem:[%s5 + $0x230] sm:$0xff]
  %v7949 = vld [vmem:[%s5 + $0x238] sm:$0xff]
  %v7950 = vld [vmem:[%s5 + $0x240] sm:$0xff]
  %v7951 = vld [vmem:[%s5 + $0x248] sm:$0xff]
  %v7952 = vld [vmem:[%s5 + $0x250] sm:$0xff]
  %v7953 = vld [vmem:[%s5 + $0x258] sm:$0xff]
  %v7954 = vld [vmem:[%s5 + $0x260] sm:$0xff]
  %v7955 = vld [vmem:[%s5 + $0x268] sm:$0xff]
  %v7956 = vld [vmem:[%s5 + $0x270] sm:$0xff]
  %v7957 = vld [vmem:[%s5 + $0x278] sm:$0xff]
  %v7958 = vld [vmem:[%s5 + $0x280] sm:$0xff]
  %v7959 = vld [vmem:[%s5 + $0x288] sm:$0xff]
  %v7960 = vld [vmem:[%s5 + $0x290] sm:$0xff]
  %v7961 = vld [vmem:[%s5 + $0x298] sm:$0xff]
  %v7962 = vld [vmem:[%s5 + $0x2a0] sm:$0xff]
  %v7963 = vld [vmem:[%s5 + $0x2a8] sm:$0xff]
  %v7964 = vld [vmem:[%s5 + $0x2b0] sm:$0xff]
  %v7965 = vld [vmem:[%s5 + $0x2b8] sm:$0xff]
  %v7966 = vld [vmem:[%s5 + $0x2c0] sm:$0xff]
  %v7967 = vld [vmem:[%s5 + $0x2c8] sm:$0xff]
  %v7968 = vld [vmem:[%s5 + $0x2d0] sm:$0xff]
  %v7969 = vld [vmem:[%s5 + $0x2d8] sm:$0xff]
  %v7970 = vld [vmem:[%s5 + $0x2e0] sm:$0xff]
  %v7971 = vld [vmem:[%s5 + $0x2e8] sm:$0xff]
  %v7972 = vld [vmem:[%s5 + $0x2f0] sm:$0xff]
  %v7973 = vld [vmem:[%s5 + $0x2f8] sm:$0xff]
  %v7974 = vld [vmem:[%s5 + $0x300] sm:$0xff]
  %v7975 = vld [vmem:[%s5 + $0x308] sm:$0xff]
  %v7976 = vld [vmem:[%s5 + $0x310] sm:$0xff]
  %v7977 = vld [vmem:[%s5 + $0x318] sm:$0xff]
  %v7978 = vld [vmem:[%s5 + $0x320] sm:$0xff]
  %v7979 = vld [vmem:[%s5 + $0x328] sm:$0xff]
  %v7980 = vld [vmem:[%s5 + $0x330] sm:$0xff]
  %v7981 = vld [vmem:[%s5 + $0x338] sm:$0xff]
  %v7982 = vld [vmem:[%s5 + $0x340] sm:$0xff]
  %v7983 = vld [vmem:[%s5 + $0x348] sm:$0xff]
  %v7984 = vld [vmem:[%s5 + $0x350] sm:$0xff]
  %v7985 = vld [vmem:[%s5 + $0x358] sm:$0xff]
  %v7986 = vld [vmem:[%s5 + $0x360] sm:$0xff]
  %v7987 = vld [vmem:[%s5 + $0x368] sm:$0xff]
  %v7988 = vld [vmem:[%s5 + $0x370] sm:$0xff]
  %v7989 = vld [vmem:[%s5 + $0x378] sm:$0xff]
  %v7990 = vld [vmem:[%s5 + $0x380] sm:$0xff]
  %v7991 = vld [vmem:[%s5 + $0x388] sm:$0xff]
  %v7992 = vld [vmem:[%s5 + $0x390] sm:$0xff]
  %v7993 = vld [vmem:[%s5 + $0x398] sm:$0xff]
  %v7994 = vld [vmem:[%s5 + $0x3a0] sm:$0xff]
  %v7995 = vld [vmem:[%s5 + $0x3a8] sm:$0xff]
  %v7996 = vld [vmem:[%s5 + $0x3b0] sm:$0xff]
  %v7997 = vld [vmem:[%s5 + $0x3b8] sm:$0xff]
  %v7998 = vld [vmem:[%s5 + $0x3c0] sm:$0xff]
  %v7999 = vld [vmem:[%s5 + $0x3c8] sm:$0xff]
  %v8000 = vld [vmem:[%s5 + $0x3d0] sm:$0xff]
  %v8001 = vld [vmem:[%s5 + $0x3d8] sm:$0xff]
  %v8002 = vld [vmem:[%s5 + $0x3e0] sm:$0xff]
  %v8003 = vld [vmem:[%s5 + $0x3e8] sm:$0xff]
  %v8004 = vld [vmem:[%s5 + $0x3f0] sm:$0xff]
  %v8005 = vld [vmem:[%s5 + $0x3f8] sm:$0xff]
  %v8006 = vld [vmem:[%s5 + $0x400] sm:$0xff]
  %v8007 = vld [vmem:[%s5 + $0x408] sm:$0xff]
  %v8008 = vld [vmem:[%s5 + $0x410] sm:$0xff]
  %v8009 = vld [vmem:[%s5 + $0x418] sm:$0xff]
  %v8010 = vld [vmem:[%s5 + $0x420] sm:$0xff]
  %v8011 = vld [vmem:[%s5 + $0x428] sm:$0xff]
  %v8012 = vld [vmem:[%s5 + $0x430] sm:$0xff]
  %v8013 = vld [vmem:[%s5 + $0x438] sm:$0xff]
  %v8014 = vld [vmem:[%s5 + $0x440] sm:$0xff]
  %v8015 = vld [vmem:[%s5 + $0x448] sm:$0xff]
  %v8016 = vld [vmem:[%s5 + $0x450] sm:$0xff]
  %v8017 = vld [vmem:[%s5 + $0x458] sm:$0xff]
  %v8018 = vld [vmem:[%s5 + $0x460] sm:$0xff]
  %v8019 = vld [vmem:[%s5 + $0x468] sm:$0xff]
  %v8020 = vld [vmem:[%s5 + $0x470] sm:$0xff]
  %v8021 = vld [vmem:[%s5 + $0x478] sm:$0xff]
  %v8022 = vld [vmem:[%s5 + $0x480] sm:$0xff]
  %v8023 = vld [vmem:[%s5 + $0x488] sm:$0xff]
  %v8024 = vld [vmem:[%s5 + $0x490] sm:$0xff]
  %v8025 = vld [vmem:[%s5 + $0x498] sm:$0xff]
  %v8026 = vld [vmem:[%s5 + $0x4a0] sm:$0xff]
  %v8027 = vld [vmem:[%s5 + $0x4a8] sm:$0xff]
  %v8028 = vld [vmem:[%s5 + $0x4b0] sm:$0xff]
  %v8029 = vld [vmem:[%s5 + $0x4b8] sm:$0xff]
  %v8030 = vld [vmem:[%s5 + $0x4c0] sm:$0xff]
  %v8031 = vld [vmem:[%s5 + $0x4c8] sm:$0xff]
  %v8032 = vld [vmem:[%s5 + $0x4d0] sm:$0xff]
  %v8033 = vld [vmem:[%s5 + $0x4d8] sm:$0xff]
  %v8034 = vld [vmem:[%s5 + $0x4e0] sm:$0xff]
  %v8035 = vld [vmem:[%s5 + $0x4e8] sm:$0xff]
  %v8036 = vld [vmem:[%s5 + $0x4f0] sm:$0xff]
  %v8037 = vld [vmem:[%s5 + $0x4f8] sm:$0xff]
  %v8038 = vld [vmem:[%s5 + $0x500] sm:$0xff]
  %v8039 = vld [vmem:[%s5 + $0x508] sm:$0xff]
  %v8040 = vld [vmem:[%s5 + $0x510] sm:$0xff]
  %v8041 = vld [vmem:[%s5 + $0x518] sm:$0xff]
  %v8042 = vld [vmem:[%s5 + $0x520] sm:$0xff]
  %v8043 = vld [vmem:[%s5 + $0x528] sm:$0xff]
  %v8044 = vld [vmem:[%s5 + $0x530] sm:$0xff]
  %v8045 = vld [vmem:[%s5 + $0x538] sm:$0xff]
  %v8046 = vld [vmem:[%s5 + $0x540] sm:$0xff]
  %v8047 = vld [vmem:[%s5 + $0x548] sm:$0xff]
  %v8048 = vld [vmem:[%s5 + $0x550] sm:$0xff]
  %v8049 = vld [vmem:[%s5 + $0x558] sm:$0xff]
  %v8050 = vld [vmem:[%s5 + $0x560] sm:$0xff]
  %v8051 = vld [vmem:[%s5 + $0x568] sm:$0xff]
  %v8052 = vld [vmem:[%s5 + $0x570] sm:$0xff]
  %v8053 = vld [vmem:[%s5 + $0x578] sm:$0xff]
  %v8054 = vld [vmem:[%s5 + $0x580] sm:$0xff]
  %v8055 = vld [vmem:[%s5 + $0x588] sm:$0xff]
  %v8056 = vld [vmem:[%s5 + $0x590] sm:$0xff]
  %v8057 = vld [vmem:[%s5 + $0x598] sm:$0xff]
  %v8058 = vld [vmem:[%s5 + $0x5a0] sm:$0xff]
  %v8059 = vld [vmem:[%s5 + $0x5a8] sm:$0xff]
  %v8060 = vld [vmem:[%s5 + $0x5b0] sm:$0xff]
  %v8061 = vld [vmem:[%s5 + $0x5b8] sm:$0xff]
  %v8062 = vld [vmem:[%s5 + $0x5c0] sm:$0xff]
  %v8063 = vld [vmem:[%s5 + $0x5c8] sm:$0xff]
  %v8064 = vld [vmem:[%s5 + $0x5d0] sm:$0xff]
  %v8065 = vld [vmem:[%s5 + $0x5d8] sm:$0xff]
  %v8066 = vld [vmem:[%s5 + $0x5e0] sm:$0xff]
  %v8067 = vld [vmem:[%s5 + $0x5e8] sm:$0xff]
  %v8068 = vld [vmem:[%s5 + $0x5f0] sm:$0xff]
  %v8069 = vld [vmem:[%s5 + $0x5f8] sm:$0xff]
  %v8070 = vld [vmem:[%s5 + $0x600] sm:$0xff]
  %v8071 = vld [vmem:[%s5 + $0x608] sm:$0xff]
  %v8072 = vld [vmem:[%s5 + $0x610] sm:$0xff]
  %v8073 = vld [vmem:[%s5 + $0x618] sm:$0xff]
  %v8074 = vld [vmem:[%s5 + $0x620] sm:$0xff]
  %v8075 = vld [vmem:[%s5 + $0x628] sm:$0xff]
  %v8076 = vld [vmem:[%s5 + $0x630] sm:$0xff]
  %v8077 = vld [vmem:[%s5 + $0x638] sm:$0xff]
  %v8078 = vld [vmem:[%s5 + $0x640] sm:$0xff]
  %v8079 = vld [vmem:[%s5 + $0x648] sm:$0xff]
  %v8080 = vld [vmem:[%s5 + $0x650] sm:$0xff]
  %v8081 = vld [vmem:[%s5 + $0x658] sm:$0xff]
  %v8082 = vld [vmem:[%s5 + $0x660] sm:$0xff]
  %v8083 = vld [vmem:[%s5 + $0x668] sm:$0xff]
  %v8084 = vld [vmem:[%s5 + $0x670] sm:$0xff]
  %v8085 = vld [vmem:[%s5 + $0x678] sm:$0xff]
  %v8086 = vld [vmem:[%s5 + $0x680] sm:$0xff]
  %v8087 = vld [vmem:[%s5 + $0x688] sm:$0xff]
  %v8088 = vld [vmem:[%s5 + $0x690] sm:$0xff]
  %v8089 = vld [vmem:[%s5 + $0x698] sm:$0xff]
  %v8090 = vld [vmem:[%s5 + $0x6a0] sm:$0xff]
  %v8091 = vld [vmem:[%s5 + $0x6a8] sm:$0xff]
  %v8092 = vld [vmem:[%s5 + $0x6b0] sm:$0xff]
  %v8093 = vld [vmem:[%s5 + $0x6b8] sm:$0xff]
  %v8094 = vld [vmem:[%s5 + $0x6c0] sm:$0xff]
  %v8095 = vld [vmem:[%s5 + $0x6c8] sm:$0xff]
  %v8096 = vld [vmem:[%s5 + $0x6d0] sm:$0xff]
  %v8097 = vld [vmem:[%s5 + $0x6d8] sm:$0xff]
  %v8098 = vld [vmem:[%s5 + $0x6e0] sm:$0xff]
  %v8099 = vld [vmem:[%s5 + $0x6e8] sm:$0xff]
  %v8100 = vld [vmem:[%s5 + $0x6f0] sm:$0xff]
  %v8101 = vld [vmem:[%s5 + $0x6f8] sm:$0xff]
  %v8102 = vld [vmem:[%s5 + $0x700] sm:$0xff]
  %v8103 = vld [vmem:[%s5 + $0x708] sm:$0xff]
  %v8104 = vld [vmem:[%s5 + $0x710] sm:$0xff]
  %v8105 = vld [vmem:[%s5 + $0x718] sm:$0xff]
  %v8106 = vld [vmem:[%s5 + $0x720] sm:$0xff]
  %v8107 = vld [vmem:[%s5 + $0x728] sm:$0xff]
  %v8108 = vld [vmem:[%s5 + $0x730] sm:$0xff]
  %v8109 = vld [vmem:[%s5 + $0x738] sm:$0xff]
  %v8110 = vld [vmem:[%s5 + $0x740] sm:$0xff]
  %v8111 = vld [vmem:[%s5 + $0x748] sm:$0xff]
  %v8112 = vld [vmem:[%s5 + $0x750] sm:$0xff]
  %v8113 = vld [vmem:[%s5 + $0x758] sm:$0xff]
  %v8114 = vld [vmem:[%s5 + $0x760] sm:$0xff]
  %v8115 = vld [vmem:[%s5 + $0x768] sm:$0xff]
  %v8116 = vld [vmem:[%s5 + $0x770] sm:$0xff]
  %v8117 = vld [vmem:[%s5 + $0x778] sm:$0xff]
  %v8118 = vld [vmem:[%s5 + $0x780] sm:$0xff]
  %v8119 = vld [vmem:[%s5 + $0x788] sm:$0xff]
  %v8120 = vld [vmem:[%s5 + $0x790] sm:$0xff]
  %v8121 = vld [vmem:[%s5 + $0x798] sm:$0xff]
  %v8122 = vld [vmem:[%s5 + $0x7a0] sm:$0xff]
  %v8123 = vld [vmem:[%s5 + $0x7a8] sm:$0xff]
  %v8124 = vld [vmem:[%s5 + $0x7b0] sm:$0xff]
  %v8125 = vld [vmem:[%s5 + $0x7b8] sm:$0xff]
  %v8126 = vld [vmem:[%s5 + $0x7c0] sm:$0xff]
  %v8127 = vld [vmem:[%s5 + $0x7c8] sm:$0xff]
  %v8128 = vld [vmem:[%s5 + $0x7d0] sm:$0xff]
  %v8129 = vld [vmem:[%s5 + $0x7d8] sm:$0xff]
  %v8130 = vld [vmem:[%s5 + $0x7e0] sm:$0xff]
  %v8131 = vld [vmem:[%s5 + $0x7e8] sm:$0xff]
  %v8132 = vld [vmem:[%s5 + $0x7f0] sm:$0xff]
  %v8133 = vld [vmem:[%s5 + $0x7f8] sm:$0xff]
  %v8134 = vld [vmem:[%s5 + $0x800] sm:$0xff]
  %v8135 = vld [vmem:[%s5 + $0x808] sm:$0xff]
  %v8136 = vld [vmem:[%s5 + $0x810] sm:$0xff]
  %v8137 = vld [vmem:[%s5 + $0x818] sm:$0xff]
  %v8138 = vld [vmem:[%s5 + $0x820] sm:$0xff]
  %v8139 = vld [vmem:[%s5 + $0x828] sm:$0xff]
  %v8140 = vld [vmem:[%s5 + $0x830] sm:$0xff]
  %v8141 = vld [vmem:[%s5 + $0x838] sm:$0xff]
  %v8142 = vld [vmem:[%s5 + $0x840] sm:$0xff]
  %v8143 = vld [vmem:[%s5 + $0x848] sm:$0xff]
  %v8144 = vld [vmem:[%s5 + $0x850] sm:$0xff]
  %v8145 = vld [vmem:[%s5 + $0x858] sm:$0xff]
  %v8146 = vld [vmem:[%s5 + $0x860] sm:$0xff]
  %v8147 = vld [vmem:[%s5 + $0x868] sm:$0xff]
  %v8148 = vld [vmem:[%s5 + $0x870] sm:$0xff]
  %v8149 = vld [vmem:[%s5 + $0x878] sm:$0xff]
  %v8150 = vld [vmem:[%s5 + $0x880] sm:$0xff]
  %v8151 = vld [vmem:[%s5 + $0x888] sm:$0xff]
  %v8152 = vld [vmem:[%s5 + $0x890] sm:$0xff]
  %v8153 = vld [vmem:[%s5 + $0x898] sm:$0xff]
  %v8154 = vld [vmem:[%s5 + $0x8a0] sm:$0xff]
  %v8155 = vld [vmem:[%s5 + $0x8a8] sm:$0xff]
  %v8156 = vld [vmem:[%s5 + $0x8b0] sm:$0xff]
  %v8157 = vld [vmem:[%s5 + $0x8b8] sm:$0xff]
  %v8158 = vld [vmem:[%s5 + $0x8c0] sm:$0xff]
  %v8159 = vld [vmem:[%s5 + $0x8c8] sm:$0xff]
  %v8160 = vld [vmem:[%s5 + $0x8d0] sm:$0xff]
  %v8161 = vld [vmem:[%s5 + $0x8d8] sm:$0xff]
  %v8162 = vld [vmem:[%s5 + $0x8e0] sm:$0xff]
  %v8163 = vld [vmem:[%s5 + $0x8e8] sm:$0xff]
  %v8164 = vld [vmem:[%s5 + $0x8f0] sm:$0xff]
  %v8165 = vld [vmem:[%s5 + $0x8f8] sm:$0xff]
  %v8166 = vld [vmem:[%s5 + $0x900] sm:$0xff]
  %v8167 = vld [vmem:[%s5 + $0x908] sm:$0xff]
  %v8168 = vld [vmem:[%s5 + $0x910] sm:$0xff]
  %v8169 = vld [vmem:[%s5 + $0x918] sm:$0xff]
  %v8170 = vld [vmem:[%s5 + $0x920] sm:$0xff]
  %v8171 = vld [vmem:[%s5 + $0x928] sm:$0xff]
  %v8172 = vld [vmem:[%s5 + $0x930] sm:$0xff]
  %v8173 = vld [vmem:[%s5 + $0x938] sm:$0xff]
  %v8174 = vld [vmem:[%s5 + $0x940] sm:$0xff]
  %v8175 = vld [vmem:[%s5 + $0x948] sm:$0xff]
  %v8176 = vld [vmem:[%s5 + $0x950] sm:$0xff]
  %v8177 = vld [vmem:[%s5 + $0x958] sm:$0xff]
  %v8178 = vld [vmem:[%s5 + $0x960] sm:$0xff]
  %v8179 = vld [vmem:[%s5 + $0x968] sm:$0xff]
  %v8180 = vld [vmem:[%s5 + $0x970] sm:$0xff]
  %v8181 = vld [vmem:[%s5 + $0x978] sm:$0xff]
  %v8182 = vld [vmem:[%s5 + $0x980] sm:$0xff]
  %v8183 = vld [vmem:[%s5 + $0x988] sm:$0xff]
  %v8184 = vld [vmem:[%s5 + $0x990] sm:$0xff]
  %v8185 = vld [vmem:[%s5 + $0x998] sm:$0xff]
  %v8186 = vld [vmem:[%s5 + $0x9a0] sm:$0xff]
  %v8187 = vld [vmem:[%s5 + $0x9a8] sm:$0xff]
  %v8188 = vld [vmem:[%s5 + $0x9b0] sm:$0xff]
  %v8189 = vld [vmem:[%s5 + $0x9b8] sm:$0xff]
  %v8190 = vld [vmem:[%s5 + $0x9c0] sm:$0xff]
  %v8191 = vld [vmem:[%s5 + $0x9c8] sm:$0xff]
  %v8192 = vld [vmem:[%s5 + $0x9d0] sm:$0xff]
  %v8193 = vld [vmem:[%s5 + $0x9d8] sm:$0xff]
  %v8194 = vld [vmem:[%s5 + $0x9e0] sm:$0xff]
  %v8195 = vld [vmem:[%s5 + $0x9e8] sm:$0xff]
  %v8196 = vld [vmem:[%s5 + $0x9f0] sm:$0xff]
  %v8197 = vld [vmem:[%s5 + $0x9f8] sm:$0xff]
  %v8198 = vld [vmem:[%s5 + $0xa00] sm:$0xff]
  %v8199 = vld [vmem:[%s5 + $0xa08] sm:$0xff]
  %v8200 = vld [vmem:[%s5 + $0xa10] sm:$0xff]
  %v8201 = vld [vmem:[%s5 + $0xa18] sm:$0xff]
  %v8202 = vld [vmem:[%s5 + $0xa20] sm:$0xff]
  %v8203 = vld [vmem:[%s5 + $0xa28] sm:$0xff]
  %v8204 = vld [vmem:[%s5 + $0xa30] sm:$0xff]
  %v8205 = vld [vmem:[%s5 + $0xa38] sm:$0xff]
  %v8206 = vld [vmem:[%s5 + $0xa40] sm:$0xff]
  %v8207 = vld [vmem:[%s5 + $0xa48] sm:$0xff]
  %v8208 = vld [vmem:[%s5 + $0xa50] sm:$0xff]
  %v8209 = vld [vmem:[%s5 + $0xa58] sm:$0xff]
  %v8210 = vld [vmem:[%s5 + $0xa60] sm:$0xff]
  %v8211 = vld [vmem:[%s5 + $0xa68] sm:$0xff]
  %v8212 = vld [vmem:[%s5 + $0xa70] sm:$0xff]
  %v8213 = vld [vmem:[%s5 + $0xa78] sm:$0xff]
  %v8214 = vld [vmem:[%s5 + $0xa80] sm:$0xff]
  %v8215 = vld [vmem:[%s5 + $0xa88] sm:$0xff]
  %v8216 = vld [vmem:[%s5 + $0xa90] sm:$0xff]
  %v8217 = vld [vmem:[%s5 + $0xa98] sm:$0xff]
  %v8218 = vld [vmem:[%s5 + $0xaa0] sm:$0xff]
  %v8219 = vld [vmem:[%s5 + $0xaa8] sm:$0xff]
  %v8220 = vld [vmem:[%s5 + $0xab0] sm:$0xff]
  %v8221 = vld [vmem:[%s5 + $0xab8] sm:$0xff]
  %v8222 = vld [vmem:[%s5 + $0xac0] sm:$0xff]
  %v8223 = vld [vmem:[%s5 + $0xac8] sm:$0xff]
  %v8224 = vld [vmem:[%s5 + $0xad0] sm:$0xff]
  %v8225 = vld [vmem:[%s5 + $0xad8] sm:$0xff]
  %v8226 = vld [vmem:[%s5 + $0xae0] sm:$0xff]
  %v8227 = vld [vmem:[%s5 + $0xae8] sm:$0xff]
  %v8228 = vld [vmem:[%s5 + $0xaf0] sm:$0xff]
  %v8229 = vld [vmem:[%s5 + $0xaf8] sm:$0xff]
  %v8230 = vld [vmem:[%s5 + $0xb00] sm:$0xff]
  %v8231 = vld [vmem:[%s5 + $0xb08] sm:$0xff]
  %v8232 = vld [vmem:[%s5 + $0xb10] sm:$0xff]
  %v8233 = vld [vmem:[%s5 + $0xb18] sm:$0xff]
  %v8234 = vld [vmem:[%s5 + $0xb20] sm:$0xff]
  %v8235 = vld [vmem:[%s5 + $0xb28] sm:$0xff]
  %v8236 = vld [vmem:[%s5 + $0xb30] sm:$0xff]
  %v8237 = vld [vmem:[%s5 + $0xb38] sm:$0xff]
  %v8238 = vld [vmem:[%s5 + $0xb40] sm:$0xff]
  %v8239 = vld [vmem:[%s5 + $0xb48] sm:$0xff]
  %v8240 = vld [vmem:[%s5 + $0xb50] sm:$0xff]
  %v8241 = vld [vmem:[%s5 + $0xb58] sm:$0xff]
  %v8242 = vld [vmem:[%s5 + $0xb60] sm:$0xff]
  %v8243 = vld [vmem:[%s5 + $0xb68] sm:$0xff]
  %v8244 = vld [vmem:[%s5 + $0xb70] sm:$0xff]
  %v8245 = vld [vmem:[%s5 + $0xb78] sm:$0xff]
  %v8246 = vld [vmem:[%s5 + $0xb80] sm:$0xff]
  %v8247 = vld [vmem:[%s5 + $0xb88] sm:$0xff]
  %v8248 = vld [vmem:[%s5 + $0xb90] sm:$0xff]
  %v8249 = vld [vmem:[%s5 + $0xb98] sm:$0xff]
  %v8250 = vld [vmem:[%s5 + $0xba0] sm:$0xff]
  %v8251 = vld [vmem:[%s5 + $0xba8] sm:$0xff]
  %v8252 = vld [vmem:[%s5 + $0xbb0] sm:$0xff]
  %v8253 = vld [vmem:[%s5 + $0xbb8] sm:$0xff]
  %v8254 = vld [vmem:[%s5 + $0xbc0] sm:$0xff]
  %v8255 = vld [vmem:[%s5 + $0xbc8] sm:$0xff]
  %v8256 = vld [vmem:[%s5 + $0xbd0] sm:$0xff]
  %v8257 = vld [vmem:[%s5 + $0xbd8] sm:$0xff]
  %v8258 = vld [vmem:[%s5 + $0xbe0] sm:$0xff]
  %v8259 = vld [vmem:[%s5 + $0xbe8] sm:$0xff]
  %v8260 = vld [vmem:[%s5 + $0xbf0] sm:$0xff]
  %v8261 = vld [vmem:[%s5 + $0xbf8] sm:$0xff]
  %v8262 = vld [vmem:[%s5 + $0xc00] sm:$0xff]
  %v8263 = vld [vmem:[%s5 + $0xc08] sm:$0xff]
  %v8264 = vld [vmem:[%s5 + $0xc10] sm:$0xff]
  %v8265 = vld [vmem:[%s5 + $0xc18] sm:$0xff]
  %v8266 = vld [vmem:[%s5 + $0xc20] sm:$0xff]
  %v8267 = vld [vmem:[%s5 + $0xc28] sm:$0xff]
  %v8268 = vld [vmem:[%s5 + $0xc30] sm:$0xff]
  %v8269 = vld [vmem:[%s5 + $0xc38] sm:$0xff]
  %v8270 = vld [vmem:[%s5 + $0xc40] sm:$0xff]
  %v8271 = vld [vmem:[%s5 + $0xc48] sm:$0xff]
  %v8272 = vld [vmem:[%s5 + $0xc50] sm:$0xff]
  %v8273 = vld [vmem:[%s5 + $0xc58] sm:$0xff]
  %v8274 = vld [vmem:[%s5 + $0xc60] sm:$0xff]
  %v8275 = vld [vmem:[%s5 + $0xc68] sm:$0xff]
  %v8276 = vld [vmem:[%s5 + $0xc70] sm:$0xff]
  %v8277 = vld [vmem:[%s5 + $0xc78] sm:$0xff]
  %v8278 = vld [vmem:[%s5 + $0xc80] sm:$0xff]
  %v8279 = vld [vmem:[%s5 + $0xc88] sm:$0xff]
  %v8280 = vld [vmem:[%s5 + $0xc90] sm:$0xff]
  %v8281 = vld [vmem:[%s5 + $0xc98] sm:$0xff]
  %v8282 = vld [vmem:[%s5 + $0xca0] sm:$0xff]
  %v8283 = vld [vmem:[%s5 + $0xca8] sm:$0xff]
  %v8284 = vld [vmem:[%s5 + $0xcb0] sm:$0xff]
  %v8285 = vld [vmem:[%s5 + $0xcb8] sm:$0xff]
  %v8286 = vld [vmem:[%s5 + $0xcc0] sm:$0xff]
  %v8287 = vld [vmem:[%s5 + $0xcc8] sm:$0xff]
  %v8288 = vld [vmem:[%s5 + $0xcd0] sm:$0xff]
  %v8289 = vld [vmem:[%s5 + $0xcd8] sm:$0xff]
  %v8290 = vld [vmem:[%s5 + $0xce0] sm:$0xff]
  %v8291 = vld [vmem:[%s5 + $0xce8] sm:$0xff]
  %v8292 = vld [vmem:[%s5 + $0xcf0] sm:$0xff]
  %v8293 = vld [vmem:[%s5 + $0xcf8] sm:$0xff]
  %v8294 = vld [vmem:[%s5 + $0xd00] sm:$0xff]
  %v8295 = vld [vmem:[%s5 + $0xd08] sm:$0xff]
  %v8296 = vld [vmem:[%s5 + $0xd10] sm:$0xff]
  %v8297 = vld [vmem:[%s5 + $0xd18] sm:$0xff]
  %v8298 = vld [vmem:[%s5 + $0xd20] sm:$0xff]
  %v8299 = vld [vmem:[%s5 + $0xd28] sm:$0xff]
  %v8300 = vld [vmem:[%s5 + $0xd30] sm:$0xff]
  %v8301 = vld [vmem:[%s5 + $0xd38] sm:$0xff]
  %v8302 = vld [vmem:[%s5 + $0xd40] sm:$0xff]
  %v8303 = vld [vmem:[%s5 + $0xd48] sm:$0xff]
  %v8304 = vld [vmem:[%s5 + $0xd50] sm:$0xff]
  %v8305 = vld [vmem:[%s5 + $0xd58] sm:$0xff]
  %v8306 = vld [vmem:[%s5 + $0xd60] sm:$0xff]
  %v8307 = vld [vmem:[%s5 + $0xd68] sm:$0xff]
  %v8308 = vld [vmem:[%s5 + $0xd70] sm:$0xff]
  %v8309 = vld [vmem:[%s5 + $0xd78] sm:$0xff]
  %v8310 = vld [vmem:[%s6] sm:$0x3]
  %v8312 = vlaneseq
  %v8313 = vshrl.u32 %v8312, 7
  %v8314 = vsub.s32 0, %v8313
  %v8315 = vrot.slane %v8310, %v8314
  %v8316 = vlaneseq
  %v8317 = vshrl.u32 %v8316, 7
  %v8318 = vsub.s32 1, %v8317
  %v8319 = vrot.slane %v8310, %v8318
  %v8754 = vunpack.c.l.b16 %v7878
  %v8755 = vunpack.c.h.b16 %v7878
  %v8756 = vunpack.c.l.b16 %v7879
  %v8757 = vunpack.c.h.b16 %v7879
  %v8758 = vunpack.c.l.b16 %v7880
  %v8759 = vunpack.c.h.b16 %v7880
  %v8760 = vunpack.c.l.b16 %v7881
  %v8761 = vunpack.c.h.b16 %v7881
  %v8762 = vunpack.c.l.b16 %v7882
  %v8763 = vunpack.c.h.b16 %v7882
  %v8764 = vunpack.c.l.b16 %v7883
  %v8765 = vunpack.c.h.b16 %v7883
  %v8766 = vunpack.c.l.b16 %v7884
  %v8767 = vunpack.c.h.b16 %v7884
  %v8768 = vunpack.c.l.b16 %v7885
  %v8769 = vunpack.c.h.b16 %v7885
  %v8770 = vunpack.c.l.b16 %v7886
  %v8771 = vunpack.c.h.b16 %v7886
  %v8772 = vunpack.c.l.b16 %v7887
  %v8773 = vunpack.c.h.b16 %v7887
  %v8774 = vunpack.c.l.b16 %v7888
  %v8775 = vunpack.c.h.b16 %v7888
  %v8776 = vunpack.c.l.b16 %v7889
  %v8777 = vunpack.c.h.b16 %v7889
  %v8778 = vunpack.c.l.b16 %v7890
  %v8779 = vunpack.c.h.b16 %v7890
  %v8780 = vunpack.c.l.b16 %v7891
  %v8781 = vunpack.c.h.b16 %v7891
  %v8782 = vunpack.c.l.b16 %v7892
  %v8783 = vunpack.c.h.b16 %v7892
  %v8784 = vunpack.c.l.b16 %v7893
  %v8785 = vunpack.c.h.b16 %v7893
  %v8786 = vunpack.c.l.b16 %v7894
  %v8787 = vunpack.c.h.b16 %v7894
  %v8788 = vunpack.c.l.b16 %v7895
  %v8789 = vunpack.c.h.b16 %v7895
  %v8790 = vunpack.c.l.b16 %v7896
  %v8791 = vunpack.c.h.b16 %v7896
  %v8792 = vunpack.c.l.b16 %v7897
  %v8793 = vunpack.c.h.b16 %v7897
  %v8794 = vunpack.c.l.b16 %v7898
  %v8795 = vunpack.c.h.b16 %v7898
  %v8796 = vunpack.c.l.b16 %v7899
  %v8797 = vunpack.c.h.b16 %v7899
  %v8798 = vunpack.c.l.b16 %v7900
  %v8799 = vunpack.c.h.b16 %v7900
  %v8800 = vunpack.c.l.b16 %v7901
  %v8801 = vunpack.c.h.b16 %v7901
  %v8802 = vunpack.c.l.b16 %v7902
  %v8803 = vunpack.c.h.b16 %v7902
  %v8804 = vunpack.c.l.b16 %v7903
  %v8805 = vunpack.c.h.b16 %v7903
  %v8806 = vunpack.c.l.b16 %v7904
  %v8807 = vunpack.c.h.b16 %v7904
  %v8808 = vunpack.c.l.b16 %v7905
  %v8809 = vunpack.c.h.b16 %v7905
  %v8810 = vunpack.c.l.b16 %v7906
  %v8811 = vunpack.c.h.b16 %v7906
  %v8812 = vunpack.c.l.b16 %v7907
  %v8813 = vunpack.c.h.b16 %v7907
  %v8814 = vunpack.c.l.b16 %v7908
  %v8815 = vunpack.c.h.b16 %v7908
  %v8816 = vunpack.c.l.b16 %v7909
  %v8817 = vunpack.c.h.b16 %v7909
  %v8818 = vunpack.c.l.b16 %v7910
  %v8819 = vunpack.c.h.b16 %v7910
  %v8820 = vunpack.c.l.b16 %v7911
  %v8821 = vunpack.c.h.b16 %v7911
  %v8822 = vunpack.c.l.b16 %v7912
  %v8823 = vunpack.c.h.b16 %v7912
  %v8824 = vunpack.c.l.b16 %v7913
  %v8825 = vunpack.c.h.b16 %v7913
  %v8826 = vunpack.c.l.b16 %v7914
  %v8827 = vunpack.c.h.b16 %v7914
  %v8828 = vunpack.c.l.b16 %v7915
  %v8829 = vunpack.c.h.b16 %v7915
  %v8830 = vunpack.c.l.b16 %v7916
  %v8831 = vunpack.c.h.b16 %v7916
  %v8832 = vunpack.c.l.b16 %v7917
  %v8833 = vunpack.c.h.b16 %v7917
  %v8834 = vunpack.c.l.b16 %v7918
  %v8835 = vunpack.c.h.b16 %v7918
  %v8836 = vunpack.c.l.b16 %v7919
  %v8837 = vunpack.c.h.b16 %v7919
  %v8838 = vunpack.c.l.b16 %v7920
  %v8839 = vunpack.c.h.b16 %v7920
  %v8840 = vunpack.c.l.b16 %v7921
  %v8841 = vunpack.c.h.b16 %v7921
  %v8842 = vunpack.c.l.b16 %v7922
  %v8843 = vunpack.c.h.b16 %v7922
  %v8844 = vunpack.c.l.b16 %v7923
  %v8845 = vunpack.c.h.b16 %v7923
  %v8846 = vunpack.c.l.b16 %v7924
  %v8847 = vunpack.c.h.b16 %v7924
  %v8848 = vunpack.c.l.b16 %v7925
  %v8849 = vunpack.c.h.b16 %v7925
  %v8850 = vunpack.c.l.b16 %v7926
  %v8851 = vunpack.c.h.b16 %v7926
  %v8852 = vunpack.c.l.b16 %v7927
  %v8853 = vunpack.c.h.b16 %v7927
  %v8854 = vunpack.c.l.b16 %v7928
  %v8855 = vunpack.c.h.b16 %v7928
  %v8856 = vunpack.c.l.b16 %v7929
  %v8857 = vunpack.c.h.b16 %v7929
  %v8858 = vunpack.c.l.b16 %v7930
  %v8859 = vunpack.c.h.b16 %v7930
  %v8860 = vunpack.c.l.b16 %v7931
  %v8861 = vunpack.c.h.b16 %v7931
  %v8862 = vunpack.c.l.b16 %v7932
  %v8863 = vunpack.c.h.b16 %v7932
  %v8864 = vunpack.c.l.b16 %v7933
  %v8865 = vunpack.c.h.b16 %v7933
  %v8866 = vunpack.c.l.b16 %v7934
  %v8867 = vunpack.c.h.b16 %v7934
  %v8868 = vunpack.c.l.b16 %v7935
  %v8869 = vunpack.c.h.b16 %v7935
  %v8870 = vunpack.c.l.b16 %v7936
  %v8871 = vunpack.c.h.b16 %v7936
  %v8872 = vunpack.c.l.b16 %v7937
  %v8873 = vunpack.c.h.b16 %v7937
  %v8874 = vunpack.c.l.b16 %v7938
  %v8875 = vunpack.c.h.b16 %v7938
  %v8876 = vunpack.c.l.b16 %v7939
  %v8877 = vunpack.c.h.b16 %v7939
  %v8878 = vunpack.c.l.b16 %v7940
  %v8879 = vunpack.c.h.b16 %v7940
  %v8880 = vunpack.c.l.b16 %v7941
  %v8881 = vunpack.c.h.b16 %v7941
  %v8882 = vunpack.c.l.b16 %v7942
  %v8883 = vunpack.c.h.b16 %v7942
  %v8884 = vunpack.c.l.b16 %v7943
  %v8885 = vunpack.c.h.b16 %v7943
  %v8886 = vunpack.c.l.b16 %v7944
  %v8887 = vunpack.c.h.b16 %v7944
  %v8888 = vunpack.c.l.b16 %v7945
  %v8889 = vunpack.c.h.b16 %v7945
  %v8890 = vunpack.c.l.b16 %v7946
  %v8891 = vunpack.c.h.b16 %v7946
  %v8892 = vunpack.c.l.b16 %v7947
  %v8893 = vunpack.c.h.b16 %v7947
  %v8894 = vunpack.c.l.b16 %v7948
  %v8895 = vunpack.c.h.b16 %v7948
  %v8896 = vunpack.c.l.b16 %v7949
  %v8897 = vunpack.c.h.b16 %v7949
  %v8898 = vunpack.c.l.b16 %v7950
  %v8899 = vunpack.c.h.b16 %v7950
  %v8900 = vunpack.c.l.b16 %v7951
  %v8901 = vunpack.c.h.b16 %v7951
  %v8902 = vunpack.c.l.b16 %v7952
  %v8903 = vunpack.c.h.b16 %v7952
  %v8904 = vunpack.c.l.b16 %v7953
  %v8905 = vunpack.c.h.b16 %v7953
  %v8906 = vunpack.c.l.b16 %v7954
  %v8907 = vunpack.c.h.b16 %v7954
  %v8908 = vunpack.c.l.b16 %v7955
  %v8909 = vunpack.c.h.b16 %v7955
  %v8910 = vunpack.c.l.b16 %v7956
  %v8911 = vunpack.c.h.b16 %v7956
  %v8912 = vunpack.c.l.b16 %v7957
  %v8913 = vunpack.c.h.b16 %v7957
  %v8914 = vunpack.c.l.b16 %v7958
  %v8915 = vunpack.c.h.b16 %v7958
  %v8916 = vunpack.c.l.b16 %v7959
  %v8917 = vunpack.c.h.b16 %v7959
  %v8918 = vunpack.c.l.b16 %v7960
  %v8919 = vunpack.c.h.b16 %v7960
  %v8920 = vunpack.c.l.b16 %v7961
  %v8921 = vunpack.c.h.b16 %v7961
  %v8922 = vunpack.c.l.b16 %v7962
  %v8923 = vunpack.c.h.b16 %v7962
  %v8924 = vunpack.c.l.b16 %v7963
  %v8925 = vunpack.c.h.b16 %v7963
  %v8926 = vunpack.c.l.b16 %v7964
  %v8927 = vunpack.c.h.b16 %v7964
  %v8928 = vunpack.c.l.b16 %v7965
  %v8929 = vunpack.c.h.b16 %v7965
  %v8930 = vunpack.c.l.b16 %v7966
  %v8931 = vunpack.c.h.b16 %v7966
  %v8932 = vunpack.c.l.b16 %v7967
  %v8933 = vunpack.c.h.b16 %v7967
  %v8934 = vunpack.c.l.b16 %v7968
  %v8935 = vunpack.c.h.b16 %v7968
  %v8936 = vunpack.c.l.b16 %v7969
  %v8937 = vunpack.c.h.b16 %v7969
  %v8938 = vunpack.c.l.b16 %v7970
  %v8939 = vunpack.c.h.b16 %v7970
  %v8940 = vunpack.c.l.b16 %v7971
  %v8941 = vunpack.c.h.b16 %v7971
  %v8942 = vunpack.c.l.b16 %v7972
  %v8943 = vunpack.c.h.b16 %v7972
  %v8944 = vunpack.c.l.b16 %v7973
  %v8945 = vunpack.c.h.b16 %v7973
  %v8946 = vunpack.c.l.b16 %v7974
  %v8947 = vunpack.c.h.b16 %v7974
  %v8948 = vunpack.c.l.b16 %v7975
  %v8949 = vunpack.c.h.b16 %v7975
  %v8950 = vunpack.c.l.b16 %v7976
  %v8951 = vunpack.c.h.b16 %v7976
  %v8952 = vunpack.c.l.b16 %v7977
  %v8953 = vunpack.c.h.b16 %v7977
  %v8954 = vunpack.c.l.b16 %v7978
  %v8955 = vunpack.c.h.b16 %v7978
  %v8956 = vunpack.c.l.b16 %v7979
  %v8957 = vunpack.c.h.b16 %v7979
  %v8958 = vunpack.c.l.b16 %v7980
  %v8959 = vunpack.c.h.b16 %v7980
  %v8960 = vunpack.c.l.b16 %v7981
  %v8961 = vunpack.c.h.b16 %v7981
  %v8962 = vunpack.c.l.b16 %v7982
  %v8963 = vunpack.c.h.b16 %v7982
  %v8964 = vunpack.c.l.b16 %v7983
  %v8965 = vunpack.c.h.b16 %v7983
  %v8966 = vunpack.c.l.b16 %v7984
  %v8967 = vunpack.c.h.b16 %v7984
  %v8968 = vunpack.c.l.b16 %v7985
  %v8969 = vunpack.c.h.b16 %v7985
  %v8970 = vunpack.c.l.b16 %v7986
  %v8971 = vunpack.c.h.b16 %v7986
  %v8972 = vunpack.c.l.b16 %v7987
  %v8973 = vunpack.c.h.b16 %v7987
  %v8974 = vunpack.c.l.b16 %v7988
  %v8975 = vunpack.c.h.b16 %v7988
  %v8976 = vunpack.c.l.b16 %v7989
  %v8977 = vunpack.c.h.b16 %v7989
  %v8978 = vunpack.c.l.b16 %v7990
  %v8979 = vunpack.c.h.b16 %v7990
  %v8980 = vunpack.c.l.b16 %v7991
  %v8981 = vunpack.c.h.b16 %v7991
  %v8982 = vunpack.c.l.b16 %v7992
  %v8983 = vunpack.c.h.b16 %v7992
  %v8984 = vunpack.c.l.b16 %v7993
  %v8985 = vunpack.c.h.b16 %v7993
  %v8986 = vunpack.c.l.b16 %v7994
  %v8987 = vunpack.c.h.b16 %v7994
  %v8988 = vunpack.c.l.b16 %v7995
  %v8989 = vunpack.c.h.b16 %v7995
  %v8990 = vunpack.c.l.b16 %v7996
  %v8991 = vunpack.c.h.b16 %v7996
  %v8992 = vunpack.c.l.b16 %v7997
  %v8993 = vunpack.c.h.b16 %v7997
  %v8994 = vunpack.c.l.b16 %v7998
  %v8995 = vunpack.c.h.b16 %v7998
  %v8996 = vunpack.c.l.b16 %v7999
  %v8997 = vunpack.c.h.b16 %v7999
  %v8998 = vunpack.c.l.b16 %v8000
  %v8999 = vunpack.c.h.b16 %v8000
  %v9000 = vunpack.c.l.b16 %v8001
  %v9001 = vunpack.c.h.b16 %v8001
  %v9002 = vunpack.c.l.b16 %v8002
  %v9003 = vunpack.c.h.b16 %v8002
  %v9004 = vunpack.c.l.b16 %v8003
  %v9005 = vunpack.c.h.b16 %v8003
  %v9006 = vunpack.c.l.b16 %v8004
  %v9007 = vunpack.c.h.b16 %v8004
  %v9008 = vunpack.c.l.b16 %v8005
  %v9009 = vunpack.c.h.b16 %v8005
  %v9010 = vunpack.c.l.b16 %v8006
  %v9011 = vunpack.c.h.b16 %v8006
  %v9012 = vunpack.c.l.b16 %v8007
  %v9013 = vunpack.c.h.b16 %v8007
  %v9014 = vunpack.c.l.b16 %v8008
  %v9015 = vunpack.c.h.b16 %v8008
  %v9016 = vunpack.c.l.b16 %v8009
  %v9017 = vunpack.c.h.b16 %v8009
  %v9018 = vunpack.c.l.b16 %v8010
  %v9019 = vunpack.c.h.b16 %v8010
  %v9020 = vunpack.c.l.b16 %v8011
  %v9021 = vunpack.c.h.b16 %v8011
  %v9022 = vunpack.c.l.b16 %v8012
  %v9023 = vunpack.c.h.b16 %v8012
  %v9024 = vunpack.c.l.b16 %v8013
  %v9025 = vunpack.c.h.b16 %v8013
  %v9026 = vunpack.c.l.b16 %v8014
  %v9027 = vunpack.c.h.b16 %v8014
  %v9028 = vunpack.c.l.b16 %v8015
  %v9029 = vunpack.c.h.b16 %v8015
  %v9030 = vunpack.c.l.b16 %v8016
  %v9031 = vunpack.c.h.b16 %v8016
  %v9032 = vunpack.c.l.b16 %v8017
  %v9033 = vunpack.c.h.b16 %v8017
  %v9034 = vunpack.c.l.b16 %v8018
  %v9035 = vunpack.c.h.b16 %v8018
  %v9036 = vunpack.c.l.b16 %v8019
  %v9037 = vunpack.c.h.b16 %v8019
  %v9038 = vunpack.c.l.b16 %v8020
  %v9039 = vunpack.c.h.b16 %v8020
  %v9040 = vunpack.c.l.b16 %v8021
  %v9041 = vunpack.c.h.b16 %v8021
  %v9042 = vunpack.c.l.b16 %v8022
  %v9043 = vunpack.c.h.b16 %v8022
  %v9044 = vunpack.c.l.b16 %v8023
  %v9045 = vunpack.c.h.b16 %v8023
  %v9046 = vunpack.c.l.b16 %v8024
  %v9047 = vunpack.c.h.b16 %v8024
  %v9048 = vunpack.c.l.b16 %v8025
  %v9049 = vunpack.c.h.b16 %v8025
  %v9050 = vunpack.c.l.b16 %v8026
  %v9051 = vunpack.c.h.b16 %v8026
  %v9052 = vunpack.c.l.b16 %v8027
  %v9053 = vunpack.c.h.b16 %v8027
  %v9054 = vunpack.c.l.b16 %v8028
  %v9055 = vunpack.c.h.b16 %v8028
  %v9056 = vunpack.c.l.b16 %v8029
  %v9057 = vunpack.c.h.b16 %v8029
  %v9058 = vunpack.c.l.b16 %v8030
  %v9059 = vunpack.c.h.b16 %v8030
  %v9060 = vunpack.c.l.b16 %v8031
  %v9061 = vunpack.c.h.b16 %v8031
  %v9062 = vunpack.c.l.b16 %v8032
  %v9063 = vunpack.c.h.b16 %v8032
  %v9064 = vunpack.c.l.b16 %v8033
  %v9065 = vunpack.c.h.b16 %v8033
  %v9066 = vunpack.c.l.b16 %v8034
  %v9067 = vunpack.c.h.b16 %v8034
  %v9068 = vunpack.c.l.b16 %v8035
  %v9069 = vunpack.c.h.b16 %v8035
  %v9070 = vunpack.c.l.b16 %v8036
  %v9071 = vunpack.c.h.b16 %v8036
  %v9072 = vunpack.c.l.b16 %v8037
  %v9073 = vunpack.c.h.b16 %v8037
  %v9074 = vunpack.c.l.b16 %v8038
  %v9075 = vunpack.c.h.b16 %v8038
  %v9076 = vunpack.c.l.b16 %v8039
  %v9077 = vunpack.c.h.b16 %v8039
  %v9078 = vunpack.c.l.b16 %v8040
  %v9079 = vunpack.c.h.b16 %v8040
  %v9080 = vunpack.c.l.b16 %v8041
  %v9081 = vunpack.c.h.b16 %v8041
  %v9082 = vunpack.c.l.b16 %v8042
  %v9083 = vunpack.c.h.b16 %v8042
  %v9084 = vunpack.c.l.b16 %v8043
  %v9085 = vunpack.c.h.b16 %v8043
  %v9086 = vunpack.c.l.b16 %v8044
  %v9087 = vunpack.c.h.b16 %v8044
  %v9088 = vunpack.c.l.b16 %v8045
  %v9089 = vunpack.c.h.b16 %v8045
  %v9090 = vunpack.c.l.b16 %v8046
  %v9091 = vunpack.c.h.b16 %v8046
  %v9092 = vunpack.c.l.b16 %v8047
  %v9093 = vunpack.c.h.b16 %v8047
  %v9094 = vunpack.c.l.b16 %v8048
  %v9095 = vunpack.c.h.b16 %v8048
  %v9096 = vunpack.c.l.b16 %v8049
  %v9097 = vunpack.c.h.b16 %v8049
  %v9098 = vunpack.c.l.b16 %v8050
  %v9099 = vunpack.c.h.b16 %v8050
  %v9100 = vunpack.c.l.b16 %v8051
  %v9101 = vunpack.c.h.b16 %v8051
  %v9102 = vunpack.c.l.b16 %v8052
  %v9103 = vunpack.c.h.b16 %v8052
  %v9104 = vunpack.c.l.b16 %v8053
  %v9105 = vunpack.c.h.b16 %v8053
  %v9106 = vunpack.c.l.b16 %v8054
  %v9107 = vunpack.c.h.b16 %v8054
  %v9108 = vunpack.c.l.b16 %v8055
  %v9109 = vunpack.c.h.b16 %v8055
  %v9110 = vunpack.c.l.b16 %v8056
  %v9111 = vunpack.c.h.b16 %v8056
  %v9112 = vunpack.c.l.b16 %v8057
  %v9113 = vunpack.c.h.b16 %v8057
  %v9114 = vunpack.c.l.b16 %v8058
  %v9115 = vunpack.c.h.b16 %v8058
  %v9116 = vunpack.c.l.b16 %v8059
  %v9117 = vunpack.c.h.b16 %v8059
  %v9118 = vunpack.c.l.b16 %v8060
  %v9119 = vunpack.c.h.b16 %v8060
  %v9120 = vunpack.c.l.b16 %v8061
  %v9121 = vunpack.c.h.b16 %v8061
  %v9122 = vunpack.c.l.b16 %v8062
  %v9123 = vunpack.c.h.b16 %v8062
  %v9124 = vunpack.c.l.b16 %v8063
  %v9125 = vunpack.c.h.b16 %v8063
  %v9126 = vunpack.c.l.b16 %v8064
  %v9127 = vunpack.c.h.b16 %v8064
  %v9128 = vunpack.c.l.b16 %v8065
  %v9129 = vunpack.c.h.b16 %v8065
  %v9130 = vunpack.c.l.b16 %v8066
  %v9131 = vunpack.c.h.b16 %v8066
  %v9132 = vunpack.c.l.b16 %v8067
  %v9133 = vunpack.c.h.b16 %v8067
  %v9134 = vunpack.c.l.b16 %v8068
  %v9135 = vunpack.c.h.b16 %v8068
  %v9136 = vunpack.c.l.b16 %v8069
  %v9137 = vunpack.c.h.b16 %v8069
  %v9138 = vunpack.c.l.b16 %v8070
  %v9139 = vunpack.c.h.b16 %v8070
  %v9140 = vunpack.c.l.b16 %v8071
  %v9141 = vunpack.c.h.b16 %v8071
  %v9142 = vunpack.c.l.b16 %v8072
  %v9143 = vunpack.c.h.b16 %v8072
  %v9144 = vunpack.c.l.b16 %v8073
  %v9145 = vunpack.c.h.b16 %v8073
  %v9146 = vunpack.c.l.b16 %v8074
  %v9147 = vunpack.c.h.b16 %v8074
  %v9148 = vunpack.c.l.b16 %v8075
  %v9149 = vunpack.c.h.b16 %v8075
  %v9150 = vunpack.c.l.b16 %v8076
  %v9151 = vunpack.c.h.b16 %v8076
  %v9152 = vunpack.c.l.b16 %v8077
  %v9153 = vunpack.c.h.b16 %v8077
  %v9154 = vunpack.c.l.b16 %v8078
  %v9155 = vunpack.c.h.b16 %v8078
  %v9156 = vunpack.c.l.b16 %v8079
  %v9157 = vunpack.c.h.b16 %v8079
  %v9158 = vunpack.c.l.b16 %v8080
  %v9159 = vunpack.c.h.b16 %v8080
  %v9160 = vunpack.c.l.b16 %v8081
  %v9161 = vunpack.c.h.b16 %v8081
  %v9162 = vunpack.c.l.b16 %v8082
  %v9163 = vunpack.c.h.b16 %v8082
  %v9164 = vunpack.c.l.b16 %v8083
  %v9165 = vunpack.c.h.b16 %v8083
  %v9166 = vunpack.c.l.b16 %v8084
  %v9167 = vunpack.c.h.b16 %v8084
  %v9168 = vunpack.c.l.b16 %v8085
  %v9169 = vunpack.c.h.b16 %v8085
  %v9170 = vunpack.c.l.b16 %v8086
  %v9171 = vunpack.c.h.b16 %v8086
  %v9172 = vunpack.c.l.b16 %v8087
  %v9173 = vunpack.c.h.b16 %v8087
  %v9174 = vunpack.c.l.b16 %v8088
  %v9175 = vunpack.c.h.b16 %v8088
  %v9176 = vunpack.c.l.b16 %v8089
  %v9177 = vunpack.c.h.b16 %v8089
  %v9178 = vunpack.c.l.b16 %v8090
  %v9179 = vunpack.c.h.b16 %v8090
  %v9180 = vunpack.c.l.b16 %v8091
  %v9181 = vunpack.c.h.b16 %v8091
  %v9182 = vunpack.c.l.b16 %v8092
  %v9183 = vunpack.c.h.b16 %v8092
  %v9184 = vunpack.c.l.b16 %v8093
  %v9185 = vunpack.c.h.b16 %v8093
  %v9186 = vunpack.c.l.b16 %v8094
  %v9187 = vunpack.c.h.b16 %v8094
  %v9188 = vunpack.c.l.b16 %v8095
  %v9189 = vunpack.c.h.b16 %v8095
  %v9190 = vunpack.c.l.b16 %v8096
  %v9191 = vunpack.c.h.b16 %v8096
  %v9192 = vunpack.c.l.b16 %v8097
  %v9193 = vunpack.c.h.b16 %v8097
  %v9194 = vunpack.c.l.b16 %v8098
  %v9195 = vunpack.c.h.b16 %v8098
  %v9196 = vunpack.c.l.b16 %v8099
  %v9197 = vunpack.c.h.b16 %v8099
  %v9198 = vunpack.c.l.b16 %v8100
  %v9199 = vunpack.c.h.b16 %v8100
  %v9200 = vunpack.c.l.b16 %v8101
  %v9201 = vunpack.c.h.b16 %v8101
  %v9202 = vunpack.c.l.b16 %v8102
  %v9203 = vunpack.c.h.b16 %v8102
  %v9204 = vunpack.c.l.b16 %v8103
  %v9205 = vunpack.c.h.b16 %v8103
  %v9206 = vunpack.c.l.b16 %v8104
  %v9207 = vunpack.c.h.b16 %v8104
  %v9208 = vunpack.c.l.b16 %v8105
  %v9209 = vunpack.c.h.b16 %v8105
  %v9210 = vunpack.c.l.b16 %v8106
  %v9211 = vunpack.c.h.b16 %v8106
  %v9212 = vunpack.c.l.b16 %v8107
  %v9213 = vunpack.c.h.b16 %v8107
  %v9214 = vunpack.c.l.b16 %v8108
  %v9215 = vunpack.c.h.b16 %v8108
  %v9216 = vunpack.c.l.b16 %v8109
  %v9217 = vunpack.c.h.b16 %v8109
  %v9218 = vunpack.c.l.b16 %v8110
  %v9219 = vunpack.c.h.b16 %v8110
  %v9220 = vunpack.c.l.b16 %v8111
  %v9221 = vunpack.c.h.b16 %v8111
  %v9222 = vunpack.c.l.b16 %v8112
  %v9223 = vunpack.c.h.b16 %v8112
  %v9224 = vunpack.c.l.b16 %v8113
  %v9225 = vunpack.c.h.b16 %v8113
  %v9226 = vunpack.c.l.b16 %v8114
  %v9227 = vunpack.c.h.b16 %v8114
  %v9228 = vunpack.c.l.b16 %v8115
  %v9229 = vunpack.c.h.b16 %v8115
  %v9230 = vunpack.c.l.b16 %v8116
  %v9231 = vunpack.c.h.b16 %v8116
  %v9232 = vunpack.c.l.b16 %v8117
  %v9233 = vunpack.c.h.b16 %v8117
  %v9234 = vunpack.c.l.b16 %v8118
  %v9235 = vunpack.c.h.b16 %v8118
  %v9236 = vunpack.c.l.b16 %v8119
  %v9237 = vunpack.c.h.b16 %v8119
  %v9238 = vunpack.c.l.b16 %v8120
  %v9239 = vunpack.c.h.b16 %v8120
  %v9240 = vunpack.c.l.b16 %v8121
  %v9241 = vunpack.c.h.b16 %v8121
  %v9242 = vunpack.c.l.b16 %v8122
  %v9243 = vunpack.c.h.b16 %v8122
  %v9244 = vunpack.c.l.b16 %v8123
  %v9245 = vunpack.c.h.b16 %v8123
  %v9246 = vunpack.c.l.b16 %v8124
  %v9247 = vunpack.c.h.b16 %v8124
  %v9248 = vunpack.c.l.b16 %v8125
  %v9249 = vunpack.c.h.b16 %v8125
  %v9250 = vunpack.c.l.b16 %v8126
  %v9251 = vunpack.c.h.b16 %v8126
  %v9252 = vunpack.c.l.b16 %v8127
  %v9253 = vunpack.c.h.b16 %v8127
  %v9254 = vunpack.c.l.b16 %v8128
  %v9255 = vunpack.c.h.b16 %v8128
  %v9256 = vunpack.c.l.b16 %v8129
  %v9257 = vunpack.c.h.b16 %v8129
  %v9258 = vunpack.c.l.b16 %v8130
  %v9259 = vunpack.c.h.b16 %v8130
  %v9260 = vunpack.c.l.b16 %v8131
  %v9261 = vunpack.c.h.b16 %v8131
  %v9262 = vunpack.c.l.b16 %v8132
  %v9263 = vunpack.c.h.b16 %v8132
  %v9264 = vunpack.c.l.b16 %v8133
  %v9265 = vunpack.c.h.b16 %v8133
  %v9266 = vunpack.c.l.b16 %v8134
  %v9267 = vunpack.c.h.b16 %v8134
  %v9268 = vunpack.c.l.b16 %v8135
  %v9269 = vunpack.c.h.b16 %v8135
  %v9270 = vunpack.c.l.b16 %v8136
  %v9271 = vunpack.c.h.b16 %v8136
  %v9272 = vunpack.c.l.b16 %v8137
  %v9273 = vunpack.c.h.b16 %v8137
  %v9274 = vunpack.c.l.b16 %v8138
  %v9275 = vunpack.c.h.b16 %v8138
  %v9276 = vunpack.c.l.b16 %v8139
  %v9277 = vunpack.c.h.b16 %v8139
  %v9278 = vunpack.c.l.b16 %v8140
  %v9279 = vunpack.c.h.b16 %v8140
  %v9280 = vunpack.c.l.b16 %v8141
  %v9281 = vunpack.c.h.b16 %v8141
  %v9282 = vunpack.c.l.b16 %v8142
  %v9283 = vunpack.c.h.b16 %v8142
  %v9284 = vunpack.c.l.b16 %v8143
  %v9285 = vunpack.c.h.b16 %v8143
  %v9286 = vunpack.c.l.b16 %v8144
  %v9287 = vunpack.c.h.b16 %v8144
  %v9288 = vunpack.c.l.b16 %v8145
  %v9289 = vunpack.c.h.b16 %v8145
  %v9290 = vunpack.c.l.b16 %v8146
  %v9291 = vunpack.c.h.b16 %v8146
  %v9292 = vunpack.c.l.b16 %v8147
  %v9293 = vunpack.c.h.b16 %v8147
  %v9294 = vunpack.c.l.b16 %v8148
  %v9295 = vunpack.c.h.b16 %v8148
  %v9296 = vunpack.c.l.b16 %v8149
  %v9297 = vunpack.c.h.b16 %v8149
  %v9298 = vunpack.c.l.b16 %v8150
  %v9299 = vunpack.c.h.b16 %v8150
  %v9300 = vunpack.c.l.b16 %v8151
  %v9301 = vunpack.c.h.b16 %v8151
  %v9302 = vunpack.c.l.b16 %v8152
  %v9303 = vunpack.c.h.b16 %v8152
  %v9304 = vunpack.c.l.b16 %v8153
  %v9305 = vunpack.c.h.b16 %v8153
  %v9306 = vunpack.c.l.b16 %v8154
  %v9307 = vunpack.c.h.b16 %v8154
  %v9308 = vunpack.c.l.b16 %v8155
  %v9309 = vunpack.c.h.b16 %v8155
  %v9310 = vunpack.c.l.b16 %v8156
  %v9311 = vunpack.c.h.b16 %v8156
  %v9312 = vunpack.c.l.b16 %v8157
  %v9313 = vunpack.c.h.b16 %v8157
  %v9314 = vunpack.c.l.b16 %v8158
  %v9315 = vunpack.c.h.b16 %v8158
  %v9316 = vunpack.c.l.b16 %v8159
  %v9317 = vunpack.c.h.b16 %v8159
  %v9318 = vunpack.c.l.b16 %v8160
  %v9319 = vunpack.c.h.b16 %v8160
  %v9320 = vunpack.c.l.b16 %v8161
  %v9321 = vunpack.c.h.b16 %v8161
  %v9322 = vunpack.c.l.b16 %v8162
  %v9323 = vunpack.c.h.b16 %v8162
  %v9324 = vunpack.c.l.b16 %v8163
  %v9325 = vunpack.c.h.b16 %v8163
  %v9326 = vunpack.c.l.b16 %v8164
  %v9327 = vunpack.c.h.b16 %v8164
  %v9328 = vunpack.c.l.b16 %v8165
  %v9329 = vunpack.c.h.b16 %v8165
  %v9330 = vunpack.c.l.b16 %v8166
  %v9331 = vunpack.c.h.b16 %v8166
  %v9332 = vunpack.c.l.b16 %v8167
  %v9333 = vunpack.c.h.b16 %v8167
  %v9334 = vunpack.c.l.b16 %v8168
  %v9335 = vunpack.c.h.b16 %v8168
  %v9336 = vunpack.c.l.b16 %v8169
  %v9337 = vunpack.c.h.b16 %v8169
  %v9338 = vunpack.c.l.b16 %v8170
  %v9339 = vunpack.c.h.b16 %v8170
  %v9340 = vunpack.c.l.b16 %v8171
  %v9341 = vunpack.c.h.b16 %v8171
  %v9342 = vunpack.c.l.b16 %v8172
  %v9343 = vunpack.c.h.b16 %v8172
  %v9344 = vunpack.c.l.b16 %v8173
  %v9345 = vunpack.c.h.b16 %v8173
  %v9346 = vunpack.c.l.b16 %v8174
  %v9347 = vunpack.c.h.b16 %v8174
  %v9348 = vunpack.c.l.b16 %v8175
  %v9349 = vunpack.c.h.b16 %v8175
  %v9350 = vunpack.c.l.b16 %v8176
  %v9351 = vunpack.c.h.b16 %v8176
  %v9352 = vunpack.c.l.b16 %v8177
  %v9353 = vunpack.c.h.b16 %v8177
  %v9354 = vunpack.c.l.b16 %v8178
  %v9355 = vunpack.c.h.b16 %v8178
  %v9356 = vunpack.c.l.b16 %v8179
  %v9357 = vunpack.c.h.b16 %v8179
  %v9358 = vunpack.c.l.b16 %v8180
  %v9359 = vunpack.c.h.b16 %v8180
  %v9360 = vunpack.c.l.b16 %v8181
  %v9361 = vunpack.c.h.b16 %v8181
  %v9362 = vunpack.c.l.b16 %v8182
  %v9363 = vunpack.c.h.b16 %v8182
  %v9364 = vunpack.c.l.b16 %v8183
  %v9365 = vunpack.c.h.b16 %v8183
  %v9366 = vunpack.c.l.b16 %v8184
  %v9367 = vunpack.c.h.b16 %v8184
  %v9368 = vunpack.c.l.b16 %v8185
  %v9369 = vunpack.c.h.b16 %v8185
  %v9370 = vunpack.c.l.b16 %v8186
  %v9371 = vunpack.c.h.b16 %v8186
  %v9372 = vunpack.c.l.b16 %v8187
  %v9373 = vunpack.c.h.b16 %v8187
  %v9374 = vunpack.c.l.b16 %v8188
  %v9375 = vunpack.c.h.b16 %v8188
  %v9376 = vunpack.c.l.b16 %v8189
  %v9377 = vunpack.c.h.b16 %v8189
  %v9378 = vunpack.c.l.b16 %v8190
  %v9379 = vunpack.c.h.b16 %v8190
  %v9380 = vunpack.c.l.b16 %v8191
  %v9381 = vunpack.c.h.b16 %v8191
  %v9382 = vunpack.c.l.b16 %v8192
  %v9383 = vunpack.c.h.b16 %v8192
  %v9384 = vunpack.c.l.b16 %v8193
  %v9385 = vunpack.c.h.b16 %v8193
  %v9386 = vunpack.c.l.b16 %v8194
  %v9387 = vunpack.c.h.b16 %v8194
  %v9388 = vunpack.c.l.b16 %v8195
  %v9389 = vunpack.c.h.b16 %v8195
  %v9390 = vunpack.c.l.b16 %v8196
  %v9391 = vunpack.c.h.b16 %v8196
  %v9392 = vunpack.c.l.b16 %v8197
  %v9393 = vunpack.c.h.b16 %v8197
  %v9394 = vunpack.c.l.b16 %v8198
  %v9395 = vunpack.c.h.b16 %v8198
  %v9396 = vunpack.c.l.b16 %v8199
  %v9397 = vunpack.c.h.b16 %v8199
  %v9398 = vunpack.c.l.b16 %v8200
  %v9399 = vunpack.c.h.b16 %v8200
  %v9400 = vunpack.c.l.b16 %v8201
  %v9401 = vunpack.c.h.b16 %v8201
  %v9402 = vunpack.c.l.b16 %v8202
  %v9403 = vunpack.c.h.b16 %v8202
  %v9404 = vunpack.c.l.b16 %v8203
  %v9405 = vunpack.c.h.b16 %v8203
  %v9406 = vunpack.c.l.b16 %v8204
  %v9407 = vunpack.c.h.b16 %v8204
  %v9408 = vunpack.c.l.b16 %v8205
  %v9409 = vunpack.c.h.b16 %v8205
  %v9410 = vunpack.c.l.b16 %v8206
  %v9411 = vunpack.c.h.b16 %v8206
  %v9412 = vunpack.c.l.b16 %v8207
  %v9413 = vunpack.c.h.b16 %v8207
  %v9414 = vunpack.c.l.b16 %v8208
  %v9415 = vunpack.c.h.b16 %v8208
  %v9416 = vunpack.c.l.b16 %v8209
  %v9417 = vunpack.c.h.b16 %v8209
  %v9418 = vunpack.c.l.b16 %v8210
  %v9419 = vunpack.c.h.b16 %v8210
  %v9420 = vunpack.c.l.b16 %v8211
  %v9421 = vunpack.c.h.b16 %v8211
  %v9422 = vunpack.c.l.b16 %v8212
  %v9423 = vunpack.c.h.b16 %v8212
  %v9424 = vunpack.c.l.b16 %v8213
  %v9425 = vunpack.c.h.b16 %v8213
  %v9426 = vunpack.c.l.b16 %v8214
  %v9427 = vunpack.c.h.b16 %v8214
  %v9428 = vunpack.c.l.b16 %v8215
  %v9429 = vunpack.c.h.b16 %v8215
  %v9430 = vunpack.c.l.b16 %v8216
  %v9431 = vunpack.c.h.b16 %v8216
  %v9432 = vunpack.c.l.b16 %v8217
  %v9433 = vunpack.c.h.b16 %v8217
  %v9434 = vunpack.c.l.b16 %v8218
  %v9435 = vunpack.c.h.b16 %v8218
  %v9436 = vunpack.c.l.b16 %v8219
  %v9437 = vunpack.c.h.b16 %v8219
  %v9438 = vunpack.c.l.b16 %v8220
  %v9439 = vunpack.c.h.b16 %v8220
  %v9440 = vunpack.c.l.b16 %v8221
  %v9441 = vunpack.c.h.b16 %v8221
  %v9442 = vunpack.c.l.b16 %v8222
  %v9443 = vunpack.c.h.b16 %v8222
  %v9444 = vunpack.c.l.b16 %v8223
  %v9445 = vunpack.c.h.b16 %v8223
  %v9446 = vunpack.c.l.b16 %v8224
  %v9447 = vunpack.c.h.b16 %v8224
  %v9448 = vunpack.c.l.b16 %v8225
  %v9449 = vunpack.c.h.b16 %v8225
  %v9450 = vunpack.c.l.b16 %v8226
  %v9451 = vunpack.c.h.b16 %v8226
  %v9452 = vunpack.c.l.b16 %v8227
  %v9453 = vunpack.c.h.b16 %v8227
  %v9454 = vunpack.c.l.b16 %v8228
  %v9455 = vunpack.c.h.b16 %v8228
  %v9456 = vunpack.c.l.b16 %v8229
  %v9457 = vunpack.c.h.b16 %v8229
  %v9458 = vunpack.c.l.b16 %v8230
  %v9459 = vunpack.c.h.b16 %v8230
  %v9460 = vunpack.c.l.b16 %v8231
  %v9461 = vunpack.c.h.b16 %v8231
  %v9462 = vunpack.c.l.b16 %v8232
  %v9463 = vunpack.c.h.b16 %v8232
  %v9464 = vunpack.c.l.b16 %v8233
  %v9465 = vunpack.c.h.b16 %v8233
  %v9466 = vunpack.c.l.b16 %v8234
  %v9467 = vunpack.c.h.b16 %v8234
  %v9468 = vunpack.c.l.b16 %v8235
  %v9469 = vunpack.c.h.b16 %v8235
  %v9470 = vunpack.c.l.b16 %v8236
  %v9471 = vunpack.c.h.b16 %v8236
  %v9472 = vunpack.c.l.b16 %v8237
  %v9473 = vunpack.c.h.b16 %v8237
  %v9474 = vunpack.c.l.b16 %v8238
  %v9475 = vunpack.c.h.b16 %v8238
  %v9476 = vunpack.c.l.b16 %v8239
  %v9477 = vunpack.c.h.b16 %v8239
  %v9478 = vunpack.c.l.b16 %v8240
  %v9479 = vunpack.c.h.b16 %v8240
  %v9480 = vunpack.c.l.b16 %v8241
  %v9481 = vunpack.c.h.b16 %v8241
  %v9482 = vunpack.c.l.b16 %v8242
  %v9483 = vunpack.c.h.b16 %v8242
  %v9484 = vunpack.c.l.b16 %v8243
  %v9485 = vunpack.c.h.b16 %v8243
  %v9486 = vunpack.c.l.b16 %v8244
  %v9487 = vunpack.c.h.b16 %v8244
  %v9488 = vunpack.c.l.b16 %v8245
  %v9489 = vunpack.c.h.b16 %v8245
  %v9490 = vunpack.c.l.b16 %v8246
  %v9491 = vunpack.c.h.b16 %v8246
  %v9492 = vunpack.c.l.b16 %v8247
  %v9493 = vunpack.c.h.b16 %v8247
  %v9494 = vunpack.c.l.b16 %v8248
  %v9495 = vunpack.c.h.b16 %v8248
  %v9496 = vunpack.c.l.b16 %v8249
  %v9497 = vunpack.c.h.b16 %v8249
  %v9498 = vunpack.c.l.b16 %v8250
  %v9499 = vunpack.c.h.b16 %v8250
  %v9500 = vunpack.c.l.b16 %v8251
  %v9501 = vunpack.c.h.b16 %v8251
  %v9502 = vunpack.c.l.b16 %v8252
  %v9503 = vunpack.c.h.b16 %v8252
  %v9504 = vunpack.c.l.b16 %v8253
  %v9505 = vunpack.c.h.b16 %v8253
  %v9506 = vunpack.c.l.b16 %v8254
  %v9507 = vunpack.c.h.b16 %v8254
  %v9508 = vunpack.c.l.b16 %v8255
  %v9509 = vunpack.c.h.b16 %v8255
  %v9510 = vunpack.c.l.b16 %v8256
  %v9511 = vunpack.c.h.b16 %v8256
  %v9512 = vunpack.c.l.b16 %v8257
  %v9513 = vunpack.c.h.b16 %v8257
  %v9514 = vunpack.c.l.b16 %v8258
  %v9515 = vunpack.c.h.b16 %v8258
  %v9516 = vunpack.c.l.b16 %v8259
  %v9517 = vunpack.c.h.b16 %v8259
  %v9518 = vunpack.c.l.b16 %v8260
  %v9519 = vunpack.c.h.b16 %v8260
  %v9520 = vunpack.c.l.b16 %v8261
  %v9521 = vunpack.c.h.b16 %v8261
  %v9522 = vunpack.c.l.b16 %v8262
  %v9523 = vunpack.c.h.b16 %v8262
  %v9524 = vunpack.c.l.b16 %v8263
  %v9525 = vunpack.c.h.b16 %v8263
  %v9526 = vunpack.c.l.b16 %v8264
  %v9527 = vunpack.c.h.b16 %v8264
  %v9528 = vunpack.c.l.b16 %v8265
  %v9529 = vunpack.c.h.b16 %v8265
  %v9530 = vunpack.c.l.b16 %v8266
  %v9531 = vunpack.c.h.b16 %v8266
  %v9532 = vunpack.c.l.b16 %v8267
  %v9533 = vunpack.c.h.b16 %v8267
  %v9534 = vunpack.c.l.b16 %v8268
  %v9535 = vunpack.c.h.b16 %v8268
  %v9536 = vunpack.c.l.b16 %v8269
  %v9537 = vunpack.c.h.b16 %v8269
  %v9538 = vunpack.c.l.b16 %v8270
  %v9539 = vunpack.c.h.b16 %v8270
  %v9540 = vunpack.c.l.b16 %v8271
  %v9541 = vunpack.c.h.b16 %v8271
  %v9542 = vunpack.c.l.b16 %v8272
  %v9543 = vunpack.c.h.b16 %v8272
  %v9544 = vunpack.c.l.b16 %v8273
  %v9545 = vunpack.c.h.b16 %v8273
  %v9546 = vunpack.c.l.b16 %v8274
  %v9547 = vunpack.c.h.b16 %v8274
  %v9548 = vunpack.c.l.b16 %v8275
  %v9549 = vunpack.c.h.b16 %v8275
  %v9550 = vunpack.c.l.b16 %v8276
  %v9551 = vunpack.c.h.b16 %v8276
  %v9552 = vunpack.c.l.b16 %v8277
  %v9553 = vunpack.c.h.b16 %v8277
  %v9554 = vunpack.c.l.b16 %v8278
  %v9555 = vunpack.c.h.b16 %v8278
  %v9556 = vunpack.c.l.b16 %v8279
  %v9557 = vunpack.c.h.b16 %v8279
  %v9558 = vunpack.c.l.b16 %v8280
  %v9559 = vunpack.c.h.b16 %v8280
  %v9560 = vunpack.c.l.b16 %v8281
  %v9561 = vunpack.c.h.b16 %v8281
  %v9562 = vunpack.c.l.b16 %v8282
  %v9563 = vunpack.c.h.b16 %v8282
  %v9564 = vunpack.c.l.b16 %v8283
  %v9565 = vunpack.c.h.b16 %v8283
  %v9566 = vunpack.c.l.b16 %v8284
  %v9567 = vunpack.c.h.b16 %v8284
  %v9568 = vunpack.c.l.b16 %v8285
  %v9569 = vunpack.c.h.b16 %v8285
  %v9570 = vunpack.c.l.b16 %v8286
  %v9571 = vunpack.c.h.b16 %v8286
  %v9572 = vunpack.c.l.b16 %v8287
  %v9573 = vunpack.c.h.b16 %v8287
  %v9574 = vunpack.c.l.b16 %v8288
  %v9575 = vunpack.c.h.b16 %v8288
  %v9576 = vunpack.c.l.b16 %v8289
  %v9577 = vunpack.c.h.b16 %v8289
  %v9578 = vunpack.c.l.b16 %v8290
  %v9579 = vunpack.c.h.b16 %v8290
  %v9580 = vunpack.c.l.b16 %v8291
  %v9581 = vunpack.c.h.b16 %v8291
  %v9582 = vunpack.c.l.b16 %v8292
  %v9583 = vunpack.c.h.b16 %v8292
  %v9584 = vunpack.c.l.b16 %v8293
  %v9585 = vunpack.c.h.b16 %v8293
  %v9586 = vunpack.c.l.b16 %v8294
  %v9587 = vunpack.c.h.b16 %v8294
  %v9588 = vunpack.c.l.b16 %v8295
  %v9589 = vunpack.c.h.b16 %v8295
  %v9590 = vunpack.c.l.b16 %v8296
  %v9591 = vunpack.c.h.b16 %v8296
  %v9592 = vunpack.c.l.b16 %v8297
  %v9593 = vunpack.c.h.b16 %v8297
  %v9594 = vunpack.c.l.b16 %v8298
  %v9595 = vunpack.c.h.b16 %v8298
  %v9596 = vunpack.c.l.b16 %v8299
  %v9597 = vunpack.c.h.b16 %v8299
  %v9598 = vunpack.c.l.b16 %v8300
  %v9599 = vunpack.c.h.b16 %v8300
  %v9600 = vunpack.c.l.b16 %v8301
  %v9601 = vunpack.c.h.b16 %v8301
  %v9602 = vunpack.c.l.b16 %v8302
  %v9603 = vunpack.c.h.b16 %v8302
  %v9604 = vunpack.c.l.b16 %v8303
  %v9605 = vunpack.c.h.b16 %v8303
  %v9606 = vunpack.c.l.b16 %v8304
  %v9607 = vunpack.c.h.b16 %v8304
  %v9608 = vunpack.c.l.b16 %v8305
  %v9609 = vunpack.c.h.b16 %v8305
  %v9610 = vunpack.c.l.b16 %v8306
  %v9611 = vunpack.c.h.b16 %v8306
  %v9612 = vunpack.c.l.b16 %v8307
  %v9613 = vunpack.c.h.b16 %v8307
  %v9614 = vunpack.c.l.b16 %v8308
  %v9615 = vunpack.c.h.b16 %v8308
  %v9616 = vunpack.c.l.b16 %v8309
  %v9617 = vunpack.c.h.b16 %v8309
  %v9618 = vpack.c.b16 %v8756, %v8754
  %v9619 = vpack.c.b16 %v8757, %v8755
  %v9620 = vpack.c.b16 %v8760, %v8758
  %v9621 = vpack.c.b16 %v8761, %v8759
  %v9622 = vpack.c.b16 %v8764, %v8762
  %v9623 = vpack.c.b16 %v8765, %v8763
  %v9624 = vpack.c.b16 %v8768, %v8766
  %v9625 = vpack.c.b16 %v8769, %v8767
  %v9626 = vpack.c.b16 %v8772, %v8770
  %v9627 = vpack.c.b16 %v8773, %v8771
  %v9628 = vpack.c.b16 %v8776, %v8774
  %v9629 = vpack.c.b16 %v8777, %v8775
  %v9630 = vpack.c.b16 %v8780, %v8778
  %v9631 = vpack.c.b16 %v8781, %v8779
  %v9632 = vpack.c.b16 %v8784, %v8782
  %v9633 = vpack.c.b16 %v8785, %v8783
  %v9634 = vpack.c.b16 %v8788, %v8786
  %v9635 = vpack.c.b16 %v8789, %v8787
  %v9636 = vpack.c.b16 %v8792, %v8790
  %v9637 = vpack.c.b16 %v8793, %v8791
  %v9638 = vpack.c.b16 %v8796, %v8794
  %v9639 = vpack.c.b16 %v8797, %v8795
  %v9640 = vpack.c.b16 %v8800, %v8798
  %v9641 = vpack.c.b16 %v8801, %v8799
  %v9642 = vpack.c.b16 %v8804, %v8802
  %v9643 = vpack.c.b16 %v8805, %v8803
  %v9644 = vpack.c.b16 %v8808, %v8806
  %v9645 = vpack.c.b16 %v8809, %v8807
  %v9646 = vpack.c.b16 %v8812, %v8810
  %v9647 = vpack.c.b16 %v8813, %v8811
  %v9648 = vpack.c.b16 %v8816, %v8814
  %v9649 = vpack.c.b16 %v8817, %v8815
  %v9650 = vpack.c.b16 %v8820, %v8818
  %v9651 = vpack.c.b16 %v8821, %v8819
  %v9652 = vpack.c.b16 %v8824, %v8822
  %v9653 = vpack.c.b16 %v8825, %v8823
  %v9654 = vpack.c.b16 %v8828, %v8826
  %v9655 = vpack.c.b16 %v8829, %v8827
  %v9656 = vpack.c.b16 %v8832, %v8830
  %v9657 = vpack.c.b16 %v8833, %v8831
  %v9658 = vpack.c.b16 %v8836, %v8834
  %v9659 = vpack.c.b16 %v8837, %v8835
  %v9660 = vpack.c.b16 %v8840, %v8838
  %v9661 = vpack.c.b16 %v8841, %v8839
  %v9662 = vpack.c.b16 %v8844, %v8842
  %v9663 = vpack.c.b16 %v8845, %v8843
  %v9664 = vpack.c.b16 %v8848, %v8846
  %v9665 = vpack.c.b16 %v8849, %v8847
  %v9666 = vpack.c.b16 %v8852, %v8850
  %v9667 = vpack.c.b16 %v8853, %v8851
  %v9668 = vpack.c.b16 %v8856, %v8854
  %v9669 = vpack.c.b16 %v8857, %v8855
  %v9670 = vpack.c.b16 %v8860, %v8858
  %v9671 = vpack.c.b16 %v8861, %v8859
  %v9672 = vpack.c.b16 %v8864, %v8862
  %v9673 = vpack.c.b16 %v8865, %v8863
  %v9674 = vpack.c.b16 %v8868, %v8866
  %v9675 = vpack.c.b16 %v8869, %v8867
  %v9676 = vpack.c.b16 %v8872, %v8870
  %v9677 = vpack.c.b16 %v8873, %v8871
  %v9678 = vpack.c.b16 %v8876, %v8874
  %v9679 = vpack.c.b16 %v8877, %v8875
  %v9680 = vpack.c.b16 %v8880, %v8878
  %v9681 = vpack.c.b16 %v8881, %v8879
  %v9682 = vpack.c.b16 %v8884, %v8882
  %v9683 = vpack.c.b16 %v8885, %v8883
  %v9684 = vpack.c.b16 %v8888, %v8886
  %v9685 = vpack.c.b16 %v8889, %v8887
  %v9686 = vpack.c.b16 %v8892, %v8890
  %v9687 = vpack.c.b16 %v8893, %v8891
  %v9688 = vpack.c.b16 %v8896, %v8894
  %v9689 = vpack.c.b16 %v8897, %v8895
  %v9690 = vpack.c.b16 %v8900, %v8898
  %v9691 = vpack.c.b16 %v8901, %v8899
  %v9692 = vpack.c.b16 %v8904, %v8902
  %v9693 = vpack.c.b16 %v8905, %v8903
  %v9694 = vpack.c.b16 %v8908, %v8906
  %v9695 = vpack.c.b16 %v8909, %v8907
  %v9696 = vpack.c.b16 %v8912, %v8910
  %v9697 = vpack.c.b16 %v8913, %v8911
  %v9698 = vpack.c.b16 %v8916, %v8914
  %v9699 = vpack.c.b16 %v8917, %v8915
  %v9700 = vpack.c.b16 %v8920, %v8918
  %v9701 = vpack.c.b16 %v8921, %v8919
  %v9702 = vpack.c.b16 %v8924, %v8922
  %v9703 = vpack.c.b16 %v8925, %v8923
  %v9704 = vpack.c.b16 %v8928, %v8926
  %v9705 = vpack.c.b16 %v8929, %v8927
  %v9706 = vpack.c.b16 %v8932, %v8930
  %v9707 = vpack.c.b16 %v8933, %v8931
  %v9708 = vpack.c.b16 %v8936, %v8934
  %v9709 = vpack.c.b16 %v8937, %v8935
  %v9710 = vpack.c.b16 %v8940, %v8938
  %v9711 = vpack.c.b16 %v8941, %v8939
  %v9712 = vpack.c.b16 %v8944, %v8942
  %v9713 = vpack.c.b16 %v8945, %v8943
  %v9714 = vpack.c.b16 %v8948, %v8946
  %v9715 = vpack.c.b16 %v8949, %v8947
  %v9716 = vpack.c.b16 %v8952, %v8950
  %v9717 = vpack.c.b16 %v8953, %v8951
  %v9718 = vpack.c.b16 %v8956, %v8954
  %v9719 = vpack.c.b16 %v8957, %v8955
  %v9720 = vpack.c.b16 %v8960, %v8958
  %v9721 = vpack.c.b16 %v8961, %v8959
  %v9722 = vpack.c.b16 %v8964, %v8962
  %v9723 = vpack.c.b16 %v8965, %v8963
  %v9724 = vpack.c.b16 %v8968, %v8966
  %v9725 = vpack.c.b16 %v8969, %v8967
  %v9726 = vpack.c.b16 %v8972, %v8970
  %v9727 = vpack.c.b16 %v8973, %v8971
  %v9728 = vpack.c.b16 %v8976, %v8974
  %v9729 = vpack.c.b16 %v8977, %v8975
  %v9730 = vpack.c.b16 %v8980, %v8978
  %v9731 = vpack.c.b16 %v8981, %v8979
  %v9732 = vpack.c.b16 %v8984, %v8982
  %v9733 = vpack.c.b16 %v8985, %v8983
  %v9734 = vpack.c.b16 %v8988, %v8986
  %v9735 = vpack.c.b16 %v8989, %v8987
  %v9736 = vpack.c.b16 %v8992, %v8990
  %v9737 = vpack.c.b16 %v8993, %v8991
  %v9738 = vpack.c.b16 %v8996, %v8994
  %v9739 = vpack.c.b16 %v8997, %v8995
  %v9740 = vpack.c.b16 %v9000, %v8998
  %v9741 = vpack.c.b16 %v9001, %v8999
  %v9742 = vpack.c.b16 %v9004, %v9002
  %v9743 = vpack.c.b16 %v9005, %v9003
  %v9744 = vpack.c.b16 %v9008, %v9006
  %v9745 = vpack.c.b16 %v9009, %v9007
  %v9746 = vpack.c.b16 %v9012, %v9010
  %v9747 = vpack.c.b16 %v9013, %v9011
  %v9748 = vpack.c.b16 %v9016, %v9014
  %v9749 = vpack.c.b16 %v9017, %v9015
  %v9750 = vpack.c.b16 %v9020, %v9018
  %v9751 = vpack.c.b16 %v9021, %v9019
  %v9752 = vpack.c.b16 %v9024, %v9022
  %v9753 = vpack.c.b16 %v9025, %v9023
  %v9754 = vpack.c.b16 %v9028, %v9026
  %v9755 = vpack.c.b16 %v9029, %v9027
  %v9756 = vpack.c.b16 %v9032, %v9030
  %v9757 = vpack.c.b16 %v9033, %v9031
  %v9758 = vpack.c.b16 %v9036, %v9034
  %v9759 = vpack.c.b16 %v9037, %v9035
  %v9760 = vpack.c.b16 %v9040, %v9038
  %v9761 = vpack.c.b16 %v9041, %v9039
  %v9762 = vpack.c.b16 %v9044, %v9042
  %v9763 = vpack.c.b16 %v9045, %v9043
  %v9764 = vpack.c.b16 %v9048, %v9046
  %v9765 = vpack.c.b16 %v9049, %v9047
  %v9766 = vpack.c.b16 %v9052, %v9050
  %v9767 = vpack.c.b16 %v9053, %v9051
  %v9768 = vpack.c.b16 %v9056, %v9054
  %v9769 = vpack.c.b16 %v9057, %v9055
  %v9770 = vpack.c.b16 %v9060, %v9058
  %v9771 = vpack.c.b16 %v9061, %v9059
  %v9772 = vpack.c.b16 %v9064, %v9062
  %v9773 = vpack.c.b16 %v9065, %v9063
  %v9774 = vpack.c.b16 %v9068, %v9066
  %v9775 = vpack.c.b16 %v9069, %v9067
  %v9776 = vpack.c.b16 %v9072, %v9070
  %v9777 = vpack.c.b16 %v9073, %v9071
  %v9778 = vpack.c.b16 %v9076, %v9074
  %v9779 = vpack.c.b16 %v9077, %v9075
  %v9780 = vpack.c.b16 %v9080, %v9078
  %v9781 = vpack.c.b16 %v9081, %v9079
  %v9782 = vpack.c.b16 %v9084, %v9082
  %v9783 = vpack.c.b16 %v9085, %v9083
  %v9784 = vpack.c.b16 %v9088, %v9086
  %v9785 = vpack.c.b16 %v9089, %v9087
  %v9786 = vpack.c.b16 %v9092, %v9090
  %v9787 = vpack.c.b16 %v9093, %v9091
  %v9788 = vpack.c.b16 %v9096, %v9094
  %v9789 = vpack.c.b16 %v9097, %v9095
  %v9790 = vpack.c.b16 %v9100, %v9098
  %v9791 = vpack.c.b16 %v9101, %v9099
  %v9792 = vpack.c.b16 %v9104, %v9102
  %v9793 = vpack.c.b16 %v9105, %v9103
  %v9794 = vpack.c.b16 %v9108, %v9106
  %v9795 = vpack.c.b16 %v9109, %v9107
  %v9796 = vpack.c.b16 %v9112, %v9110
  %v9797 = vpack.c.b16 %v9113, %v9111
  %v9798 = vpack.c.b16 %v9116, %v9114
  %v9799 = vpack.c.b16 %v9117, %v9115
  %v9800 = vpack.c.b16 %v9120, %v9118
  %v9801 = vpack.c.b16 %v9121, %v9119
  %v9802 = vpack.c.b16 %v9124, %v9122
  %v9803 = vpack.c.b16 %v9125, %v9123
  %v9804 = vpack.c.b16 %v9128, %v9126
  %v9805 = vpack.c.b16 %v9129, %v9127
  %v9806 = vpack.c.b16 %v9132, %v9130
  %v9807 = vpack.c.b16 %v9133, %v9131
  %v9808 = vpack.c.b16 %v9136, %v9134
  %v9809 = vpack.c.b16 %v9137, %v9135
  %v9810 = vpack.c.b16 %v9140, %v9138
  %v9811 = vpack.c.b16 %v9141, %v9139
  %v9812 = vpack.c.b16 %v9144, %v9142
  %v9813 = vpack.c.b16 %v9145, %v9143
  %v9814 = vpack.c.b16 %v9148, %v9146
  %v9815 = vpack.c.b16 %v9149, %v9147
  %v9816 = vpack.c.b16 %v9152, %v9150
  %v9817 = vpack.c.b16 %v9153, %v9151
  %v9818 = vpack.c.b16 %v9156, %v9154
  %v9819 = vpack.c.b16 %v9157, %v9155
  %v9820 = vpack.c.b16 %v9160, %v9158
  %v9821 = vpack.c.b16 %v9161, %v9159
  %v9822 = vpack.c.b16 %v9164, %v9162
  %v9823 = vpack.c.b16 %v9165, %v9163
  %v9824 = vpack.c.b16 %v9168, %v9166
  %v9825 = vpack.c.b16 %v9169, %v9167
  %v9826 = vpack.c.b16 %v9172, %v9170
  %v9827 = vpack.c.b16 %v9173, %v9171
  %v9828 = vpack.c.b16 %v9176, %v9174
  %v9829 = vpack.c.b16 %v9177, %v9175
  %v9830 = vpack.c.b16 %v9180, %v9178
  %v9831 = vpack.c.b16 %v9181, %v9179
  %v9832 = vpack.c.b16 %v9184, %v9182
  %v9833 = vpack.c.b16 %v9185, %v9183
  %v9834 = vpack.c.b16 %v9188, %v9186
  %v9835 = vpack.c.b16 %v9189, %v9187
  %v9836 = vpack.c.b16 %v9192, %v9190
  %v9837 = vpack.c.b16 %v9193, %v9191
  %v9838 = vpack.c.b16 %v9196, %v9194
  %v9839 = vpack.c.b16 %v9197, %v9195
  %v9840 = vpack.c.b16 %v9200, %v9198
  %v9841 = vpack.c.b16 %v9201, %v9199
  %v9842 = vpack.c.b16 %v9204, %v9202
  %v9843 = vpack.c.b16 %v9205, %v9203
  %v9844 = vpack.c.b16 %v9208, %v9206
  %v9845 = vpack.c.b16 %v9209, %v9207
  %v9846 = vpack.c.b16 %v9212, %v9210
  %v9847 = vpack.c.b16 %v9213, %v9211
  %v9848 = vpack.c.b16 %v9216, %v9214
  %v9849 = vpack.c.b16 %v9217, %v9215
  %v9850 = vpack.c.b16 %v9220, %v9218
  %v9851 = vpack.c.b16 %v9221, %v9219
  %v9852 = vpack.c.b16 %v9224, %v9222
  %v9853 = vpack.c.b16 %v9225, %v9223
  %v9854 = vpack.c.b16 %v9228, %v9226
  %v9855 = vpack.c.b16 %v9229, %v9227
  %v9856 = vpack.c.b16 %v9232, %v9230
  %v9857 = vpack.c.b16 %v9233, %v9231
  %v9858 = vpack.c.b16 %v9236, %v9234
  %v9859 = vpack.c.b16 %v9237, %v9235
  %v9860 = vpack.c.b16 %v9240, %v9238
  %v9861 = vpack.c.b16 %v9241, %v9239
  %v9862 = vpack.c.b16 %v9244, %v9242
  %v9863 = vpack.c.b16 %v9245, %v9243
  %v9864 = vpack.c.b16 %v9248, %v9246
  %v9865 = vpack.c.b16 %v9249, %v9247
  %v9866 = vpack.c.b16 %v9252, %v9250
  %v9867 = vpack.c.b16 %v9253, %v9251
  %v9868 = vpack.c.b16 %v9256, %v9254
  %v9869 = vpack.c.b16 %v9257, %v9255
  %v9870 = vpack.c.b16 %v9260, %v9258
  %v9871 = vpack.c.b16 %v9261, %v9259
  %v9872 = vpack.c.b16 %v9264, %v9262
  %v9873 = vpack.c.b16 %v9265, %v9263
  %v9874 = vpack.c.b16 %v9268, %v9266
  %v9875 = vpack.c.b16 %v9269, %v9267
  %v9876 = vpack.c.b16 %v9272, %v9270
  %v9877 = vpack.c.b16 %v9273, %v9271
  %v9878 = vpack.c.b16 %v9276, %v9274
  %v9879 = vpack.c.b16 %v9277, %v9275
  %v9880 = vpack.c.b16 %v9280, %v9278
  %v9881 = vpack.c.b16 %v9281, %v9279
  %v9882 = vpack.c.b16 %v9284, %v9282
  %v9883 = vpack.c.b16 %v9285, %v9283
  %v9884 = vpack.c.b16 %v9288, %v9286
  %v9885 = vpack.c.b16 %v9289, %v9287
  %v9886 = vpack.c.b16 %v9292, %v9290
  %v9887 = vpack.c.b16 %v9293, %v9291
  %v9888 = vpack.c.b16 %v9296, %v9294
  %v9889 = vpack.c.b16 %v9297, %v9295
  %v9890 = vpack.c.b16 %v9300, %v9298
  %v9891 = vpack.c.b16 %v9301, %v9299
  %v9892 = vpack.c.b16 %v9304, %v9302
  %v9893 = vpack.c.b16 %v9305, %v9303
  %v9894 = vpack.c.b16 %v9308, %v9306
  %v9895 = vpack.c.b16 %v9309, %v9307
  %v9896 = vpack.c.b16 %v9312, %v9310
  %v9897 = vpack.c.b16 %v9313, %v9311
  %v9898 = vpack.c.b16 %v9316, %v9314
  %v9899 = vpack.c.b16 %v9317, %v9315
  %v9900 = vpack.c.b16 %v9320, %v9318
  %v9901 = vpack.c.b16 %v9321, %v9319
  %v9902 = vpack.c.b16 %v9324, %v9322
  %v9903 = vpack.c.b16 %v9325, %v9323
  %v9904 = vpack.c.b16 %v9328, %v9326
  %v9905 = vpack.c.b16 %v9329, %v9327
  %v9906 = vpack.c.b16 %v9332, %v9330
  %v9907 = vpack.c.b16 %v9333, %v9331
  %v9908 = vpack.c.b16 %v9336, %v9334
  %v9909 = vpack.c.b16 %v9337, %v9335
  %v9910 = vpack.c.b16 %v9340, %v9338
  %v9911 = vpack.c.b16 %v9341, %v9339
  %v9912 = vpack.c.b16 %v9344, %v9342
  %v9913 = vpack.c.b16 %v9345, %v9343
  %v9914 = vpack.c.b16 %v9348, %v9346
  %v9915 = vpack.c.b16 %v9349, %v9347
  %v9916 = vpack.c.b16 %v9352, %v9350
  %v9917 = vpack.c.b16 %v9353, %v9351
  %v9918 = vpack.c.b16 %v9356, %v9354
  %v9919 = vpack.c.b16 %v9357, %v9355
  %v9920 = vpack.c.b16 %v9360, %v9358
  %v9921 = vpack.c.b16 %v9361, %v9359
  %v9922 = vpack.c.b16 %v9364, %v9362
  %v9923 = vpack.c.b16 %v9365, %v9363
  %v9924 = vpack.c.b16 %v9368, %v9366
  %v9925 = vpack.c.b16 %v9369, %v9367
  %v9926 = vpack.c.b16 %v9372, %v9370
  %v9927 = vpack.c.b16 %v9373, %v9371
  %v9928 = vpack.c.b16 %v9376, %v9374
  %v9929 = vpack.c.b16 %v9377, %v9375
  %v9930 = vpack.c.b16 %v9380, %v9378
  %v9931 = vpack.c.b16 %v9381, %v9379
  %v9932 = vpack.c.b16 %v9384, %v9382
  %v9933 = vpack.c.b16 %v9385, %v9383
  %v9934 = vpack.c.b16 %v9388, %v9386
  %v9935 = vpack.c.b16 %v9389, %v9387
  %v9936 = vpack.c.b16 %v9392, %v9390
  %v9937 = vpack.c.b16 %v9393, %v9391
  %v9938 = vpack.c.b16 %v9396, %v9394
  %v9939 = vpack.c.b16 %v9397, %v9395
  %v9940 = vpack.c.b16 %v9400, %v9398
  %v9941 = vpack.c.b16 %v9401, %v9399
  %v9942 = vpack.c.b16 %v9404, %v9402
  %v9943 = vpack.c.b16 %v9405, %v9403
  %v9944 = vpack.c.b16 %v9408, %v9406
  %v9945 = vpack.c.b16 %v9409, %v9407
  %v9946 = vpack.c.b16 %v9412, %v9410
  %v9947 = vpack.c.b16 %v9413, %v9411
  %v9948 = vpack.c.b16 %v9416, %v9414
  %v9949 = vpack.c.b16 %v9417, %v9415
  %v9950 = vpack.c.b16 %v9420, %v9418
  %v9951 = vpack.c.b16 %v9421, %v9419
  %v9952 = vpack.c.b16 %v9424, %v9422
  %v9953 = vpack.c.b16 %v9425, %v9423
  %v9954 = vpack.c.b16 %v9428, %v9426
  %v9955 = vpack.c.b16 %v9429, %v9427
  %v9956 = vpack.c.b16 %v9432, %v9430
  %v9957 = vpack.c.b16 %v9433, %v9431
  %v9958 = vpack.c.b16 %v9436, %v9434
  %v9959 = vpack.c.b16 %v9437, %v9435
  %v9960 = vpack.c.b16 %v9440, %v9438
  %v9961 = vpack.c.b16 %v9441, %v9439
  %v9962 = vpack.c.b16 %v9444, %v9442
  %v9963 = vpack.c.b16 %v9445, %v9443
  %v9964 = vpack.c.b16 %v9448, %v9446
  %v9965 = vpack.c.b16 %v9449, %v9447
  %v9966 = vpack.c.b16 %v9452, %v9450
  %v9967 = vpack.c.b16 %v9453, %v9451
  %v9968 = vpack.c.b16 %v9456, %v9454
  %v9969 = vpack.c.b16 %v9457, %v9455
  %v9970 = vpack.c.b16 %v9460, %v9458
  %v9971 = vpack.c.b16 %v9461, %v9459
  %v9972 = vpack.c.b16 %v9464, %v9462
  %v9973 = vpack.c.b16 %v9465, %v9463
  %v9974 = vpack.c.b16 %v9468, %v9466
  %v9975 = vpack.c.b16 %v9469, %v9467
  %v9976 = vpack.c.b16 %v9472, %v9470
  %v9977 = vpack.c.b16 %v9473, %v9471
  %v9978 = vpack.c.b16 %v9476, %v9474
  %v9979 = vpack.c.b16 %v9477, %v9475
  %v9980 = vpack.c.b16 %v9480, %v9478
  %v9981 = vpack.c.b16 %v9481, %v9479
  %v9982 = vpack.c.b16 %v9484, %v9482
  %v9983 = vpack.c.b16 %v9485, %v9483
  %v9984 = vpack.c.b16 %v9488, %v9486
  %v9985 = vpack.c.b16 %v9489, %v9487
  %v9986 = vpack.c.b16 %v9492, %v9490
  %v9987 = vpack.c.b16 %v9493, %v9491
  %v9988 = vpack.c.b16 %v9496, %v9494
  %v9989 = vpack.c.b16 %v9497, %v9495
  %v9990 = vpack.c.b16 %v9500, %v9498
  %v9991 = vpack.c.b16 %v9501, %v9499
  %v9992 = vpack.c.b16 %v9504, %v9502
  %v9993 = vpack.c.b16 %v9505, %v9503
  %v9994 = vpack.c.b16 %v9508, %v9506
  %v9995 = vpack.c.b16 %v9509, %v9507
  %v9996 = vpack.c.b16 %v9512, %v9510
  %v9997 = vpack.c.b16 %v9513, %v9511
  %v9998 = vpack.c.b16 %v9516, %v9514
  %v9999 = vpack.c.b16 %v9517, %v9515
  %v10000 = vpack.c.b16 %v9520, %v9518
  %v10001 = vpack.c.b16 %v9521, %v9519
  %v10002 = vpack.c.b16 %v9524, %v9522
  %v10003 = vpack.c.b16 %v9525, %v9523
  %v10004 = vpack.c.b16 %v9528, %v9526
  %v10005 = vpack.c.b16 %v9529, %v9527
  %v10006 = vpack.c.b16 %v9532, %v9530
  %v10007 = vpack.c.b16 %v9533, %v9531
  %v10008 = vpack.c.b16 %v9536, %v9534
  %v10009 = vpack.c.b16 %v9537, %v9535
  %v10010 = vpack.c.b16 %v9540, %v9538
  %v10011 = vpack.c.b16 %v9541, %v9539
  %v10012 = vpack.c.b16 %v9544, %v9542
  %v10013 = vpack.c.b16 %v9545, %v9543
  %v10014 = vpack.c.b16 %v9548, %v9546
  %v10015 = vpack.c.b16 %v9549, %v9547
  %v10016 = vpack.c.b16 %v9552, %v9550
  %v10017 = vpack.c.b16 %v9553, %v9551
  %v10018 = vpack.c.b16 %v9556, %v9554
  %v10019 = vpack.c.b16 %v9557, %v9555
  %v10020 = vpack.c.b16 %v9560, %v9558
  %v10021 = vpack.c.b16 %v9561, %v9559
  %v10022 = vpack.c.b16 %v9564, %v9562
  %v10023 = vpack.c.b16 %v9565, %v9563
  %v10024 = vpack.c.b16 %v9568, %v9566
  %v10025 = vpack.c.b16 %v9569, %v9567
  %v10026 = vpack.c.b16 %v9572, %v9570
  %v10027 = vpack.c.b16 %v9573, %v9571
  %v10028 = vpack.c.b16 %v9576, %v9574
  %v10029 = vpack.c.b16 %v9577, %v9575
  %v10030 = vpack.c.b16 %v9580, %v9578
  %v10031 = vpack.c.b16 %v9581, %v9579
  %v10032 = vpack.c.b16 %v9584, %v9582
  %v10033 = vpack.c.b16 %v9585, %v9583
  %v10034 = vpack.c.b16 %v9588, %v9586
  %v10035 = vpack.c.b16 %v9589, %v9587
  %v10036 = vpack.c.b16 %v9592, %v9590
  %v10037 = vpack.c.b16 %v9593, %v9591
  %v10038 = vpack.c.b16 %v9596, %v9594
  %v10039 = vpack.c.b16 %v9597, %v9595
  %v10040 = vpack.c.b16 %v9600, %v9598
  %v10041 = vpack.c.b16 %v9601, %v9599
  %v10042 = vpack.c.b16 %v9604, %v9602
  %v10043 = vpack.c.b16 %v9605, %v9603
  %v10044 = vpack.c.b16 %v9608, %v9606
  %v10045 = vpack.c.b16 %v9609, %v9607
  %v10046 = vpack.c.b16 %v9612, %v9610
  %v10047 = vpack.c.b16 %v9613, %v9611
  %v10048 = vpack.c.b16 %v9616, %v9614
  %v10049 = vpack.c.b16 %v9617, %v9615
  %10482 = vmatprep.subr.bf16.mxu0 %v9619
  %10483 = vmatpush1.bf16.msra.mxu0 %v9618
  %10484 = vmatprep.subr.bf16.mxu0 %v9621
  %10485 = vmatpush1.bf16.msra.mxu0 %v9620
  %10486 = vmatprep.subr.bf16.mxu0 %v9623
  %10487 = vmatpush1.bf16.msra.mxu0 %v9622
  %10488 = vmatprep.subr.bf16.mxu0 %v9625
  %10489 = vmatpush1.bf16.msra.mxu0 %v9624
  %10490 = vmatprep.subr.bf16.mxu0 %v9627
  %10491 = vmatpush1.bf16.msra.mxu0 %v9626
  %10492 = vmatprep.subr.bf16.mxu0 %v9629
  %10493 = vmatpush1.bf16.msra.mxu0 %v9628
  %10494 = vmatprep.subr.bf16.mxu0 %v9631
  %10495 = vmatpush1.bf16.msra.mxu0 %v9630
  %10496 = vmatprep.subr.bf16.mxu0 %v9633
  %10497 = vmatpush1.bf16.msra.mxu0 %v9632
  %10498 = vmatprep.subr.bf16.mxu0 %v9635
  %10499 = vmatpush1.bf16.msra.mxu0 %v9634
  %10500 = vmatprep.subr.bf16.mxu0 %v9637
  %10501 = vmatpush1.bf16.msra.mxu0 %v9636
  %10502 = vmatprep.subr.bf16.mxu0 %v9639
  %10503 = vmatpush1.bf16.msra.mxu0 %v9638
  %10504 = vmatprep.subr.bf16.mxu0 %v9641
  %10505 = vmatpush1.bf16.msra.mxu0 %v9640
  %10506 = vmatprep.subr.bf16.mxu0 %v9643
  %10507 = vmatpush1.bf16.msra.mxu0 %v9642
  %10508 = vmatprep.subr.bf16.mxu0 %v9645
  %10509 = vmatpush1.bf16.msra.mxu0 %v9644
  %10510 = vmatprep.subr.bf16.mxu0 %v9647
  %10511 = vmatpush1.bf16.msra.mxu0 %v9646
  %10512 = vmatprep.subr.bf16.mxu0 %v9649
  %10513 = vmatpush1.bf16.msra.mxu0 %v9648
  %10514 = vmatprep.mubr.bf16.mxu0 %v7852
  %10515 = vmatmul.mubr.bf16.gmra.mrb[0].mxu0 %v7851
  %v10516 = vpop.f32.mrb[0].mxu0
  %v10517 = vadd.f32 %v8315, %v10516
  %v10518 = vpop.f32.mrb[0].mxu0
  %v10519 = vadd.f32 %v8319, %v10518
  %v10520 = vpop.f32.mrb[0].mxu0
  %v10521 = vpop.f32.mrb[0].mxu0
  %10522 = vdwg.mxu0
  %10523 = vmatprep.subr.bf16.mxu0 %v9651
  %10524 = vmatpush1.bf16.msra.mxu0 %v9650
  %10525 = vmatprep.subr.bf16.mxu0 %v9653
  %10526 = vmatpush1.bf16.msra.mxu0 %v9652
  %10527 = vmatprep.subr.bf16.mxu0 %v9655
  %10528 = vmatpush1.bf16.msra.mxu0 %v9654
  %10529 = vmatprep.subr.bf16.mxu0 %v9657
  %10530 = vmatpush1.bf16.msra.mxu0 %v9656
  %10531 = vmatprep.subr.bf16.mxu0 %v9659
  %10532 = vmatpush1.bf16.msra.mxu0 %v9658
  %10533 = vmatprep.subr.bf16.mxu0 %v9661
  %10534 = vmatpush1.bf16.msra.mxu0 %v9660
  %10535 = vmatprep.subr.bf16.mxu0 %v9663
  %10536 = vmatpush1.bf16.msra.mxu0 %v9662
  %10537 = vmatprep.subr.bf16.mxu0 %v9665
  %10538 = vmatpush1.bf16.msra.mxu0 %v9664
  %10539 = vmatprep.subr.bf16.mxu0 %v9667
  %10540 = vmatpush1.bf16.msra.mxu0 %v9666
  %10541 = vmatprep.subr.bf16.mxu0 %v9669
  %10542 = vmatpush1.bf16.msra.mxu0 %v9668
  %10543 = vmatprep.subr.bf16.mxu0 %v9671
  %10544 = vmatpush1.bf16.msra.mxu0 %v9670
  %10545 = vmatprep.subr.bf16.mxu0 %v9673
  %10546 = vmatpush1.bf16.msra.mxu0 %v9672
  %10547 = vmatprep.subr.bf16.mxu0 %v9675
  %10548 = vmatpush1.bf16.msra.mxu0 %v9674
  %10549 = vmatprep.subr.bf16.mxu0 %v9677
  %10550 = vmatpush1.bf16.msra.mxu0 %v9676
  %10551 = vmatprep.subr.bf16.mxu0 %v9679
  %10552 = vmatpush1.bf16.msra.mxu0 %v9678
  %10553 = vmatprep.subr.bf16.mxu0 %v9681
  %10554 = vmatpush1.bf16.msra.mxu0 %v9680
  %10555 = vmatprep.mubr.bf16.mxu0 %v7854
  %10556 = vmatmul.mubr.bf16.gmra.mrb[0].mxu0 %v7853
  %v10557 = vpop.f32.mrb[0].mxu0
  %v10558 = vadd.f32 %v10517, %v10557
  %v10559 = vpop.f32.mrb[0].mxu0
  %v10560 = vadd.f32 %v10519, %v10559
  %v10561 = vpop.f32.mrb[0].mxu0
  %v10562 = vpop.f32.mrb[0].mxu0
  %10563 = vdwg.mxu0
  %10564 = vmatprep.subr.bf16.mxu0 %v9683
  %10565 = vmatpush1.bf16.msra.mxu0 %v9682
  %10566 = vmatprep.subr.bf16.mxu0 %v9685
  %10567 = vmatpush1.bf16.msra.mxu0 %v9684
  %10568 = vmatprep.subr.bf16.mxu0 %v9687
  %10569 = vmatpush1.bf16.msra.mxu0 %v9686
  %10570 = vmatprep.subr.bf16.mxu0 %v9689
  %10571 = vmatpush1.bf16.msra.mxu0 %v9688
  %10572 = vmatprep.subr.bf16.mxu0 %v9691
  %10573 = vmatpush1.bf16.msra.mxu0 %v9690
  %10574 = vmatprep.subr.bf16.mxu0 %v9693
  %10575 = vmatpush1.bf16.msra.mxu0 %v9692
  %10576 = vmatprep.subr.bf16.mxu0 %v9695
  %10577 = vmatpush1.bf16.msra.mxu0 %v9694
  %10578 = vmatprep.subr.bf16.mxu0 %v9697
  %10579 = vmatpush1.bf16.msra.mxu0 %v9696
  %10580 = vmatprep.subr.bf16.mxu0 %v9699
  %10581 = vmatpush1.bf16.msra.mxu0 %v9698
  %10582 = vmatprep.subr.bf16.mxu0 %v9701
  %10583 = vmatpush1.bf16.msra.mxu0 %v9700
  %10584 = vmatprep.subr.bf16.mxu0 %v9703
  %10585 = vmatpush1.bf16.msra.mxu0 %v9702
  %10586 = vmatprep.subr.bf16.mxu0 %v9705
  %10587 = vmatpush1.bf16.msra.mxu0 %v9704
  %10588 = vmatprep.subr.bf16.mxu0 %v9707
  %10589 = vmatpush1.bf16.msra.mxu0 %v9706
  %10590 = vmatprep.subr.bf16.mxu0 %v9709
  %10591 = vmatpush1.bf16.msra.mxu0 %v9708
  %10592 = vmatprep.subr.bf16.mxu0 %v9711
  %10593 = vmatpush1.bf16.msra.mxu0 %v9710
  %10594 = vmatprep.subr.bf16.mxu0 %v9713
  %10595 = vmatpush1.bf16.msra.mxu0 %v9712
  %10596 = vmatprep.mubr.bf16.mxu0 %v7856
  %10597 = vmatmul.mubr.bf16.gmra.mrb[0].mxu0 %v7855
  %v10598 = vpop.f32.mrb[0].mxu0
  %v10599 = vadd.f32 %v10558, %v10598
  %v10600 = vpop.f32.mrb[0].mxu0
  %v10601 = vadd.f32 %v10560, %v10600
  %v10602 = vpop.f32.mrb[0].mxu0
  %v10603 = vpop.f32.mrb[0].mxu0
  %10604 = vdwg.mxu0
  %10605 = vmatprep.subr.bf16.mxu0 %v9715
  %10606 = vmatpush1.bf16.msra.mxu0 %v9714
  %10607 = vmatprep.subr.bf16.mxu0 %v9717
  %10608 = vmatpush1.bf16.msra.mxu0 %v9716
  %10609 = vmatprep.subr.bf16.mxu0 %v9719
  %10610 = vmatpush1.bf16.msra.mxu0 %v9718
  %10611 = vmatprep.subr.bf16.mxu0 %v9721
  %10612 = vmatpush1.bf16.msra.mxu0 %v9720
  %10613 = vmatprep.subr.bf16.mxu0 %v9723
  %10614 = vmatpush1.bf16.msra.mxu0 %v9722
  %10615 = vmatprep.subr.bf16.mxu0 %v9725
  %10616 = vmatpush1.bf16.msra.mxu0 %v9724
  %10617 = vmatprep.subr.bf16.mxu0 %v9727
  %10618 = vmatpush1.bf16.msra.mxu0 %v9726
  %10619 = vmatprep.subr.bf16.mxu0 %v9729
  %10620 = vmatpush1.bf16.msra.mxu0 %v9728
  %10621 = vmatprep.subr.bf16.mxu0 %v9731
  %10622 = vmatpush1.bf16.msra.mxu0 %v9730
  %10623 = vmatprep.subr.bf16.mxu0 %v9733
  %10624 = vmatpush1.bf16.msra.mxu0 %v9732
  %10625 = vmatprep.subr.bf16.mxu0 %v9735
  %10626 = vmatpush1.bf16.msra.mxu0 %v9734
  %10627 = vmatprep.subr.bf16.mxu0 %v9737
  %10628 = vmatpush1.bf16.msra.mxu0 %v9736
  %10629 = vmatprep.subr.bf16.mxu0 %v9739
  %10630 = vmatpush1.bf16.msra.mxu0 %v9738
  %10631 = vmatprep.subr.bf16.mxu0 %v9741
  %10632 = vmatpush1.bf16.msra.mxu0 %v9740
  %10633 = vmatprep.subr.bf16.mxu0 %v9743
  %10634 = vmatpush1.bf16.msra.mxu0 %v9742
  %10635 = vmatprep.subr.bf16.mxu0 %v9745
  %10636 = vmatpush1.bf16.msra.mxu0 %v9744
  %10637 = vmatprep.mubr.bf16.mxu0 %v7858
  %10638 = vmatmul.mubr.bf16.gmra.mrb[0].mxu0 %v7857
  %v10639 = vpop.f32.mrb[0].mxu0
  %v10640 = vadd.f32 %v10599, %v10639
  %v10641 = vpop.f32.mrb[0].mxu0
  %v10642 = vadd.f32 %v10601, %v10641
  %v10643 = vpop.f32.mrb[0].mxu0
  %v10644 = vpop.f32.mrb[0].mxu0
  %10645 = vdwg.mxu0
  %10646 = vmatprep.subr.bf16.mxu0 %v9747
  %10647 = vmatpush1.bf16.msra.mxu0 %v9746
  %10648 = vmatprep.subr.bf16.mxu0 %v9749
  %10649 = vmatpush1.bf16.msra.mxu0 %v9748
  %10650 = vmatprep.subr.bf16.mxu0 %v9751
  %10651 = vmatpush1.bf16.msra.mxu0 %v9750
  %10652 = vmatprep.subr.bf16.mxu0 %v9753
  %10653 = vmatpush1.bf16.msra.mxu0 %v9752
  %10654 = vmatprep.subr.bf16.mxu0 %v9755
  %10655 = vmatpush1.bf16.msra.mxu0 %v9754
  %10656 = vmatprep.subr.bf16.mxu0 %v9757
  %10657 = vmatpush1.bf16.msra.mxu0 %v9756
  %10658 = vmatprep.subr.bf16.mxu0 %v9759
  %10659 = vmatpush1.bf16.msra.mxu0 %v9758
  %10660 = vmatprep.subr.bf16.mxu0 %v9761
  %10661 = vmatpush1.bf16.msra.mxu0 %v9760
  %10662 = vmatprep.subr.bf16.mxu0 %v9763
  %10663 = vmatpush1.bf16.msra.mxu0 %v9762
  %10664 = vmatprep.subr.bf16.mxu0 %v9765
  %10665 = vmatpush1.bf16.msra.mxu0 %v9764
  %10666 = vmatprep.subr.bf16.mxu0 %v9767
  %10667 = vmatpush1.bf16.msra.mxu0 %v9766
  %10668 = vmatprep.subr.bf16.mxu0 %v9769
  %10669 = vmatpush1.bf16.msra.mxu0 %v9768
  %10670 = vmatprep.subr.bf16.mxu0 %v9771
  %10671 = vmatpush1.bf16.msra.mxu0 %v9770
  %10672 = vmatprep.subr.bf16.mxu0 %v9773
  %10673 = vmatpush1.bf16.msra.mxu0 %v9772
  %10674 = vmatprep.subr.bf16.mxu0 %v9775
  %10675 = vmatpush1.bf16.msra.mxu0 %v9774
  %10676 = vmatprep.subr.bf16.mxu0 %v9777
  %10677 = vmatpush1.bf16.msra.mxu0 %v9776
  %10678 = vmatprep.mubr.bf16.mxu0 %v7860
  %10679 = vmatmul.mubr.bf16.gmra.mrb[0].mxu0 %v7859
  %v10680 = vpop.f32.mrb[0].mxu0
  %v10681 = vadd.f32 %v10640, %v10680
  %v10682 = vpop.f32.mrb[0].mxu0
  %v10683 = vadd.f32 %v10642, %v10682
  %v10684 = vpop.f32.mrb[0].mxu0
  %v10685 = vpop.f32.mrb[0].mxu0
  %10686 = vdwg.mxu0
  %10687 = vmatprep.subr.bf16.mxu0 %v9779
  %10688 = vmatpush1.bf16.msra.mxu0 %v9778
  %10689 = vmatprep.subr.bf16.mxu0 %v9781
  %10690 = vmatpush1.bf16.msra.mxu0 %v9780
  %10691 = vmatprep.subr.bf16.mxu0 %v9783
  %10692 = vmatpush1.bf16.msra.mxu0 %v9782
  %10693 = vmatprep.subr.bf16.mxu0 %v9785
  %10694 = vmatpush1.bf16.msra.mxu0 %v9784
  %10695 = vmatprep.subr.bf16.mxu0 %v9787
  %10696 = vmatpush1.bf16.msra.mxu0 %v9786
  %10697 = vmatprep.subr.bf16.mxu0 %v9789
  %10698 = vmatpush1.bf16.msra.mxu0 %v9788
  %10699 = vmatprep.subr.bf16.mxu0 %v9791
  %10700 = vmatpush1.bf16.msra.mxu0 %v9790
  %10701 = vmatprep.subr.bf16.mxu0 %v9793
  %10702 = vmatpush1.bf16.msra.mxu0 %v9792
  %10703 = vmatprep.subr.bf16.mxu0 %v9795
  %10704 = vmatpush1.bf16.msra.mxu0 %v9794
  %10705 = vmatprep.subr.bf16.mxu0 %v9797
  %10706 = vmatpush1.bf16.msra.mxu0 %v9796
  %10707 = vmatprep.subr.bf16.mxu0 %v9799
  %10708 = vmatpush1.bf16.msra.mxu0 %v9798
  %10709 = vmatprep.subr.bf16.mxu0 %v9801
  %10710 = vmatpush1.bf16.msra.mxu0 %v9800
  %10711 = vmatprep.subr.bf16.mxu0 %v9803
  %10712 = vmatpush1.bf16.msra.mxu0 %v9802
  %10713 = vmatprep.subr.bf16.mxu0 %v9805
  %10714 = vmatpush1.bf16.msra.mxu0 %v9804
  %10715 = vmatprep.subr.bf16.mxu0 %v9807
  %10716 = vmatpush1.bf16.msra.mxu0 %v9806
  %10717 = vmatprep.subr.bf16.mxu0 %v9809
  %10718 = vmatpush1.bf16.msra.mxu0 %v9808
  %10719 = vmatprep.mubr.bf16.mxu0 %v7862
  %10720 = vmatmul.mubr.bf16.gmra.mrb[0].mxu0 %v7861
  %v10721 = vpop.f32.mrb[0].mxu0
  %v10722 = vadd.f32 %v10681, %v10721
  %v10723 = vpop.f32.mrb[0].mxu0
  %v10724 = vadd.f32 %v10683, %v10723
  %v10725 = vpop.f32.mrb[0].mxu0
  %v10726 = vpop.f32.mrb[0].mxu0
  %10727 = vdwg.mxu0
  %10728 = vmatprep.subr.bf16.mxu0 %v9811
  %10729 = vmatpush1.bf16.msra.mxu0 %v9810
  %10730 = vmatprep.subr.bf16.mxu0 %v9813
  %10731 = vmatpush1.bf16.msra.mxu0 %v9812
  %10732 = vmatprep.subr.bf16.mxu0 %v9815
  %10733 = vmatpush1.bf16.msra.mxu0 %v9814
  %10734 = vmatprep.subr.bf16.mxu0 %v9817
  %10735 = vmatpush1.bf16.msra.mxu0 %v9816
  %10736 = vmatprep.subr.bf16.mxu0 %v9819
  %10737 = vmatpush1.bf16.msra.mxu0 %v9818
  %10738 = vmatprep.subr.bf16.mxu0 %v9821
  %10739 = vmatpush1.bf16.msra.mxu0 %v9820
  %10740 = vmatprep.subr.bf16.mxu0 %v9823
  %10741 = vmatpush1.bf16.msra.mxu0 %v9822
  %10742 = vmatprep.subr.bf16.mxu0 %v9825
  %10743 = vmatpush1.bf16.msra.mxu0 %v9824
  %10744 = vmatprep.subr.bf16.mxu0 %v9827
  %10745 = vmatpush1.bf16.msra.mxu0 %v9826
  %10746 = vmatprep.subr.bf16.mxu0 %v9829
  %10747 = vmatpush1.bf16.msra.mxu0 %v9828
  %10748 = vmatprep.subr.bf16.mxu0 %v9831
  %10749 = vmatpush1.bf16.msra.mxu0 %v9830
  %10750 = vmatprep.subr.bf16.mxu0 %v9833
  %10751 = vmatpush1.bf16.msra.mxu0 %v9832
  %10752 = vmatprep.subr.bf16.mxu0 %v9835
  %10753 = vmatpush1.bf16.msra.mxu0 %v9834
  %10754 = vmatprep.subr.bf16.mxu0 %v9837
  %10755 = vmatpush1.bf16.msra.mxu0 %v9836
  %10756 = vmatprep.subr.bf16.mxu0 %v9839
  %10757 = vmatpush1.bf16.msra.mxu0 %v9838
  %10758 = vmatprep.subr.bf16.mxu0 %v9841
  %10759 = vmatpush1.bf16.msra.mxu0 %v9840
  %10760 = vmatprep.mubr.bf16.mxu0 %v7864
  %10761 = vmatmul.mubr.bf16.gmra.mrb[0].mxu0 %v7863
  %v10762 = vpop.f32.mrb[0].mxu0
  %v10763 = vadd.f32 %v10722, %v10762
  %v10764 = vpop.f32.mrb[0].mxu0
  %v10765 = vadd.f32 %v10724, %v10764
  %v10766 = vpop.f32.mrb[0].mxu0
  %v10767 = vpop.f32.mrb[0].mxu0
  %10768 = vdwg.mxu0
  %10769 = vmatprep.subr.bf16.mxu0 %v9843
  %10770 = vmatpush1.bf16.msra.mxu0 %v9842
  %10771 = vmatprep.subr.bf16.mxu0 %v9845
  %10772 = vmatpush1.bf16.msra.mxu0 %v9844
  %10773 = vmatprep.subr.bf16.mxu0 %v9847
  %10774 = vmatpush1.bf16.msra.mxu0 %v9846
  %10775 = vmatprep.subr.bf16.mxu0 %v9849
  %10776 = vmatpush1.bf16.msra.mxu0 %v9848
  %10777 = vmatprep.subr.bf16.mxu0 %v9851
  %10778 = vmatpush1.bf16.msra.mxu0 %v9850
  %10779 = vmatprep.subr.bf16.mxu0 %v9853
  %10780 = vmatpush1.bf16.msra.mxu0 %v9852
  %10781 = vmatprep.subr.bf16.mxu0 %v9855
  %10782 = vmatpush1.bf16.msra.mxu0 %v9854
  %10783 = vmatprep.subr.bf16.mxu0 %v9857
  %10784 = vmatpush1.bf16.msra.mxu0 %v9856
  %10785 = vmatprep.subr.bf16.mxu0 %v9859
  %10786 = vmatpush1.bf16.msra.mxu0 %v9858
  %10787 = vmatprep.subr.bf16.mxu0 %v9861
  %10788 = vmatpush1.bf16.msra.mxu0 %v9860
  %10789 = vmatprep.subr.bf16.mxu0 %v9863
  %10790 = vmatpush1.bf16.msra.mxu0 %v9862
  %10791 = vmatprep.subr.bf16.mxu0 %v9865
  %10792 = vmatpush1.bf16.msra.mxu0 %v9864
  %10793 = vmatprep.subr.bf16.mxu0 %v9867
  %10794 = vmatpush1.bf16.msra.mxu0 %v9866
  %10795 = vmatprep.subr.bf16.mxu0 %v9869
  %10796 = vmatpush1.bf16.msra.mxu0 %v9868
  %10797 = vmatprep.subr.bf16.mxu0 %v9871
  %10798 = vmatpush1.bf16.msra.mxu0 %v9870
  %10799 = vmatprep.subr.bf16.mxu0 %v9873
  %10800 = vmatpush1.bf16.msra.mxu0 %v9872
  %10801 = vmatprep.mubr.bf16.mxu0 %v7866
  %10802 = vmatmul.mubr.bf16.gmra.mrb[0].mxu0 %v7865
  %v10803 = vpop.f32.mrb[0].mxu0
  %v10804 = vadd.f32 %v10763, %v10803
  %v10805 = vpop.f32.mrb[0].mxu0
  %v10806 = vadd.f32 %v10765, %v10805
  %v10807 = vpop.f32.mrb[0].mxu0
  %v10808 = vpop.f32.mrb[0].mxu0
  %10809 = vdwg.mxu0
  %10810 = vmatprep.subr.bf16.mxu0 %v9875
  %10811 = vmatpush1.bf16.msra.mxu0 %v9874
  %10812 = vmatprep.subr.bf16.mxu0 %v9877
  %10813 = vmatpush1.bf16.msra.mxu0 %v9876
  %10814 = vmatprep.subr.bf16.mxu0 %v9879
  %10815 = vmatpush1.bf16.msra.mxu0 %v9878
  %10816 = vmatprep.subr.bf16.mxu0 %v9881
  %10817 = vmatpush1.bf16.msra.mxu0 %v9880
  %10818 = vmatprep.subr.bf16.mxu0 %v9883
  %10819 = vmatpush1.bf16.msra.mxu0 %v9882
  %10820 = vmatprep.subr.bf16.mxu0 %v9885
  %10821 = vmatpush1.bf16.msra.mxu0 %v9884
  %10822 = vmatprep.subr.bf16.mxu0 %v9887
  %10823 = vmatpush1.bf16.msra.mxu0 %v9886
  %10824 = vmatprep.subr.bf16.mxu0 %v9889
  %10825 = vmatpush1.bf16.msra.mxu0 %v9888
  %10826 = vmatprep.subr.bf16.mxu0 %v9891
  %10827 = vmatpush1.bf16.msra.mxu0 %v9890
  %10828 = vmatprep.subr.bf16.mxu0 %v9893
  %10829 = vmatpush1.bf16.msra.mxu0 %v9892
  %10830 = vmatprep.subr.bf16.mxu0 %v9895
  %10831 = vmatpush1.bf16.msra.mxu0 %v9894
  %10832 = vmatprep.subr.bf16.mxu0 %v9897
  %10833 = vmatpush1.bf16.msra.mxu0 %v9896
  %10834 = vmatprep.subr.bf16.mxu0 %v9899
  %10835 = vmatpush1.bf16.msra.mxu0 %v9898
  %10836 = vmatprep.subr.bf16.mxu0 %v9901
  %10837 = vmatpush1.bf16.msra.mxu0 %v9900
  %10838 = vmatprep.subr.bf16.mxu0 %v9903
  %10839 = vmatpush1.bf16.msra.mxu0 %v9902
  %10840 = vmatprep.subr.bf16.mxu0 %v9905
  %10841 = vmatpush1.bf16.msra.mxu0 %v9904
  %10842 = vmatprep.mubr.bf16.mxu0 %v7868
  %10843 = vmatmul.mubr.bf16.gmra.mrb[0].mxu0 %v7867
  %v10844 = vpop.f32.mrb[0].mxu0
  %v10845 = vadd.f32 %v10804, %v10844
  %v10846 = vpop.f32.mrb[0].mxu0
  %v10847 = vadd.f32 %v10806, %v10846
  %v10848 = vpop.f32.mrb[0].mxu0
  %v10849 = vpop.f32.mrb[0].mxu0
  %10850 = vdwg.mxu0
  %10851 = vmatprep.subr.bf16.mxu0 %v9907
  %10852 = vmatpush1.bf16.msra.mxu0 %v9906
  %10853 = vmatprep.subr.bf16.mxu0 %v9909
  %10854 = vmatpush1.bf16.msra.mxu0 %v9908
  %10855 = vmatprep.subr.bf16.mxu0 %v9911
  %10856 = vmatpush1.bf16.msra.mxu0 %v9910
  %10857 = vmatprep.subr.bf16.mxu0 %v9913
  %10858 = vmatpush1.bf16.msra.mxu0 %v9912
  %10859 = vmatprep.subr.bf16.mxu0 %v9915
  %10860 = vmatpush1.bf16.msra.mxu0 %v9914
  %10861 = vmatprep.subr.bf16.mxu0 %v9917
  %10862 = vmatpush1.bf16.msra.mxu0 %v9916
  %10863 = vmatprep.subr.bf16.mxu0 %v9919
  %10864 = vmatpush1.bf16.msra.mxu0 %v9918
  %10865 = vmatprep.subr.bf16.mxu0 %v9921
  %10866 = vmatpush1.bf16.msra.mxu0 %v9920
  %10867 = vmatprep.subr.bf16.mxu0 %v9923
  %10868 = vmatpush1.bf16.msra.mxu0 %v9922
  %10869 = vmatprep.subr.bf16.mxu0 %v9925
  %10870 = vmatpush1.bf16.msra.mxu0 %v9924
  %10871 = vmatprep.subr.bf16.mxu0 %v9927
  %10872 = vmatpush1.bf16.msra.mxu0 %v9926
  %10873 = vmatprep.subr.bf16.mxu0 %v9929
  %10874 = vmatpush1.bf16.msra.mxu0 %v9928
  %10875 = vmatprep.subr.bf16.mxu0 %v9931
  %10876 = vmatpush1.bf16.msra.mxu0 %v9930
  %10877 = vmatprep.subr.bf16.mxu0 %v9933
  %10878 = vmatpush1.bf16.msra.mxu0 %v9932
  %10879 = vmatprep.subr.bf16.mxu0 %v9935
  %10880 = vmatpush1.bf16.msra.mxu0 %v9934
  %10881 = vmatprep.subr.bf16.mxu0 %v9937
  %10882 = vmatpush1.bf16.msra.mxu0 %v9936
  %10883 = vmatprep.mubr.bf16.mxu0 %v7870
  %10884 = vmatmul.mubr.bf16.gmra.mrb[0].mxu0 %v7869
  %v10885 = vpop.f32.mrb[0].mxu0
  %v10886 = vadd.f32 %v10845, %v10885
  %v10887 = vpop.f32.mrb[0].mxu0
  %v10888 = vadd.f32 %v10847, %v10887
  %v10889 = vpop.f32.mrb[0].mxu0
  %v10890 = vpop.f32.mrb[0].mxu0
  %10891 = vdwg.mxu0
  %10892 = vmatprep.subr.bf16.mxu0 %v9939
  %10893 = vmatpush1.bf16.msra.mxu0 %v9938
  %10894 = vmatprep.subr.bf16.mxu0 %v9941
  %10895 = vmatpush1.bf16.msra.mxu0 %v9940
  %10896 = vmatprep.subr.bf16.mxu0 %v9943
  %10897 = vmatpush1.bf16.msra.mxu0 %v9942
  %10898 = vmatprep.subr.bf16.mxu0 %v9945
  %10899 = vmatpush1.bf16.msra.mxu0 %v9944
  %10900 = vmatprep.subr.bf16.mxu0 %v9947
  %10901 = vmatpush1.bf16.msra.mxu0 %v9946
  %10902 = vmatprep.subr.bf16.mxu0 %v9949
  %10903 = vmatpush1.bf16.msra.mxu0 %v9948
  %10904 = vmatprep.subr.bf16.mxu0 %v9951
  %10905 = vmatpush1.bf16.msra.mxu0 %v9950
  %10906 = vmatprep.subr.bf16.mxu0 %v9953
  %10907 = vmatpush1.bf16.msra.mxu0 %v9952
  %10908 = vmatprep.subr.bf16.mxu0 %v9955
  %10909 = vmatpush1.bf16.msra.mxu0 %v9954
  %10910 = vmatprep.subr.bf16.mxu0 %v9957
  %10911 = vmatpush1.bf16.msra.mxu0 %v9956
  %10912 = vmatprep.subr.bf16.mxu0 %v9959
  %10913 = vmatpush1.bf16.msra.mxu0 %v9958
  %10914 = vmatprep.subr.bf16.mxu0 %v9961
  %10915 = vmatpush1.bf16.msra.mxu0 %v9960
  %10916 = vmatprep.subr.bf16.mxu0 %v9963
  %10917 = vmatpush1.bf16.msra.mxu0 %v9962
  %10918 = vmatprep.subr.bf16.mxu0 %v9965
  %10919 = vmatpush1.bf16.msra.mxu0 %v9964
  %10920 = vmatprep.subr.bf16.mxu0 %v9967
  %10921 = vmatpush1.bf16.msra.mxu0 %v9966
  %10922 = vmatprep.subr.bf16.mxu0 %v9969
  %10923 = vmatpush1.bf16.msra.mxu0 %v9968
  %10924 = vmatprep.mubr.bf16.mxu0 %v7872
  %10925 = vmatmul.mubr.bf16.gmra.mrb[0].mxu0 %v7871
  %v10926 = vpop.f32.mrb[0].mxu0
  %v10927 = vadd.f32 %v10886, %v10926
  %v10928 = vpop.f32.mrb[0].mxu0
  %v10929 = vadd.f32 %v10888, %v10928
  %v10930 = vpop.f32.mrb[0].mxu0
  %v10931 = vpop.f32.mrb[0].mxu0
  %10932 = vdwg.mxu0
  %10933 = vmatprep.subr.bf16.mxu0 %v9971
  %10934 = vmatpush1.bf16.msra.mxu0 %v9970
  %10935 = vmatprep.subr.bf16.mxu0 %v9973
  %10936 = vmatpush1.bf16.msra.mxu0 %v9972
  %10937 = vmatprep.subr.bf16.mxu0 %v9975
  %10938 = vmatpush1.bf16.msra.mxu0 %v9974
  %10939 = vmatprep.subr.bf16.mxu0 %v9977
  %10940 = vmatpush1.bf16.msra.mxu0 %v9976
  %10941 = vmatprep.subr.bf16.mxu0 %v9979
  %10942 = vmatpush1.bf16.msra.mxu0 %v9978
  %10943 = vmatprep.subr.bf16.mxu0 %v9981
  %10944 = vmatpush1.bf16.msra.mxu0 %v9980
  %10945 = vmatprep.subr.bf16.mxu0 %v9983
  %10946 = vmatpush1.bf16.msra.mxu0 %v9982
  %10947 = vmatprep.subr.bf16.mxu0 %v9985
  %10948 = vmatpush1.bf16.msra.mxu0 %v9984
  %10949 = vmatprep.subr.bf16.mxu0 %v9987
  %10950 = vmatpush1.bf16.msra.mxu0 %v9986
  %10951 = vmatprep.subr.bf16.mxu0 %v9989
  %10952 = vmatpush1.bf16.msra.mxu0 %v9988
  %10953 = vmatprep.subr.bf16.mxu0 %v9991
  %10954 = vmatpush1.bf16.msra.mxu0 %v9990
  %10955 = vmatprep.subr.bf16.mxu0 %v9993
  %10956 = vmatpush1.bf16.msra.mxu0 %v9992
  %10957 = vmatprep.subr.bf16.mxu0 %v9995
  %10958 = vmatpush1.bf16.msra.mxu0 %v9994
  %10959 = vmatprep.subr.bf16.mxu0 %v9997
  %10960 = vmatpush1.bf16.msra.mxu0 %v9996
  %10961 = vmatprep.subr.bf16.mxu0 %v9999
  %10962 = vmatpush1.bf16.msra.mxu0 %v9998
  %10963 = vmatprep.subr.bf16.mxu0 %v10001
  %10964 = vmatpush1.bf16.msra.mxu0 %v10000
  %10965 = vmatprep.mubr.bf16.mxu0 %v7874
  %10966 = vmatmul.mubr.bf16.gmra.mrb[0].mxu0 %v7873
  %v10967 = vpop.f32.mrb[0].mxu0
  %v10968 = vadd.f32 %v10927, %v10967
  %v10969 = vpop.f32.mrb[0].mxu0
  %v10970 = vadd.f32 %v10929, %v10969
  %v10971 = vpop.f32.mrb[0].mxu0
  %v10972 = vpop.f32.mrb[0].mxu0
  %10973 = vdwg.mxu0
  %10974 = vmatprep.subr.bf16.mxu0 %v10003
  %10975 = vmatpush1.bf16.msra.mxu0 %v10002
  %10976 = vmatprep.subr.bf16.mxu0 %v10005
  %10977 = vmatpush1.bf16.msra.mxu0 %v10004
  %10978 = vmatprep.subr.bf16.mxu0 %v10007
  %10979 = vmatpush1.bf16.msra.mxu0 %v10006
  %10980 = vmatprep.subr.bf16.mxu0 %v10009
  %10981 = vmatpush1.bf16.msra.mxu0 %v10008
  %10982 = vmatprep.subr.bf16.mxu0 %v10011
  %10983 = vmatpush1.bf16.msra.mxu0 %v10010
  %10984 = vmatprep.subr.bf16.mxu0 %v10013
  %10985 = vmatpush1.bf16.msra.mxu0 %v10012
  %10986 = vmatprep.subr.bf16.mxu0 %v10015
  %10987 = vmatpush1.bf16.msra.mxu0 %v10014
  %10988 = vmatprep.subr.bf16.mxu0 %v10017
  %10989 = vmatpush1.bf16.msra.mxu0 %v10016
  %10990 = vmatprep.subr.bf16.mxu0 %v10019
  %10991 = vmatpush1.bf16.msra.mxu0 %v10018
  %10992 = vmatprep.subr.bf16.mxu0 %v10021
  %10993 = vmatpush1.bf16.msra.mxu0 %v10020
  %10994 = vmatprep.subr.bf16.mxu0 %v10023
  %10995 = vmatpush1.bf16.msra.mxu0 %v10022
  %10996 = vmatprep.subr.bf16.mxu0 %v10025
  %10997 = vmatpush1.bf16.msra.mxu0 %v10024
  %10998 = vmatprep.subr.bf16.mxu0 %v10027
  %10999 = vmatpush1.bf16.msra.mxu0 %v10026
  %11000 = vmatprep.subr.bf16.mxu0 %v10029
  %11001 = vmatpush1.bf16.msra.mxu0 %v10028
  %11002 = vmatprep.subr.bf16.mxu0 %v10031
  %11003 = vmatpush1.bf16.msra.mxu0 %v10030
  %11004 = vmatprep.subr.bf16.mxu0 %v10033
  %11005 = vmatpush1.bf16.msra.mxu0 %v10032
  %11006 = vmatprep.mubr.bf16.mxu0 %v7876
  %11007 = vmatmul.mubr.bf16.gmra.mrb[0].mxu0 %v7875
  %v11008 = vpop.f32.mrb[0].mxu0
  %v11009 = vadd.f32 %v10968, %v11008
  %v11010 = vpop.f32.mrb[0].mxu0
  %v11011 = vadd.f32 %v10970, %v11010
  %v11012 = vpop.f32.mrb[0].mxu0
  %v11013 = vpop.f32.mrb[0].mxu0
  %11014 = vdwg.mxu0
  %11015 = vmatprep.subr.bf16.mxu0 %v10035
  %11016 = vmatpush1.bf16.msra.mxu0 %v10034
  %11017 = vmatprep.subr.bf16.mxu0 %v10037
  %11018 = vmatpush1.bf16.msra.mxu0 %v10036
  %11019 = vmatprep.subr.bf16.mxu0 %v10039
  %11020 = vmatpush1.bf16.msra.mxu0 %v10038
  %11021 = vmatprep.subr.bf16.mxu0 %v10041
  %11022 = vmatpush1.bf16.msra.mxu0 %v10040
  %11023 = vmatprep.subr.bf16.mxu0 %v10043
  %11024 = vmatpush1.bf16.msra.mxu0 %v10042
  %11025 = vmatprep.subr.bf16.mxu0 %v10045
  %11026 = vmatpush1.bf16.msra.mxu0 %v10044
  %11027 = vmatprep.subr.bf16.mxu0 %v10047
  %11028 = vmatpush1.bf16.msra.mxu0 %v10046
  %11029 = vmatprep.subr.bf16.mxu0 %v10049
  %11030 = vmatpush1.bf16.msra.mxu0 %v10048
  %11031 = vmatprep.subr.bf16.mxu0 0
  %11032 = vmatpush1.bf16.msra.mxu0 0
  %11033 = vmatprep.subr.bf16.mxu0 0
  %11034 = vmatpush1.bf16.msra.mxu0 0
  %11035 = vmatprep.subr.bf16.mxu0 0
  %11036 = vmatpush1.bf16.msra.mxu0 0
  %11037 = vmatprep.subr.bf16.mxu0 0
  %11038 = vmatpush1.bf16.msra.mxu0 0
  %11039 = vmatprep.subr.bf16.mxu0 0
  %11040 = vmatpush1.bf16.msra.mxu0 0
  %11041 = vmatprep.subr.bf16.mxu0 0
  %11042 = vmatpush1.bf16.msra.mxu0 0
  %11043 = vmatprep.subr.bf16.mxu0 0
  %11044 = vmatpush1.bf16.msra.mxu0 0
  %11045 = vmatprep.subr.bf16.mxu0 0
  %11046 = vmatpush1.bf16.msra.mxu0 0
  %11047 = vmatprep.mubr.bf16.mxu0 0
  %11048 = vmatmul.mubr.bf16.gmra.mrb[0].mxu0 %v7877
  %v11049 = vpop.f32.mrb[0].mxu0
  %v11050 = vadd.f32 %v11009, %v11049
  %v11051 = vpop.f32.mrb[0].mxu0
  %v11052 = vadd.f32 %v11011, %v11051
  %v11053 = vpop.f32.mrb[0].mxu0
  %v11054 = vpop.f32.mrb[0].mxu0
  %11055 = vdwg.mxu0
  %v11056 = vmax.f32 %v11050, 0.0
  %v11057 = vmax.f32 %v11052, 0.0
  %v11058 = vld [vmem:[%s7] sm:$0xff]
  %v11059 = vld [vmem:[%s7 + $0x8] sm:$0xff]
  %v11060 = vld [vmem:[%s7 + $0x10] sm:$0xff]
  %v11061 = vld [vmem:[%s7 + $0x18] sm:$0xff]
  %v11062 = vld [vmem:[%s7 + $0x20] sm:$0xff]
  %v11063 = vld [vmem:[%s7 + $0x28] sm:$0xff]
  %v11064 = vld [vmem:[%s7 + $0x30] sm:$0xff]
  %v11065 = vld [vmem:[%s7 + $0x38] sm:$0xff]
  %v11066 = vld [vmem:[%s7 + $0x40] sm:$0xff]
  %v11067 = vld [vmem:[%s7 + $0x48] sm:$0xff]
  %v11068 = vld [vmem:[%s7 + $0x50] sm:$0xff]
  %v11069 = vld [vmem:[%s7 + $0x58] sm:$0xff]
  %v11070 = vld [vmem:[%s7 + $0x60] sm:$0xff]
  %v11071 = vld [vmem:[%s7 + $0x68] sm:$0xff]
  %v11072 = vld [vmem:[%s7 + $0x70] sm:$0xff]
  %v11073 = vld [vmem:[%s7 + $0x78] sm:$0xff]
  %v11074 = vld [vmem:[%s7 + $0x80] sm:$0xff]
  %v11075 = vld [vmem:[%s7 + $0x88] sm:$0xff]
  %v11076 = vld [vmem:[%s7 + $0x90] sm:$0xff]
  %v11077 = vld [vmem:[%s7 + $0x98] sm:$0xff]
  %v11078 = vld [vmem:[%s7 + $0xa0] sm:$0xff]
  %v11079 = vld [vmem:[%s7 + $0xa8] sm:$0xff]
  %v11080 = vld [vmem:[%s7 + $0xb0] sm:$0xff]
  %v11081 = vld [vmem:[%s7 + $0xb8] sm:$0xff]
  %v11082 = vld [vmem:[%s7 + $0xc0] sm:$0xff]
  %v11083 = vld [vmem:[%s7 + $0xc8] sm:$0xff]
  %v11084 = vld [vmem:[%s7 + $0xd0] sm:$0xff]
  %v11085 = vld [vmem:[%s7 + $0xd8] sm:$0xff]
  %v11086 = vld [vmem:[%s7 + $0xe0] sm:$0xff]
  %v11087 = vld [vmem:[%s7 + $0xe8] sm:$0xff]
  %v11088 = vld [vmem:[%s7 + $0xf0] sm:$0xff]
  %v11089 = vld [vmem:[%s7 + $0xf8] sm:$0xff]
  %v11090 = vld [vmem:[%s8] sm:$0x1]
  %v11092 = vlaneseq
  %v11093 = vshrl.u32 %v11092, 7
  %v11094 = vsub.s32 0, %v11093
  %v11095 = vrot.slane %v11090, %v11094
  %11097 = vmatprep.subr.mxu0 0.0
  %11098 = vmatpush1.msra.mxu0 %v11058
  %11099 = vmatprep.subr.mxu0 0.0
  %11100 = vmatpush1.msra.mxu0 %v11059
  %11101 = vmatprep.subr.mxu0 0.0
  %11102 = vmatpush1.msra.mxu0 %v11060
  %11103 = vmatprep.subr.mxu0 0.0
  %11104 = vmatpush1.msra.mxu0 %v11061
  %11105 = vmatprep.subr.mxu0 0.0
  %11106 = vmatpush1.msra.mxu0 %v11062
  %11107 = vmatprep.subr.mxu0 0.0
  %11108 = vmatpush1.msra.mxu0 %v11063
  %11109 = vmatprep.subr.mxu0 0.0
  %11110 = vmatpush1.msra.mxu0 %v11064
  %11111 = vmatprep.subr.mxu0 0.0
  %11112 = vmatpush1.msra.mxu0 %v11065
  %11113 = vmatprep.subr.mxu0 0.0
  %11114 = vmatpush1.msra.mxu0 %v11066
  %11115 = vmatprep.subr.mxu0 0.0
  %11116 = vmatpush1.msra.mxu0 %v11067
  %11117 = vmatprep.subr.mxu0 0.0
  %11118 = vmatpush1.msra.mxu0 %v11068
  %11119 = vmatprep.subr.mxu0 0.0
  %11120 = vmatpush1.msra.mxu0 %v11069
  %11121 = vmatprep.subr.mxu0 0.0
  %11122 = vmatpush1.msra.mxu0 %v11070
  %11123 = vmatprep.subr.mxu0 0.0
  %11124 = vmatpush1.msra.mxu0 %v11071
  %11125 = vmatprep.subr.mxu0 0.0
  %11126 = vmatpush1.msra.mxu0 %v11072
  %11127 = vmatprep.subr.mxu0 0.0
  %11128 = vmatpush1.msra.mxu0 %v11073
  %11129 = vmatprep.subr.mxu0 0.0
  %11130 = vmatpush1.msra.mxu0 %v11074
  %11131 = vmatprep.subr.mxu0 0.0
  %11132 = vmatpush1.msra.mxu0 %v11075
  %11133 = vmatprep.subr.mxu0 0.0
  %11134 = vmatpush1.msra.mxu0 %v11076
  %11135 = vmatprep.subr.mxu0 0.0
  %11136 = vmatpush1.msra.mxu0 %v11077
  %11137 = vmatprep.subr.mxu0 0.0
  %11138 = vmatpush1.msra.mxu0 %v11078
  %11139 = vmatprep.subr.mxu0 0.0
  %11140 = vmatpush1.msra.mxu0 %v11079
  %11141 = vmatprep.subr.mxu0 0.0
  %11142 = vmatpush1.msra.mxu0 %v11080
  %11143 = vmatprep.subr.mxu0 0.0
  %11144 = vmatpush1.msra.mxu0 %v11081
  %11145 = vmatprep.subr.mxu0 0.0
  %11146 = vmatpush1.msra.mxu0 %v11082
  %11147 = vmatprep.subr.mxu0 0.0
  %11148 = vmatpush1.msra.mxu0 %v11083
  %11149 = vmatprep.subr.mxu0 0.0
  %11150 = vmatpush1.msra.mxu0 %v11084
  %11151 = vmatprep.subr.mxu0 0.0
  %11152 = vmatpush1.msra.mxu0 %v11085
  %11153 = vmatprep.subr.mxu0 0.0
  %11154 = vmatpush1.msra.mxu0 %v11086
  %11155 = vmatprep.subr.mxu0 0.0
  %11156 = vmatpush1.msra.mxu0 %v11087
  %11157 = vmatprep.subr.mxu0 0.0
  %11158 = vmatpush1.msra.mxu0 %v11088
  %11159 = vmatprep.subr.mxu0 0.0
  %11160 = vmatpush1.msra.mxu0 %v11089
  %11161 = vmatprep.mubr.f32.mxu0 %v11057
  %11162 = vmatmul.mubr.f32.gmra.mrb[0].mxu0 %v11056
  %v11163 = vpop.f32.mrb[0].mxu0
  %v11164 = vadd.f32 %v11095, %v11163
  %v11165 = vpop.f32.mrb[0].mxu0
  %11166 = vdwg.mxu0
  %v11167 = vlaneseq
  %v11168 = vand.u32 %v11167, 127
  %vm11169 = vcmp.lt.s32.totalorder %v11168, 6
  %v11170 = vsel %vm11169, %v11164, -1e+30
  %v11171 = vsel %vm5172, %v11170, -inf
  %11172 = vmax.xlane.f32.xlu0 %v11171
  %v11173 = vpop.xlane.xlu0 %11172
  %v11174 = vsub.f32 %v11170, %v11173
  %v11175 = vmul.f32 %v11174, 1.442695
  %v11176 = vpow.pop %v11175
  %v11177 = vsel %vm5172, %v11176, 0.0
  %11178 = vadd.xlane.f32.xlu0 %v11177
  %v11179 = vpop.xlane.xlu0 %11178
  %v11180 = vrcp.pop %v11179
  %v11181 = vmul.f32 %v11179, %v11180
  %v11182 = vsub.f32 2.0, %v11181
  %v11183 = vmul.f32 %v11180, %v11182
  %v11184 = vmul.f32 %v11176, %v11183
  %vm11185 = vcmp.eq.s32.totalorder %v11168, 6
  %v11186 = vsel %vm11185, %v11164, %v11184
  %11187 = vst [vmem:[%s9] sm:$0x3] %v11186
  // Predicated region
  $region38: #{forward_pallas.1} parent=0 // pred_check
    _
  $region39: #{forward_pallas.1} parent=0 // pred_check_branch
    %11189 = sbr.rel (0) target = $region41
  $region40: #{forward_pallas.1} parent=0 // pred_region
    _
  $region41: #{forward_pallas.1} parent=0 // pred_fallthru
    _
  // Predicated region
  $region42: #{forward_pallas.1} parent=0 // pred_check
    _
  $region43: #{forward_pallas.1} parent=0 // pred_check_branch
    %11191 = sbr.rel (0) target = $region45
  $region44: #{forward_pallas.1} parent=0 // pred_region
    _
  $region45: #{forward_pallas.1} parent=0 // pred_fallthru
    _

</llo_original>
